<compile_context>
chip_gen: v5e
topology: v5e:2x2
jax: 0.10.0
libtpu: 0.0.40
codegen_flags: <defaults>
</compile_context>

<pallas_src>
import jax
import jax.numpy as jnp
import numpy as np
from jax import lax
from jax.experimental import pallas as pl
from jax.experimental.pallas import tpu as pltpu

# ---- hyperparameters from anneal.py params ----
KS1, NK1 = 7, 20
KS2, NK2 = 4, 42
H_IN = 28
C1_OUT = H_IN - KS1 + 1          # 22  (conv1 output spatial)
P1_OUT = C1_OUT // 2             # 11  (after 2x2 max pool)
C2_OUT = P1_OUT - KS2 + 1        # 8   (conv2 output spatial)
P2_OUT = C2_OUT // 2             # 4   (after 2x2 max pool)
LIN = P2_OUT * P2_OUT * NK2      # 672 == self.lin
FC1_OUT = 300
NUM_CLASSES = 10

C1P = 256                        # padded lane half-width, conv1 out (11*20=220 -> 256)
C2P = 256                        # padded lane half-width, conv2 out (4*42=168 -> 256)
K1 = KS1 * H_IN                  # 196: conv1 contraction depth
KFC1 = P2_OUT * C2P              # 1024: fc1 contraction depth (padded NHWC flatten)
OUT_PAD = 128                    # lane-dense padded logits

TILE_B_CAP = 128                 # safe for v7x (64 MiB VMEM); v5e/v6e could use 256


def _round_up(n, m):
    return ((n + m - 1) // m) * m


def _choose_tile_b(B):
    tb = min(TILE_B_CAP, _round_up(B, 8))
    # guarantee >= 2 grid steps when possible so v7x's two TensorCores both get work
    if _round_up(B, tb) // tb < 2 and tb > 8:
        tb = max(8, _round_up(tb // 2, 8))
    return tb


# --------------------------- fused Pallas kernel -----------------------------

def fused_net_kernel(xim_ref, wb1_ref, b1_ref, w2b_ref, b2_ref,
                     wf1_ref, bf1_ref, wf2_ref, bf2_ref, o_ref):
    """One batch tile end-to-end; all intermediates stay in VMEM."""
    tb = o_ref.shape[0]

    # ---- conv1: single matmul, K=196, N=512 (even/odd output-column halves) ----
    # acc1[(b, oi), q*256 + ojp*20 + c] = conv1[b, c, oi, 2*ojp + q]
    acc1 = jnp.dot(xim_ref[...], wb1_ref[...],
                   preferred_element_type=jnp.float32)        # (tb*22, 512) f32

    # ---- 2x2 max-pool + bias + ReLU (bias constant over the pool window) ----
    pw = jnp.maximum(acc1[:, :C1P], acc1[:, C1P:])            # width pool (aligned halves)
    pw = pw.reshape(tb * P1_OUT, 2, C1P)
    ph = jnp.maximum(pw[:, 0, :], pw[:, 1, :])                # height pool (paired rows)
    h1 = jnp.maximum(ph + b1_ref[...], 0.0).astype(jnp.bfloat16)
    h1 = h1.reshape(tb, P1_OUT, C1P)                          # rows: (b, oi1p); lanes: oj1p*20+c

    # ---- conv2: 4 accumulating matmuls over the kernel-row offset, K=256, N=512 ----
    # TODO(synk): nn.Dropout2d / F.dropout are identity at inference; training
    # parity would need in-kernel pltpu.prng_seed / prng_random_bits masks.
    acc2 = jnp.dot(h1[:, 0:C2_OUT, :].reshape(tb * C2_OUT, C1P), w2b_ref[0],
                   preferred_element_type=jnp.float32)
    for ki in range(1, KS2):
        acc2 = acc2 + jnp.dot(
            h1[:, ki:ki + C2_OUT, :].reshape(tb * C2_OUT, C1P), w2b_ref[ki],
            preferred_element_type=jnp.float32)               # (tb*8, 512) f32

    # ---- 2x2 max-pool + bias + ReLU ----
    qw = jnp.maximum(acc2[:, :C2P], acc2[:, C2P:])            # width pool (aligned halves)
    qw = qw.reshape(tb * P2_OUT, 2, C2P)
    qh = jnp.maximum(qw[:, 0, :], qw[:, 1, :])                # height pool (paired rows)
    h2 = jnp.maximum(qh + b2_ref[...], 0.0).astype(jnp.bfloat16)   # (tb*4, 256)

    # ---- flatten (padded NHWC; fc1 weight rows pre-permuted/zero-padded) ----
    flat = h2.reshape(tb, KFC1)                               # (tb, 1024) bf16

    # ---- fc1 + ReLU + (dropout = identity) + fc2 + log_softmax ----
    g = jnp.dot(flat, wf1_ref[...], preferred_element_type=jnp.float32) + bf1_ref[...]
    g = jnp.maximum(g, 0.0).astype(jnp.bfloat16)              # (tb, 300)
    z = jnp.dot(g, wf2_ref[...], preferred_element_type=jnp.float32) + bf2_ref[...]
    # pad logit columns carry a -1e30 bias -> exp underflows to 0, excluded from lse
    zmax = jnp.max(z, axis=-1, keepdims=True)
    lse = jnp.log(jnp.sum(jnp.exp(z - zmax), axis=-1, keepdims=True))
    o_ref[...] = (z - zmax) - lse                             # (tb, 128) f32


# --------------------------- one-time param layout ----------------------------

def init_params(key):
    """Deterministic init with PyTorch-layout shapes (uniform +-1/sqrt(fan_in))."""
    ks = jax.random.split(key, 8)

    def u(k, shape, fan_in):
        bound = 1.0 / float(fan_in) ** 0.5
        return jax.random.uniform(k, shape, jnp.float32, -bound, bound)

    return dict(
        w_conv1=u(ks[0], (NK1, 1, KS1, KS1), KS1 * KS1),
        b_conv1=u(ks[1], (NK1,), KS1 * KS1),
        w_conv2=u(ks[2], (NK2, NK1, KS2, KS2), NK1 * KS2 * KS2),
        b_conv2=u(ks[3], (NK2,), NK1 * KS2 * KS2),
        w_fc1=u(ks[4], (FC1_OUT, LIN), LIN),
        b_fc1=u(ks[5], (FC1_OUT,), LIN),
        w_fc2=u(ks[6], (NUM_CLASSES, FC1_OUT), FC1_OUT),
        b_fc2=u(ks[7], (NUM_CLASSES,), FC1_OUT),
    )


def prepare_params(params):
    """Hoisted layout prep (runs once): banded conv weights with even/odd
    128-aligned output halves, pooled-layout bias rows, NHWC-permuted & padded
    fc1, lane-padded fc2; matmul operands in bf16."""
    # ---- conv1 banded weight: (196, 512) ----
    # wb1[ki*28 + jj, q*256 + ojp*20 + c] = w1[c, ki, jj - (2*ojp + q)]
    w1 = np.asarray(params["w_conv1"], np.float32).reshape(NK1, KS1, KS1)  # (c, ki, kw)
    wb1 = np.zeros((K1, 2 * C1P), np.float32)
    for ki in range(KS1):
        for ojp in range(P1_OUT):
            for q in range(2):
                oj = 2 * ojp + q
                col0 = q * C1P + ojp * NK1
                for kw in range(KS1):
                    wb1[ki * H_IN + oj + kw, col0:col0 + NK1] = w1[:, ki, kw]

    b1c = np.zeros((1, C1P), np.float32)
    b1c[0, :P1_OUT * NK1] = np.tile(np.asarray(params["b_conv1"], np.float32), P1_OUT)

    # ---- conv2 banded weights: (4, 256, 512) ----
    # w2b[ki, jj*20 + ch, q*256 + ojp*42 + co] = w2[co, ch, ki, jj - (2*ojp + q)]
    w2 = np.asarray(params["w_conv2"], np.float32)            # (co, ch, kh, kw)
    w2b = np.zeros((KS2, C1P, 2 * C2P), np.float32)
    for ki in range(KS2):
        for ojp in range(P2_OUT):
            for q in range(2):
                oj = 2 * ojp + q
                col0 = q * C2P + ojp * NK2
                for kj in range(KS2):
                    row0 = (oj + kj) * NK1
                    w2b[ki, row0:row0 + NK1, col0:col0 + NK2] = w2[:, :, ki, kj].T

    b2c = np.zeros((1, C2P), np.float32)
    b2c[0, :P2_OUT * NK2] = np.tile(np.asarray(params["b_conv2"], np.float32), P2_OUT)

    # ---- fc1: rows permuted from torch NCHW flatten to padded (oi, oj*42+co) layout ----
    wfc1 = np.asarray(params["w_fc1"], np.float32)            # (300, 672)
    wfc1_r = wfc1.reshape(FC1_OUT, NK2, P2_OUT, P2_OUT)       # (n, co, oi, oj)
    wf1p = np.zeros((P2_OUT, C2P, FC1_OUT), np.float32)
    wf1p[:, :P2_OUT * NK2, :] = np.transpose(wfc1_r, (2, 3, 1, 0)).reshape(
        P2_OUT, P2_OUT * NK2, FC1_OUT)
    wf1p = wf1p.reshape(KFC1, FC1_OUT)                        # (1024, 300)

    # ---- fc2: lane-padded to 128 output columns; pad columns masked via -1e30 bias ----
    wf2p = np.zeros((FC1_OUT, OUT_PAD), np.float32)
    wf2p[:, :NUM_CLASSES] = np.asarray(params["w_fc2"], np.float32).T
    bf2p = np.full((1, OUT_PAD), -1e30, np.float32)
    bf2p[0, :NUM_CLASSES] = np.asarray(params["b_fc2"], np.float32)

    return dict(
        wb1=jnp.asarray(wb1, jnp.bfloat16),
        b1=jnp.asarray(b1c),
        w2b=jnp.asarray(w2b, jnp.bfloat16),
        b2=jnp.asarray(b2c),
        wf1=jnp.asarray(wf1p, jnp.bfloat16),
        bf1=jnp.asarray(np.asarray(params["b_fc1"], np.float32).reshape(1, FC1_OUT)),
        wf2=jnp.asarray(wf2p, jnp.bfloat16),
        bf2=jnp.asarray(bf2p),
    )


# --------------------------- forward wrapper ---------------------------------

@jax.jit
def net_forward(x_nchw, prepped):
    B = x_nchw.shape[0]
    tile_b = _choose_tile_b(B)
    pb = _round_up(B, tile_b)

    x = x_nchw.reshape(B, H_IN, H_IN).astype(jnp.bfloat16)
    if pb != B:
        x = jnp.pad(x, ((0, pb - B), (0, 0), (0, 0)))

    # conv1 ki-im2col staged in the wrapper (layout plumbing; input is tiny):
    # xim[b, oi, ki*28 + w] = x[b, oi + ki, w]
    xim = jnp.concatenate([x[:, ki:ki + C1_OUT, :] for ki in range(KS1)], axis=-1)
    xim = xim.reshape(pb * C1_OUT, K1)                        # (pb*22, 196) bf16

    out = pl.pallas_call(
        fused_net_kernel,
        out_shape=jax.ShapeDtypeStruct((pb, OUT_PAD), jnp.float32),
        grid=(pb // tile_b,),
        in_specs=[
            pl.BlockSpec((tile_b * C1_OUT, K1), lambda i: (i, 0)),      # im2col images
            pl.BlockSpec((K1, 2 * C1P), lambda i: (0, 0)),              # conv1 banded w
            pl.BlockSpec((1, C1P), lambda i: (0, 0)),                   # conv1 bias row
            pl.BlockSpec((KS2, C1P, 2 * C2P), lambda i: (0, 0, 0)),     # conv2 banded w
            pl.BlockSpec((1, C2P), lambda i: (0, 0)),                   # conv2 bias row
            pl.BlockSpec((KFC1, FC1_OUT), lambda i: (0, 0)),            # fc1 w
            pl.BlockSpec((1, FC1_OUT), lambda i: (0, 0)),               # fc1 b
            pl.BlockSpec((FC1_OUT, OUT_PAD), lambda i: (0, 0)),         # fc2 w (padded)
            pl.BlockSpec((1, OUT_PAD), lambda i: (0, 0)),               # fc2 b (padded)
        ],
        out_specs=pl.BlockSpec((tile_b, OUT_PAD), lambda i: (i, 0)),
        compiler_params=pltpu.CompilerParams(
            dimension_semantics=("parallel",),
            vmem_limit_bytes=48 * 1024 * 1024,    # <= v7x's 64 MiB; v5e/v6e have headroom
        ),
    )(xim, prepped["wb1"], prepped["b1"], prepped["w2b"], prepped["b2"],
      prepped["wf1"], prepped["bf1"], prepped["wf2"], prepped["bf2"])
    return out[:B, :NUM_CLASSES]


# --------------------------- pure-JAX reference (f32) ------------------------

def net_forward_reference(x_nchw, params):
    x = x_nchw.astype(jnp.float32)
    y = lax.conv_general_dilated(x, params["w_conv1"], (1, 1), "VALID",
                                 dimension_numbers=("NCHW", "OIHW", "NCHW"))
    y = y + params["b_conv1"][None, :, None, None]
    y = lax.reduce_window(y, -jnp.inf, lax.max, (1, 1, 2, 2), (1, 1, 2, 2), "VALID")
    y = jnp.maximum(y, 0.0)
    y = lax.conv_general_dilated(y, params["w_conv2"], (1, 1), "VALID",
                                 dimension_numbers=("NCHW", "OIHW", "NCHW"))
    y = y + params["b_conv2"][None, :, None, None]
    y = lax.reduce_window(y, -jnp.inf, lax.max, (1, 1, 2, 2), (1, 1, 2, 2), "VALID")
    y = jnp.maximum(y, 0.0)
    y = y.reshape(x.shape[0], LIN)                            # torch NCHW flatten
    y = jnp.maximum(y @ params["w_fc1"].T + params["b_fc1"], 0.0)
    z = y @ params["w_fc2"].T + params["b_fc2"]
    return jax.nn.log_softmax(z, axis=-1)


if __name__ == "__main__":
    key = jax.random.PRNGKey(0)
    pkey, xkey = jax.random.split(key)
    params = init_params(pkey)
    prepped = prepare_params(params)

    # Input spatial size is fixed to 1x28x28 by the module's self.lin computation.
    x = jax.random.normal(xkey, (2, 1, H_IN, H_IN), jnp.float32)
    out = jax.block_until_ready(net_forward(x, prepped))
    assert out.shape == (2, NUM_CLASSES)
    assert bool(jnp.all(jnp.isfinite(out)))
    assert jnp.allclose(jnp.exp(out).sum(axis=-1), 1.0, atol=1e-3)
    ref = jax.block_until_ready(net_forward_reference(x, params))
    max_err = float(jnp.max(jnp.abs(out - ref)))
    assert max_err < 0.2, max_err

    # Second check: exercises multi-step grid (>=2 tiles) and padded batch rows.
    x2 = jax.random.normal(jax.random.PRNGKey(1), (100, 1, H_IN, H_IN), jnp.float32)
    out2 = jax.block_until_ready(net_forward(x2, prepped))
    assert out2.shape == (100, NUM_CLASSES)
    assert bool(jnp.all(jnp.isfinite(out2)))
    ref2 = jax.block_until_ready(net_forward_reference(x2, params))
    max_err2 = float(jnp.max(jnp.abs(out2 - ref2)))
    assert max_err2 < 0.25, max_err2

    print("KERNEL_OK")
</pallas_src>

<mosaic_0001>
module attributes {stable_mosaic.version = 11 : i64} {
  func.func @fused_net_kernel(%arg0: i32, %arg1: memref<176x196xbf16, #tpu.memory_space<vmem>>, %arg2: memref<196x512xbf16, #tpu.memory_space<vmem>>, %arg3: memref<1x256xf32, #tpu.memory_space<vmem>>, %arg4: memref<4x256x512xbf16, #tpu.memory_space<vmem>>, %arg5: memref<1x256xf32, #tpu.memory_space<vmem>>, %arg6: memref<1024x300xbf16, #tpu.memory_space<vmem>>, %arg7: memref<1x300xf32, #tpu.memory_space<vmem>>, %arg8: memref<300x128xbf16, #tpu.memory_space<vmem>>, %arg9: memref<1x128xf32, #tpu.memory_space<vmem>>, %arg10: memref<8x128xf32, #tpu.memory_space<vmem>>) attributes {dimension_semantics = [#tpu.dimension_semantics<parallel>], iteration_bounds = array<i64: 1>, scalar_prefetch = 0 : i64, scratch_operands = 0 : i64, tpu.core_type = #tpu.core_type<tc>, window_params = [{transform_indices = @transform_0, window_bounds = array<i64: 176, 196>}, {pipeline_mode = #tpu.pipeline_mode<synchronous>, transform_indices = @transform_1, window_bounds = array<i64: 196, 512>}, {pipeline_mode = #tpu.pipeline_mode<synchronous>, transform_indices = @transform_2, window_bounds = array<i64: 1, 256>}, {pipeline_mode = #tpu.pipeline_mode<synchronous>, transform_indices = @transform_3, window_bounds = array<i64: 4, 256, 512>}, {pipeline_mode = #tpu.pipeline_mode<synchronous>, transform_indices = @transform_4, window_bounds = array<i64: 1, 256>}, {pipeline_mode = #tpu.pipeline_mode<synchronous>, transform_indices = @transform_5, window_bounds = array<i64: 1024, 300>}, {pipeline_mode = #tpu.pipeline_mode<synchronous>, transform_indices = @transform_6, window_bounds = array<i64: 1, 300>}, {pipeline_mode = #tpu.pipeline_mode<synchronous>, transform_indices = @transform_7, window_bounds = array<i64: 300, 128>}, {pipeline_mode = #tpu.pipeline_mode<synchronous>, transform_indices = @transform_8, window_bounds = array<i64: 1, 128>}, {transform_indices = @transform_9, window_bounds = array<i64: 8, 128>}]} {
    %c0 = arith.constant 0 : index
    %c0_0 = arith.constant 0 : index
    %0 = vector.load %arg1[%c0, %c0_0] : memref<176x196xbf16, #tpu.memory_space<vmem>>, vector<176x196xbf16>
    %c0_1 = arith.constant 0 : index
    %c0_2 = arith.constant 0 : index
    %1 = vector.load %arg2[%c0_1, %c0_2] : memref<196x512xbf16, #tpu.memory_space<vmem>>, vector<196x512xbf16>
    %cst = arith.constant dense<0.000000e+00> : vector<176x512xf32>
    %2 = tpu.matmul %0, %1, %cst {dimension_numbers = #tpu.dot_dimension_numbers<[1], [0], [0], [1], [0, 0, 1, 1], [], []>} : vector<176x196xbf16>, vector<196x512xbf16>, vector<176x512xf32> -> vector<176x512xf32>
    %3 = vector.extract_strided_slice %2 {offsets = [0, 0], sizes = [176, 256], strides = [1, 1]} : vector<176x512xf32> to vector<176x256xf32>
    %4 = vector.extract_strided_slice %2 {offsets = [0, 256], sizes = [176, 256], strides = [1, 1]} : vector<176x512xf32> to vector<176x256xf32>
    %5 = arith.maximumf %3, %4 : vector<176x256xf32>
    %6 = vector.shape_cast %5 : vector<176x256xf32> to vector<88x2x256xf32>
    %7 = vector.extract_strided_slice %6 {offsets = [0, 0, 0], sizes = [88, 1, 256], strides = [1, 1, 1]} : vector<88x2x256xf32> to vector<88x1x256xf32>
    %8 = vector.shape_cast %7 : vector<88x1x256xf32> to vector<88x256xf32>
    %9 = vector.extract_strided_slice %6 {offsets = [0, 1, 0], sizes = [88, 1, 256], strides = [1, 1, 1]} : vector<88x2x256xf32> to vector<88x1x256xf32>
    %10 = vector.shape_cast %9 : vector<88x1x256xf32> to vector<88x256xf32>
    %11 = arith.maximumf %8, %10 : vector<88x256xf32>
    %c0_3 = arith.constant 0 : index
    %c0_4 = arith.constant 0 : index
    %12 = vector.load %arg3[%c0_3, %c0_4] : memref<1x256xf32, #tpu.memory_space<vmem>>, vector<1x256xf32>
    %13 = vector.broadcast %12 : vector<1x256xf32> to vector<88x256xf32>
    %14 = arith.addf %11, %13 : vector<88x256xf32>
    %cst_5 = arith.constant 0.000000e+00 : f32
    %15 = vector.broadcast %cst_5 : f32 to vector<88x256xf32>
    %16 = arith.maximumf %14, %15 : vector<88x256xf32>
    %17 = arith.truncf %16 : vector<88x256xf32> to vector<88x256xbf16>
    %18 = vector.shape_cast %17 : vector<88x256xbf16> to vector<8x11x256xbf16>
    %19 = vector.extract_strided_slice %18 {offsets = [0, 0, 0], sizes = [8, 8, 256], strides = [1, 1, 1]} : vector<8x11x256xbf16> to vector<8x8x256xbf16>
    %20 = vector.shape_cast %19 : vector<8x8x256xbf16> to vector<64x256xbf16>
    %c0_6 = arith.constant 0 : index
    %c0_7 = arith.constant 0 : index
    %c0_8 = arith.constant 0 : index
    %21 = vector.load %arg4[%c0_6, %c0_7, %c0_8] : memref<4x256x512xbf16, #tpu.memory_space<vmem>>, vector<1x256x512xbf16>
    %22 = vector.shape_cast %21 : vector<1x256x512xbf16> to vector<256x512xbf16>
    %cst_9 = arith.constant dense<0.000000e+00> : vector<64x512xf32>
    %23 = tpu.matmul %20, %22, %cst_9 {dimension_numbers = #tpu.dot_dimension_numbers<[1], [0], [0], [1], [0, 0, 1, 1], [], []>} : vector<64x256xbf16>, vector<256x512xbf16>, vector<64x512xf32> -> vector<64x512xf32>
    %24 = vector.extract_strided_slice %18 {offsets = [0, 1, 0], sizes = [8, 8, 256], strides = [1, 1, 1]} : vector<8x11x256xbf16> to vector<8x8x256xbf16>
    %25 = vector.shape_cast %24 : vector<8x8x256xbf16> to vector<64x256xbf16>
    %c1 = arith.constant 1 : index
    %c0_10 = arith.constant 0 : index
    %c0_11 = arith.constant 0 : index
    %26 = vector.load %arg4[%c1, %c0_10, %c0_11] : memref<4x256x512xbf16, #tpu.memory_space<vmem>>, vector<1x256x512xbf16>
    %27 = vector.shape_cast %26 : vector<1x256x512xbf16> to vector<256x512xbf16>
    %cst_12 = arith.constant dense<0.000000e+00> : vector<64x512xf32>
    %28 = tpu.matmul %25, %27, %cst_12 {dimension_numbers = #tpu.dot_dimension_numbers<[1], [0], [0], [1], [0, 0, 1, 1], [], []>} : vector<64x256xbf16>, vector<256x512xbf16>, vector<64x512xf32> -> vector<64x512xf32>
    %29 = arith.addf %23, %28 : vector<64x512xf32>
    %30 = vector.extract_strided_slice %18 {offsets = [0, 2, 0], sizes = [8, 8, 256], strides = [1, 1, 1]} : vector<8x11x256xbf16> to vector<8x8x256xbf16>
    %31 = vector.shape_cast %30 : vector<8x8x256xbf16> to vector<64x256xbf16>
    %c2 = arith.constant 2 : index
    %c0_13 = arith.constant 0 : index
    %c0_14 = arith.constant 0 : index
    %32 = vector.load %arg4[%c2, %c0_13, %c0_14] : memref<4x256x512xbf16, #tpu.memory_space<vmem>>, vector<1x256x512xbf16>
    %33 = vector.shape_cast %32 : vector<1x256x512xbf16> to vector<256x512xbf16>
    %cst_15 = arith.constant dense<0.000000e+00> : vector<64x512xf32>
    %34 = tpu.matmul %31, %33, %cst_15 {dimension_numbers = #tpu.dot_dimension_numbers<[1], [0], [0], [1], [0, 0, 1, 1], [], []>} : vector<64x256xbf16>, vector<256x512xbf16>, vector<64x512xf32> -> vector<64x512xf32>
    %35 = arith.addf %29, %34 : vector<64x512xf32>
    %36 = vector.extract_strided_slice %18 {offsets = [0, 3, 0], sizes = [8, 8, 256], strides = [1, 1, 1]} : vector<8x11x256xbf16> to vector<8x8x256xbf16>
    %37 = vector.shape_cast %36 : vector<8x8x256xbf16> to vector<64x256xbf16>
    %c3 = arith.constant 3 : index
    %c0_16 = arith.constant 0 : index
    %c0_17 = arith.constant 0 : index
    %38 = vector.load %arg4[%c3, %c0_16, %c0_17] : memref<4x256x512xbf16, #tpu.memory_space<vmem>>, vector<1x256x512xbf16>
    %39 = vector.shape_cast %38 : vector<1x256x512xbf16> to vector<256x512xbf16>
    %cst_18 = arith.constant dense<0.000000e+00> : vector<64x512xf32>
    %40 = tpu.matmul %37, %39, %cst_18 {dimension_numbers = #tpu.dot_dimension_numbers<[1], [0], [0], [1], [0, 0, 1, 1], [], []>} : vector<64x256xbf16>, vector<256x512xbf16>, vector<64x512xf32> -> vector<64x512xf32>
    %41 = arith.addf %35, %40 : vector<64x512xf32>
    %42 = vector.extract_strided_slice %41 {offsets = [0, 0], sizes = [64, 256], strides = [1, 1]} : vector<64x512xf32> to vector<64x256xf32>
    %43 = vector.extract_strided_slice %41 {offsets = [0, 256], sizes = [64, 256], strides = [1, 1]} : vector<64x512xf32> to vector<64x256xf32>
    %44 = arith.maximumf %42, %43 : vector<64x256xf32>
    %45 = vector.shape_cast %44 : vector<64x256xf32> to vector<32x2x256xf32>
    %46 = vector.extract_strided_slice %45 {offsets = [0, 0, 0], sizes = [32, 1, 256], strides = [1, 1, 1]} : vector<32x2x256xf32> to vector<32x1x256xf32>
    %47 = vector.shape_cast %46 : vector<32x1x256xf32> to vector<32x256xf32>
    %48 = vector.extract_strided_slice %45 {offsets = [0, 1, 0], sizes = [32, 1, 256], strides = [1, 1, 1]} : vector<32x2x256xf32> to vector<32x1x256xf32>
    %49 = vector.shape_cast %48 : vector<32x1x256xf32> to vector<32x256xf32>
    %50 = arith.maximumf %47, %49 : vector<32x256xf32>
    %c0_19 = arith.constant 0 : index
    %c0_20 = arith.constant 0 : index
    %51 = vector.load %arg5[%c0_19, %c0_20] : memref<1x256xf32, #tpu.memory_space<vmem>>, vector<1x256xf32>
    %52 = vector.broadcast %51 : vector<1x256xf32> to vector<32x256xf32>
    %53 = arith.addf %50, %52 : vector<32x256xf32>
    %cst_21 = arith.constant 0.000000e+00 : f32
    %54 = vector.broadcast %cst_21 : f32 to vector<32x256xf32>
    %55 = arith.maximumf %53, %54 : vector<32x256xf32>
    %56 = arith.truncf %55 : vector<32x256xf32> to vector<32x256xbf16>
    %57 = vector.shape_cast %56 : vector<32x256xbf16> to vector<8x1024xbf16>
    %c0_22 = arith.constant 0 : index
    %c0_23 = arith.constant 0 : index
    %58 = vector.load %arg6[%c0_22, %c0_23] : memref<1024x300xbf16, #tpu.memory_space<vmem>>, vector<1024x300xbf16>
    %cst_24 = arith.constant dense<0.000000e+00> : vector<8x300xf32>
    %59 = tpu.matmul %57, %58, %cst_24 {dimension_numbers = #tpu.dot_dimension_numbers<[1], [0], [0], [1], [0, 0, 1, 1], [], []>} : vector<8x1024xbf16>, vector<1024x300xbf16>, vector<8x300xf32> -> vector<8x300xf32>
    %c0_25 = arith.constant 0 : index
    %c0_26 = arith.constant 0 : index
    %60 = vector.load %arg7[%c0_25, %c0_26] : memref<1x300xf32, #tpu.memory_space<vmem>>, vector<1x300xf32>
    %61 = vector.broadcast %60 : vector<1x300xf32> to vector<8x300xf32>
    %62 = arith.addf %59, %61 : vector<8x300xf32>
    %cst_27 = arith.constant 0.000000e+00 : f32
    %63 = vector.broadcast %cst_27 : f32 to vector<8x300xf32>
    %64 = arith.maximumf %62, %63 : vector<8x300xf32>
    %65 = arith.truncf %64 : vector<8x300xf32> to vector<8x300xbf16>
    %c0_28 = arith.constant 0 : index
    %c0_29 = arith.constant 0 : index
    %66 = vector.load %arg8[%c0_28, %c0_29] : memref<300x128xbf16, #tpu.memory_space<vmem>>, vector<300x128xbf16>
    %cst_30 = arith.constant dense<0.000000e+00> : vector<8x128xf32>
    %67 = tpu.matmul %65, %66, %cst_30 {dimension_numbers = #tpu.dot_dimension_numbers<[1], [0], [0], [1], [0, 0, 1, 1], [], []>} : vector<8x300xbf16>, vector<300x128xbf16>, vector<8x128xf32> -> vector<8x128xf32>
    %c0_31 = arith.constant 0 : index
    %c0_32 = arith.constant 0 : index
    %68 = vector.load %arg9[%c0_31, %c0_32] : memref<1x128xf32, #tpu.memory_space<vmem>>, vector<1x128xf32>
    %69 = vector.broadcast %68 : vector<1x128xf32> to vector<8x128xf32>
    %70 = arith.addf %67, %69 : vector<8x128xf32>
    %cst_33 = arith.constant dense<0xFF800000> : vector<8xf32>
    %71 = vector.multi_reduction <maximumf>, %70, %cst_33 [1] : vector<8x128xf32> to vector<8xf32>
    %72 = vector.shape_cast %71 : vector<8xf32> to vector<8x1xf32>
    %73 = vector.broadcast %72 : vector<8x1xf32> to vector<8x128xf32>
    %74 = arith.subf %70, %73 : vector<8x128xf32>
    %75 = math.exp %74 : vector<8x128xf32>
    %cst_34 = arith.constant dense<0.000000e+00> : vector<8xf32>
    %76 = vector.multi_reduction <add>, %75, %cst_34 [1] : vector<8x128xf32> to vector<8xf32>
    %77 = vector.shape_cast %76 : vector<8xf32> to vector<8x1xf32>
    %78 = math.log %77 : vector<8x1xf32>
    %79 = vector.broadcast %72 : vector<8x1xf32> to vector<8x128xf32>
    %80 = arith.subf %70, %79 : vector<8x128xf32>
    %81 = vector.broadcast %78 : vector<8x1xf32> to vector<8x128xf32>
    %82 = arith.subf %80, %81 : vector<8x128xf32>
    %c0_35 = arith.constant 0 : index
    %c0_36 = arith.constant 0 : index
    %83 = vector.load %arg10[%c0_35, %c0_36] : memref<8x128xf32, #tpu.memory_space<vmem>>, vector<8x128xf32>
    tpu.vector_store %arg10[%c0_35, %c0_36], %82 {strides = array<i32>} : memref<8x128xf32, #tpu.memory_space<vmem>>, vector<8x128xf32>,
    return
  }
  func.func @transform_0(%arg0: i32) -> (i32, i32) {
    %c0_i32 = arith.constant 0 : i32
    %c0_i32_0 = arith.constant 0 : i32
    return %arg0, %c0_i32 : i32, i32
  }
  func.func @transform_1(%arg0: i32) -> (i32, i32) {
    %c0_i32 = arith.constant 0 : i32
    %c0_i32_0 = arith.constant 0 : i32
    %c0_i32_1 = arith.constant 0 : i32
    return %c0_i32, %c0_i32_0 : i32, i32
  }
  func.func @transform_2(%arg0: i32) -> (i32, i32) {
    %c0_i32 = arith.constant 0 : i32
    %c0_i32_0 = arith.constant 0 : i32
    %c0_i32_1 = arith.constant 0 : i32
    return %c0_i32, %c0_i32_0 : i32, i32
  }
  func.func @transform_3(%arg0: i32) -> (i32, i32, i32) {
    %c0_i32 = arith.constant 0 : i32
    %c0_i32_0 = arith.constant 0 : i32
    %c0_i32_1 = arith.constant 0 : i32
    %c0_i32_2 = arith.constant 0 : i32
    return %c0_i32, %c0_i32_0, %c0_i32_1 : i32, i32, i32
  }
  func.func @transform_4(%arg0: i32) -> (i32, i32) {
    %c0_i32 = arith.constant 0 : i32
    %c0_i32_0 = arith.constant 0 : i32
    %c0_i32_1 = arith.constant 0 : i32
    return %c0_i32, %c0_i32_0 : i32, i32
  }
  func.func @transform_5(%arg0: i32) -> (i32, i32) {
    %c0_i32 = arith.constant 0 : i32
    %c0_i32_0 = arith.constant 0 : i32
    %c0_i32_1 = arith.constant 0 : i32
    return %c0_i32, %c0_i32_0 : i32, i32
  }
  func.func @transform_6(%arg0: i32) -> (i32, i32) {
    %c0_i32 = arith.constant 0 : i32
    %c0_i32_0 = arith.constant 0 : i32
    %c0_i32_1 = arith.constant 0 : i32
    return %c0_i32, %c0_i32_0 : i32, i32
  }
  func.func @transform_7(%arg0: i32) -> (i32, i32) {
    %c0_i32 = arith.constant 0 : i32
    %c0_i32_0 = arith.constant 0 : i32
    %c0_i32_1 = arith.constant 0 : i32
    return %c0_i32, %c0_i32_0 : i32, i32
  }
  func.func @transform_8(%arg0: i32) -> (i32, i32) {
    %c0_i32 = arith.constant 0 : i32
    %c0_i32_0 = arith.constant 0 : i32
    %c0_i32_1 = arith.constant 0 : i32
    return %c0_i32, %c0_i32_0 : i32, i32
  }
  func.func @transform_9(%arg0: i32) -> (i32, i32) {
    %c0_i32 = arith.constant 0 : i32
    %c0_i32_0 = arith.constant 0 : i32
    return %arg0, %c0_i32 : i32, i32
  }
}

</mosaic_0001>

<llo_original>
// kernel: net_forward.1
$region0: #{net_forward.1}
  #allocation0 [shape = 'u32[]', space=smem, size = 0x4, offset = 0x4, fixed_abs, tag = 'smem constant byte address 0x4 - core index']
  #allocation1 [shape = 'u32[72,128]{1,0:T(1,128)}', space=vmem, size = 0x9000, scoped, tag = 'internal scratch']
  %s0 = inlined_call_operand.vmem [shape: bf16[176,196], index: 0, kind: input, shape index: {}]
  %s1 = inlined_call_operand.vmem [shape: bf16[196,512], index: 1, kind: input, shape index: {}]
  %s2 = inlined_call_operand.vmem [shape: f32[1,256], index: 2, kind: input, shape index: {}]
  %s3 = inlined_call_operand.vmem [shape: bf16[4,256,512], index: 3, kind: input, shape index: {}]
  %s4 = inlined_call_operand.vmem [shape: f32[1,256], index: 4, kind: input, shape index: {}]
  %s5 = inlined_call_operand.vmem [shape: bf16[1024,300], index: 5, kind: input, shape index: {}]
  %s6 = inlined_call_operand.vmem [shape: f32[1,300], index: 6, kind: input, shape index: {}]
  %s7 = inlined_call_operand.vmem [shape: bf16[300,128], index: 7, kind: input, shape index: {}]
  %s8 = inlined_call_operand.vmem [shape: f32[1,128], index: 8, kind: input, shape index: {}]
  %s9 = inlined_call_operand.vmem [shape: f32[8,128], index: 9, kind: output, shape index: {}]
  %s10 = sld [smem:[#allocation0]]
  $region46: #{net_forward.1} parent=0
    _
  %s12 = ssub.s32 1, %s10
  %s13 = scalar_select 0, %s12, %s10
  // Predicated region
  $region2: #{net_forward.1} parent=0 // pred_check
    _
  $region3: #{net_forward.1} parent=0 // pred_check_branch
    %15 = sbr.rel (0) target = $region5
  $region4: #{net_forward.1} parent=0 // pred_region
    _
  $region5: #{net_forward.1} parent=0 // pred_fallthru
    _
  // Predicated region
  $region6: #{net_forward.1} parent=0 // pred_check
    _
  $region7: #{net_forward.1} parent=0 // pred_check_branch
    %17 = sbr.rel (0) target = $region9
  $region8: #{net_forward.1} parent=0 // pred_region
    _
  $region9: #{net_forward.1} parent=0 // pred_fallthru
    _
  // Predicated region
  $region10: #{net_forward.1} parent=0 // pred_check
    _
  $region11: #{net_forward.1} parent=0 // pred_check_branch
    %19 = sbr.rel (0) target = $region13
  $region12: #{net_forward.1} parent=0 // pred_region
    _
  $region13: #{net_forward.1} parent=0 // pred_fallthru
    _
  // Predicated region
  $region14: #{net_forward.1} parent=0 // pred_check
    _
  $region15: #{net_forward.1} parent=0 // pred_check_branch
    %21 = sbr.rel (0) target = $region17
  $region16: #{net_forward.1} parent=0 // pred_region
    _
  $region17: #{net_forward.1} parent=0 // pred_fallthru
    _
  // Predicated region
  $region18: #{net_forward.1} parent=0 // pred_check
    _
  $region19: #{net_forward.1} parent=0 // pred_check_branch
    %23 = sbr.rel (0) target = $region21
  $region20: #{net_forward.1} parent=0 // pred_region
    _
  $region21: #{net_forward.1} parent=0 // pred_fallthru
    _
  // Predicated region
  $region22: #{net_forward.1} parent=0 // pred_check
    _
  $region23: #{net_forward.1} parent=0 // pred_check_branch
    %25 = sbr.rel (0) target = $region25
  $region24: #{net_forward.1} parent=0 // pred_region
    _
  $region25: #{net_forward.1} parent=0 // pred_fallthru
    _
  // Predicated region
  $region26: #{net_forward.1} parent=0 // pred_check
    _
  $region27: #{net_forward.1} parent=0 // pred_check_branch
    %27 = sbr.rel (0) target = $region29
  $region28: #{net_forward.1} parent=0 // pred_region
    _
  $region29: #{net_forward.1} parent=0 // pred_fallthru
    _
  // Predicated region
  $region30: #{net_forward.1} parent=0 // pred_check
    _
  $region31: #{net_forward.1} parent=0 // pred_check_branch
    %29 = sbr.rel (0) target = $region33
  $region32: #{net_forward.1} parent=0 // pred_region
    _
  $region33: #{net_forward.1} parent=0 // pred_fallthru
    _
  // Predicated region
  $region34: #{net_forward.1} parent=0 // pred_check
    _
  $region35: #{net_forward.1} parent=0 // pred_check_branch
    %31 = sbr.rel (0) target = $region37
  $region36: #{net_forward.1} parent=0 // pred_region
    _
  $region37: #{net_forward.1} parent=0 // pred_fallthru
    _
  %v33 = vld [vmem:[%s0] sm:$0xff]
  %v34 = vld [vmem:[%s0 + $0x8] sm:$0xff]
  %v35 = vld [vmem:[%s0 + $0x10] sm:$0xff]
  %v36 = vld [vmem:[%s0 + $0x18] sm:$0xff]
  %v37 = vld [vmem:[%s0 + $0x20] sm:$0xff]
  %v38 = vld [vmem:[%s0 + $0x28] sm:$0xff]
  %v39 = vld [vmem:[%s0 + $0x30] sm:$0xff]
  %v40 = vld [vmem:[%s0 + $0x38] sm:$0xff]
  %v41 = vld [vmem:[%s0 + $0x40] sm:$0xff]
  %v42 = vld [vmem:[%s0 + $0x48] sm:$0xff]
  %v43 = vld [vmem:[%s0 + $0x50] sm:$0xff]
  %v44 = vld [vmem:[%s0 + $0x58] sm:$0xff]
  %v45 = vld [vmem:[%s0 + $0x60] sm:$0xff]
  %v46 = vld [vmem:[%s0 + $0x68] sm:$0xff]
  %v47 = vld [vmem:[%s0 + $0x70] sm:$0xff]
  %v48 = vld [vmem:[%s0 + $0x78] sm:$0xff]
  %v49 = vld [vmem:[%s0 + $0x80] sm:$0xff]
  %v50 = vld [vmem:[%s0 + $0x88] sm:$0xff]
  %v51 = vld [vmem:[%s0 + $0x90] sm:$0xff]
  %v52 = vld [vmem:[%s0 + $0x98] sm:$0xff]
  %v53 = vld [vmem:[%s0 + $0xa0] sm:$0xff]
  %v54 = vld [vmem:[%s0 + $0xa8] sm:$0xff]
  %v55 = vld [vmem:[%s1] sm:$0xff]
  %v56 = vld [vmem:[%s1 + $0x8] sm:$0xff]
  %v57 = vld [vmem:[%s1 + $0x10] sm:$0xff]
  %v58 = vld [vmem:[%s1 + $0x18] sm:$0xff]
  %v59 = vld [vmem:[%s1 + $0x20] sm:$0xff]
  %v60 = vld [vmem:[%s1 + $0x28] sm:$0xff]
  %v61 = vld [vmem:[%s1 + $0x30] sm:$0xff]
  %v62 = vld [vmem:[%s1 + $0x38] sm:$0xff]
  %v63 = vld [vmem:[%s1 + $0x40] sm:$0xff]
  %v64 = vld [vmem:[%s1 + $0x48] sm:$0xff]
  %v65 = vld [vmem:[%s1 + $0x50] sm:$0xff]
  %v66 = vld [vmem:[%s1 + $0x58] sm:$0xff]
  %v67 = vld [vmem:[%s1 + $0x60] sm:$0xff]
  %v68 = vld [vmem:[%s1 + $0x68] sm:$0xff]
  %v69 = vld [vmem:[%s1 + $0x70] sm:$0xff]
  %v70 = vld [vmem:[%s1 + $0x78] sm:$0xff]
  %v71 = vld [vmem:[%s1 + $0x80] sm:$0xff]
  %v72 = vld [vmem:[%s1 + $0x88] sm:$0xff]
  %v73 = vld [vmem:[%s1 + $0x90] sm:$0xff]
  %v74 = vld [vmem:[%s1 + $0x98] sm:$0xff]
  %v75 = vld [vmem:[%s1 + $0xa0] sm:$0xff]
  %v76 = vld [vmem:[%s1 + $0xa8] sm:$0xff]
  %v77 = vld [vmem:[%s1 + $0xb0] sm:$0xff]
  %v78 = vld [vmem:[%s1 + $0xb8] sm:$0xff]
  %v79 = vld [vmem:[%s1 + $0xc0] sm:$0xff]
  %v80 = vld [vmem:[%s1 + $0xc8] sm:$0xff]
  %v81 = vld [vmem:[%s1 + $0xd0] sm:$0xff]
  %v82 = vld [vmem:[%s1 + $0xd8] sm:$0xff]
  %v83 = vld [vmem:[%s1 + $0xe0] sm:$0xff]
  %v84 = vld [vmem:[%s1 + $0xe8] sm:$0xff]
  %v85 = vld [vmem:[%s1 + $0xf0] sm:$0xff]
  %v86 = vld [vmem:[%s1 + $0xf8] sm:$0xff]
  %v87 = vld [vmem:[%s1 + $0x100] sm:$0xff]
  %v88 = vld [vmem:[%s1 + $0x108] sm:$0xff]
  %v89 = vld [vmem:[%s1 + $0x110] sm:$0xff]
  %v90 = vld [vmem:[%s1 + $0x118] sm:$0xff]
  %v91 = vld [vmem:[%s1 + $0x120] sm:$0xff]
  %v92 = vld [vmem:[%s1 + $0x128] sm:$0xff]
  %v93 = vld [vmem:[%s1 + $0x130] sm:$0xff]
  %v94 = vld [vmem:[%s1 + $0x138] sm:$0xff]
  %v95 = vld [vmem:[%s1 + $0x140] sm:$0xff]
  %v96 = vld [vmem:[%s1 + $0x148] sm:$0xff]
  %v97 = vld [vmem:[%s1 + $0x150] sm:$0xff]
  %v98 = vld [vmem:[%s1 + $0x158] sm:$0xff]
  %v99 = vld [vmem:[%s1 + $0x160] sm:$0xff]
  %v100 = vld [vmem:[%s1 + $0x168] sm:$0xff]
  %v101 = vld [vmem:[%s1 + $0x170] sm:$0xff]
  %v102 = vld [vmem:[%s1 + $0x178] sm:$0xff]
  %v103 = vld [vmem:[%s1 + $0x180] sm:$0x33]
  %v104 = vld [vmem:[%s1 + $0x188] sm:$0x33]
  %v127 = vunpack.c.l.b16 %v33
  %v128 = vunpack.c.h.b16 %v33
  %v129 = vunpack.c.l.b16 %v34
  %v130 = vunpack.c.h.b16 %v34
  %v131 = vunpack.c.l.b16 %v35
  %v132 = vunpack.c.h.b16 %v35
  %v133 = vunpack.c.l.b16 %v36
  %v134 = vunpack.c.h.b16 %v36
  %v135 = vunpack.c.l.b16 %v37
  %v136 = vunpack.c.h.b16 %v37
  %v137 = vunpack.c.l.b16 %v38
  %v138 = vunpack.c.h.b16 %v38
  %v139 = vunpack.c.l.b16 %v39
  %v140 = vunpack.c.h.b16 %v39
  %v141 = vunpack.c.l.b16 %v40
  %v142 = vunpack.c.h.b16 %v40
  %v143 = vunpack.c.l.b16 %v41
  %v144 = vunpack.c.h.b16 %v41
  %v145 = vunpack.c.l.b16 %v42
  %v146 = vunpack.c.h.b16 %v42
  %v147 = vunpack.c.l.b16 %v43
  %v148 = vunpack.c.h.b16 %v43
  %v149 = vunpack.c.l.b16 %v44
  %v150 = vunpack.c.h.b16 %v44
  %v151 = vunpack.c.l.b16 %v45
  %v152 = vunpack.c.h.b16 %v45
  %v153 = vunpack.c.l.b16 %v46
  %v154 = vunpack.c.h.b16 %v46
  %v155 = vunpack.c.l.b16 %v47
  %v156 = vunpack.c.h.b16 %v47
  %v157 = vunpack.c.l.b16 %v48
  %v158 = vunpack.c.h.b16 %v48
  %v159 = vunpack.c.l.b16 %v49
  %v160 = vunpack.c.h.b16 %v49
  %v161 = vunpack.c.l.b16 %v50
  %v162 = vunpack.c.h.b16 %v50
  %v163 = vunpack.c.l.b16 %v51
  %v164 = vunpack.c.h.b16 %v51
  %v165 = vunpack.c.l.b16 %v52
  %v166 = vunpack.c.h.b16 %v52
  %v167 = vunpack.c.l.b16 %v53
  %v168 = vunpack.c.h.b16 %v53
  %v169 = vunpack.c.l.b16 %v54
  %v170 = vunpack.c.h.b16 %v54
  %v171 = vpack.c.b16 %v129, %v127
  %v172 = vpack.c.b16 %v130, %v128
  %v173 = vpack.c.b16 %v133, %v131
  %v174 = vpack.c.b16 %v134, %v132
  %v175 = vpack.c.b16 %v137, %v135
  %v176 = vpack.c.b16 %v138, %v136
  %v177 = vpack.c.b16 %v141, %v139
  %v178 = vpack.c.b16 %v142, %v140
  %v179 = vpack.c.b16 %v145, %v143
  %v180 = vpack.c.b16 %v146, %v144
  %v181 = vpack.c.b16 %v149, %v147
  %v182 = vpack.c.b16 %v150, %v148
  %v183 = vpack.c.b16 %v153, %v151
  %v184 = vpack.c.b16 %v154, %v152
  %v185 = vpack.c.b16 %v157, %v155
  %v186 = vpack.c.b16 %v158, %v156
  %v187 = vpack.c.b16 %v161, %v159
  %v188 = vpack.c.b16 %v162, %v160
  %v189 = vpack.c.b16 %v165, %v163
  %v190 = vpack.c.b16 %v166, %v164
  %v191 = vpack.c.b16 %v169, %v167
  %v192 = vpack.c.b16 %v170, %v168
  %v254 = vunpack.c.l.b16 %v55
  %v255 = vunpack.c.h.b16 %v55
  %v256 = vunpack.c.l.b16 %v56
  %v257 = vunpack.c.h.b16 %v56
  %v258 = vunpack.c.l.b16 %v57
  %v259 = vunpack.c.h.b16 %v57
  %v260 = vunpack.c.l.b16 %v58
  %v261 = vunpack.c.h.b16 %v58
  %v262 = vunpack.c.l.b16 %v59
  %v263 = vunpack.c.h.b16 %v59
  %v264 = vunpack.c.l.b16 %v60
  %v265 = vunpack.c.h.b16 %v60
  %v266 = vunpack.c.l.b16 %v61
  %v267 = vunpack.c.h.b16 %v61
  %v268 = vunpack.c.l.b16 %v62
  %v269 = vunpack.c.h.b16 %v62
  %v270 = vunpack.c.l.b16 %v63
  %v271 = vunpack.c.h.b16 %v63
  %v272 = vunpack.c.l.b16 %v64
  %v273 = vunpack.c.h.b16 %v64
  %v274 = vunpack.c.l.b16 %v65
  %v275 = vunpack.c.h.b16 %v65
  %v276 = vunpack.c.l.b16 %v66
  %v277 = vunpack.c.h.b16 %v66
  %v278 = vunpack.c.l.b16 %v67
  %v279 = vunpack.c.h.b16 %v67
  %v280 = vunpack.c.l.b16 %v68
  %v281 = vunpack.c.h.b16 %v68
  %v282 = vunpack.c.l.b16 %v69
  %v283 = vunpack.c.h.b16 %v69
  %v284 = vunpack.c.l.b16 %v70
  %v285 = vunpack.c.h.b16 %v70
  %v286 = vunpack.c.l.b16 %v71
  %v287 = vunpack.c.h.b16 %v71
  %v288 = vunpack.c.l.b16 %v72
  %v289 = vunpack.c.h.b16 %v72
  %v290 = vunpack.c.l.b16 %v73
  %v291 = vunpack.c.h.b16 %v73
  %v292 = vunpack.c.l.b16 %v74
  %v293 = vunpack.c.h.b16 %v74
  %v294 = vunpack.c.l.b16 %v75
  %v295 = vunpack.c.h.b16 %v75
  %v296 = vunpack.c.l.b16 %v76
  %v297 = vunpack.c.h.b16 %v76
  %v298 = vunpack.c.l.b16 %v77
  %v299 = vunpack.c.h.b16 %v77
  %v300 = vunpack.c.l.b16 %v78
  %v301 = vunpack.c.h.b16 %v78
  %v302 = vunpack.c.l.b16 %v79
  %v303 = vunpack.c.h.b16 %v79
  %v304 = vunpack.c.l.b16 %v80
  %v305 = vunpack.c.h.b16 %v80
  %v306 = vunpack.c.l.b16 %v81
  %v307 = vunpack.c.h.b16 %v81
  %v308 = vunpack.c.l.b16 %v82
  %v309 = vunpack.c.h.b16 %v82
  %v310 = vunpack.c.l.b16 %v83
  %v311 = vunpack.c.h.b16 %v83
  %v312 = vunpack.c.l.b16 %v84
  %v313 = vunpack.c.h.b16 %v84
  %v314 = vunpack.c.l.b16 %v85
  %v315 = vunpack.c.h.b16 %v85
  %v316 = vunpack.c.l.b16 %v86
  %v317 = vunpack.c.h.b16 %v86
  %v318 = vunpack.c.l.b16 %v87
  %v319 = vunpack.c.h.b16 %v87
  %v320 = vunpack.c.l.b16 %v88
  %v321 = vunpack.c.h.b16 %v88
  %v322 = vunpack.c.l.b16 %v89
  %v323 = vunpack.c.h.b16 %v89
  %v324 = vunpack.c.l.b16 %v90
  %v325 = vunpack.c.h.b16 %v90
  %v326 = vunpack.c.l.b16 %v91
  %v327 = vunpack.c.h.b16 %v91
  %v328 = vunpack.c.l.b16 %v92
  %v329 = vunpack.c.h.b16 %v92
  %v330 = vunpack.c.l.b16 %v93
  %v331 = vunpack.c.h.b16 %v93
  %v332 = vunpack.c.l.b16 %v94
  %v333 = vunpack.c.h.b16 %v94
  %v334 = vunpack.c.l.b16 %v95
  %v335 = vunpack.c.h.b16 %v95
  %v336 = vunpack.c.l.b16 %v96
  %v337 = vunpack.c.h.b16 %v96
  %v338 = vunpack.c.l.b16 %v97
  %v339 = vunpack.c.h.b16 %v97
  %v340 = vunpack.c.l.b16 %v98
  %v341 = vunpack.c.h.b16 %v98
  %v342 = vunpack.c.l.b16 %v99
  %v343 = vunpack.c.h.b16 %v99
  %v344 = vunpack.c.l.b16 %v100
  %v345 = vunpack.c.h.b16 %v100
  %v346 = vunpack.c.l.b16 %v101
  %v347 = vunpack.c.h.b16 %v101
  %v348 = vunpack.c.l.b16 %v102
  %v349 = vunpack.c.h.b16 %v102
  %v350 = vunpack.c.l.b16 %v103
  %v351 = vunpack.c.h.b16 %v103
  %v352 = vunpack.c.l.b16 %v104
  %v353 = vunpack.c.h.b16 %v104
  %v354 = vpack.c.b16 %v258, %v254
  %v355 = vpack.c.b16 %v259, %v255
  %v356 = vpack.c.b16 %v260, %v256
  %v357 = vpack.c.b16 %v261, %v257
  %v358 = vpack.c.b16 %v266, %v262
  %v359 = vpack.c.b16 %v267, %v263
  %v360 = vpack.c.b16 %v268, %v264
  %v361 = vpack.c.b16 %v269, %v265
  %v362 = vpack.c.b16 %v274, %v270
  %v363 = vpack.c.b16 %v275, %v271
  %v364 = vpack.c.b16 %v276, %v272
  %v365 = vpack.c.b16 %v277, %v273
  %v366 = vpack.c.b16 %v282, %v278
  %v367 = vpack.c.b16 %v283, %v279
  %v368 = vpack.c.b16 %v284, %v280
  %v369 = vpack.c.b16 %v285, %v281
  %v370 = vpack.c.b16 %v290, %v286
  %v371 = vpack.c.b16 %v291, %v287
  %v372 = vpack.c.b16 %v292, %v288
  %v373 = vpack.c.b16 %v293, %v289
  %v374 = vpack.c.b16 %v298, %v294
  %v375 = vpack.c.b16 %v299, %v295
  %v376 = vpack.c.b16 %v300, %v296
  %v377 = vpack.c.b16 %v301, %v297
  %v378 = vpack.c.b16 %v306, %v302
  %v379 = vpack.c.b16 %v307, %v303
  %v380 = vpack.c.b16 %v308, %v304
  %v381 = vpack.c.b16 %v309, %v305
  %v382 = vpack.c.b16 %v314, %v310
  %v383 = vpack.c.b16 %v315, %v311
  %v384 = vpack.c.b16 %v316, %v312
  %v385 = vpack.c.b16 %v317, %v313
  %v386 = vpack.c.b16 %v322, %v318
  %v387 = vpack.c.b16 %v323, %v319
  %v388 = vpack.c.b16 %v324, %v320
  %v389 = vpack.c.b16 %v325, %v321
  %v390 = vpack.c.b16 %v330, %v326
  %v391 = vpack.c.b16 %v331, %v327
  %v392 = vpack.c.b16 %v332, %v328
  %v393 = vpack.c.b16 %v333, %v329
  %v394 = vpack.c.b16 %v338, %v334
  %v395 = vpack.c.b16 %v339, %v335
  %v396 = vpack.c.b16 %v340, %v336
  %v397 = vpack.c.b16 %v341, %v337
  %v398 = vpack.c.b16 %v346, %v342
  %v399 = vpack.c.b16 %v347, %v343
  %v400 = vpack.c.b16 %v348, %v344
  %v401 = vpack.c.b16 %v349, %v345
  %v402 = vpack.c.b16 %v350, %v350
  %v403 = vpack.c.b16 %v351, %v351
  %v404 = vpack.c.b16 %v352, %v352
  %v405 = vpack.c.b16 %v353, %v353
  %vm454 = vcmask 556032
  %v456 = vsel %vm454, %v172, 0
  %v459 = vsel %vm454, %v174, 0
  %v462 = vsel %vm454, %v176, 0
  %v465 = vsel %vm454, %v178, 0
  %v468 = vsel %vm454, %v180, 0
  %v471 = vsel %vm454, %v182, 0
  %v474 = vsel %vm454, %v184, 0
  %v477 = vsel %vm454, %v186, 0
  %v480 = vsel %vm454, %v188, 0
  %v483 = vsel %vm454, %v190, 0
  %v486 = vsel %vm454, %v192, 0
  %vm488 = vcmask 1041408
  %v490 = vsel %vm488, %v402, 0
  %v493 = vsel %vm488, %v403, 0
  %v496 = vsel %vm488, %v404, 0
  %v499 = vsel %vm488, %v405, 0
  %501 = vmatpush.bf16.msra.mxu0 %v382
  %502 = vmatpush.bf16.msra.mxu0 %v378
  %503 = vmatpush.bf16.msra.mxu0 %v374
  %504 = vmatpush.bf16.msra.mxu0 %v370
  %505 = vmatpush.bf16.msra.mxu0 %v366
  %506 = vmatpush.bf16.msra.mxu0 %v362
  %507 = vmatpush.bf16.msra.mxu0 %v358
  %508 = vmatpush.bf16.msra.mxu0 %v354
  %509 = vmatmul.bf16.gmra.mxu0 %v171
  %v510 = vpop.f32.mrf.mxu0
  %v511 = vadd.f32 0.0, %v510
  %v512 = vpop.f32.mrf.mxu0
  %v513 = vadd.f32 0.0, %v512
  %514 = vmatmul.bf16.gmra.mxu0 %v173
  %v515 = vpop.f32.mrf.mxu0
  %v516 = vadd.f32 0.0, %v515
  %v517 = vpop.f32.mrf.mxu0
  %v518 = vadd.f32 0.0, %v517
  %519 = vmatmul.bf16.gmra.mxu0 %v175
  %v520 = vpop.f32.mrf.mxu0
  %v521 = vadd.f32 0.0, %v520
  %v522 = vpop.f32.mrf.mxu0
  %v523 = vadd.f32 0.0, %v522
  %524 = vmatmul.bf16.gmra.mxu0 %v177
  %v525 = vpop.f32.mrf.mxu0
  %v526 = vadd.f32 0.0, %v525
  %v527 = vpop.f32.mrf.mxu0
  %v528 = vadd.f32 0.0, %v527
  %529 = vmatmul.bf16.gmra.mxu0 %v179
  %v530 = vpop.f32.mrf.mxu0
  %v531 = vadd.f32 0.0, %v530
  %v532 = vpop.f32.mrf.mxu0
  %v533 = vadd.f32 0.0, %v532
  %534 = vmatmul.bf16.gmra.mxu0 %v181
  %v535 = vpop.f32.mrf.mxu0
  %v536 = vadd.f32 0.0, %v535
  %v537 = vpop.f32.mrf.mxu0
  %v538 = vadd.f32 0.0, %v537
  %539 = vmatmul.bf16.gmra.mxu0 %v183
  %v540 = vpop.f32.mrf.mxu0
  %v541 = vadd.f32 0.0, %v540
  %v542 = vpop.f32.mrf.mxu0
  %v543 = vadd.f32 0.0, %v542
  %544 = vmatmul.bf16.gmra.mxu0 %v185
  %v545 = vpop.f32.mrf.mxu0
  %v546 = vadd.f32 0.0, %v545
  %v547 = vpop.f32.mrf.mxu0
  %v548 = vadd.f32 0.0, %v547
  %549 = vmatmul.bf16.gmra.mxu0 %v187
  %v550 = vpop.f32.mrf.mxu0
  %v551 = vadd.f32 0.0, %v550
  %v552 = vpop.f32.mrf.mxu0
  %v553 = vadd.f32 0.0, %v552
  %554 = vmatmul.bf16.gmra.mxu0 %v189
  %v555 = vpop.f32.mrf.mxu0
  %v556 = vadd.f32 0.0, %v555
  %v557 = vpop.f32.mrf.mxu0
  %v558 = vadd.f32 0.0, %v557
  %559 = vmatmul.bf16.gmra.mxu0 %v191
  %v560 = vpop.f32.mrf.mxu0
  %v561 = vadd.f32 0.0, %v560
  %v562 = vpop.f32.mrf.mxu0
  %v563 = vadd.f32 0.0, %v562
  %564 = vdwg.mxu0
  %565 = vmatpush.bf16.msra.mxu0 0
  %566 = vmatpush.bf16.msra.mxu0 0
  %567 = vmatpush.bf16.msra.mxu0 0
  %568 = vmatpush.bf16.msra.mxu0 %v490
  %569 = vmatpush.bf16.msra.mxu0 %v398
  %570 = vmatpush.bf16.msra.mxu0 %v394
  %571 = vmatpush.bf16.msra.mxu0 %v390
  %572 = vmatpush.bf16.msra.mxu0 %v386
  %573 = vmatmul.bf16.gmra.mxu0 %v456
  %v574 = vpop.f32.mrf.mxu0
  %v575 = vadd.f32 %v511, %v574
  %v576 = vpop.f32.mrf.mxu0
  %v577 = vadd.f32 %v513, %v576
  %578 = vmatmul.bf16.gmra.mxu0 %v459
  %v579 = vpop.f32.mrf.mxu0
  %v580 = vadd.f32 %v516, %v579
  %v581 = vpop.f32.mrf.mxu0
  %v582 = vadd.f32 %v518, %v581
  %583 = vmatmul.bf16.gmra.mxu0 %v462
  %v584 = vpop.f32.mrf.mxu0
  %v585 = vadd.f32 %v521, %v584
  %v586 = vpop.f32.mrf.mxu0
  %v587 = vadd.f32 %v523, %v586
  %588 = vmatmul.bf16.gmra.mxu0 %v465
  %v589 = vpop.f32.mrf.mxu0
  %v590 = vadd.f32 %v526, %v589
  %v591 = vpop.f32.mrf.mxu0
  %v592 = vadd.f32 %v528, %v591
  %593 = vmatmul.bf16.gmra.mxu0 %v468
  %v594 = vpop.f32.mrf.mxu0
  %v595 = vadd.f32 %v531, %v594
  %v596 = vpop.f32.mrf.mxu0
  %v597 = vadd.f32 %v533, %v596
  %598 = vmatmul.bf16.gmra.mxu0 %v471
  %v599 = vpop.f32.mrf.mxu0
  %v600 = vadd.f32 %v536, %v599
  %v601 = vpop.f32.mrf.mxu0
  %v602 = vadd.f32 %v538, %v601
  %603 = vmatmul.bf16.gmra.mxu0 %v474
  %v604 = vpop.f32.mrf.mxu0
  %v605 = vadd.f32 %v541, %v604
  %v606 = vpop.f32.mrf.mxu0
  %v607 = vadd.f32 %v543, %v606
  %608 = vmatmul.bf16.gmra.mxu0 %v477
  %v609 = vpop.f32.mrf.mxu0
  %v610 = vadd.f32 %v546, %v609
  %v611 = vpop.f32.mrf.mxu0
  %v612 = vadd.f32 %v548, %v611
  %613 = vmatmul.bf16.gmra.mxu0 %v480
  %v614 = vpop.f32.mrf.mxu0
  %v615 = vadd.f32 %v551, %v614
  %v616 = vpop.f32.mrf.mxu0
  %v617 = vadd.f32 %v553, %v616
  %618 = vmatmul.bf16.gmra.mxu0 %v483
  %v619 = vpop.f32.mrf.mxu0
  %v620 = vadd.f32 %v556, %v619
  %v621 = vpop.f32.mrf.mxu0
  %v622 = vadd.f32 %v558, %v621
  %623 = vmatmul.bf16.gmra.mxu0 %v486
  %v624 = vpop.f32.mrf.mxu0
  %v625 = vadd.f32 %v561, %v624
  %v626 = vpop.f32.mrf.mxu0
  %v627 = vadd.f32 %v563, %v626
  %628 = vdwg.mxu0
  %629 = vmatpush.bf16.msra.mxu0 %v383
  %630 = vmatpush.bf16.msra.mxu0 %v379
  %631 = vmatpush.bf16.msra.mxu0 %v375
  %632 = vmatpush.bf16.msra.mxu0 %v371
  %633 = vmatpush.bf16.msra.mxu0 %v367
  %634 = vmatpush.bf16.msra.mxu0 %v363
  %635 = vmatpush.bf16.msra.mxu0 %v359
  %636 = vmatpush.bf16.msra.mxu0 %v355
  %637 = vmatmul.bf16.gmra.mxu0 %v171
  %v638 = vpop.f32.mrf.mxu0
  %v639 = vadd.f32 0.0, %v638
  %v640 = vpop.f32.mrf.mxu0
  %v641 = vadd.f32 0.0, %v640
  %642 = vmatmul.bf16.gmra.mxu0 %v173
  %v643 = vpop.f32.mrf.mxu0
  %v644 = vadd.f32 0.0, %v643
  %v645 = vpop.f32.mrf.mxu0
  %v646 = vadd.f32 0.0, %v645
  %647 = vmatmul.bf16.gmra.mxu0 %v175
  %v648 = vpop.f32.mrf.mxu0
  %v649 = vadd.f32 0.0, %v648
  %v650 = vpop.f32.mrf.mxu0
  %v651 = vadd.f32 0.0, %v650
  %652 = vmatmul.bf16.gmra.mxu0 %v177
  %v653 = vpop.f32.mrf.mxu0
  %v654 = vadd.f32 0.0, %v653
  %v655 = vpop.f32.mrf.mxu0
  %v656 = vadd.f32 0.0, %v655
  %657 = vmatmul.bf16.gmra.mxu0 %v179
  %v658 = vpop.f32.mrf.mxu0
  %v659 = vadd.f32 0.0, %v658
  %v660 = vpop.f32.mrf.mxu0
  %v661 = vadd.f32 0.0, %v660
  %662 = vmatmul.bf16.gmra.mxu0 %v181
  %v663 = vpop.f32.mrf.mxu0
  %v664 = vadd.f32 0.0, %v663
  %v665 = vpop.f32.mrf.mxu0
  %v666 = vadd.f32 0.0, %v665
  %667 = vmatmul.bf16.gmra.mxu0 %v183
  %v668 = vpop.f32.mrf.mxu0
  %v669 = vadd.f32 0.0, %v668
  %v670 = vpop.f32.mrf.mxu0
  %v671 = vadd.f32 0.0, %v670
  %672 = vmatmul.bf16.gmra.mxu0 %v185
  %v673 = vpop.f32.mrf.mxu0
  %v674 = vadd.f32 0.0, %v673
  %v675 = vpop.f32.mrf.mxu0
  %v676 = vadd.f32 0.0, %v675
  %677 = vmatmul.bf16.gmra.mxu0 %v187
  %v678 = vpop.f32.mrf.mxu0
  %v679 = vadd.f32 0.0, %v678
  %v680 = vpop.f32.mrf.mxu0
  %v681 = vadd.f32 0.0, %v680
  %682 = vmatmul.bf16.gmra.mxu0 %v189
  %v683 = vpop.f32.mrf.mxu0
  %v684 = vadd.f32 0.0, %v683
  %v685 = vpop.f32.mrf.mxu0
  %v686 = vadd.f32 0.0, %v685
  %687 = vmatmul.bf16.gmra.mxu0 %v191
  %v688 = vpop.f32.mrf.mxu0
  %v689 = vadd.f32 0.0, %v688
  %v690 = vpop.f32.mrf.mxu0
  %v691 = vadd.f32 0.0, %v690
  %692 = vdwg.mxu0
  %693 = vmatpush.bf16.msra.mxu0 0
  %694 = vmatpush.bf16.msra.mxu0 0
  %695 = vmatpush.bf16.msra.mxu0 0
  %696 = vmatpush.bf16.msra.mxu0 %v493
  %697 = vmatpush.bf16.msra.mxu0 %v399
  %698 = vmatpush.bf16.msra.mxu0 %v395
  %699 = vmatpush.bf16.msra.mxu0 %v391
  %700 = vmatpush.bf16.msra.mxu0 %v387
  %701 = vmatmul.bf16.gmra.mxu0 %v456
  %v702 = vpop.f32.mrf.mxu0
  %v703 = vadd.f32 %v639, %v702
  %v704 = vpop.f32.mrf.mxu0
  %v705 = vadd.f32 %v641, %v704
  %706 = vmatmul.bf16.gmra.mxu0 %v459
  %v707 = vpop.f32.mrf.mxu0
  %v708 = vadd.f32 %v644, %v707
  %v709 = vpop.f32.mrf.mxu0
  %v710 = vadd.f32 %v646, %v709
  %711 = vmatmul.bf16.gmra.mxu0 %v462
  %v712 = vpop.f32.mrf.mxu0
  %v713 = vadd.f32 %v649, %v712
  %v714 = vpop.f32.mrf.mxu0
  %v715 = vadd.f32 %v651, %v714
  %716 = vmatmul.bf16.gmra.mxu0 %v465
  %v717 = vpop.f32.mrf.mxu0
  %v718 = vadd.f32 %v654, %v717
  %v719 = vpop.f32.mrf.mxu0
  %v720 = vadd.f32 %v656, %v719
  %721 = vmatmul.bf16.gmra.mxu0 %v468
  %v722 = vpop.f32.mrf.mxu0
  %v723 = vadd.f32 %v659, %v722
  %v724 = vpop.f32.mrf.mxu0
  %v725 = vadd.f32 %v661, %v724
  %726 = vmatmul.bf16.gmra.mxu0 %v471
  %v727 = vpop.f32.mrf.mxu0
  %v728 = vadd.f32 %v664, %v727
  %v729 = vpop.f32.mrf.mxu0
  %v730 = vadd.f32 %v666, %v729
  %731 = vmatmul.bf16.gmra.mxu0 %v474
  %v732 = vpop.f32.mrf.mxu0
  %v733 = vadd.f32 %v669, %v732
  %v734 = vpop.f32.mrf.mxu0
  %v735 = vadd.f32 %v671, %v734
  %736 = vmatmul.bf16.gmra.mxu0 %v477
  %v737 = vpop.f32.mrf.mxu0
  %v738 = vadd.f32 %v674, %v737
  %v739 = vpop.f32.mrf.mxu0
  %v740 = vadd.f32 %v676, %v739
  %741 = vmatmul.bf16.gmra.mxu0 %v480
  %v742 = vpop.f32.mrf.mxu0
  %v743 = vadd.f32 %v679, %v742
  %v744 = vpop.f32.mrf.mxu0
  %v745 = vadd.f32 %v681, %v744
  %746 = vmatmul.bf16.gmra.mxu0 %v483
  %v747 = vpop.f32.mrf.mxu0
  %v748 = vadd.f32 %v684, %v747
  %v749 = vpop.f32.mrf.mxu0
  %v750 = vadd.f32 %v686, %v749
  %751 = vmatmul.bf16.gmra.mxu0 %v486
  %v752 = vpop.f32.mrf.mxu0
  %v753 = vadd.f32 %v689, %v752
  %v754 = vpop.f32.mrf.mxu0
  %v755 = vadd.f32 %v691, %v754
  %756 = vdwg.mxu0
  %757 = vmatpush.bf16.msra.mxu0 %v384
  %758 = vmatpush.bf16.msra.mxu0 %v380
  %759 = vmatpush.bf16.msra.mxu0 %v376
  %760 = vmatpush.bf16.msra.mxu0 %v372
  %761 = vmatpush.bf16.msra.mxu0 %v368
  %762 = vmatpush.bf16.msra.mxu0 %v364
  %763 = vmatpush.bf16.msra.mxu0 %v360
  %764 = vmatpush.bf16.msra.mxu0 %v356
  %765 = vmatmul.bf16.gmra.mxu0 %v171
  %v766 = vpop.f32.mrf.mxu0
  %v767 = vadd.f32 0.0, %v766
  %v768 = vpop.f32.mrf.mxu0
  %v769 = vadd.f32 0.0, %v768
  %770 = vmatmul.bf16.gmra.mxu0 %v173
  %v771 = vpop.f32.mrf.mxu0
  %v772 = vadd.f32 0.0, %v771
  %v773 = vpop.f32.mrf.mxu0
  %v774 = vadd.f32 0.0, %v773
  %775 = vmatmul.bf16.gmra.mxu0 %v175
  %v776 = vpop.f32.mrf.mxu0
  %v777 = vadd.f32 0.0, %v776
  %v778 = vpop.f32.mrf.mxu0
  %v779 = vadd.f32 0.0, %v778
  %780 = vmatmul.bf16.gmra.mxu0 %v177
  %v781 = vpop.f32.mrf.mxu0
  %v782 = vadd.f32 0.0, %v781
  %v783 = vpop.f32.mrf.mxu0
  %v784 = vadd.f32 0.0, %v783
  %785 = vmatmul.bf16.gmra.mxu0 %v179
  %v786 = vpop.f32.mrf.mxu0
  %v787 = vadd.f32 0.0, %v786
  %v788 = vpop.f32.mrf.mxu0
  %v789 = vadd.f32 0.0, %v788
  %790 = vmatmul.bf16.gmra.mxu0 %v181
  %v791 = vpop.f32.mrf.mxu0
  %v792 = vadd.f32 0.0, %v791
  %v793 = vpop.f32.mrf.mxu0
  %v794 = vadd.f32 0.0, %v793
  %795 = vmatmul.bf16.gmra.mxu0 %v183
  %v796 = vpop.f32.mrf.mxu0
  %v797 = vadd.f32 0.0, %v796
  %v798 = vpop.f32.mrf.mxu0
  %v799 = vadd.f32 0.0, %v798
  %800 = vmatmul.bf16.gmra.mxu0 %v185
  %v801 = vpop.f32.mrf.mxu0
  %v802 = vadd.f32 0.0, %v801
  %v803 = vpop.f32.mrf.mxu0
  %v804 = vadd.f32 0.0, %v803
  %805 = vmatmul.bf16.gmra.mxu0 %v187
  %v806 = vpop.f32.mrf.mxu0
  %v807 = vadd.f32 0.0, %v806
  %v808 = vpop.f32.mrf.mxu0
  %v809 = vadd.f32 0.0, %v808
  %810 = vmatmul.bf16.gmra.mxu0 %v189
  %v811 = vpop.f32.mrf.mxu0
  %v812 = vadd.f32 0.0, %v811
  %v813 = vpop.f32.mrf.mxu0
  %v814 = vadd.f32 0.0, %v813
  %815 = vmatmul.bf16.gmra.mxu0 %v191
  %v816 = vpop.f32.mrf.mxu0
  %v817 = vadd.f32 0.0, %v816
  %v818 = vpop.f32.mrf.mxu0
  %v819 = vadd.f32 0.0, %v818
  %820 = vdwg.mxu0
  %821 = vmatpush.bf16.msra.mxu0 0
  %822 = vmatpush.bf16.msra.mxu0 0
  %823 = vmatpush.bf16.msra.mxu0 0
  %824 = vmatpush.bf16.msra.mxu0 %v496
  %825 = vmatpush.bf16.msra.mxu0 %v400
  %826 = vmatpush.bf16.msra.mxu0 %v396
  %827 = vmatpush.bf16.msra.mxu0 %v392
  %828 = vmatpush.bf16.msra.mxu0 %v388
  %829 = vmatmul.bf16.gmra.mxu0 %v456
  %v830 = vpop.f32.mrf.mxu0
  %v831 = vadd.f32 %v767, %v830
  %v832 = vpop.f32.mrf.mxu0
  %v833 = vadd.f32 %v769, %v832
  %834 = vmatmul.bf16.gmra.mxu0 %v459
  %v835 = vpop.f32.mrf.mxu0
  %v836 = vadd.f32 %v772, %v835
  %v837 = vpop.f32.mrf.mxu0
  %v838 = vadd.f32 %v774, %v837
  %839 = vmatmul.bf16.gmra.mxu0 %v462
  %v840 = vpop.f32.mrf.mxu0
  %v841 = vadd.f32 %v777, %v840
  %v842 = vpop.f32.mrf.mxu0
  %v843 = vadd.f32 %v779, %v842
  %844 = vmatmul.bf16.gmra.mxu0 %v465
  %v845 = vpop.f32.mrf.mxu0
  %v846 = vadd.f32 %v782, %v845
  %v847 = vpop.f32.mrf.mxu0
  %v848 = vadd.f32 %v784, %v847
  %849 = vmatmul.bf16.gmra.mxu0 %v468
  %v850 = vpop.f32.mrf.mxu0
  %v851 = vadd.f32 %v787, %v850
  %v852 = vpop.f32.mrf.mxu0
  %v853 = vadd.f32 %v789, %v852
  %854 = vmatmul.bf16.gmra.mxu0 %v471
  %v855 = vpop.f32.mrf.mxu0
  %v856 = vadd.f32 %v792, %v855
  %v857 = vpop.f32.mrf.mxu0
  %v858 = vadd.f32 %v794, %v857
  %859 = vmatmul.bf16.gmra.mxu0 %v474
  %v860 = vpop.f32.mrf.mxu0
  %v861 = vadd.f32 %v797, %v860
  %v862 = vpop.f32.mrf.mxu0
  %v863 = vadd.f32 %v799, %v862
  %864 = vmatmul.bf16.gmra.mxu0 %v477
  %v865 = vpop.f32.mrf.mxu0
  %v866 = vadd.f32 %v802, %v865
  %v867 = vpop.f32.mrf.mxu0
  %v868 = vadd.f32 %v804, %v867
  %869 = vmatmul.bf16.gmra.mxu0 %v480
  %v870 = vpop.f32.mrf.mxu0
  %v871 = vadd.f32 %v807, %v870
  %v872 = vpop.f32.mrf.mxu0
  %v873 = vadd.f32 %v809, %v872
  %874 = vmatmul.bf16.gmra.mxu0 %v483
  %v875 = vpop.f32.mrf.mxu0
  %v876 = vadd.f32 %v812, %v875
  %v877 = vpop.f32.mrf.mxu0
  %v878 = vadd.f32 %v814, %v877
  %879 = vmatmul.bf16.gmra.mxu0 %v486
  %v880 = vpop.f32.mrf.mxu0
  %v881 = vadd.f32 %v817, %v880
  %v882 = vpop.f32.mrf.mxu0
  %v883 = vadd.f32 %v819, %v882
  %884 = vdwg.mxu0
  %885 = vmatpush.bf16.msra.mxu0 %v385
  %886 = vmatpush.bf16.msra.mxu0 %v381
  %887 = vmatpush.bf16.msra.mxu0 %v377
  %888 = vmatpush.bf16.msra.mxu0 %v373
  %889 = vmatpush.bf16.msra.mxu0 %v369
  %890 = vmatpush.bf16.msra.mxu0 %v365
  %891 = vmatpush.bf16.msra.mxu0 %v361
  %892 = vmatpush.bf16.msra.mxu0 %v357
  %893 = vmatmul.bf16.gmra.mxu0 %v171
  %v894 = vpop.f32.mrf.mxu0
  %v895 = vadd.f32 0.0, %v894
  %v896 = vpop.f32.mrf.mxu0
  %v897 = vadd.f32 0.0, %v896
  %898 = vmatmul.bf16.gmra.mxu0 %v173
  %v899 = vpop.f32.mrf.mxu0
  %v900 = vadd.f32 0.0, %v899
  %v901 = vpop.f32.mrf.mxu0
  %v902 = vadd.f32 0.0, %v901
  %903 = vmatmul.bf16.gmra.mxu0 %v175
  %v904 = vpop.f32.mrf.mxu0
  %v905 = vadd.f32 0.0, %v904
  %v906 = vpop.f32.mrf.mxu0
  %v907 = vadd.f32 0.0, %v906
  %908 = vmatmul.bf16.gmra.mxu0 %v177
  %v909 = vpop.f32.mrf.mxu0
  %v910 = vadd.f32 0.0, %v909
  %v911 = vpop.f32.mrf.mxu0
  %v912 = vadd.f32 0.0, %v911
  %913 = vmatmul.bf16.gmra.mxu0 %v179
  %v914 = vpop.f32.mrf.mxu0
  %v915 = vadd.f32 0.0, %v914
  %v916 = vpop.f32.mrf.mxu0
  %v917 = vadd.f32 0.0, %v916
  %918 = vmatmul.bf16.gmra.mxu0 %v181
  %v919 = vpop.f32.mrf.mxu0
  %v920 = vadd.f32 0.0, %v919
  %v921 = vpop.f32.mrf.mxu0
  %v922 = vadd.f32 0.0, %v921
  %923 = vmatmul.bf16.gmra.mxu0 %v183
  %v924 = vpop.f32.mrf.mxu0
  %v925 = vadd.f32 0.0, %v924
  %v926 = vpop.f32.mrf.mxu0
  %v927 = vadd.f32 0.0, %v926
  %928 = vmatmul.bf16.gmra.mxu0 %v185
  %v929 = vpop.f32.mrf.mxu0
  %v930 = vadd.f32 0.0, %v929
  %v931 = vpop.f32.mrf.mxu0
  %v932 = vadd.f32 0.0, %v931
  %933 = vmatmul.bf16.gmra.mxu0 %v187
  %v934 = vpop.f32.mrf.mxu0
  %v935 = vadd.f32 0.0, %v934
  %v936 = vpop.f32.mrf.mxu0
  %v937 = vadd.f32 0.0, %v936
  %938 = vmatmul.bf16.gmra.mxu0 %v189
  %v939 = vpop.f32.mrf.mxu0
  %v940 = vadd.f32 0.0, %v939
  %v941 = vpop.f32.mrf.mxu0
  %v942 = vadd.f32 0.0, %v941
  %943 = vmatmul.bf16.gmra.mxu0 %v191
  %v944 = vpop.f32.mrf.mxu0
  %v945 = vadd.f32 0.0, %v944
  %v946 = vpop.f32.mrf.mxu0
  %v947 = vadd.f32 0.0, %v946
  %948 = vdwg.mxu0
  %949 = vmatpush.bf16.msra.mxu0 0
  %950 = vmatpush.bf16.msra.mxu0 0
  %951 = vmatpush.bf16.msra.mxu0 0
  %952 = vmatpush.bf16.msra.mxu0 %v499
  %953 = vmatpush.bf16.msra.mxu0 %v401
  %954 = vmatpush.bf16.msra.mxu0 %v397
  %955 = vmatpush.bf16.msra.mxu0 %v393
  %956 = vmatpush.bf16.msra.mxu0 %v389
  %957 = vmatmul.bf16.gmra.mxu0 %v456
  %v958 = vpop.f32.mrf.mxu0
  %v959 = vadd.f32 %v895, %v958
  %v960 = vpop.f32.mrf.mxu0
  %v961 = vadd.f32 %v897, %v960
  %962 = vmatmul.bf16.gmra.mxu0 %v459
  %v963 = vpop.f32.mrf.mxu0
  %v964 = vadd.f32 %v900, %v963
  %v965 = vpop.f32.mrf.mxu0
  %v966 = vadd.f32 %v902, %v965
  %967 = vmatmul.bf16.gmra.mxu0 %v462
  %v968 = vpop.f32.mrf.mxu0
  %v969 = vadd.f32 %v905, %v968
  %v970 = vpop.f32.mrf.mxu0
  %v971 = vadd.f32 %v907, %v970
  %972 = vmatmul.bf16.gmra.mxu0 %v465
  %v973 = vpop.f32.mrf.mxu0
  %v974 = vadd.f32 %v910, %v973
  %v975 = vpop.f32.mrf.mxu0
  %v976 = vadd.f32 %v912, %v975
  %977 = vmatmul.bf16.gmra.mxu0 %v468
  %v978 = vpop.f32.mrf.mxu0
  %v979 = vadd.f32 %v915, %v978
  %v980 = vpop.f32.mrf.mxu0
  %v981 = vadd.f32 %v917, %v980
  %982 = vmatmul.bf16.gmra.mxu0 %v471
  %v983 = vpop.f32.mrf.mxu0
  %v984 = vadd.f32 %v920, %v983
  %v985 = vpop.f32.mrf.mxu0
  %v986 = vadd.f32 %v922, %v985
  %987 = vmatmul.bf16.gmra.mxu0 %v474
  %v988 = vpop.f32.mrf.mxu0
  %v989 = vadd.f32 %v925, %v988
  %v990 = vpop.f32.mrf.mxu0
  %v991 = vadd.f32 %v927, %v990
  %992 = vmatmul.bf16.gmra.mxu0 %v477
  %v993 = vpop.f32.mrf.mxu0
  %v994 = vadd.f32 %v930, %v993
  %v995 = vpop.f32.mrf.mxu0
  %v996 = vadd.f32 %v932, %v995
  %997 = vmatmul.bf16.gmra.mxu0 %v480
  %v998 = vpop.f32.mrf.mxu0
  %v999 = vadd.f32 %v935, %v998
  %v1000 = vpop.f32.mrf.mxu0
  %v1001 = vadd.f32 %v937, %v1000
  %1002 = vmatmul.bf16.gmra.mxu0 %v483
  %v1003 = vpop.f32.mrf.mxu0
  %v1004 = vadd.f32 %v940, %v1003
  %v1005 = vpop.f32.mrf.mxu0
  %v1006 = vadd.f32 %v942, %v1005
  %1007 = vmatmul.bf16.gmra.mxu0 %v486
  %v1008 = vpop.f32.mrf.mxu0
  %v1009 = vadd.f32 %v945, %v1008
  %v1010 = vpop.f32.mrf.mxu0
  %v1011 = vadd.f32 %v947, %v1010
  %1012 = vdwg.mxu0
  %v1013 = vmax.f32 %v575, %v831
  %v1014 = vmax.f32 %v703, %v959
  %v1015 = vmax.f32 %v577, %v833
  %v1016 = vmax.f32 %v705, %v961
  %v1017 = vmax.f32 %v580, %v836
  %v1018 = vmax.f32 %v708, %v964
  %v1019 = vmax.f32 %v582, %v838
  %v1020 = vmax.f32 %v710, %v966
  %v1021 = vmax.f32 %v585, %v841
  %v1022 = vmax.f32 %v713, %v969
  %v1023 = vmax.f32 %v587, %v843
  %v1024 = vmax.f32 %v715, %v971
  %v1025 = vmax.f32 %v590, %v846
  %v1026 = vmax.f32 %v718, %v974
  %v1027 = vmax.f32 %v592, %v848
  %v1028 = vmax.f32 %v720, %v976
  %v1029 = vmax.f32 %v595, %v851
  %v1030 = vmax.f32 %v723, %v979
  %v1031 = vmax.f32 %v597, %v853
  %v1032 = vmax.f32 %v725, %v981
  %v1033 = vmax.f32 %v600, %v856
  %v1034 = vmax.f32 %v728, %v984
  %v1035 = vmax.f32 %v602, %v858
  %v1036 = vmax.f32 %v730, %v986
  %v1037 = vmax.f32 %v605, %v861
  %v1038 = vmax.f32 %v733, %v989
  %v1039 = vmax.f32 %v607, %v863
  %v1040 = vmax.f32 %v735, %v991
  %v1041 = vmax.f32 %v610, %v866
  %v1042 = vmax.f32 %v738, %v994
  %v1043 = vmax.f32 %v612, %v868
  %v1044 = vmax.f32 %v740, %v996
  %v1045 = vmax.f32 %v615, %v871
  %v1046 = vmax.f32 %v743, %v999
  %v1047 = vmax.f32 %v617, %v873
  %v1048 = vmax.f32 %v745, %v1001
  %v1049 = vmax.f32 %v620, %v876
  %v1050 = vmax.f32 %v748, %v1004
  %v1051 = vmax.f32 %v622, %v878
  %v1052 = vmax.f32 %v750, %v1006
  %v1053 = vmax.f32 %v625, %v881
  %v1054 = vmax.f32 %v753, %v1009
  %v1055 = vmax.f32 %v627, %v883
  %v1056 = vmax.f32 %v755, %v1011
  %v1101 = vrot.slane %v1014, 6
  %v1102 = vrot.slane %v1016, 6
  %v1103 = vrot.slane %v1018, 6
  %v1104 = vrot.slane %v1020, 6
  %v1105 = vrot.slane %v1022, 6
  %v1106 = vrot.slane %v1024, 6
  %v1107 = vrot.slane %v1026, 6
  %v1108 = vrot.slane %v1028, 6
  %v1109 = vrot.slane %v1030, 6
  %v1110 = vrot.slane %v1032, 6
  %v1111 = vrot.slane %v1034, 6
  %v1112 = vrot.slane %v1036, 6
  %v1113 = vrot.slane %v1038, 6
  %v1114 = vrot.slane %v1040, 6
  %v1115 = vrot.slane %v1042, 6
  %v1116 = vrot.slane %v1044, 6
  %v1117 = vrot.slane %v1046, 6
  %v1118 = vrot.slane %v1048, 6
  %v1119 = vrot.slane %v1050, 6
  %v1120 = vrot.slane %v1052, 6
  %v1121 = vrot.slane %v1054, 6
  %v1122 = vrot.slane %v1056, 6
  %v1123 = vsel %vm488, %v1013, %v1101
  %vm1124 = vcmask 1043458
  %v1125 = vsel %vm1124, %v1013, %v1101
  %v1126 = vrot.slane %v1125, 2
  %vm1127 = vcmask 1045508
  %v1128 = vsel %vm1127, %v1013, %v1101
  %v1129 = vrot.slane %v1128, 4
  %vm1130 = vcmask 1045504
  %v1131 = vsel %vm1130, %v1101, %v1013
  %v1132 = vrot.slane %v1131, 6
  %v1133 = vsel %vm488, %v1015, %v1102
  %v1134 = vsel %vm1124, %v1015, %v1102
  %v1135 = vrot.slane %v1134, 2
  %v1136 = vsel %vm1127, %v1015, %v1102
  %v1137 = vrot.slane %v1136, 4
  %v1138 = vsel %vm1130, %v1102, %v1015
  %v1139 = vrot.slane %v1138, 6
  %v1140 = vsel %vm488, %v1017, %v1103
  %v1141 = vsel %vm1124, %v1017, %v1103
  %v1142 = vrot.slane %v1141, 2
  %v1143 = vsel %vm1127, %v1017, %v1103
  %v1144 = vrot.slane %v1143, 4
  %v1145 = vsel %vm1130, %v1103, %v1017
  %v1146 = vrot.slane %v1145, 6
  %v1147 = vsel %vm488, %v1019, %v1104
  %v1148 = vsel %vm1124, %v1019, %v1104
  %v1149 = vrot.slane %v1148, 2
  %v1150 = vsel %vm1127, %v1019, %v1104
  %v1151 = vrot.slane %v1150, 4
  %v1152 = vsel %vm1130, %v1104, %v1019
  %v1153 = vrot.slane %v1152, 6
  %v1154 = vsel %vm488, %v1021, %v1105
  %v1155 = vsel %vm1124, %v1021, %v1105
  %v1156 = vrot.slane %v1155, 2
  %v1157 = vsel %vm1127, %v1021, %v1105
  %v1158 = vrot.slane %v1157, 4
  %v1159 = vsel %vm1130, %v1105, %v1021
  %v1160 = vrot.slane %v1159, 6
  %v1161 = vsel %vm488, %v1023, %v1106
  %v1162 = vsel %vm1124, %v1023, %v1106
  %v1163 = vrot.slane %v1162, 2
  %v1164 = vsel %vm1127, %v1023, %v1106
  %v1165 = vrot.slane %v1164, 4
  %v1166 = vsel %vm1130, %v1106, %v1023
  %v1167 = vrot.slane %v1166, 6
  %v1168 = vsel %vm488, %v1025, %v1107
  %v1169 = vsel %vm1124, %v1025, %v1107
  %v1170 = vrot.slane %v1169, 2
  %v1171 = vsel %vm1127, %v1025, %v1107
  %v1172 = vrot.slane %v1171, 4
  %v1173 = vsel %vm1130, %v1107, %v1025
  %v1174 = vrot.slane %v1173, 6
  %v1175 = vsel %vm488, %v1027, %v1108
  %v1176 = vsel %vm1124, %v1027, %v1108
  %v1177 = vrot.slane %v1176, 2
  %v1178 = vsel %vm1127, %v1027, %v1108
  %v1179 = vrot.slane %v1178, 4
  %v1180 = vsel %vm1130, %v1108, %v1027
  %v1181 = vrot.slane %v1180, 6
  %v1182 = vsel %vm488, %v1029, %v1109
  %v1183 = vsel %vm1124, %v1029, %v1109
  %v1184 = vrot.slane %v1183, 2
  %v1185 = vsel %vm1127, %v1029, %v1109
  %v1186 = vrot.slane %v1185, 4
  %v1187 = vsel %vm1130, %v1109, %v1029
  %v1188 = vrot.slane %v1187, 6
  %v1189 = vsel %vm488, %v1031, %v1110
  %v1190 = vsel %vm1124, %v1031, %v1110
  %v1191 = vrot.slane %v1190, 2
  %v1192 = vsel %vm1127, %v1031, %v1110
  %v1193 = vrot.slane %v1192, 4
  %v1194 = vsel %vm1130, %v1110, %v1031
  %v1195 = vrot.slane %v1194, 6
  %v1196 = vsel %vm488, %v1033, %v1111
  %v1197 = vsel %vm1124, %v1033, %v1111
  %v1198 = vrot.slane %v1197, 2
  %v1199 = vsel %vm1127, %v1033, %v1111
  %v1200 = vrot.slane %v1199, 4
  %v1201 = vsel %vm1130, %v1111, %v1033
  %v1202 = vrot.slane %v1201, 6
  %v1203 = vsel %vm488, %v1035, %v1112
  %v1204 = vsel %vm1124, %v1035, %v1112
  %v1205 = vrot.slane %v1204, 2
  %v1206 = vsel %vm1127, %v1035, %v1112
  %v1207 = vrot.slane %v1206, 4
  %v1208 = vsel %vm1130, %v1112, %v1035
  %v1209 = vrot.slane %v1208, 6
  %v1210 = vsel %vm488, %v1037, %v1113
  %v1211 = vsel %vm1124, %v1037, %v1113
  %v1212 = vrot.slane %v1211, 2
  %v1213 = vsel %vm1127, %v1037, %v1113
  %v1214 = vrot.slane %v1213, 4
  %v1215 = vsel %vm1130, %v1113, %v1037
  %v1216 = vrot.slane %v1215, 6
  %v1217 = vsel %vm488, %v1039, %v1114
  %v1218 = vsel %vm1124, %v1039, %v1114
  %v1219 = vrot.slane %v1218, 2
  %v1220 = vsel %vm1127, %v1039, %v1114
  %v1221 = vrot.slane %v1220, 4
  %v1222 = vsel %vm1130, %v1114, %v1039
  %v1223 = vrot.slane %v1222, 6
  %v1224 = vsel %vm488, %v1041, %v1115
  %v1225 = vsel %vm1124, %v1041, %v1115
  %v1226 = vrot.slane %v1225, 2
  %v1227 = vsel %vm1127, %v1041, %v1115
  %v1228 = vrot.slane %v1227, 4
  %v1229 = vsel %vm1130, %v1115, %v1041
  %v1230 = vrot.slane %v1229, 6
  %v1231 = vsel %vm488, %v1043, %v1116
  %v1232 = vsel %vm1124, %v1043, %v1116
  %v1233 = vrot.slane %v1232, 2
  %v1234 = vsel %vm1127, %v1043, %v1116
  %v1235 = vrot.slane %v1234, 4
  %v1236 = vsel %vm1130, %v1116, %v1043
  %v1237 = vrot.slane %v1236, 6
  %v1238 = vsel %vm488, %v1045, %v1117
  %v1239 = vsel %vm1124, %v1045, %v1117
  %v1240 = vrot.slane %v1239, 2
  %v1241 = vsel %vm1127, %v1045, %v1117
  %v1242 = vrot.slane %v1241, 4
  %v1243 = vsel %vm1130, %v1117, %v1045
  %v1244 = vrot.slane %v1243, 6
  %v1245 = vsel %vm488, %v1047, %v1118
  %v1246 = vsel %vm1124, %v1047, %v1118
  %v1247 = vrot.slane %v1246, 2
  %v1248 = vsel %vm1127, %v1047, %v1118
  %v1249 = vrot.slane %v1248, 4
  %v1250 = vsel %vm1130, %v1118, %v1047
  %v1251 = vrot.slane %v1250, 6
  %v1252 = vsel %vm488, %v1049, %v1119
  %v1253 = vsel %vm1124, %v1049, %v1119
  %v1254 = vrot.slane %v1253, 2
  %v1255 = vsel %vm1127, %v1049, %v1119
  %v1256 = vrot.slane %v1255, 4
  %v1257 = vsel %vm1130, %v1119, %v1049
  %v1258 = vrot.slane %v1257, 6
  %v1259 = vsel %vm488, %v1051, %v1120
  %v1260 = vsel %vm1124, %v1051, %v1120
  %v1261 = vrot.slane %v1260, 2
  %v1262 = vsel %vm1127, %v1051, %v1120
  %v1263 = vrot.slane %v1262, 4
  %v1264 = vsel %vm1130, %v1120, %v1051
  %v1265 = vrot.slane %v1264, 6
  %v1266 = vsel %vm488, %v1053, %v1121
  %v1267 = vsel %vm1124, %v1053, %v1121
  %v1268 = vrot.slane %v1267, 2
  %v1269 = vsel %vm1127, %v1053, %v1121
  %v1270 = vrot.slane %v1269, 4
  %v1271 = vsel %vm1130, %v1121, %v1053
  %v1272 = vrot.slane %v1271, 6
  %v1273 = vsel %vm488, %v1055, %v1122
  %v1274 = vsel %vm1124, %v1055, %v1122
  %v1275 = vrot.slane %v1274, 2
  %v1276 = vsel %vm1127, %v1055, %v1122
  %v1277 = vrot.slane %v1276, 4
  %v1278 = vsel %vm1130, %v1122, %v1055
  %v1279 = vrot.slane %v1278, 6
  %v1368 = vrot.slane %v1123, 7
  %v1369 = vrot.slane %v1368, 2
  %v1370 = vrot.slane %v1126, 7
  %v1371 = vrot.slane %v1370, 2
  %v1372 = vrot.slane %v1129, 7
  %v1373 = vrot.slane %v1372, 2
  %v1374 = vrot.slane %v1132, 7
  %v1375 = vrot.slane %v1374, 2
  %v1376 = vrot.slane %v1133, 7
  %v1377 = vrot.slane %v1376, 2
  %v1378 = vrot.slane %v1135, 7
  %v1379 = vrot.slane %v1378, 2
  %v1380 = vrot.slane %v1137, 7
  %v1381 = vrot.slane %v1380, 2
  %v1382 = vrot.slane %v1139, 7
  %v1383 = vrot.slane %v1382, 2
  %v1384 = vrot.slane %v1140, 7
  %v1385 = vrot.slane %v1384, 2
  %v1386 = vrot.slane %v1142, 7
  %v1387 = vrot.slane %v1386, 2
  %v1388 = vrot.slane %v1144, 7
  %v1389 = vrot.slane %v1388, 2
  %v1390 = vrot.slane %v1146, 7
  %v1391 = vrot.slane %v1390, 2
  %v1392 = vrot.slane %v1147, 7
  %v1393 = vrot.slane %v1392, 2
  %v1394 = vrot.slane %v1149, 7
  %v1395 = vrot.slane %v1394, 2
  %v1396 = vrot.slane %v1151, 7
  %v1397 = vrot.slane %v1396, 2
  %v1398 = vrot.slane %v1153, 7
  %v1399 = vrot.slane %v1398, 2
  %v1400 = vrot.slane %v1154, 7
  %v1401 = vrot.slane %v1400, 2
  %v1402 = vrot.slane %v1156, 7
  %v1403 = vrot.slane %v1402, 2
  %v1404 = vrot.slane %v1158, 7
  %v1405 = vrot.slane %v1404, 2
  %v1406 = vrot.slane %v1160, 7
  %v1407 = vrot.slane %v1406, 2
  %v1408 = vrot.slane %v1161, 7
  %v1409 = vrot.slane %v1408, 2
  %v1410 = vrot.slane %v1163, 7
  %v1411 = vrot.slane %v1410, 2
  %v1412 = vrot.slane %v1165, 7
  %v1413 = vrot.slane %v1412, 2
  %v1414 = vrot.slane %v1167, 7
  %v1415 = vrot.slane %v1414, 2
  %v1416 = vrot.slane %v1168, 7
  %v1417 = vrot.slane %v1416, 2
  %v1418 = vrot.slane %v1170, 7
  %v1419 = vrot.slane %v1418, 2
  %v1420 = vrot.slane %v1172, 7
  %v1421 = vrot.slane %v1420, 2
  %v1422 = vrot.slane %v1174, 7
  %v1423 = vrot.slane %v1422, 2
  %v1424 = vrot.slane %v1175, 7
  %v1425 = vrot.slane %v1424, 2
  %v1426 = vrot.slane %v1177, 7
  %v1427 = vrot.slane %v1426, 2
  %v1428 = vrot.slane %v1179, 7
  %v1429 = vrot.slane %v1428, 2
  %v1430 = vrot.slane %v1181, 7
  %v1431 = vrot.slane %v1430, 2
  %v1432 = vrot.slane %v1182, 7
  %v1433 = vrot.slane %v1432, 2
  %v1434 = vrot.slane %v1184, 7
  %v1435 = vrot.slane %v1434, 2
  %v1436 = vrot.slane %v1186, 7
  %v1437 = vrot.slane %v1436, 2
  %v1438 = vrot.slane %v1188, 7
  %v1439 = vrot.slane %v1438, 2
  %v1440 = vrot.slane %v1189, 7
  %v1441 = vrot.slane %v1440, 2
  %v1442 = vrot.slane %v1191, 7
  %v1443 = vrot.slane %v1442, 2
  %v1444 = vrot.slane %v1193, 7
  %v1445 = vrot.slane %v1444, 2
  %v1446 = vrot.slane %v1195, 7
  %v1447 = vrot.slane %v1446, 2
  %v1448 = vrot.slane %v1196, 7
  %v1449 = vrot.slane %v1448, 2
  %v1450 = vrot.slane %v1198, 7
  %v1451 = vrot.slane %v1450, 2
  %v1452 = vrot.slane %v1200, 7
  %v1453 = vrot.slane %v1452, 2
  %v1454 = vrot.slane %v1202, 7
  %v1455 = vrot.slane %v1454, 2
  %v1456 = vrot.slane %v1203, 7
  %v1457 = vrot.slane %v1456, 2
  %v1458 = vrot.slane %v1205, 7
  %v1459 = vrot.slane %v1458, 2
  %v1460 = vrot.slane %v1207, 7
  %v1461 = vrot.slane %v1460, 2
  %v1462 = vrot.slane %v1209, 7
  %v1463 = vrot.slane %v1462, 2
  %v1464 = vrot.slane %v1210, 7
  %v1465 = vrot.slane %v1464, 2
  %v1466 = vrot.slane %v1212, 7
  %v1467 = vrot.slane %v1466, 2
  %v1468 = vrot.slane %v1214, 7
  %v1469 = vrot.slane %v1468, 2
  %v1470 = vrot.slane %v1216, 7
  %v1471 = vrot.slane %v1470, 2
  %v1472 = vrot.slane %v1217, 7
  %v1473 = vrot.slane %v1472, 2
  %v1474 = vrot.slane %v1219, 7
  %v1475 = vrot.slane %v1474, 2
  %v1476 = vrot.slane %v1221, 7
  %v1477 = vrot.slane %v1476, 2
  %v1478 = vrot.slane %v1223, 7
  %v1479 = vrot.slane %v1478, 2
  %v1480 = vrot.slane %v1224, 7
  %v1481 = vrot.slane %v1480, 2
  %v1482 = vrot.slane %v1226, 7
  %v1483 = vrot.slane %v1482, 2
  %v1484 = vrot.slane %v1228, 7
  %v1485 = vrot.slane %v1484, 2
  %v1486 = vrot.slane %v1230, 7
  %v1487 = vrot.slane %v1486, 2
  %v1488 = vrot.slane %v1231, 7
  %v1489 = vrot.slane %v1488, 2
  %v1490 = vrot.slane %v1233, 7
  %v1491 = vrot.slane %v1490, 2
  %v1492 = vrot.slane %v1235, 7
  %v1493 = vrot.slane %v1492, 2
  %v1494 = vrot.slane %v1237, 7
  %v1495 = vrot.slane %v1494, 2
  %v1496 = vrot.slane %v1238, 7
  %v1497 = vrot.slane %v1496, 2
  %v1498 = vrot.slane %v1240, 7
  %v1499 = vrot.slane %v1498, 2
  %v1500 = vrot.slane %v1242, 7
  %v1501 = vrot.slane %v1500, 2
  %v1502 = vrot.slane %v1244, 7
  %v1503 = vrot.slane %v1502, 2
  %v1504 = vrot.slane %v1245, 7
  %v1505 = vrot.slane %v1504, 2
  %v1506 = vrot.slane %v1247, 7
  %v1507 = vrot.slane %v1506, 2
  %v1508 = vrot.slane %v1249, 7
  %v1509 = vrot.slane %v1508, 2
  %v1510 = vrot.slane %v1251, 7
  %v1511 = vrot.slane %v1510, 2
  %v1512 = vrot.slane %v1252, 7
  %v1513 = vrot.slane %v1512, 2
  %v1514 = vrot.slane %v1254, 7
  %v1515 = vrot.slane %v1514, 2
  %v1516 = vrot.slane %v1256, 7
  %v1517 = vrot.slane %v1516, 2
  %v1518 = vrot.slane %v1258, 7
  %v1519 = vrot.slane %v1518, 2
  %v1520 = vrot.slane %v1259, 7
  %v1521 = vrot.slane %v1520, 2
  %v1522 = vrot.slane %v1261, 7
  %v1523 = vrot.slane %v1522, 2
  %v1524 = vrot.slane %v1263, 7
  %v1525 = vrot.slane %v1524, 2
  %v1526 = vrot.slane %v1265, 7
  %v1527 = vrot.slane %v1526, 2
  %v1528 = vrot.slane %v1266, 7
  %v1529 = vrot.slane %v1528, 2
  %v1530 = vrot.slane %v1268, 7
  %v1531 = vrot.slane %v1530, 2
  %v1532 = vrot.slane %v1270, 7
  %v1533 = vrot.slane %v1532, 2
  %v1534 = vrot.slane %v1272, 7
  %v1535 = vrot.slane %v1534, 2
  %v1536 = vrot.slane %v1273, 7
  %v1537 = vrot.slane %v1536, 2
  %v1538 = vrot.slane %v1275, 7
  %v1539 = vrot.slane %v1538, 2
  %v1540 = vrot.slane %v1277, 7
  %v1541 = vrot.slane %v1540, 2
  %v1542 = vrot.slane %v1279, 7
  %v1543 = vrot.slane %v1542, 2
  %v1632 = vmax.f32 %v1123, %v1369
  %v1633 = vmax.f32 %v1126, %v1371
  %v1634 = vmax.f32 %v1129, %v1373
  %v1635 = vmax.f32 %v1132, %v1375
  %v1636 = vmax.f32 %v1133, %v1377
  %v1637 = vmax.f32 %v1135, %v1379
  %v1638 = vmax.f32 %v1137, %v1381
  %v1639 = vmax.f32 %v1139, %v1383
  %v1640 = vmax.f32 %v1140, %v1385
  %v1641 = vmax.f32 %v1142, %v1387
  %v1642 = vmax.f32 %v1144, %v1389
  %v1643 = vmax.f32 %v1146, %v1391
  %v1644 = vmax.f32 %v1147, %v1393
  %v1645 = vmax.f32 %v1149, %v1395
  %v1646 = vmax.f32 %v1151, %v1397
  %v1647 = vmax.f32 %v1153, %v1399
  %v1648 = vmax.f32 %v1154, %v1401
  %v1649 = vmax.f32 %v1156, %v1403
  %v1650 = vmax.f32 %v1158, %v1405
  %v1651 = vmax.f32 %v1160, %v1407
  %v1652 = vmax.f32 %v1161, %v1409
  %v1653 = vmax.f32 %v1163, %v1411
  %v1654 = vmax.f32 %v1165, %v1413
  %v1655 = vmax.f32 %v1167, %v1415
  %v1656 = vmax.f32 %v1168, %v1417
  %v1657 = vmax.f32 %v1170, %v1419
  %v1658 = vmax.f32 %v1172, %v1421
  %v1659 = vmax.f32 %v1174, %v1423
  %v1660 = vmax.f32 %v1175, %v1425
  %v1661 = vmax.f32 %v1177, %v1427
  %v1662 = vmax.f32 %v1179, %v1429
  %v1663 = vmax.f32 %v1181, %v1431
  %v1664 = vmax.f32 %v1182, %v1433
  %v1665 = vmax.f32 %v1184, %v1435
  %v1666 = vmax.f32 %v1186, %v1437
  %v1667 = vmax.f32 %v1188, %v1439
  %v1668 = vmax.f32 %v1189, %v1441
  %v1669 = vmax.f32 %v1191, %v1443
  %v1670 = vmax.f32 %v1193, %v1445
  %v1671 = vmax.f32 %v1195, %v1447
  %v1672 = vmax.f32 %v1196, %v1449
  %v1673 = vmax.f32 %v1198, %v1451
  %v1674 = vmax.f32 %v1200, %v1453
  %v1675 = vmax.f32 %v1202, %v1455
  %v1676 = vmax.f32 %v1203, %v1457
  %v1677 = vmax.f32 %v1205, %v1459
  %v1678 = vmax.f32 %v1207, %v1461
  %v1679 = vmax.f32 %v1209, %v1463
  %v1680 = vmax.f32 %v1210, %v1465
  %v1681 = vmax.f32 %v1212, %v1467
  %v1682 = vmax.f32 %v1214, %v1469
  %v1683 = vmax.f32 %v1216, %v1471
  %v1684 = vmax.f32 %v1217, %v1473
  %v1685 = vmax.f32 %v1219, %v1475
  %v1686 = vmax.f32 %v1221, %v1477
  %v1687 = vmax.f32 %v1223, %v1479
  %v1688 = vmax.f32 %v1224, %v1481
  %v1689 = vmax.f32 %v1226, %v1483
  %v1690 = vmax.f32 %v1228, %v1485
  %v1691 = vmax.f32 %v1230, %v1487
  %v1692 = vmax.f32 %v1231, %v1489
  %v1693 = vmax.f32 %v1233, %v1491
  %v1694 = vmax.f32 %v1235, %v1493
  %v1695 = vmax.f32 %v1237, %v1495
  %v1696 = vmax.f32 %v1238, %v1497
  %v1697 = vmax.f32 %v1240, %v1499
  %v1698 = vmax.f32 %v1242, %v1501
  %v1699 = vmax.f32 %v1244, %v1503
  %v1700 = vmax.f32 %v1245, %v1505
  %v1701 = vmax.f32 %v1247, %v1507
  %v1702 = vmax.f32 %v1249, %v1509
  %v1703 = vmax.f32 %v1251, %v1511
  %v1704 = vmax.f32 %v1252, %v1513
  %v1705 = vmax.f32 %v1254, %v1515
  %v1706 = vmax.f32 %v1256, %v1517
  %v1707 = vmax.f32 %v1258, %v1519
  %v1708 = vmax.f32 %v1259, %v1521
  %v1709 = vmax.f32 %v1261, %v1523
  %v1710 = vmax.f32 %v1263, %v1525
  %v1711 = vmax.f32 %v1265, %v1527
  %v1712 = vmax.f32 %v1266, %v1529
  %v1713 = vmax.f32 %v1268, %v1531
  %v1714 = vmax.f32 %v1270, %v1533
  %v1715 = vmax.f32 %v1272, %v1535
  %v1716 = vmax.f32 %v1273, %v1537
  %v1717 = vmax.f32 %v1275, %v1539
  %v1718 = vmax.f32 %v1277, %v1541
  %v1719 = vmax.f32 %v1279, %v1543
  %v1720 = vld [vmem:[%s2] sm:$0x3]
  %v1722 = vperm.slane %v1720, 0
  %v1723 = vperm.slane %v1720, 1
  %v1724 = vrot.slane %v1723, 6
  %v1725 = vsel %vm488, %v1722, %v1724
  %v1726 = vsel %vm1124, %v1722, %v1724
  %v1727 = vrot.slane %v1726, 2
  %v1728 = vsel %vm1127, %v1722, %v1724
  %v1729 = vrot.slane %v1728, 4
  %v1730 = vsel %vm1130, %v1724, %v1722
  %v1731 = vrot.slane %v1730, 6
  %v1732 = vrot.slane %v1725, 1
  %v1733 = vrot.slane %v1727, 1
  %v1734 = vrot.slane %v1729, 1
  %v1735 = vrot.slane %v1731, 1
  %v1744 = vadd.f32 %v1632, %v1725
  %v1745 = vadd.f32 %v1633, %v1732
  %v1746 = vadd.f32 %v1634, %v1727
  %v1747 = vadd.f32 %v1635, %v1733
  %v1748 = vadd.f32 %v1636, %v1729
  %v1749 = vadd.f32 %v1637, %v1734
  %v1750 = vadd.f32 %v1638, %v1731
  %v1751 = vadd.f32 %v1639, %v1735
  %v1752 = vadd.f32 %v1640, %v1725
  %v1753 = vadd.f32 %v1641, %v1732
  %v1754 = vadd.f32 %v1642, %v1727
  %v1755 = vadd.f32 %v1643, %v1733
  %v1756 = vadd.f32 %v1644, %v1729
  %v1757 = vadd.f32 %v1645, %v1734
  %v1758 = vadd.f32 %v1646, %v1731
  %v1759 = vadd.f32 %v1647, %v1735
  %v1760 = vadd.f32 %v1648, %v1725
  %v1761 = vadd.f32 %v1649, %v1732
  %v1762 = vadd.f32 %v1650, %v1727
  %v1763 = vadd.f32 %v1651, %v1733
  %v1764 = vadd.f32 %v1652, %v1729
  %v1765 = vadd.f32 %v1653, %v1734
  %v1766 = vadd.f32 %v1654, %v1731
  %v1767 = vadd.f32 %v1655, %v1735
  %v1768 = vadd.f32 %v1656, %v1725
  %v1769 = vadd.f32 %v1657, %v1732
  %v1770 = vadd.f32 %v1658, %v1727
  %v1771 = vadd.f32 %v1659, %v1733
  %v1772 = vadd.f32 %v1660, %v1729
  %v1773 = vadd.f32 %v1661, %v1734
  %v1774 = vadd.f32 %v1662, %v1731
  %v1775 = vadd.f32 %v1663, %v1735
  %v1776 = vadd.f32 %v1664, %v1725
  %v1777 = vadd.f32 %v1665, %v1732
  %v1778 = vadd.f32 %v1666, %v1727
  %v1779 = vadd.f32 %v1667, %v1733
  %v1780 = vadd.f32 %v1668, %v1729
  %v1781 = vadd.f32 %v1669, %v1734
  %v1782 = vadd.f32 %v1670, %v1731
  %v1783 = vadd.f32 %v1671, %v1735
  %v1784 = vadd.f32 %v1672, %v1725
  %v1785 = vadd.f32 %v1673, %v1732
  %v1786 = vadd.f32 %v1674, %v1727
  %v1787 = vadd.f32 %v1675, %v1733
  %v1788 = vadd.f32 %v1676, %v1729
  %v1789 = vadd.f32 %v1677, %v1734
  %v1790 = vadd.f32 %v1678, %v1731
  %v1791 = vadd.f32 %v1679, %v1735
  %v1792 = vadd.f32 %v1680, %v1725
  %v1793 = vadd.f32 %v1681, %v1732
  %v1794 = vadd.f32 %v1682, %v1727
  %v1795 = vadd.f32 %v1683, %v1733
  %v1796 = vadd.f32 %v1684, %v1729
  %v1797 = vadd.f32 %v1685, %v1734
  %v1798 = vadd.f32 %v1686, %v1731
  %v1799 = vadd.f32 %v1687, %v1735
  %v1800 = vadd.f32 %v1688, %v1725
  %v1801 = vadd.f32 %v1689, %v1732
  %v1802 = vadd.f32 %v1690, %v1727
  %v1803 = vadd.f32 %v1691, %v1733
  %v1804 = vadd.f32 %v1692, %v1729
  %v1805 = vadd.f32 %v1693, %v1734
  %v1806 = vadd.f32 %v1694, %v1731
  %v1807 = vadd.f32 %v1695, %v1735
  %v1808 = vadd.f32 %v1696, %v1725
  %v1809 = vadd.f32 %v1697, %v1732
  %v1810 = vadd.f32 %v1698, %v1727
  %v1811 = vadd.f32 %v1699, %v1733
  %v1812 = vadd.f32 %v1700, %v1729
  %v1813 = vadd.f32 %v1701, %v1734
  %v1814 = vadd.f32 %v1702, %v1731
  %v1815 = vadd.f32 %v1703, %v1735
  %v1816 = vadd.f32 %v1704, %v1725
  %v1817 = vadd.f32 %v1705, %v1732
  %v1818 = vadd.f32 %v1706, %v1727
  %v1819 = vadd.f32 %v1707, %v1733
  %v1820 = vadd.f32 %v1708, %v1729
  %v1821 = vadd.f32 %v1709, %v1734
  %v1822 = vadd.f32 %v1710, %v1731
  %v1823 = vadd.f32 %v1711, %v1735
  %v1824 = vadd.f32 %v1712, %v1725
  %v1825 = vadd.f32 %v1713, %v1732
  %v1826 = vadd.f32 %v1714, %v1727
  %v1827 = vadd.f32 %v1715, %v1733
  %v1828 = vadd.f32 %v1716, %v1729
  %v1829 = vadd.f32 %v1717, %v1734
  %v1830 = vadd.f32 %v1718, %v1731
  %v1831 = vadd.f32 %v1719, %v1735
  %v1832 = vmax.f32 %v1744, 0.0
  %v1833 = vmax.f32 %v1745, 0.0
  %v1834 = vmax.f32 %v1746, 0.0
  %v1835 = vmax.f32 %v1747, 0.0
  %v1836 = vmax.f32 %v1748, 0.0
  %v1837 = vmax.f32 %v1749, 0.0
  %v1838 = vmax.f32 %v1750, 0.0
  %v1839 = vmax.f32 %v1751, 0.0
  %v1840 = vmax.f32 %v1752, 0.0
  %v1841 = vmax.f32 %v1753, 0.0
  %v1842 = vmax.f32 %v1754, 0.0
  %v1843 = vmax.f32 %v1755, 0.0
  %v1844 = vmax.f32 %v1756, 0.0
  %v1845 = vmax.f32 %v1757, 0.0
  %v1846 = vmax.f32 %v1758, 0.0
  %v1847 = vmax.f32 %v1759, 0.0
  %v1848 = vmax.f32 %v1760, 0.0
  %v1849 = vmax.f32 %v1761, 0.0
  %v1850 = vmax.f32 %v1762, 0.0
  %v1851 = vmax.f32 %v1763, 0.0
  %v1852 = vmax.f32 %v1764, 0.0
  %v1853 = vmax.f32 %v1765, 0.0
  %v1854 = vmax.f32 %v1766, 0.0
  %v1855 = vmax.f32 %v1767, 0.0
  %v1856 = vmax.f32 %v1768, 0.0
  %v1857 = vmax.f32 %v1769, 0.0
  %v1858 = vmax.f32 %v1770, 0.0
  %v1859 = vmax.f32 %v1771, 0.0
  %v1860 = vmax.f32 %v1772, 0.0
  %v1861 = vmax.f32 %v1773, 0.0
  %v1862 = vmax.f32 %v1774, 0.0
  %v1863 = vmax.f32 %v1775, 0.0
  %v1864 = vmax.f32 %v1776, 0.0
  %v1865 = vmax.f32 %v1777, 0.0
  %v1866 = vmax.f32 %v1778, 0.0
  %v1867 = vmax.f32 %v1779, 0.0
  %v1868 = vmax.f32 %v1780, 0.0
  %v1869 = vmax.f32 %v1781, 0.0
  %v1870 = vmax.f32 %v1782, 0.0
  %v1871 = vmax.f32 %v1783, 0.0
  %v1872 = vmax.f32 %v1784, 0.0
  %v1873 = vmax.f32 %v1785, 0.0
  %v1874 = vmax.f32 %v1786, 0.0
  %v1875 = vmax.f32 %v1787, 0.0
  %v1876 = vmax.f32 %v1788, 0.0
  %v1877 = vmax.f32 %v1789, 0.0
  %v1878 = vmax.f32 %v1790, 0.0
  %v1879 = vmax.f32 %v1791, 0.0
  %v1880 = vmax.f32 %v1792, 0.0
  %v1881 = vmax.f32 %v1793, 0.0
  %v1882 = vmax.f32 %v1794, 0.0
  %v1883 = vmax.f32 %v1795, 0.0
  %v1884 = vmax.f32 %v1796, 0.0
  %v1885 = vmax.f32 %v1797, 0.0
  %v1886 = vmax.f32 %v1798, 0.0
  %v1887 = vmax.f32 %v1799, 0.0
  %v1888 = vmax.f32 %v1800, 0.0
  %v1889 = vmax.f32 %v1801, 0.0
  %v1890 = vmax.f32 %v1802, 0.0
  %v1891 = vmax.f32 %v1803, 0.0
  %v1892 = vmax.f32 %v1804, 0.0
  %v1893 = vmax.f32 %v1805, 0.0
  %v1894 = vmax.f32 %v1806, 0.0
  %v1895 = vmax.f32 %v1807, 0.0
  %v1896 = vmax.f32 %v1808, 0.0
  %v1897 = vmax.f32 %v1809, 0.0
  %v1898 = vmax.f32 %v1810, 0.0
  %v1899 = vmax.f32 %v1811, 0.0
  %v1900 = vmax.f32 %v1812, 0.0
  %v1901 = vmax.f32 %v1813, 0.0
  %v1902 = vmax.f32 %v1814, 0.0
  %v1903 = vmax.f32 %v1815, 0.0
  %v1904 = vmax.f32 %v1816, 0.0
  %v1905 = vmax.f32 %v1817, 0.0
  %v1906 = vmax.f32 %v1818, 0.0
  %v1907 = vmax.f32 %v1819, 0.0
  %v1908 = vmax.f32 %v1820, 0.0
  %v1909 = vmax.f32 %v1821, 0.0
  %v1910 = vmax.f32 %v1822, 0.0
  %v1911 = vmax.f32 %v1823, 0.0
  %v1912 = vmax.f32 %v1824, 0.0
  %v1913 = vmax.f32 %v1825, 0.0
  %v1914 = vmax.f32 %v1826, 0.0
  %v1915 = vmax.f32 %v1827, 0.0
  %v1916 = vmax.f32 %v1828, 0.0
  %v1917 = vmax.f32 %v1829, 0.0
  %v1918 = vmax.f32 %v1830, 0.0
  %v1919 = vmax.f32 %v1831, 0.0
  %v2008 = vperm.slane %v1832, 0
  %v2009 = vperm.slane %v1832, 2
  %v2010 = vperm.slane %v1833, 0
  %v2011 = vperm.slane %v1833, 2
  %v2012 = vperm.slane %v1834, 0
  %v2013 = vperm.slane %v1834, 2
  %v2014 = vperm.slane %v1835, 0
  %v2015 = vperm.slane %v1835, 2
  %v2016 = vperm.slane %v1836, 0
  %v2017 = vperm.slane %v1836, 2
  %v2018 = vperm.slane %v1837, 0
  %v2019 = vperm.slane %v1837, 2
  %v2020 = vperm.slane %v1838, 0
  %v2021 = vperm.slane %v1838, 2
  %v2022 = vperm.slane %v1839, 0
  %v2023 = vperm.slane %v1839, 2
  %v2024 = vperm.slane %v1840, 0
  %v2025 = vperm.slane %v1840, 2
  %v2026 = vperm.slane %v1841, 0
  %v2027 = vperm.slane %v1841, 2
  %v2028 = vperm.slane %v1842, 0
  %v2029 = vperm.slane %v1842, 2
  %v2030 = vperm.slane %v1843, 0
  %v2031 = vperm.slane %v1843, 2
  %v2032 = vperm.slane %v1844, 0
  %v2033 = vperm.slane %v1844, 2
  %v2034 = vperm.slane %v1845, 0
  %v2035 = vperm.slane %v1845, 2
  %v2036 = vperm.slane %v1846, 0
  %v2037 = vperm.slane %v1846, 2
  %v2038 = vperm.slane %v1847, 0
  %v2039 = vperm.slane %v1847, 2
  %v2040 = vperm.slane %v1848, 0
  %v2041 = vperm.slane %v1848, 2
  %v2042 = vperm.slane %v1849, 0
  %v2043 = vperm.slane %v1849, 2
  %v2044 = vperm.slane %v1850, 0
  %v2045 = vperm.slane %v1850, 2
  %v2046 = vperm.slane %v1851, 0
  %v2047 = vperm.slane %v1851, 2
  %v2048 = vperm.slane %v1852, 0
  %v2049 = vperm.slane %v1852, 2
  %v2050 = vperm.slane %v1853, 0
  %v2051 = vperm.slane %v1853, 2
  %v2052 = vperm.slane %v1854, 0
  %v2053 = vperm.slane %v1854, 2
  %v2054 = vperm.slane %v1855, 0
  %v2055 = vperm.slane %v1855, 2
  %v2056 = vperm.slane %v1856, 0
  %v2057 = vperm.slane %v1856, 2
  %v2058 = vperm.slane %v1857, 0
  %v2059 = vperm.slane %v1857, 2
  %v2060 = vperm.slane %v1858, 0
  %v2061 = vperm.slane %v1858, 2
  %v2062 = vperm.slane %v1859, 0
  %v2063 = vperm.slane %v1859, 2
  %v2064 = vperm.slane %v1860, 0
  %v2065 = vperm.slane %v1860, 2
  %v2066 = vperm.slane %v1861, 0
  %v2067 = vperm.slane %v1861, 2
  %v2068 = vperm.slane %v1862, 0
  %v2069 = vperm.slane %v1862, 2
  %v2070 = vperm.slane %v1863, 0
  %v2071 = vperm.slane %v1863, 2
  %v2072 = vperm.slane %v1864, 0
  %v2073 = vperm.slane %v1864, 2
  %v2074 = vperm.slane %v1865, 0
  %v2075 = vperm.slane %v1865, 2
  %v2076 = vperm.slane %v1866, 0
  %v2077 = vperm.slane %v1866, 2
  %v2078 = vperm.slane %v1867, 0
  %v2079 = vperm.slane %v1867, 2
  %v2080 = vperm.slane %v1868, 0
  %v2081 = vperm.slane %v1868, 2
  %v2082 = vperm.slane %v1869, 0
  %v2083 = vperm.slane %v1869, 2
  %v2084 = vperm.slane %v1870, 0
  %v2085 = vperm.slane %v1870, 2
  %v2086 = vperm.slane %v1871, 0
  %v2087 = vperm.slane %v1871, 2
  %v2088 = vperm.slane %v1872, 0
  %v2089 = vperm.slane %v1872, 2
  %v2090 = vperm.slane %v1873, 0
  %v2091 = vperm.slane %v1873, 2
  %v2092 = vperm.slane %v1874, 0
  %v2093 = vperm.slane %v1874, 2
  %v2094 = vperm.slane %v1875, 0
  %v2095 = vperm.slane %v1875, 2
  %v2096 = vperm.slane %v1876, 0
  %v2097 = vperm.slane %v1876, 2
  %v2098 = vperm.slane %v1877, 0
  %v2099 = vperm.slane %v1877, 2
  %v2100 = vperm.slane %v1878, 0
  %v2101 = vperm.slane %v1878, 2
  %v2102 = vperm.slane %v1879, 0
  %v2103 = vperm.slane %v1879, 2
  %v2104 = vperm.slane %v1880, 0
  %v2105 = vperm.slane %v1880, 2
  %v2106 = vperm.slane %v1881, 0
  %v2107 = vperm.slane %v1881, 2
  %v2108 = vperm.slane %v1882, 0
  %v2109 = vperm.slane %v1882, 2
  %v2110 = vperm.slane %v1883, 0
  %v2111 = vperm.slane %v1883, 2
  %v2112 = vperm.slane %v1884, 0
  %v2113 = vperm.slane %v1884, 2
  %v2114 = vperm.slane %v1885, 0
  %v2115 = vperm.slane %v1885, 2
  %v2116 = vperm.slane %v1886, 0
  %v2117 = vperm.slane %v1886, 2
  %v2118 = vperm.slane %v1887, 0
  %v2119 = vperm.slane %v1887, 2
  %v2120 = vperm.slane %v1888, 0
  %v2121 = vperm.slane %v1888, 2
  %v2122 = vperm.slane %v1889, 0
  %v2123 = vperm.slane %v1889, 2
  %v2124 = vperm.slane %v1890, 0
  %v2125 = vperm.slane %v1890, 2
  %v2126 = vperm.slane %v1891, 0
  %v2127 = vperm.slane %v1891, 2
  %v2128 = vperm.slane %v1892, 0
  %v2129 = vperm.slane %v1892, 2
  %v2130 = vperm.slane %v1893, 0
  %v2131 = vperm.slane %v1893, 2
  %v2132 = vperm.slane %v1894, 0
  %v2133 = vperm.slane %v1894, 2
  %v2134 = vperm.slane %v1895, 0
  %v2135 = vperm.slane %v1895, 2
  %v2136 = vperm.slane %v1896, 0
  %v2137 = vperm.slane %v1896, 2
  %v2138 = vperm.slane %v1897, 0
  %v2139 = vperm.slane %v1897, 2
  %v2140 = vperm.slane %v1898, 0
  %v2141 = vperm.slane %v1898, 2
  %v2142 = vperm.slane %v1899, 0
  %v2143 = vperm.slane %v1899, 2
  %v2144 = vperm.slane %v1900, 0
  %v2145 = vperm.slane %v1900, 2
  %v2146 = vperm.slane %v1901, 0
  %v2147 = vperm.slane %v1901, 2
  %v2148 = vperm.slane %v1902, 0
  %v2149 = vperm.slane %v1902, 2
  %v2150 = vperm.slane %v1903, 0
  %v2151 = vperm.slane %v1903, 2
  %v2152 = vperm.slane %v1904, 0
  %v2153 = vperm.slane %v1904, 2
  %v2154 = vperm.slane %v1905, 0
  %v2155 = vperm.slane %v1905, 2
  %v2156 = vperm.slane %v1906, 0
  %v2157 = vperm.slane %v1906, 2
  %v2158 = vperm.slane %v1907, 0
  %v2159 = vperm.slane %v1907, 2
  %v2160 = vperm.slane %v1908, 0
  %v2161 = vperm.slane %v1908, 2
  %v2162 = vperm.slane %v1909, 0
  %v2163 = vperm.slane %v1909, 2
  %v2164 = vperm.slane %v1910, 0
  %v2165 = vperm.slane %v1910, 2
  %v2166 = vperm.slane %v1911, 0
  %v2167 = vperm.slane %v1911, 2
  %v2168 = vperm.slane %v1912, 0
  %v2169 = vperm.slane %v1912, 2
  %v2170 = vperm.slane %v1913, 0
  %v2171 = vperm.slane %v1913, 2
  %v2172 = vperm.slane %v1914, 0
  %v2173 = vperm.slane %v1914, 2
  %v2174 = vperm.slane %v1915, 0
  %v2175 = vperm.slane %v1915, 2
  %v2176 = vperm.slane %v1916, 0
  %v2177 = vperm.slane %v1916, 2
  %v2178 = vperm.slane %v1917, 0
  %v2179 = vperm.slane %v1917, 2
  %v2180 = vperm.slane %v1918, 0
  %v2181 = vperm.slane %v1918, 2
  %v2182 = vperm.slane %v1919, 0
  %v2183 = vperm.slane %v1919, 2
  %v2360 = vpack.c.bf16 %v2009, %v2008
  %v2361 = vpack.c.bf16 %v2011, %v2010
  %v2362 = vpack.c.bf16 %v2013, %v2012
  %v2363 = vpack.c.bf16 %v2015, %v2014
  %v2364 = vpack.c.bf16 %v2017, %v2016
  %v2365 = vpack.c.bf16 %v2019, %v2018
  %v2366 = vpack.c.bf16 %v2021, %v2020
  %v2367 = vpack.c.bf16 %v2023, %v2022
  %v2368 = vpack.c.bf16 %v2025, %v2024
  %v2369 = vpack.c.bf16 %v2027, %v2026
  %v2370 = vpack.c.bf16 %v2029, %v2028
  %v2371 = vpack.c.bf16 %v2031, %v2030
  %v2372 = vpack.c.bf16 %v2033, %v2032
  %v2373 = vpack.c.bf16 %v2035, %v2034
  %v2374 = vpack.c.bf16 %v2037, %v2036
  %v2375 = vpack.c.bf16 %v2039, %v2038
  %v2376 = vpack.c.bf16 %v2041, %v2040
  %v2377 = vpack.c.bf16 %v2043, %v2042
  %v2378 = vpack.c.bf16 %v2045, %v2044
  %v2379 = vpack.c.bf16 %v2047, %v2046
  %v2380 = vpack.c.bf16 %v2049, %v2048
  %v2381 = vpack.c.bf16 %v2051, %v2050
  %v2382 = vpack.c.bf16 %v2053, %v2052
  %v2383 = vpack.c.bf16 %v2055, %v2054
  %v2384 = vpack.c.bf16 %v2057, %v2056
  %v2385 = vpack.c.bf16 %v2059, %v2058
  %v2386 = vpack.c.bf16 %v2061, %v2060
  %v2387 = vpack.c.bf16 %v2063, %v2062
  %v2388 = vpack.c.bf16 %v2065, %v2064
  %v2389 = vpack.c.bf16 %v2067, %v2066
  %v2390 = vpack.c.bf16 %v2069, %v2068
  %v2391 = vpack.c.bf16 %v2071, %v2070
  %v2392 = vpack.c.bf16 %v2073, %v2072
  %v2393 = vpack.c.bf16 %v2075, %v2074
  %v2394 = vpack.c.bf16 %v2077, %v2076
  %v2395 = vpack.c.bf16 %v2079, %v2078
  %v2396 = vpack.c.bf16 %v2081, %v2080
  %v2397 = vpack.c.bf16 %v2083, %v2082
  %v2398 = vpack.c.bf16 %v2085, %v2084
  %v2399 = vpack.c.bf16 %v2087, %v2086
  %v2400 = vpack.c.bf16 %v2089, %v2088
  %v2401 = vpack.c.bf16 %v2091, %v2090
  %v2402 = vpack.c.bf16 %v2093, %v2092
  %v2403 = vpack.c.bf16 %v2095, %v2094
  %v2404 = vpack.c.bf16 %v2097, %v2096
  %v2405 = vpack.c.bf16 %v2099, %v2098
  %v2406 = vpack.c.bf16 %v2101, %v2100
  %v2407 = vpack.c.bf16 %v2103, %v2102
  %v2408 = vpack.c.bf16 %v2105, %v2104
  %v2409 = vpack.c.bf16 %v2107, %v2106
  %v2410 = vpack.c.bf16 %v2109, %v2108
  %v2411 = vpack.c.bf16 %v2111, %v2110
  %v2412 = vpack.c.bf16 %v2113, %v2112
  %v2413 = vpack.c.bf16 %v2115, %v2114
  %v2414 = vpack.c.bf16 %v2117, %v2116
  %v2415 = vpack.c.bf16 %v2119, %v2118
  %v2416 = vpack.c.bf16 %v2121, %v2120
  %v2417 = vpack.c.bf16 %v2123, %v2122
  %v2418 = vpack.c.bf16 %v2125, %v2124
  %v2419 = vpack.c.bf16 %v2127, %v2126
  %v2420 = vpack.c.bf16 %v2129, %v2128
  %v2421 = vpack.c.bf16 %v2131, %v2130
  %v2422 = vpack.c.bf16 %v2133, %v2132
  %v2423 = vpack.c.bf16 %v2135, %v2134
  %v2424 = vpack.c.bf16 %v2137, %v2136
  %v2425 = vpack.c.bf16 %v2139, %v2138
  %v2426 = vpack.c.bf16 %v2141, %v2140
  %v2427 = vpack.c.bf16 %v2143, %v2142
  %v2428 = vpack.c.bf16 %v2145, %v2144
  %v2429 = vpack.c.bf16 %v2147, %v2146
  %v2430 = vpack.c.bf16 %v2149, %v2148
  %v2431 = vpack.c.bf16 %v2151, %v2150
  %v2432 = vpack.c.bf16 %v2153, %v2152
  %v2433 = vpack.c.bf16 %v2155, %v2154
  %v2434 = vpack.c.bf16 %v2157, %v2156
  %v2435 = vpack.c.bf16 %v2159, %v2158
  %v2436 = vpack.c.bf16 %v2161, %v2160
  %v2437 = vpack.c.bf16 %v2163, %v2162
  %v2438 = vpack.c.bf16 %v2165, %v2164
  %v2439 = vpack.c.bf16 %v2167, %v2166
  %v2440 = vpack.c.bf16 %v2169, %v2168
  %v2441 = vpack.c.bf16 %v2171, %v2170
  %v2442 = vpack.c.bf16 %v2173, %v2172
  %v2443 = vpack.c.bf16 %v2175, %v2174
  %v2444 = vpack.c.bf16 %v2177, %v2176
  %v2445 = vpack.c.bf16 %v2179, %v2178
  %v2446 = vpack.c.bf16 %v2181, %v2180
  %v2447 = vpack.c.bf16 %v2183, %v2182
  %v2448 = vld [vmem:[%s3] sm:$0xff]
  %v2449 = vld [vmem:[%s3 + $0x8] sm:$0xff]
  %v2450 = vld [vmem:[%s3 + $0x10] sm:$0xff]
  %v2451 = vld [vmem:[%s3 + $0x18] sm:$0xff]
  %v2452 = vld [vmem:[%s3 + $0x20] sm:$0xff]
  %v2453 = vld [vmem:[%s3 + $0x28] sm:$0xff]
  %v2454 = vld [vmem:[%s3 + $0x30] sm:$0xff]
  %v2455 = vld [vmem:[%s3 + $0x38] sm:$0xff]
  %v2456 = vld [vmem:[%s3 + $0x40] sm:$0xff]
  %v2457 = vld [vmem:[%s3 + $0x48] sm:$0xff]
  %v2458 = vld [vmem:[%s3 + $0x50] sm:$0xff]
  %v2459 = vld [vmem:[%s3 + $0x58] sm:$0xff]
  %v2460 = vld [vmem:[%s3 + $0x60] sm:$0xff]
  %v2461 = vld [vmem:[%s3 + $0x68] sm:$0xff]
  %v2462 = vld [vmem:[%s3 + $0x70] sm:$0xff]
  %v2463 = vld [vmem:[%s3 + $0x78] sm:$0xff]
  %v2464 = vld [vmem:[%s3 + $0x80] sm:$0xff]
  %v2465 = vld [vmem:[%s3 + $0x88] sm:$0xff]
  %v2466 = vld [vmem:[%s3 + $0x90] sm:$0xff]
  %v2467 = vld [vmem:[%s3 + $0x98] sm:$0xff]
  %v2468 = vld [vmem:[%s3 + $0xa0] sm:$0xff]
  %v2469 = vld [vmem:[%s3 + $0xa8] sm:$0xff]
  %v2470 = vld [vmem:[%s3 + $0xb0] sm:$0xff]
  %v2471 = vld [vmem:[%s3 + $0xb8] sm:$0xff]
  %v2472 = vld [vmem:[%s3 + $0xc0] sm:$0xff]
  %v2473 = vld [vmem:[%s3 + $0xc8] sm:$0xff]
  %v2474 = vld [vmem:[%s3 + $0xd0] sm:$0xff]
  %v2475 = vld [vmem:[%s3 + $0xd8] sm:$0xff]
  %v2476 = vld [vmem:[%s3 + $0xe0] sm:$0xff]
  %v2477 = vld [vmem:[%s3 + $0xe8] sm:$0xff]
  %v2478 = vld [vmem:[%s3 + $0xf0] sm:$0xff]
  %v2479 = vld [vmem:[%s3 + $0xf8] sm:$0xff]
  %v2480 = vld [vmem:[%s3 + $0x100] sm:$0xff]
  %v2481 = vld [vmem:[%s3 + $0x108] sm:$0xff]
  %v2482 = vld [vmem:[%s3 + $0x110] sm:$0xff]
  %v2483 = vld [vmem:[%s3 + $0x118] sm:$0xff]
  %v2484 = vld [vmem:[%s3 + $0x120] sm:$0xff]
  %v2485 = vld [vmem:[%s3 + $0x128] sm:$0xff]
  %v2486 = vld [vmem:[%s3 + $0x130] sm:$0xff]
  %v2487 = vld [vmem:[%s3 + $0x138] sm:$0xff]
  %v2488 = vld [vmem:[%s3 + $0x140] sm:$0xff]
  %v2489 = vld [vmem:[%s3 + $0x148] sm:$0xff]
  %v2490 = vld [vmem:[%s3 + $0x150] sm:$0xff]
  %v2491 = vld [vmem:[%s3 + $0x158] sm:$0xff]
  %v2492 = vld [vmem:[%s3 + $0x160] sm:$0xff]
  %v2493 = vld [vmem:[%s3 + $0x168] sm:$0xff]
  %v2494 = vld [vmem:[%s3 + $0x170] sm:$0xff]
  %v2495 = vld [vmem:[%s3 + $0x178] sm:$0xff]
  %v2496 = vld [vmem:[%s3 + $0x180] sm:$0xff]
  %v2497 = vld [vmem:[%s3 + $0x188] sm:$0xff]
  %v2498 = vld [vmem:[%s3 + $0x190] sm:$0xff]
  %v2499 = vld [vmem:[%s3 + $0x198] sm:$0xff]
  %v2500 = vld [vmem:[%s3 + $0x1a0] sm:$0xff]
  %v2501 = vld [vmem:[%s3 + $0x1a8] sm:$0xff]
  %v2502 = vld [vmem:[%s3 + $0x1b0] sm:$0xff]
  %v2503 = vld [vmem:[%s3 + $0x1b8] sm:$0xff]
  %v2504 = vld [vmem:[%s3 + $0x1c0] sm:$0xff]
  %v2505 = vld [vmem:[%s3 + $0x1c8] sm:$0xff]
  %v2506 = vld [vmem:[%s3 + $0x1d0] sm:$0xff]
  %v2507 = vld [vmem:[%s3 + $0x1d8] sm:$0xff]
  %v2508 = vld [vmem:[%s3 + $0x1e0] sm:$0xff]
  %v2509 = vld [vmem:[%s3 + $0x1e8] sm:$0xff]
  %v2510 = vld [vmem:[%s3 + $0x1f0] sm:$0xff]
  %v2511 = vld [vmem:[%s3 + $0x1f8] sm:$0xff]
  %s2512 = scalar_lea.vmem %s3, 512
  %v2513 = vld [vmem:[%s2512] sm:$0xff]
  %v2514 = vld [vmem:[%s2512 + $0x8] sm:$0xff]
  %v2515 = vld [vmem:[%s2512 + $0x10] sm:$0xff]
  %v2516 = vld [vmem:[%s2512 + $0x18] sm:$0xff]
  %v2517 = vld [vmem:[%s2512 + $0x20] sm:$0xff]
  %v2518 = vld [vmem:[%s2512 + $0x28] sm:$0xff]
  %v2519 = vld [vmem:[%s2512 + $0x30] sm:$0xff]
  %v2520 = vld [vmem:[%s2512 + $0x38] sm:$0xff]
  %v2521 = vld [vmem:[%s2512 + $0x40] sm:$0xff]
  %v2522 = vld [vmem:[%s2512 + $0x48] sm:$0xff]
  %v2523 = vld [vmem:[%s2512 + $0x50] sm:$0xff]
  %v2524 = vld [vmem:[%s2512 + $0x58] sm:$0xff]
  %v2525 = vld [vmem:[%s2512 + $0x60] sm:$0xff]
  %v2526 = vld [vmem:[%s2512 + $0x68] sm:$0xff]
  %v2527 = vld [vmem:[%s2512 + $0x70] sm:$0xff]
  %v2528 = vld [vmem:[%s2512 + $0x78] sm:$0xff]
  %v2529 = vld [vmem:[%s2512 + $0x80] sm:$0xff]
  %v2530 = vld [vmem:[%s2512 + $0x88] sm:$0xff]
  %v2531 = vld [vmem:[%s2512 + $0x90] sm:$0xff]
  %v2532 = vld [vmem:[%s2512 + $0x98] sm:$0xff]
  %v2533 = vld [vmem:[%s2512 + $0xa0] sm:$0xff]
  %v2534 = vld [vmem:[%s2512 + $0xa8] sm:$0xff]
  %v2535 = vld [vmem:[%s2512 + $0xb0] sm:$0xff]
  %v2536 = vld [vmem:[%s2512 + $0xb8] sm:$0xff]
  %v2537 = vld [vmem:[%s2512 + $0xc0] sm:$0xff]
  %v2538 = vld [vmem:[%s2512 + $0xc8] sm:$0xff]
  %v2539 = vld [vmem:[%s2512 + $0xd0] sm:$0xff]
  %v2540 = vld [vmem:[%s2512 + $0xd8] sm:$0xff]
  %v2541 = vld [vmem:[%s2512 + $0xe0] sm:$0xff]
  %v2542 = vld [vmem:[%s2512 + $0xe8] sm:$0xff]
  %v2543 = vld [vmem:[%s2512 + $0xf0] sm:$0xff]
  %v2544 = vld [vmem:[%s2512 + $0xf8] sm:$0xff]
  %v2545 = vld [vmem:[%s2512 + $0x100] sm:$0xff]
  %v2546 = vld [vmem:[%s2512 + $0x108] sm:$0xff]
  %v2547 = vld [vmem:[%s2512 + $0x110] sm:$0xff]
  %v2548 = vld [vmem:[%s2512 + $0x118] sm:$0xff]
  %v2549 = vld [vmem:[%s2512 + $0x120] sm:$0xff]
  %v2550 = vld [vmem:[%s2512 + $0x128] sm:$0xff]
  %v2551 = vld [vmem:[%s2512 + $0x130] sm:$0xff]
  %v2552 = vld [vmem:[%s2512 + $0x138] sm:$0xff]
  %v2553 = vld [vmem:[%s2512 + $0x140] sm:$0xff]
  %v2554 = vld [vmem:[%s2512 + $0x148] sm:$0xff]
  %v2555 = vld [vmem:[%s2512 + $0x150] sm:$0xff]
  %v2556 = vld [vmem:[%s2512 + $0x158] sm:$0xff]
  %v2557 = vld [vmem:[%s2512 + $0x160] sm:$0xff]
  %v2558 = vld [vmem:[%s2512 + $0x168] sm:$0xff]
  %v2559 = vld [vmem:[%s2512 + $0x170] sm:$0xff]
  %v2560 = vld [vmem:[%s2512 + $0x178] sm:$0xff]
  %v2561 = vld [vmem:[%s2512 + $0x180] sm:$0xff]
  %v2562 = vld [vmem:[%s2512 + $0x188] sm:$0xff]
  %v2563 = vld [vmem:[%s2512 + $0x190] sm:$0xff]
  %v2564 = vld [vmem:[%s2512 + $0x198] sm:$0xff]
  %v2565 = vld [vmem:[%s2512 + $0x1a0] sm:$0xff]
  %v2566 = vld [vmem:[%s2512 + $0x1a8] sm:$0xff]
  %v2567 = vld [vmem:[%s2512 + $0x1b0] sm:$0xff]
  %v2568 = vld [vmem:[%s2512 + $0x1b8] sm:$0xff]
  %v2569 = vld [vmem:[%s2512 + $0x1c0] sm:$0xff]
  %v2570 = vld [vmem:[%s2512 + $0x1c8] sm:$0xff]
  %v2571 = vld [vmem:[%s2512 + $0x1d0] sm:$0xff]
  %v2572 = vld [vmem:[%s2512 + $0x1d8] sm:$0xff]
  %v2573 = vld [vmem:[%s2512 + $0x1e0] sm:$0xff]
  %v2574 = vld [vmem:[%s2512 + $0x1e8] sm:$0xff]
  %v2575 = vld [vmem:[%s2512 + $0x1f0] sm:$0xff]
  %v2576 = vld [vmem:[%s2512 + $0x1f8] sm:$0xff]
  %v2641 = vunpack.c.l.b16 %v2361
  %v2642 = vunpack.c.h.b16 %v2361
  %v2643 = vunpack.c.l.b16 %v2362
  %v2644 = vunpack.c.h.b16 %v2362
  %v2645 = vunpack.c.l.b16 %v2363
  %v2646 = vunpack.c.h.b16 %v2363
  %v2647 = vunpack.c.l.b16 %v2364
  %v2648 = vunpack.c.h.b16 %v2364
  %v2649 = vunpack.c.l.b16 %v2365
  %v2650 = vunpack.c.h.b16 %v2365
  %v2651 = vunpack.c.l.b16 %v2366
  %v2652 = vunpack.c.h.b16 %v2366
  %v2653 = vunpack.c.l.b16 %v2367
  %v2654 = vunpack.c.h.b16 %v2367
  %v2655 = vunpack.c.l.b16 %v2368
  %v2656 = vunpack.c.h.b16 %v2368
  %v2657 = vunpack.c.l.b16 %v2372
  %v2658 = vunpack.c.h.b16 %v2372
  %v2659 = vunpack.c.l.b16 %v2373
  %v2660 = vunpack.c.h.b16 %v2373
  %v2661 = vunpack.c.l.b16 %v2374
  %v2662 = vunpack.c.h.b16 %v2374
  %v2663 = vunpack.c.l.b16 %v2375
  %v2664 = vunpack.c.h.b16 %v2375
  %v2665 = vunpack.c.l.b16 %v2376
  %v2666 = vunpack.c.h.b16 %v2376
  %v2667 = vunpack.c.l.b16 %v2377
  %v2668 = vunpack.c.h.b16 %v2377
  %v2669 = vunpack.c.l.b16 %v2378
  %v2670 = vunpack.c.h.b16 %v2378
  %v2671 = vunpack.c.l.b16 %v2379
  %v2672 = vunpack.c.h.b16 %v2379
  %v2673 = vunpack.c.l.b16 %v2383
  %v2674 = vunpack.c.h.b16 %v2383
  %v2675 = vunpack.c.l.b16 %v2384
  %v2676 = vunpack.c.h.b16 %v2384
  %v2677 = vunpack.c.l.b16 %v2385
  %v2678 = vunpack.c.h.b16 %v2385
  %v2679 = vunpack.c.l.b16 %v2386
  %v2680 = vunpack.c.h.b16 %v2386
  %v2681 = vunpack.c.l.b16 %v2387
  %v2682 = vunpack.c.h.b16 %v2387
  %v2683 = vunpack.c.l.b16 %v2388
  %v2684 = vunpack.c.h.b16 %v2388
  %v2685 = vunpack.c.l.b16 %v2389
  %v2686 = vunpack.c.h.b16 %v2389
  %v2687 = vunpack.c.l.b16 %v2390
  %v2688 = vunpack.c.h.b16 %v2390
  %v2689 = vunpack.c.l.b16 %v2394
  %v2690 = vunpack.c.h.b16 %v2394
  %v2691 = vunpack.c.l.b16 %v2395
  %v2692 = vunpack.c.h.b16 %v2395
  %v2693 = vunpack.c.l.b16 %v2396
  %v2694 = vunpack.c.h.b16 %v2396
  %v2695 = vunpack.c.l.b16 %v2397
  %v2696 = vunpack.c.h.b16 %v2397
  %v2697 = vunpack.c.l.b16 %v2398
  %v2698 = vunpack.c.h.b16 %v2398
  %v2699 = vunpack.c.l.b16 %v2399
  %v2700 = vunpack.c.h.b16 %v2399
  %v2701 = vunpack.c.l.b16 %v2400
  %v2702 = vunpack.c.h.b16 %v2400
  %v2703 = vunpack.c.l.b16 %v2401
  %v2704 = vunpack.c.h.b16 %v2401
  %v2705 = vunpack.c.l.b16 %v2405
  %v2706 = vunpack.c.h.b16 %v2405
  %v2707 = vunpack.c.l.b16 %v2406
  %v2708 = vunpack.c.h.b16 %v2406
  %v2709 = vunpack.c.l.b16 %v2407
  %v2710 = vunpack.c.h.b16 %v2407
  %v2711 = vunpack.c.l.b16 %v2408
  %v2712 = vunpack.c.h.b16 %v2408
  %v2713 = vunpack.c.l.b16 %v2409
  %v2714 = vunpack.c.h.b16 %v2409
  %v2715 = vunpack.c.l.b16 %v2410
  %v2716 = vunpack.c.h.b16 %v2410
  %v2717 = vunpack.c.l.b16 %v2411
  %v2718 = vunpack.c.h.b16 %v2411
  %v2719 = vunpack.c.l.b16 %v2412
  %v2720 = vunpack.c.h.b16 %v2412
  %v2721 = vunpack.c.l.b16 %v2416
  %v2722 = vunpack.c.h.b16 %v2416
  %v2723 = vunpack.c.l.b16 %v2417
  %v2724 = vunpack.c.h.b16 %v2417
  %v2725 = vunpack.c.l.b16 %v2418
  %v2726 = vunpack.c.h.b16 %v2418
  %v2727 = vunpack.c.l.b16 %v2419
  %v2728 = vunpack.c.h.b16 %v2419
  %v2729 = vunpack.c.l.b16 %v2420
  %v2730 = vunpack.c.h.b16 %v2420
  %v2731 = vunpack.c.l.b16 %v2421
  %v2732 = vunpack.c.h.b16 %v2421
  %v2733 = vunpack.c.l.b16 %v2422
  %v2734 = vunpack.c.h.b16 %v2422
  %v2735 = vunpack.c.l.b16 %v2423
  %v2736 = vunpack.c.h.b16 %v2423
  %v2737 = vunpack.c.l.b16 %v2427
  %v2738 = vunpack.c.h.b16 %v2427
  %v2739 = vunpack.c.l.b16 %v2428
  %v2740 = vunpack.c.h.b16 %v2428
  %v2741 = vunpack.c.l.b16 %v2429
  %v2742 = vunpack.c.h.b16 %v2429
  %v2743 = vunpack.c.l.b16 %v2430
  %v2744 = vunpack.c.h.b16 %v2430
  %v2745 = vunpack.c.l.b16 %v2431
  %v2746 = vunpack.c.h.b16 %v2431
  %v2747 = vunpack.c.l.b16 %v2432
  %v2748 = vunpack.c.h.b16 %v2432
  %v2749 = vunpack.c.l.b16 %v2433
  %v2750 = vunpack.c.h.b16 %v2433
  %v2751 = vunpack.c.l.b16 %v2434
  %v2752 = vunpack.c.h.b16 %v2434
  %v2753 = vunpack.c.l.b16 %v2438
  %v2754 = vunpack.c.h.b16 %v2438
  %v2755 = vunpack.c.l.b16 %v2439
  %v2756 = vunpack.c.h.b16 %v2439
  %v2757 = vunpack.c.l.b16 %v2440
  %v2758 = vunpack.c.h.b16 %v2440
  %v2759 = vunpack.c.l.b16 %v2441
  %v2760 = vunpack.c.h.b16 %v2441
  %v2761 = vunpack.c.l.b16 %v2442
  %v2762 = vunpack.c.h.b16 %v2442
  %v2763 = vunpack.c.l.b16 %v2443
  %v2764 = vunpack.c.h.b16 %v2443
  %v2765 = vunpack.c.l.b16 %v2444
  %v2766 = vunpack.c.h.b16 %v2444
  %v2767 = vunpack.c.l.b16 %v2445
  %v2768 = vunpack.c.h.b16 %v2445
  %v2769 = vpack.c.b16 %v2641, %v2641
  %v2770 = vpack.c.b16 %v2642, %v2642
  %v2771 = vpack.c.b16 %v2643, %v2643
  %v2772 = vpack.c.b16 %v2644, %v2644
  %v2773 = vpack.c.b16 %v2645, %v2645
  %v2774 = vpack.c.b16 %v2646, %v2646
  %v2775 = vpack.c.b16 %v2647, %v2647
  %v2776 = vpack.c.b16 %v2648, %v2648
  %v2777 = vpack.c.b16 %v2649, %v2649
  %v2778 = vpack.c.b16 %v2650, %v2650
  %v2779 = vpack.c.b16 %v2651, %v2651
  %v2780 = vpack.c.b16 %v2652, %v2652
  %v2781 = vpack.c.b16 %v2653, %v2653
  %v2782 = vpack.c.b16 %v2654, %v2654
  %v2783 = vpack.c.b16 %v2655, %v2655
  %v2784 = vpack.c.b16 %v2656, %v2656
  %v2785 = vpack.c.b16 %v2657, %v2657
  %v2786 = vpack.c.b16 %v2658, %v2658
  %v2787 = vpack.c.b16 %v2659, %v2659
  %v2788 = vpack.c.b16 %v2660, %v2660
  %v2789 = vpack.c.b16 %v2661, %v2661
  %v2790 = vpack.c.b16 %v2662, %v2662
  %v2791 = vpack.c.b16 %v2663, %v2663
  %v2792 = vpack.c.b16 %v2664, %v2664
  %v2793 = vpack.c.b16 %v2665, %v2665
  %v2794 = vpack.c.b16 %v2666, %v2666
  %v2795 = vpack.c.b16 %v2667, %v2667
  %v2796 = vpack.c.b16 %v2668, %v2668
  %v2797 = vpack.c.b16 %v2669, %v2669
  %v2798 = vpack.c.b16 %v2670, %v2670
  %v2799 = vpack.c.b16 %v2671, %v2671
  %v2800 = vpack.c.b16 %v2672, %v2672
  %v2801 = vpack.c.b16 %v2673, %v2673
  %v2802 = vpack.c.b16 %v2674, %v2674
  %v2803 = vpack.c.b16 %v2675, %v2675
  %v2804 = vpack.c.b16 %v2676, %v2676
  %v2805 = vpack.c.b16 %v2677, %v2677
  %v2806 = vpack.c.b16 %v2678, %v2678
  %v2807 = vpack.c.b16 %v2679, %v2679
  %v2808 = vpack.c.b16 %v2680, %v2680
  %v2809 = vpack.c.b16 %v2681, %v2681
  %v2810 = vpack.c.b16 %v2682, %v2682
  %v2811 = vpack.c.b16 %v2683, %v2683
  %v2812 = vpack.c.b16 %v2684, %v2684
  %v2813 = vpack.c.b16 %v2685, %v2685
  %v2814 = vpack.c.b16 %v2686, %v2686
  %v2815 = vpack.c.b16 %v2687, %v2687
  %v2816 = vpack.c.b16 %v2688, %v2688
  %v2817 = vpack.c.b16 %v2689, %v2689
  %v2818 = vpack.c.b16 %v2690, %v2690
  %v2819 = vpack.c.b16 %v2691, %v2691
  %v2820 = vpack.c.b16 %v2692, %v2692
  %v2821 = vpack.c.b16 %v2693, %v2693
  %v2822 = vpack.c.b16 %v2694, %v2694
  %v2823 = vpack.c.b16 %v2695, %v2695
  %v2824 = vpack.c.b16 %v2696, %v2696
  %v2825 = vpack.c.b16 %v2697, %v2697
  %v2826 = vpack.c.b16 %v2698, %v2698
  %v2827 = vpack.c.b16 %v2699, %v2699
  %v2828 = vpack.c.b16 %v2700, %v2700
  %v2829 = vpack.c.b16 %v2701, %v2701
  %v2830 = vpack.c.b16 %v2702, %v2702
  %v2831 = vpack.c.b16 %v2703, %v2703
  %v2832 = vpack.c.b16 %v2704, %v2704
  %v2833 = vpack.c.b16 %v2705, %v2705
  %v2834 = vpack.c.b16 %v2706, %v2706
  %v2835 = vpack.c.b16 %v2707, %v2707
  %v2836 = vpack.c.b16 %v2708, %v2708
  %v2837 = vpack.c.b16 %v2709, %v2709
  %v2838 = vpack.c.b16 %v2710, %v2710
  %v2839 = vpack.c.b16 %v2711, %v2711
  %v2840 = vpack.c.b16 %v2712, %v2712
  %v2841 = vpack.c.b16 %v2713, %v2713
  %v2842 = vpack.c.b16 %v2714, %v2714
  %v2843 = vpack.c.b16 %v2715, %v2715
  %v2844 = vpack.c.b16 %v2716, %v2716
  %v2845 = vpack.c.b16 %v2717, %v2717
  %v2846 = vpack.c.b16 %v2718, %v2718
  %v2847 = vpack.c.b16 %v2719, %v2719
  %v2848 = vpack.c.b16 %v2720, %v2720
  %v2849 = vpack.c.b16 %v2721, %v2721
  %v2850 = vpack.c.b16 %v2722, %v2722
  %v2851 = vpack.c.b16 %v2723, %v2723
  %v2852 = vpack.c.b16 %v2724, %v2724
  %v2853 = vpack.c.b16 %v2725, %v2725
  %v2854 = vpack.c.b16 %v2726, %v2726
  %v2855 = vpack.c.b16 %v2727, %v2727
  %v2856 = vpack.c.b16 %v2728, %v2728
  %v2857 = vpack.c.b16 %v2729, %v2729
  %v2858 = vpack.c.b16 %v2730, %v2730
  %v2859 = vpack.c.b16 %v2731, %v2731
  %v2860 = vpack.c.b16 %v2732, %v2732
  %v2861 = vpack.c.b16 %v2733, %v2733
  %v2862 = vpack.c.b16 %v2734, %v2734
  %v2863 = vpack.c.b16 %v2735, %v2735
  %v2864 = vpack.c.b16 %v2736, %v2736
  %v2865 = vpack.c.b16 %v2737, %v2737
  %v2866 = vpack.c.b16 %v2738, %v2738
  %v2867 = vpack.c.b16 %v2739, %v2739
  %v2868 = vpack.c.b16 %v2740, %v2740
  %v2869 = vpack.c.b16 %v2741, %v2741
  %v2870 = vpack.c.b16 %v2742, %v2742
  %v2871 = vpack.c.b16 %v2743, %v2743
  %v2872 = vpack.c.b16 %v2744, %v2744
  %v2873 = vpack.c.b16 %v2745, %v2745
  %v2874 = vpack.c.b16 %v2746, %v2746
  %v2875 = vpack.c.b16 %v2747, %v2747
  %v2876 = vpack.c.b16 %v2748, %v2748
  %v2877 = vpack.c.b16 %v2749, %v2749
  %v2878 = vpack.c.b16 %v2750, %v2750
  %v2879 = vpack.c.b16 %v2751, %v2751
  %v2880 = vpack.c.b16 %v2752, %v2752
  %v2881 = vpack.c.b16 %v2753, %v2753
  %v2882 = vpack.c.b16 %v2754, %v2754
  %v2883 = vpack.c.b16 %v2755, %v2755
  %v2884 = vpack.c.b16 %v2756, %v2756
  %v2885 = vpack.c.b16 %v2757, %v2757
  %v2886 = vpack.c.b16 %v2758, %v2758
  %v2887 = vpack.c.b16 %v2759, %v2759
  %v2888 = vpack.c.b16 %v2760, %v2760
  %v2889 = vpack.c.b16 %v2761, %v2761
  %v2890 = vpack.c.b16 %v2762, %v2762
  %v2891 = vpack.c.b16 %v2763, %v2763
  %v2892 = vpack.c.b16 %v2764, %v2764
  %v2893 = vpack.c.b16 %v2765, %v2765
  %v2894 = vpack.c.b16 %v2766, %v2766
  %v2895 = vpack.c.b16 %v2767, %v2767
  %v2896 = vpack.c.b16 %v2768, %v2768
  %v2897 = vunpack.c.l.b16 %v2769
  %v2898 = vunpack.c.l.b16 %v2770
  %v2899 = vunpack.c.l.b16 %v2771
  %v2900 = vunpack.c.l.b16 %v2772
  %v2901 = vunpack.c.l.b16 %v2773
  %v2902 = vunpack.c.l.b16 %v2774
  %v2903 = vunpack.c.l.b16 %v2775
  %v2904 = vunpack.c.l.b16 %v2776
  %v2905 = vunpack.c.l.b16 %v2777
  %v2906 = vunpack.c.l.b16 %v2778
  %v2907 = vunpack.c.l.b16 %v2779
  %v2908 = vunpack.c.l.b16 %v2780
  %v2909 = vunpack.c.l.b16 %v2781
  %v2910 = vunpack.c.l.b16 %v2782
  %v2911 = vunpack.c.l.b16 %v2783
  %v2912 = vunpack.c.l.b16 %v2784
  %v2913 = vunpack.c.l.b16 %v2785
  %v2914 = vunpack.c.l.b16 %v2786
  %v2915 = vunpack.c.l.b16 %v2787
  %v2916 = vunpack.c.l.b16 %v2788
  %v2917 = vunpack.c.l.b16 %v2789
  %v2918 = vunpack.c.l.b16 %v2790
  %v2919 = vunpack.c.l.b16 %v2791
  %v2920 = vunpack.c.l.b16 %v2792
  %v2921 = vunpack.c.l.b16 %v2793
  %v2922 = vunpack.c.l.b16 %v2794
  %v2923 = vunpack.c.l.b16 %v2795
  %v2924 = vunpack.c.l.b16 %v2796
  %v2925 = vunpack.c.l.b16 %v2797
  %v2926 = vunpack.c.l.b16 %v2798
  %v2927 = vunpack.c.l.b16 %v2799
  %v2928 = vunpack.c.l.b16 %v2800
  %v2929 = vunpack.c.l.b16 %v2801
  %v2930 = vunpack.c.l.b16 %v2802
  %v2931 = vunpack.c.l.b16 %v2803
  %v2932 = vunpack.c.l.b16 %v2804
  %v2933 = vunpack.c.l.b16 %v2805
  %v2934 = vunpack.c.l.b16 %v2806
  %v2935 = vunpack.c.l.b16 %v2807
  %v2936 = vunpack.c.l.b16 %v2808
  %v2937 = vunpack.c.l.b16 %v2809
  %v2938 = vunpack.c.l.b16 %v2810
  %v2939 = vunpack.c.l.b16 %v2811
  %v2940 = vunpack.c.l.b16 %v2812
  %v2941 = vunpack.c.l.b16 %v2813
  %v2942 = vunpack.c.l.b16 %v2814
  %v2943 = vunpack.c.l.b16 %v2815
  %v2944 = vunpack.c.l.b16 %v2816
  %v2945 = vunpack.c.l.b16 %v2817
  %v2946 = vunpack.c.l.b16 %v2818
  %v2947 = vunpack.c.l.b16 %v2819
  %v2948 = vunpack.c.l.b16 %v2820
  %v2949 = vunpack.c.l.b16 %v2821
  %v2950 = vunpack.c.l.b16 %v2822
  %v2951 = vunpack.c.l.b16 %v2823
  %v2952 = vunpack.c.l.b16 %v2824
  %v2953 = vunpack.c.l.b16 %v2825
  %v2954 = vunpack.c.l.b16 %v2826
  %v2955 = vunpack.c.l.b16 %v2827
  %v2956 = vunpack.c.l.b16 %v2828
  %v2957 = vunpack.c.l.b16 %v2829
  %v2958 = vunpack.c.l.b16 %v2830
  %v2959 = vunpack.c.l.b16 %v2831
  %v2960 = vunpack.c.l.b16 %v2832
  %v2961 = vunpack.c.l.b16 %v2833
  %v2962 = vunpack.c.l.b16 %v2834
  %v2963 = vunpack.c.l.b16 %v2835
  %v2964 = vunpack.c.l.b16 %v2836
  %v2965 = vunpack.c.l.b16 %v2837
  %v2966 = vunpack.c.l.b16 %v2838
  %v2967 = vunpack.c.l.b16 %v2839
  %v2968 = vunpack.c.l.b16 %v2840
  %v2969 = vunpack.c.l.b16 %v2841
  %v2970 = vunpack.c.l.b16 %v2842
  %v2971 = vunpack.c.l.b16 %v2843
  %v2972 = vunpack.c.l.b16 %v2844
  %v2973 = vunpack.c.l.b16 %v2845
  %v2974 = vunpack.c.l.b16 %v2846
  %v2975 = vunpack.c.l.b16 %v2847
  %v2976 = vunpack.c.l.b16 %v2848
  %v2977 = vunpack.c.l.b16 %v2849
  %v2978 = vunpack.c.l.b16 %v2850
  %v2979 = vunpack.c.l.b16 %v2851
  %v2980 = vunpack.c.l.b16 %v2852
  %v2981 = vunpack.c.l.b16 %v2853
  %v2982 = vunpack.c.l.b16 %v2854
  %v2983 = vunpack.c.l.b16 %v2855
  %v2984 = vunpack.c.l.b16 %v2856
  %v2985 = vunpack.c.l.b16 %v2857
  %v2986 = vunpack.c.l.b16 %v2858
  %v2987 = vunpack.c.l.b16 %v2859
  %v2988 = vunpack.c.l.b16 %v2860
  %v2989 = vunpack.c.l.b16 %v2861
  %v2990 = vunpack.c.l.b16 %v2862
  %v2991 = vunpack.c.l.b16 %v2863
  %v2992 = vunpack.c.l.b16 %v2864
  %v2993 = vunpack.c.l.b16 %v2865
  %v2994 = vunpack.c.l.b16 %v2866
  %v2995 = vunpack.c.l.b16 %v2867
  %v2996 = vunpack.c.l.b16 %v2868
  %v2997 = vunpack.c.l.b16 %v2869
  %v2998 = vunpack.c.l.b16 %v2870
  %v2999 = vunpack.c.l.b16 %v2871
  %v3000 = vunpack.c.l.b16 %v2872
  %v3001 = vunpack.c.l.b16 %v2873
  %v3002 = vunpack.c.l.b16 %v2874
  %v3003 = vunpack.c.l.b16 %v2875
  %v3004 = vunpack.c.l.b16 %v2876
  %v3005 = vunpack.c.l.b16 %v2877
  %v3006 = vunpack.c.l.b16 %v2878
  %v3007 = vunpack.c.l.b16 %v2879
  %v3008 = vunpack.c.l.b16 %v2880
  %v3009 = vunpack.c.l.b16 %v2881
  %v3010 = vunpack.c.l.b16 %v2882
  %v3011 = vunpack.c.l.b16 %v2883
  %v3012 = vunpack.c.l.b16 %v2884
  %v3013 = vunpack.c.l.b16 %v2885
  %v3014 = vunpack.c.l.b16 %v2886
  %v3015 = vunpack.c.l.b16 %v2887
  %v3016 = vunpack.c.l.b16 %v2888
  %v3017 = vunpack.c.l.b16 %v2889
  %v3018 = vunpack.c.l.b16 %v2890
  %v3019 = vunpack.c.l.b16 %v2891
  %v3020 = vunpack.c.l.b16 %v2892
  %v3021 = vunpack.c.l.b16 %v2893
  %v3022 = vunpack.c.l.b16 %v2894
  %v3023 = vunpack.c.l.b16 %v2895
  %v3024 = vunpack.c.l.b16 %v2896
  %v3025 = vrot.slane %v2899, 7
  %vm3026 = vcmask 1041409
  %v3027 = vsel %vm3026, %v3025, %v2897
  %v3028 = vrot.slane %v2901, 6
  %vm3029 = vcmask 1042434
  %v3030 = vsel %vm3029, %v3028, %v3027
  %v3031 = vrot.slane %v2903, 5
  %vm3032 = vcmask 1043459
  %v3033 = vsel %vm3032, %v3031, %v3030
  %v3034 = vrot.slane %v2905, 4
  %vm3035 = vcmask 1044484
  %v3036 = vsel %vm3035, %v3034, %v3033
  %v3037 = vrot.slane %v2907, 3
  %vm3038 = vcmask 1045509
  %v3039 = vsel %vm3038, %v3037, %v3036
  %v3040 = vrot.slane %v2909, 2
  %vm3041 = vcmask 1046534
  %v3042 = vsel %vm3041, %v3040, %v3039
  %v3043 = vrot.slane %v2911, 1
  %vm3044 = vcmask 1047559
  %v3045 = vsel %vm3044, %v3043, %v3042
  %v3046 = vrot.slane %v2900, 7
  %v3047 = vsel %vm3026, %v3046, %v2898
  %v3048 = vrot.slane %v2902, 6
  %v3049 = vsel %vm3029, %v3048, %v3047
  %v3050 = vrot.slane %v2904, 5
  %v3051 = vsel %vm3032, %v3050, %v3049
  %v3052 = vrot.slane %v2906, 4
  %v3053 = vsel %vm3035, %v3052, %v3051
  %v3054 = vrot.slane %v2908, 3
  %v3055 = vsel %vm3038, %v3054, %v3053
  %v3056 = vrot.slane %v2910, 2
  %v3057 = vsel %vm3041, %v3056, %v3055
  %v3058 = vrot.slane %v2912, 1
  %v3059 = vsel %vm3044, %v3058, %v3057
  %v3060 = vrot.slane %v2915, 7
  %v3061 = vsel %vm3026, %v3060, %v2913
  %v3062 = vrot.slane %v2917, 6
  %v3063 = vsel %vm3029, %v3062, %v3061
  %v3064 = vrot.slane %v2919, 5
  %v3065 = vsel %vm3032, %v3064, %v3063
  %v3066 = vrot.slane %v2921, 4
  %v3067 = vsel %vm3035, %v3066, %v3065
  %v3068 = vrot.slane %v2923, 3
  %v3069 = vsel %vm3038, %v3068, %v3067
  %v3070 = vrot.slane %v2925, 2
  %v3071 = vsel %vm3041, %v3070, %v3069
  %v3072 = vrot.slane %v2927, 1
  %v3073 = vsel %vm3044, %v3072, %v3071
  %v3074 = vrot.slane %v2916, 7
  %v3075 = vsel %vm3026, %v3074, %v2914
  %v3076 = vrot.slane %v2918, 6
  %v3077 = vsel %vm3029, %v3076, %v3075
  %v3078 = vrot.slane %v2920, 5
  %v3079 = vsel %vm3032, %v3078, %v3077
  %v3080 = vrot.slane %v2922, 4
  %v3081 = vsel %vm3035, %v3080, %v3079
  %v3082 = vrot.slane %v2924, 3
  %v3083 = vsel %vm3038, %v3082, %v3081
  %v3084 = vrot.slane %v2926, 2
  %v3085 = vsel %vm3041, %v3084, %v3083
  %v3086 = vrot.slane %v2928, 1
  %v3087 = vsel %vm3044, %v3086, %v3085
  %v3088 = vrot.slane %v2931, 7
  %v3089 = vsel %vm3026, %v3088, %v2929
  %v3090 = vrot.slane %v2933, 6
  %v3091 = vsel %vm3029, %v3090, %v3089
  %v3092 = vrot.slane %v2935, 5
  %v3093 = vsel %vm3032, %v3092, %v3091
  %v3094 = vrot.slane %v2937, 4
  %v3095 = vsel %vm3035, %v3094, %v3093
  %v3096 = vrot.slane %v2939, 3
  %v3097 = vsel %vm3038, %v3096, %v3095
  %v3098 = vrot.slane %v2941, 2
  %v3099 = vsel %vm3041, %v3098, %v3097
  %v3100 = vrot.slane %v2943, 1
  %v3101 = vsel %vm3044, %v3100, %v3099
  %v3102 = vrot.slane %v2932, 7
  %v3103 = vsel %vm3026, %v3102, %v2930
  %v3104 = vrot.slane %v2934, 6
  %v3105 = vsel %vm3029, %v3104, %v3103
  %v3106 = vrot.slane %v2936, 5
  %v3107 = vsel %vm3032, %v3106, %v3105
  %v3108 = vrot.slane %v2938, 4
  %v3109 = vsel %vm3035, %v3108, %v3107
  %v3110 = vrot.slane %v2940, 3
  %v3111 = vsel %vm3038, %v3110, %v3109
  %v3112 = vrot.slane %v2942, 2
  %v3113 = vsel %vm3041, %v3112, %v3111
  %v3114 = vrot.slane %v2944, 1
  %v3115 = vsel %vm3044, %v3114, %v3113
  %v3116 = vrot.slane %v2947, 7
  %v3117 = vsel %vm3026, %v3116, %v2945
  %v3118 = vrot.slane %v2949, 6
  %v3119 = vsel %vm3029, %v3118, %v3117
  %v3120 = vrot.slane %v2951, 5
  %v3121 = vsel %vm3032, %v3120, %v3119
  %v3122 = vrot.slane %v2953, 4
  %v3123 = vsel %vm3035, %v3122, %v3121
  %v3124 = vrot.slane %v2955, 3
  %v3125 = vsel %vm3038, %v3124, %v3123
  %v3126 = vrot.slane %v2957, 2
  %v3127 = vsel %vm3041, %v3126, %v3125
  %v3128 = vrot.slane %v2959, 1
  %v3129 = vsel %vm3044, %v3128, %v3127
  %v3130 = vrot.slane %v2948, 7
  %v3131 = vsel %vm3026, %v3130, %v2946
  %v3132 = vrot.slane %v2950, 6
  %v3133 = vsel %vm3029, %v3132, %v3131
  %v3134 = vrot.slane %v2952, 5
  %v3135 = vsel %vm3032, %v3134, %v3133
  %v3136 = vrot.slane %v2954, 4
  %v3137 = vsel %vm3035, %v3136, %v3135
  %v3138 = vrot.slane %v2956, 3
  %v3139 = vsel %vm3038, %v3138, %v3137
  %v3140 = vrot.slane %v2958, 2
  %v3141 = vsel %vm3041, %v3140, %v3139
  %v3142 = vrot.slane %v2960, 1
  %v3143 = vsel %vm3044, %v3142, %v3141
  %v3144 = vrot.slane %v2963, 7
  %v3145 = vsel %vm3026, %v3144, %v2961
  %v3146 = vrot.slane %v2965, 6
  %v3147 = vsel %vm3029, %v3146, %v3145
  %v3148 = vrot.slane %v2967, 5
  %v3149 = vsel %vm3032, %v3148, %v3147
  %v3150 = vrot.slane %v2969, 4
  %v3151 = vsel %vm3035, %v3150, %v3149
  %v3152 = vrot.slane %v2971, 3
  %v3153 = vsel %vm3038, %v3152, %v3151
  %v3154 = vrot.slane %v2973, 2
  %v3155 = vsel %vm3041, %v3154, %v3153
  %v3156 = vrot.slane %v2975, 1
  %v3157 = vsel %vm3044, %v3156, %v3155
  %v3158 = vrot.slane %v2964, 7
  %v3159 = vsel %vm3026, %v3158, %v2962
  %v3160 = vrot.slane %v2966, 6
  %v3161 = vsel %vm3029, %v3160, %v3159
  %v3162 = vrot.slane %v2968, 5
  %v3163 = vsel %vm3032, %v3162, %v3161
  %v3164 = vrot.slane %v2970, 4
  %v3165 = vsel %vm3035, %v3164, %v3163
  %v3166 = vrot.slane %v2972, 3
  %v3167 = vsel %vm3038, %v3166, %v3165
  %v3168 = vrot.slane %v2974, 2
  %v3169 = vsel %vm3041, %v3168, %v3167
  %v3170 = vrot.slane %v2976, 1
  %v3171 = vsel %vm3044, %v3170, %v3169
  %v3172 = vrot.slane %v2979, 7
  %v3173 = vsel %vm3026, %v3172, %v2977
  %v3174 = vrot.slane %v2981, 6
  %v3175 = vsel %vm3029, %v3174, %v3173
  %v3176 = vrot.slane %v2983, 5
  %v3177 = vsel %vm3032, %v3176, %v3175
  %v3178 = vrot.slane %v2985, 4
  %v3179 = vsel %vm3035, %v3178, %v3177
  %v3180 = vrot.slane %v2987, 3
  %v3181 = vsel %vm3038, %v3180, %v3179
  %v3182 = vrot.slane %v2989, 2
  %v3183 = vsel %vm3041, %v3182, %v3181
  %v3184 = vrot.slane %v2991, 1
  %v3185 = vsel %vm3044, %v3184, %v3183
  %v3186 = vrot.slane %v2980, 7
  %v3187 = vsel %vm3026, %v3186, %v2978
  %v3188 = vrot.slane %v2982, 6
  %v3189 = vsel %vm3029, %v3188, %v3187
  %v3190 = vrot.slane %v2984, 5
  %v3191 = vsel %vm3032, %v3190, %v3189
  %v3192 = vrot.slane %v2986, 4
  %v3193 = vsel %vm3035, %v3192, %v3191
  %v3194 = vrot.slane %v2988, 3
  %v3195 = vsel %vm3038, %v3194, %v3193
  %v3196 = vrot.slane %v2990, 2
  %v3197 = vsel %vm3041, %v3196, %v3195
  %v3198 = vrot.slane %v2992, 1
  %v3199 = vsel %vm3044, %v3198, %v3197
  %v3200 = vrot.slane %v2995, 7
  %v3201 = vsel %vm3026, %v3200, %v2993
  %v3202 = vrot.slane %v2997, 6
  %v3203 = vsel %vm3029, %v3202, %v3201
  %v3204 = vrot.slane %v2999, 5
  %v3205 = vsel %vm3032, %v3204, %v3203
  %v3206 = vrot.slane %v3001, 4
  %v3207 = vsel %vm3035, %v3206, %v3205
  %v3208 = vrot.slane %v3003, 3
  %v3209 = vsel %vm3038, %v3208, %v3207
  %v3210 = vrot.slane %v3005, 2
  %v3211 = vsel %vm3041, %v3210, %v3209
  %v3212 = vrot.slane %v3007, 1
  %v3213 = vsel %vm3044, %v3212, %v3211
  %v3214 = vrot.slane %v2996, 7
  %v3215 = vsel %vm3026, %v3214, %v2994
  %v3216 = vrot.slane %v2998, 6
  %v3217 = vsel %vm3029, %v3216, %v3215
  %v3218 = vrot.slane %v3000, 5
  %v3219 = vsel %vm3032, %v3218, %v3217
  %v3220 = vrot.slane %v3002, 4
  %v3221 = vsel %vm3035, %v3220, %v3219
  %v3222 = vrot.slane %v3004, 3
  %v3223 = vsel %vm3038, %v3222, %v3221
  %v3224 = vrot.slane %v3006, 2
  %v3225 = vsel %vm3041, %v3224, %v3223
  %v3226 = vrot.slane %v3008, 1
  %v3227 = vsel %vm3044, %v3226, %v3225
  %v3228 = vrot.slane %v3011, 7
  %v3229 = vsel %vm3026, %v3228, %v3009
  %v3230 = vrot.slane %v3013, 6
  %v3231 = vsel %vm3029, %v3230, %v3229
  %v3232 = vrot.slane %v3015, 5
  %v3233 = vsel %vm3032, %v3232, %v3231
  %v3234 = vrot.slane %v3017, 4
  %v3235 = vsel %vm3035, %v3234, %v3233
  %v3236 = vrot.slane %v3019, 3
  %v3237 = vsel %vm3038, %v3236, %v3235
  %v3238 = vrot.slane %v3021, 2
  %v3239 = vsel %vm3041, %v3238, %v3237
  %v3240 = vrot.slane %v3023, 1
  %v3241 = vsel %vm3044, %v3240, %v3239
  %v3242 = vrot.slane %v3012, 7
  %v3243 = vsel %vm3026, %v3242, %v3010
  %v3244 = vrot.slane %v3014, 6
  %v3245 = vsel %vm3029, %v3244, %v3243
  %v3246 = vrot.slane %v3016, 5
  %v3247 = vsel %vm3032, %v3246, %v3245
  %v3248 = vrot.slane %v3018, 4
  %v3249 = vsel %vm3035, %v3248, %v3247
  %v3250 = vrot.slane %v3020, 3
  %v3251 = vsel %vm3038, %v3250, %v3249
  %v3252 = vrot.slane %v3022, 2
  %v3253 = vsel %vm3041, %v3252, %v3251
  %v3254 = vrot.slane %v3024, 1
  %v3255 = vsel %vm3044, %v3254, %v3253
  %v3256 = vpack.c.b16 %v3073, %v3045
  %v3257 = vpack.c.b16 %v3087, %v3059
  %v3258 = vpack.c.b16 %v3129, %v3101
  %v3259 = vpack.c.b16 %v3143, %v3115
  %v3260 = vpack.c.b16 %v3185, %v3157
  %v3261 = vpack.c.b16 %v3199, %v3171
  %v3262 = vpack.c.b16 %v3241, %v3213
  %v3263 = vpack.c.b16 %v3255, %v3227
  %v3336 = vunpack.c.l.b16 %v2513
  %v3337 = vunpack.c.h.b16 %v2513
  %v3338 = vunpack.c.l.b16 %v2514
  %v3339 = vunpack.c.h.b16 %v2514
  %v3340 = vunpack.c.l.b16 %v2515
  %v3341 = vunpack.c.h.b16 %v2515
  %v3342 = vunpack.c.l.b16 %v2516
  %v3343 = vunpack.c.h.b16 %v2516
  %v3344 = vunpack.c.l.b16 %v2517
  %v3345 = vunpack.c.h.b16 %v2517
  %v3346 = vunpack.c.l.b16 %v2518
  %v3347 = vunpack.c.h.b16 %v2518
  %v3348 = vunpack.c.l.b16 %v2519
  %v3349 = vunpack.c.h.b16 %v2519
  %v3350 = vunpack.c.l.b16 %v2520
  %v3351 = vunpack.c.h.b16 %v2520
  %v3352 = vunpack.c.l.b16 %v2521
  %v3353 = vunpack.c.h.b16 %v2521
  %v3354 = vunpack.c.l.b16 %v2522
  %v3355 = vunpack.c.h.b16 %v2522
  %v3356 = vunpack.c.l.b16 %v2523
  %v3357 = vunpack.c.h.b16 %v2523
  %v3358 = vunpack.c.l.b16 %v2524
  %v3359 = vunpack.c.h.b16 %v2524
  %v3360 = vunpack.c.l.b16 %v2525
  %v3361 = vunpack.c.h.b16 %v2525
  %v3362 = vunpack.c.l.b16 %v2526
  %v3363 = vunpack.c.h.b16 %v2526
  %v3364 = vunpack.c.l.b16 %v2527
  %v3365 = vunpack.c.h.b16 %v2527
  %v3366 = vunpack.c.l.b16 %v2528
  %v3367 = vunpack.c.h.b16 %v2528
  %v3368 = vunpack.c.l.b16 %v2529
  %v3369 = vunpack.c.h.b16 %v2529
  %v3370 = vunpack.c.l.b16 %v2530
  %v3371 = vunpack.c.h.b16 %v2530
  %v3372 = vunpack.c.l.b16 %v2531
  %v3373 = vunpack.c.h.b16 %v2531
  %v3374 = vunpack.c.l.b16 %v2532
  %v3375 = vunpack.c.h.b16 %v2532
  %v3376 = vunpack.c.l.b16 %v2533
  %v3377 = vunpack.c.h.b16 %v2533
  %v3378 = vunpack.c.l.b16 %v2534
  %v3379 = vunpack.c.h.b16 %v2534
  %v3380 = vunpack.c.l.b16 %v2535
  %v3381 = vunpack.c.h.b16 %v2535
  %v3382 = vunpack.c.l.b16 %v2536
  %v3383 = vunpack.c.h.b16 %v2536
  %v3384 = vunpack.c.l.b16 %v2537
  %v3385 = vunpack.c.h.b16 %v2537
  %v3386 = vunpack.c.l.b16 %v2538
  %v3387 = vunpack.c.h.b16 %v2538
  %v3388 = vunpack.c.l.b16 %v2539
  %v3389 = vunpack.c.h.b16 %v2539
  %v3390 = vunpack.c.l.b16 %v2540
  %v3391 = vunpack.c.h.b16 %v2540
  %v3392 = vunpack.c.l.b16 %v2541
  %v3393 = vunpack.c.h.b16 %v2541
  %v3394 = vunpack.c.l.b16 %v2542
  %v3395 = vunpack.c.h.b16 %v2542
  %v3396 = vunpack.c.l.b16 %v2543
  %v3397 = vunpack.c.h.b16 %v2543
  %v3398 = vunpack.c.l.b16 %v2544
  %v3399 = vunpack.c.h.b16 %v2544
  %v3400 = vunpack.c.l.b16 %v2545
  %v3401 = vunpack.c.h.b16 %v2545
  %v3402 = vunpack.c.l.b16 %v2546
  %v3403 = vunpack.c.h.b16 %v2546
  %v3404 = vunpack.c.l.b16 %v2547
  %v3405 = vunpack.c.h.b16 %v2547
  %v3406 = vunpack.c.l.b16 %v2548
  %v3407 = vunpack.c.h.b16 %v2548
  %v3408 = vunpack.c.l.b16 %v2549
  %v3409 = vunpack.c.h.b16 %v2549
  %v3410 = vunpack.c.l.b16 %v2550
  %v3411 = vunpack.c.h.b16 %v2550
  %v3412 = vunpack.c.l.b16 %v2551
  %v3413 = vunpack.c.h.b16 %v2551
  %v3414 = vunpack.c.l.b16 %v2552
  %v3415 = vunpack.c.h.b16 %v2552
  %v3416 = vunpack.c.l.b16 %v2553
  %v3417 = vunpack.c.h.b16 %v2553
  %v3418 = vunpack.c.l.b16 %v2554
  %v3419 = vunpack.c.h.b16 %v2554
  %v3420 = vunpack.c.l.b16 %v2555
  %v3421 = vunpack.c.h.b16 %v2555
  %v3422 = vunpack.c.l.b16 %v2556
  %v3423 = vunpack.c.h.b16 %v2556
  %v3424 = vunpack.c.l.b16 %v2557
  %v3425 = vunpack.c.h.b16 %v2557
  %v3426 = vunpack.c.l.b16 %v2558
  %v3427 = vunpack.c.h.b16 %v2558
  %v3428 = vunpack.c.l.b16 %v2559
  %v3429 = vunpack.c.h.b16 %v2559
  %v3430 = vunpack.c.l.b16 %v2560
  %v3431 = vunpack.c.h.b16 %v2560
  %v3432 = vunpack.c.l.b16 %v2561
  %v3433 = vunpack.c.h.b16 %v2561
  %v3434 = vunpack.c.l.b16 %v2562
  %v3435 = vunpack.c.h.b16 %v2562
  %v3436 = vunpack.c.l.b16 %v2563
  %v3437 = vunpack.c.h.b16 %v2563
  %v3438 = vunpack.c.l.b16 %v2564
  %v3439 = vunpack.c.h.b16 %v2564
  %v3440 = vunpack.c.l.b16 %v2565
  %v3441 = vunpack.c.h.b16 %v2565
  %v3442 = vunpack.c.l.b16 %v2566
  %v3443 = vunpack.c.h.b16 %v2566
  %v3444 = vunpack.c.l.b16 %v2567
  %v3445 = vunpack.c.h.b16 %v2567
  %v3446 = vunpack.c.l.b16 %v2568
  %v3447 = vunpack.c.h.b16 %v2568
  %v3448 = vunpack.c.l.b16 %v2569
  %v3449 = vunpack.c.h.b16 %v2569
  %v3450 = vunpack.c.l.b16 %v2570
  %v3451 = vunpack.c.h.b16 %v2570
  %v3452 = vunpack.c.l.b16 %v2571
  %v3453 = vunpack.c.h.b16 %v2571
  %v3454 = vunpack.c.l.b16 %v2572
  %v3455 = vunpack.c.h.b16 %v2572
  %v3456 = vunpack.c.l.b16 %v2573
  %v3457 = vunpack.c.h.b16 %v2573
  %v3458 = vunpack.c.l.b16 %v2574
  %v3459 = vunpack.c.h.b16 %v2574
  %v3460 = vunpack.c.l.b16 %v2575
  %v3461 = vunpack.c.h.b16 %v2575
  %v3462 = vunpack.c.l.b16 %v2576
  %v3463 = vunpack.c.h.b16 %v2576
  %v3464 = vpack.c.b16 %v3340, %v3336
  %v3465 = vpack.c.b16 %v3341, %v3337
  %v3466 = vpack.c.b16 %v3342, %v3338
  %v3467 = vpack.c.b16 %v3343, %v3339
  %v3468 = vpack.c.b16 %v3348, %v3344
  %v3469 = vpack.c.b16 %v3349, %v3345
  %v3470 = vpack.c.b16 %v3350, %v3346
  %v3471 = vpack.c.b16 %v3351, %v3347
  %v3472 = vpack.c.b16 %v3356, %v3352
  %v3473 = vpack.c.b16 %v3357, %v3353
  %v3474 = vpack.c.b16 %v3358, %v3354
  %v3475 = vpack.c.b16 %v3359, %v3355
  %v3476 = vpack.c.b16 %v3364, %v3360
  %v3477 = vpack.c.b16 %v3365, %v3361
  %v3478 = vpack.c.b16 %v3366, %v3362
  %v3479 = vpack.c.b16 %v3367, %v3363
  %v3480 = vpack.c.b16 %v3372, %v3368
  %v3481 = vpack.c.b16 %v3373, %v3369
  %v3482 = vpack.c.b16 %v3374, %v3370
  %v3483 = vpack.c.b16 %v3375, %v3371
  %v3484 = vpack.c.b16 %v3380, %v3376
  %v3485 = vpack.c.b16 %v3381, %v3377
  %v3486 = vpack.c.b16 %v3382, %v3378
  %v3487 = vpack.c.b16 %v3383, %v3379
  %v3488 = vpack.c.b16 %v3388, %v3384
  %v3489 = vpack.c.b16 %v3389, %v3385
  %v3490 = vpack.c.b16 %v3390, %v3386
  %v3491 = vpack.c.b16 %v3391, %v3387
  %v3492 = vpack.c.b16 %v3396, %v3392
  %v3493 = vpack.c.b16 %v3397, %v3393
  %v3494 = vpack.c.b16 %v3398, %v3394
  %v3495 = vpack.c.b16 %v3399, %v3395
  %v3496 = vpack.c.b16 %v3404, %v3400
  %v3497 = vpack.c.b16 %v3405, %v3401
  %v3498 = vpack.c.b16 %v3406, %v3402
  %v3499 = vpack.c.b16 %v3407, %v3403
  %v3500 = vpack.c.b16 %v3412, %v3408
  %v3501 = vpack.c.b16 %v3413, %v3409
  %v3502 = vpack.c.b16 %v3414, %v3410
  %v3503 = vpack.c.b16 %v3415, %v3411
  %v3504 = vpack.c.b16 %v3420, %v3416
  %v3505 = vpack.c.b16 %v3421, %v3417
  %v3506 = vpack.c.b16 %v3422, %v3418
  %v3507 = vpack.c.b16 %v3423, %v3419
  %v3508 = vpack.c.b16 %v3428, %v3424
  %v3509 = vpack.c.b16 %v3429, %v3425
  %v3510 = vpack.c.b16 %v3430, %v3426
  %v3511 = vpack.c.b16 %v3431, %v3427
  %v3512 = vpack.c.b16 %v3436, %v3432
  %v3513 = vpack.c.b16 %v3437, %v3433
  %v3514 = vpack.c.b16 %v3438, %v3434
  %v3515 = vpack.c.b16 %v3439, %v3435
  %v3516 = vpack.c.b16 %v3444, %v3440
  %v3517 = vpack.c.b16 %v3445, %v3441
  %v3518 = vpack.c.b16 %v3446, %v3442
  %v3519 = vpack.c.b16 %v3447, %v3443
  %v3520 = vpack.c.b16 %v3452, %v3448
  %v3521 = vpack.c.b16 %v3453, %v3449
  %v3522 = vpack.c.b16 %v3454, %v3450
  %v3523 = vpack.c.b16 %v3455, %v3451
  %v3524 = vpack.c.b16 %v3460, %v3456
  %v3525 = vpack.c.b16 %v3461, %v3457
  %v3526 = vpack.c.b16 %v3462, %v3458
  %v3527 = vpack.c.b16 %v3463, %v3459
  %3592 = vmatpush.bf16.msra.mxu0 %v3492
  %3593 = vmatpush.bf16.msra.mxu0 %v3488
  %3594 = vmatpush.bf16.msra.mxu0 %v3484
  %3595 = vmatpush.bf16.msra.mxu0 %v3480
  %3596 = vmatpush.bf16.msra.mxu0 %v3476
  %3597 = vmatpush.bf16.msra.mxu0 %v3472
  %3598 = vmatpush.bf16.msra.mxu0 %v3468
  %3599 = vmatpush.bf16.msra.mxu0 %v3464
  %3600 = vmatmul.bf16.gmra.mxu0 %v3256
  %v3601 = vpop.f32.mrf.mxu0
  %v3602 = vadd.f32 0.0, %v3601
  %v3603 = vpop.f32.mrf.mxu0
  %v3604 = vadd.f32 0.0, %v3603
  %3605 = vmatmul.bf16.gmra.mxu0 %v3258
  %v3606 = vpop.f32.mrf.mxu0
  %v3607 = vadd.f32 0.0, %v3606
  %v3608 = vpop.f32.mrf.mxu0
  %v3609 = vadd.f32 0.0, %v3608
  %3610 = vmatmul.bf16.gmra.mxu0 %v3260
  %v3611 = vpop.f32.mrf.mxu0
  %v3612 = vadd.f32 0.0, %v3611
  %v3613 = vpop.f32.mrf.mxu0
  %v3614 = vadd.f32 0.0, %v3613
  %3615 = vmatmul.bf16.gmra.mxu0 %v3262
  %v3616 = vpop.f32.mrf.mxu0
  %v3617 = vadd.f32 0.0, %v3616
  %v3618 = vpop.f32.mrf.mxu0
  %v3619 = vadd.f32 0.0, %v3618
  %3620 = vdwg.mxu0
  %3621 = vmatpush.bf16.msra.mxu0 %v3524
  %3622 = vmatpush.bf16.msra.mxu0 %v3520
  %3623 = vmatpush.bf16.msra.mxu0 %v3516
  %3624 = vmatpush.bf16.msra.mxu0 %v3512
  %3625 = vmatpush.bf16.msra.mxu0 %v3508
  %3626 = vmatpush.bf16.msra.mxu0 %v3504
  %3627 = vmatpush.bf16.msra.mxu0 %v3500
  %3628 = vmatpush.bf16.msra.mxu0 %v3496
  %3629 = vmatmul.bf16.gmra.mxu0 %v3257
  %v3630 = vpop.f32.mrf.mxu0
  %v3631 = vadd.f32 %v3602, %v3630
  %v3632 = vpop.f32.mrf.mxu0
  %v3633 = vadd.f32 %v3604, %v3632
  %3634 = vmatmul.bf16.gmra.mxu0 %v3259
  %v3635 = vpop.f32.mrf.mxu0
  %v3636 = vadd.f32 %v3607, %v3635
  %v3637 = vpop.f32.mrf.mxu0
  %v3638 = vadd.f32 %v3609, %v3637
  %3639 = vmatmul.bf16.gmra.mxu0 %v3261
  %v3640 = vpop.f32.mrf.mxu0
  %v3641 = vadd.f32 %v3612, %v3640
  %v3642 = vpop.f32.mrf.mxu0
  %v3643 = vadd.f32 %v3614, %v3642
  %3644 = vmatmul.bf16.gmra.mxu0 %v3263
  %v3645 = vpop.f32.mrf.mxu0
  %v3646 = vadd.f32 %v3617, %v3645
  %v3647 = vpop.f32.mrf.mxu0
  %v3648 = vadd.f32 %v3619, %v3647
  %3649 = vdwg.mxu0
  %3650 = vmatpush.bf16.msra.mxu0 %v3493
  %3651 = vmatpush.bf16.msra.mxu0 %v3489
  %3652 = vmatpush.bf16.msra.mxu0 %v3485
  %3653 = vmatpush.bf16.msra.mxu0 %v3481
  %3654 = vmatpush.bf16.msra.mxu0 %v3477
  %3655 = vmatpush.bf16.msra.mxu0 %v3473
  %3656 = vmatpush.bf16.msra.mxu0 %v3469
  %3657 = vmatpush.bf16.msra.mxu0 %v3465
  %3658 = vmatmul.bf16.gmra.mxu0 %v3256
  %v3659 = vpop.f32.mrf.mxu0
  %v3660 = vadd.f32 0.0, %v3659
  %v3661 = vpop.f32.mrf.mxu0
  %v3662 = vadd.f32 0.0, %v3661
  %3663 = vmatmul.bf16.gmra.mxu0 %v3258
  %v3664 = vpop.f32.mrf.mxu0
  %v3665 = vadd.f32 0.0, %v3664
  %v3666 = vpop.f32.mrf.mxu0
  %v3667 = vadd.f32 0.0, %v3666
  %3668 = vmatmul.bf16.gmra.mxu0 %v3260
  %v3669 = vpop.f32.mrf.mxu0
  %v3670 = vadd.f32 0.0, %v3669
  %v3671 = vpop.f32.mrf.mxu0
  %v3672 = vadd.f32 0.0, %v3671
  %3673 = vmatmul.bf16.gmra.mxu0 %v3262
  %v3674 = vpop.f32.mrf.mxu0
  %v3675 = vadd.f32 0.0, %v3674
  %v3676 = vpop.f32.mrf.mxu0
  %v3677 = vadd.f32 0.0, %v3676
  %3678 = vdwg.mxu0
  %3679 = vmatpush.bf16.msra.mxu0 %v3525
  %3680 = vmatpush.bf16.msra.mxu0 %v3521
  %3681 = vmatpush.bf16.msra.mxu0 %v3517
  %3682 = vmatpush.bf16.msra.mxu0 %v3513
  %3683 = vmatpush.bf16.msra.mxu0 %v3509
  %3684 = vmatpush.bf16.msra.mxu0 %v3505
  %3685 = vmatpush.bf16.msra.mxu0 %v3501
  %3686 = vmatpush.bf16.msra.mxu0 %v3497
  %3687 = vmatmul.bf16.gmra.mxu0 %v3257
  %v3688 = vpop.f32.mrf.mxu0
  %v3689 = vadd.f32 %v3660, %v3688
  %v3690 = vpop.f32.mrf.mxu0
  %v3691 = vadd.f32 %v3662, %v3690
  %3692 = vmatmul.bf16.gmra.mxu0 %v3259
  %v3693 = vpop.f32.mrf.mxu0
  %v3694 = vadd.f32 %v3665, %v3693
  %v3695 = vpop.f32.mrf.mxu0
  %v3696 = vadd.f32 %v3667, %v3695
  %3697 = vmatmul.bf16.gmra.mxu0 %v3261
  %v3698 = vpop.f32.mrf.mxu0
  %v3699 = vadd.f32 %v3670, %v3698
  %v3700 = vpop.f32.mrf.mxu0
  %v3701 = vadd.f32 %v3672, %v3700
  %3702 = vmatmul.bf16.gmra.mxu0 %v3263
  %v3703 = vpop.f32.mrf.mxu0
  %v3704 = vadd.f32 %v3675, %v3703
  %v3705 = vpop.f32.mrf.mxu0
  %v3706 = vadd.f32 %v3677, %v3705
  %3707 = vdwg.mxu0
  %3708 = vmatpush.bf16.msra.mxu0 %v3494
  %3709 = vmatpush.bf16.msra.mxu0 %v3490
  %3710 = vmatpush.bf16.msra.mxu0 %v3486
  %3711 = vmatpush.bf16.msra.mxu0 %v3482
  %3712 = vmatpush.bf16.msra.mxu0 %v3478
  %3713 = vmatpush.bf16.msra.mxu0 %v3474
  %3714 = vmatpush.bf16.msra.mxu0 %v3470
  %3715 = vmatpush.bf16.msra.mxu0 %v3466
  %3716 = vmatmul.bf16.gmra.mxu0 %v3256
  %v3717 = vpop.f32.mrf.mxu0
  %v3718 = vadd.f32 0.0, %v3717
  %v3719 = vpop.f32.mrf.mxu0
  %v3720 = vadd.f32 0.0, %v3719
  %3721 = vmatmul.bf16.gmra.mxu0 %v3258
  %v3722 = vpop.f32.mrf.mxu0
  %v3723 = vadd.f32 0.0, %v3722
  %v3724 = vpop.f32.mrf.mxu0
  %v3725 = vadd.f32 0.0, %v3724
  %3726 = vmatmul.bf16.gmra.mxu0 %v3260
  %v3727 = vpop.f32.mrf.mxu0
  %v3728 = vadd.f32 0.0, %v3727
  %v3729 = vpop.f32.mrf.mxu0
  %v3730 = vadd.f32 0.0, %v3729
  %3731 = vmatmul.bf16.gmra.mxu0 %v3262
  %v3732 = vpop.f32.mrf.mxu0
  %v3733 = vadd.f32 0.0, %v3732
  %v3734 = vpop.f32.mrf.mxu0
  %v3735 = vadd.f32 0.0, %v3734
  %3736 = vdwg.mxu0
  %3737 = vmatpush.bf16.msra.mxu0 %v3526
  %3738 = vmatpush.bf16.msra.mxu0 %v3522
  %3739 = vmatpush.bf16.msra.mxu0 %v3518
  %3740 = vmatpush.bf16.msra.mxu0 %v3514
  %3741 = vmatpush.bf16.msra.mxu0 %v3510
  %3742 = vmatpush.bf16.msra.mxu0 %v3506
  %3743 = vmatpush.bf16.msra.mxu0 %v3502
  %3744 = vmatpush.bf16.msra.mxu0 %v3498
  %3745 = vmatmul.bf16.gmra.mxu0 %v3257
  %v3746 = vpop.f32.mrf.mxu0
  %v3747 = vadd.f32 %v3718, %v3746
  %v3748 = vpop.f32.mrf.mxu0
  %v3749 = vadd.f32 %v3720, %v3748
  %3750 = vmatmul.bf16.gmra.mxu0 %v3259
  %v3751 = vpop.f32.mrf.mxu0
  %v3752 = vadd.f32 %v3723, %v3751
  %v3753 = vpop.f32.mrf.mxu0
  %v3754 = vadd.f32 %v3725, %v3753
  %3755 = vmatmul.bf16.gmra.mxu0 %v3261
  %v3756 = vpop.f32.mrf.mxu0
  %v3757 = vadd.f32 %v3728, %v3756
  %v3758 = vpop.f32.mrf.mxu0
  %v3759 = vadd.f32 %v3730, %v3758
  %3760 = vmatmul.bf16.gmra.mxu0 %v3263
  %v3761 = vpop.f32.mrf.mxu0
  %v3762 = vadd.f32 %v3733, %v3761
  %v3763 = vpop.f32.mrf.mxu0
  %v3764 = vadd.f32 %v3735, %v3763
  %3765 = vdwg.mxu0
  %3766 = vmatpush.bf16.msra.mxu0 %v3495
  %3767 = vmatpush.bf16.msra.mxu0 %v3491
  %3768 = vmatpush.bf16.msra.mxu0 %v3487
  %3769 = vmatpush.bf16.msra.mxu0 %v3483
  %3770 = vmatpush.bf16.msra.mxu0 %v3479
  %3771 = vmatpush.bf16.msra.mxu0 %v3475
  %3772 = vmatpush.bf16.msra.mxu0 %v3471
  %3773 = vmatpush.bf16.msra.mxu0 %v3467
  %3774 = vmatmul.bf16.gmra.mxu0 %v3256
  %v3775 = vpop.f32.mrf.mxu0
  %v3776 = vadd.f32 0.0, %v3775
  %v3777 = vpop.f32.mrf.mxu0
  %v3778 = vadd.f32 0.0, %v3777
  %3779 = vmatmul.bf16.gmra.mxu0 %v3258
  %v3780 = vpop.f32.mrf.mxu0
  %v3781 = vadd.f32 0.0, %v3780
  %v3782 = vpop.f32.mrf.mxu0
  %v3783 = vadd.f32 0.0, %v3782
  %3784 = vmatmul.bf16.gmra.mxu0 %v3260
  %v3785 = vpop.f32.mrf.mxu0
  %v3786 = vadd.f32 0.0, %v3785
  %v3787 = vpop.f32.mrf.mxu0
  %v3788 = vadd.f32 0.0, %v3787
  %3789 = vmatmul.bf16.gmra.mxu0 %v3262
  %v3790 = vpop.f32.mrf.mxu0
  %v3791 = vadd.f32 0.0, %v3790
  %v3792 = vpop.f32.mrf.mxu0
  %v3793 = vadd.f32 0.0, %v3792
  %3794 = vdwg.mxu0
  %3795 = vmatpush.bf16.msra.mxu0 %v3527
  %3796 = vmatpush.bf16.msra.mxu0 %v3523
  %3797 = vmatpush.bf16.msra.mxu0 %v3519
  %3798 = vmatpush.bf16.msra.mxu0 %v3515
  %3799 = vmatpush.bf16.msra.mxu0 %v3511
  %3800 = vmatpush.bf16.msra.mxu0 %v3507
  %3801 = vmatpush.bf16.msra.mxu0 %v3503
  %3802 = vmatpush.bf16.msra.mxu0 %v3499
  %3803 = vmatmul.bf16.gmra.mxu0 %v3257
  %v3804 = vpop.f32.mrf.mxu0
  %v3805 = vadd.f32 %v3776, %v3804
  %v3806 = vpop.f32.mrf.mxu0
  %v3807 = vadd.f32 %v3778, %v3806
  %3808 = vmatmul.bf16.gmra.mxu0 %v3259
  %v3809 = vpop.f32.mrf.mxu0
  %v3810 = vadd.f32 %v3781, %v3809
  %v3811 = vpop.f32.mrf.mxu0
  %v3812 = vadd.f32 %v3783, %v3811
  %3813 = vmatmul.bf16.gmra.mxu0 %v3261
  %v3814 = vpop.f32.mrf.mxu0
  %v3815 = vadd.f32 %v3786, %v3814
  %v3816 = vpop.f32.mrf.mxu0
  %v3817 = vadd.f32 %v3788, %v3816
  %3818 = vmatmul.bf16.gmra.mxu0 %v3263
  %v3819 = vpop.f32.mrf.mxu0
  %v3820 = vadd.f32 %v3791, %v3819
  %v3821 = vpop.f32.mrf.mxu0
  %v3822 = vadd.f32 %v3793, %v3821
  %3823 = vdwg.mxu0
  %v3832 = vunpack.c.l.b16 %v2360
  %v3833 = vunpack.c.h.b16 %v2360
  %v3834 = vunpack.c.l.b16 %v2371
  %v3835 = vunpack.c.h.b16 %v2371
  %v3836 = vunpack.c.l.b16 %v2382
  %v3837 = vunpack.c.h.b16 %v2382
  %v3838 = vunpack.c.l.b16 %v2393
  %v3839 = vunpack.c.h.b16 %v2393
  %v3840 = vunpack.c.l.b16 %v2404
  %v3841 = vunpack.c.h.b16 %v2404
  %v3842 = vunpack.c.l.b16 %v2415
  %v3843 = vunpack.c.h.b16 %v2415
  %v3844 = vunpack.c.l.b16 %v2426
  %v3845 = vunpack.c.h.b16 %v2426
  %v3846 = vunpack.c.l.b16 %v2437
  %v3847 = vunpack.c.h.b16 %v2437
  %v3848 = vpack.c.b16 %v3832, %v3832
  %v3849 = vpack.c.b16 %v3833, %v3833
  %v3850 = vpack.c.b16 %v3834, %v3834
  %v3851 = vpack.c.b16 %v3835, %v3835
  %v3852 = vpack.c.b16 %v3836, %v3836
  %v3853 = vpack.c.b16 %v3837, %v3837
  %v3854 = vpack.c.b16 %v3838, %v3838
  %v3855 = vpack.c.b16 %v3839, %v3839
  %v3856 = vpack.c.b16 %v3840, %v3840
  %v3857 = vpack.c.b16 %v3841, %v3841
  %v3858 = vpack.c.b16 %v3842, %v3842
  %v3859 = vpack.c.b16 %v3843, %v3843
  %v3860 = vpack.c.b16 %v3844, %v3844
  %v3861 = vpack.c.b16 %v3845, %v3845
  %v3862 = vpack.c.b16 %v3846, %v3846
  %v3863 = vpack.c.b16 %v3847, %v3847
  %v3864 = vunpack.c.l.b16 %v3848
  %v3865 = vunpack.c.l.b16 %v3849
  %v3866 = vunpack.c.l.b16 %v3850
  %v3867 = vunpack.c.l.b16 %v3851
  %v3868 = vunpack.c.l.b16 %v3852
  %v3869 = vunpack.c.l.b16 %v3853
  %v3870 = vunpack.c.l.b16 %v3854
  %v3871 = vunpack.c.l.b16 %v3855
  %v3872 = vunpack.c.l.b16 %v3856
  %v3873 = vunpack.c.l.b16 %v3857
  %v3874 = vunpack.c.l.b16 %v3858
  %v3875 = vunpack.c.l.b16 %v3859
  %v3876 = vunpack.c.l.b16 %v3860
  %v3877 = vunpack.c.l.b16 %v3861
  %v3878 = vunpack.c.l.b16 %v3862
  %v3879 = vunpack.c.l.b16 %v3863
  %v3880 = vrot.slane %v2897, 7
  %v3881 = vsel %vm3026, %v3880, %v3864
  %v3882 = vrot.slane %v2899, 6
  %v3883 = vsel %vm3029, %v3882, %v3881
  %v3884 = vrot.slane %v2901, 5
  %v3885 = vsel %vm3032, %v3884, %v3883
  %v3886 = vrot.slane %v2903, 4
  %v3887 = vsel %vm3035, %v3886, %v3885
  %v3888 = vrot.slane %v2905, 3
  %v3889 = vsel %vm3038, %v3888, %v3887
  %v3890 = vrot.slane %v2907, 2
  %v3891 = vsel %vm3041, %v3890, %v3889
  %v3892 = vrot.slane %v2909, 1
  %v3893 = vsel %vm3044, %v3892, %v3891
  %v3894 = vrot.slane %v2898, 7
  %v3895 = vsel %vm3026, %v3894, %v3865
  %v3896 = vrot.slane %v2900, 6
  %v3897 = vsel %vm3029, %v3896, %v3895
  %v3898 = vrot.slane %v2902, 5
  %v3899 = vsel %vm3032, %v3898, %v3897
  %v3900 = vrot.slane %v2904, 4
  %v3901 = vsel %vm3035, %v3900, %v3899
  %v3902 = vrot.slane %v2906, 3
  %v3903 = vsel %vm3038, %v3902, %v3901
  %v3904 = vrot.slane %v2908, 2
  %v3905 = vsel %vm3041, %v3904, %v3903
  %v3906 = vrot.slane %v2910, 1
  %v3907 = vsel %vm3044, %v3906, %v3905
  %v3908 = vrot.slane %v2913, 7
  %v3909 = vsel %vm3026, %v3908, %v3866
  %v3910 = vrot.slane %v2915, 6
  %v3911 = vsel %vm3029, %v3910, %v3909
  %v3912 = vrot.slane %v2917, 5
  %v3913 = vsel %vm3032, %v3912, %v3911
  %v3914 = vrot.slane %v2919, 4
  %v3915 = vsel %vm3035, %v3914, %v3913
  %v3916 = vrot.slane %v2921, 3
  %v3917 = vsel %vm3038, %v3916, %v3915
  %v3918 = vrot.slane %v2923, 2
  %v3919 = vsel %vm3041, %v3918, %v3917
  %v3920 = vrot.slane %v2925, 1
  %v3921 = vsel %vm3044, %v3920, %v3919
  %v3922 = vrot.slane %v2914, 7
  %v3923 = vsel %vm3026, %v3922, %v3867
  %v3924 = vrot.slane %v2916, 6
  %v3925 = vsel %vm3029, %v3924, %v3923
  %v3926 = vrot.slane %v2918, 5
  %v3927 = vsel %vm3032, %v3926, %v3925
  %v3928 = vrot.slane %v2920, 4
  %v3929 = vsel %vm3035, %v3928, %v3927
  %v3930 = vrot.slane %v2922, 3
  %v3931 = vsel %vm3038, %v3930, %v3929
  %v3932 = vrot.slane %v2924, 2
  %v3933 = vsel %vm3041, %v3932, %v3931
  %v3934 = vrot.slane %v2926, 1
  %v3935 = vsel %vm3044, %v3934, %v3933
  %v3936 = vrot.slane %v2929, 7
  %v3937 = vsel %vm3026, %v3936, %v3868
  %v3938 = vrot.slane %v2931, 6
  %v3939 = vsel %vm3029, %v3938, %v3937
  %v3940 = vrot.slane %v2933, 5
  %v3941 = vsel %vm3032, %v3940, %v3939
  %v3942 = vrot.slane %v2935, 4
  %v3943 = vsel %vm3035, %v3942, %v3941
  %v3944 = vrot.slane %v2937, 3
  %v3945 = vsel %vm3038, %v3944, %v3943
  %v3946 = vrot.slane %v2939, 2
  %v3947 = vsel %vm3041, %v3946, %v3945
  %v3948 = vrot.slane %v2941, 1
  %v3949 = vsel %vm3044, %v3948, %v3947
  %v3950 = vrot.slane %v2930, 7
  %v3951 = vsel %vm3026, %v3950, %v3869
  %v3952 = vrot.slane %v2932, 6
  %v3953 = vsel %vm3029, %v3952, %v3951
  %v3954 = vrot.slane %v2934, 5
  %v3955 = vsel %vm3032, %v3954, %v3953
  %v3956 = vrot.slane %v2936, 4
  %v3957 = vsel %vm3035, %v3956, %v3955
  %v3958 = vrot.slane %v2938, 3
  %v3959 = vsel %vm3038, %v3958, %v3957
  %v3960 = vrot.slane %v2940, 2
  %v3961 = vsel %vm3041, %v3960, %v3959
  %v3962 = vrot.slane %v2942, 1
  %v3963 = vsel %vm3044, %v3962, %v3961
  %v3964 = vrot.slane %v2945, 7
  %v3965 = vsel %vm3026, %v3964, %v3870
  %v3966 = vrot.slane %v2947, 6
  %v3967 = vsel %vm3029, %v3966, %v3965
  %v3968 = vrot.slane %v2949, 5
  %v3969 = vsel %vm3032, %v3968, %v3967
  %v3970 = vrot.slane %v2951, 4
  %v3971 = vsel %vm3035, %v3970, %v3969
  %v3972 = vrot.slane %v2953, 3
  %v3973 = vsel %vm3038, %v3972, %v3971
  %v3974 = vrot.slane %v2955, 2
  %v3975 = vsel %vm3041, %v3974, %v3973
  %v3976 = vrot.slane %v2957, 1
  %v3977 = vsel %vm3044, %v3976, %v3975
  %v3978 = vrot.slane %v2946, 7
  %v3979 = vsel %vm3026, %v3978, %v3871
  %v3980 = vrot.slane %v2948, 6
  %v3981 = vsel %vm3029, %v3980, %v3979
  %v3982 = vrot.slane %v2950, 5
  %v3983 = vsel %vm3032, %v3982, %v3981
  %v3984 = vrot.slane %v2952, 4
  %v3985 = vsel %vm3035, %v3984, %v3983
  %v3986 = vrot.slane %v2954, 3
  %v3987 = vsel %vm3038, %v3986, %v3985
  %v3988 = vrot.slane %v2956, 2
  %v3989 = vsel %vm3041, %v3988, %v3987
  %v3990 = vrot.slane %v2958, 1
  %v3991 = vsel %vm3044, %v3990, %v3989
  %v3992 = vrot.slane %v2961, 7
  %v3993 = vsel %vm3026, %v3992, %v3872
  %v3994 = vrot.slane %v2963, 6
  %v3995 = vsel %vm3029, %v3994, %v3993
  %v3996 = vrot.slane %v2965, 5
  %v3997 = vsel %vm3032, %v3996, %v3995
  %v3998 = vrot.slane %v2967, 4
  %v3999 = vsel %vm3035, %v3998, %v3997
  %v4000 = vrot.slane %v2969, 3
  %v4001 = vsel %vm3038, %v4000, %v3999
  %v4002 = vrot.slane %v2971, 2
  %v4003 = vsel %vm3041, %v4002, %v4001
  %v4004 = vrot.slane %v2973, 1
  %v4005 = vsel %vm3044, %v4004, %v4003
  %v4006 = vrot.slane %v2962, 7
  %v4007 = vsel %vm3026, %v4006, %v3873
  %v4008 = vrot.slane %v2964, 6
  %v4009 = vsel %vm3029, %v4008, %v4007
  %v4010 = vrot.slane %v2966, 5
  %v4011 = vsel %vm3032, %v4010, %v4009
  %v4012 = vrot.slane %v2968, 4
  %v4013 = vsel %vm3035, %v4012, %v4011
  %v4014 = vrot.slane %v2970, 3
  %v4015 = vsel %vm3038, %v4014, %v4013
  %v4016 = vrot.slane %v2972, 2
  %v4017 = vsel %vm3041, %v4016, %v4015
  %v4018 = vrot.slane %v2974, 1
  %v4019 = vsel %vm3044, %v4018, %v4017
  %v4020 = vrot.slane %v2977, 7
  %v4021 = vsel %vm3026, %v4020, %v3874
  %v4022 = vrot.slane %v2979, 6
  %v4023 = vsel %vm3029, %v4022, %v4021
  %v4024 = vrot.slane %v2981, 5
  %v4025 = vsel %vm3032, %v4024, %v4023
  %v4026 = vrot.slane %v2983, 4
  %v4027 = vsel %vm3035, %v4026, %v4025
  %v4028 = vrot.slane %v2985, 3
  %v4029 = vsel %vm3038, %v4028, %v4027
  %v4030 = vrot.slane %v2987, 2
  %v4031 = vsel %vm3041, %v4030, %v4029
  %v4032 = vrot.slane %v2989, 1
  %v4033 = vsel %vm3044, %v4032, %v4031
  %v4034 = vrot.slane %v2978, 7
  %v4035 = vsel %vm3026, %v4034, %v3875
  %v4036 = vrot.slane %v2980, 6
  %v4037 = vsel %vm3029, %v4036, %v4035
  %v4038 = vrot.slane %v2982, 5
  %v4039 = vsel %vm3032, %v4038, %v4037
  %v4040 = vrot.slane %v2984, 4
  %v4041 = vsel %vm3035, %v4040, %v4039
  %v4042 = vrot.slane %v2986, 3
  %v4043 = vsel %vm3038, %v4042, %v4041
  %v4044 = vrot.slane %v2988, 2
  %v4045 = vsel %vm3041, %v4044, %v4043
  %v4046 = vrot.slane %v2990, 1
  %v4047 = vsel %vm3044, %v4046, %v4045
  %v4048 = vrot.slane %v2993, 7
  %v4049 = vsel %vm3026, %v4048, %v3876
  %v4050 = vrot.slane %v2995, 6
  %v4051 = vsel %vm3029, %v4050, %v4049
  %v4052 = vrot.slane %v2997, 5
  %v4053 = vsel %vm3032, %v4052, %v4051
  %v4054 = vrot.slane %v2999, 4
  %v4055 = vsel %vm3035, %v4054, %v4053
  %v4056 = vrot.slane %v3001, 3
  %v4057 = vsel %vm3038, %v4056, %v4055
  %v4058 = vrot.slane %v3003, 2
  %v4059 = vsel %vm3041, %v4058, %v4057
  %v4060 = vrot.slane %v3005, 1
  %v4061 = vsel %vm3044, %v4060, %v4059
  %v4062 = vrot.slane %v2994, 7
  %v4063 = vsel %vm3026, %v4062, %v3877
  %v4064 = vrot.slane %v2996, 6
  %v4065 = vsel %vm3029, %v4064, %v4063
  %v4066 = vrot.slane %v2998, 5
  %v4067 = vsel %vm3032, %v4066, %v4065
  %v4068 = vrot.slane %v3000, 4
  %v4069 = vsel %vm3035, %v4068, %v4067
  %v4070 = vrot.slane %v3002, 3
  %v4071 = vsel %vm3038, %v4070, %v4069
  %v4072 = vrot.slane %v3004, 2
  %v4073 = vsel %vm3041, %v4072, %v4071
  %v4074 = vrot.slane %v3006, 1
  %v4075 = vsel %vm3044, %v4074, %v4073
  %v4076 = vrot.slane %v3009, 7
  %v4077 = vsel %vm3026, %v4076, %v3878
  %v4078 = vrot.slane %v3011, 6
  %v4079 = vsel %vm3029, %v4078, %v4077
  %v4080 = vrot.slane %v3013, 5
  %v4081 = vsel %vm3032, %v4080, %v4079
  %v4082 = vrot.slane %v3015, 4
  %v4083 = vsel %vm3035, %v4082, %v4081
  %v4084 = vrot.slane %v3017, 3
  %v4085 = vsel %vm3038, %v4084, %v4083
  %v4086 = vrot.slane %v3019, 2
  %v4087 = vsel %vm3041, %v4086, %v4085
  %v4088 = vrot.slane %v3021, 1
  %v4089 = vsel %vm3044, %v4088, %v4087
  %v4090 = vrot.slane %v3010, 7
  %v4091 = vsel %vm3026, %v4090, %v3879
  %v4092 = vrot.slane %v3012, 6
  %v4093 = vsel %vm3029, %v4092, %v4091
  %v4094 = vrot.slane %v3014, 5
  %v4095 = vsel %vm3032, %v4094, %v4093
  %v4096 = vrot.slane %v3016, 4
  %v4097 = vsel %vm3035, %v4096, %v4095
  %v4098 = vrot.slane %v3018, 3
  %v4099 = vsel %vm3038, %v4098, %v4097
  %v4100 = vrot.slane %v3020, 2
  %v4101 = vsel %vm3041, %v4100, %v4099
  %v4102 = vrot.slane %v3022, 1
  %v4103 = vsel %vm3044, %v4102, %v4101
  %v4104 = vpack.c.b16 %v3921, %v3893
  %v4105 = vpack.c.b16 %v3935, %v3907
  %v4106 = vpack.c.b16 %v3977, %v3949
  %v4107 = vpack.c.b16 %v3991, %v3963
  %v4108 = vpack.c.b16 %v4033, %v4005
  %v4109 = vpack.c.b16 %v4047, %v4019
  %v4110 = vpack.c.b16 %v4089, %v4061
  %v4111 = vpack.c.b16 %v4103, %v4075
  %v4184 = vunpack.c.l.b16 %v2448
  %v4185 = vunpack.c.h.b16 %v2448
  %v4186 = vunpack.c.l.b16 %v2449
  %v4187 = vunpack.c.h.b16 %v2449
  %v4188 = vunpack.c.l.b16 %v2450
  %v4189 = vunpack.c.h.b16 %v2450
  %v4190 = vunpack.c.l.b16 %v2451
  %v4191 = vunpack.c.h.b16 %v2451
  %v4192 = vunpack.c.l.b16 %v2452
  %v4193 = vunpack.c.h.b16 %v2452
  %v4194 = vunpack.c.l.b16 %v2453
  %v4195 = vunpack.c.h.b16 %v2453
  %v4196 = vunpack.c.l.b16 %v2454
  %v4197 = vunpack.c.h.b16 %v2454
  %v4198 = vunpack.c.l.b16 %v2455
  %v4199 = vunpack.c.h.b16 %v2455
  %v4200 = vunpack.c.l.b16 %v2456
  %v4201 = vunpack.c.h.b16 %v2456
  %v4202 = vunpack.c.l.b16 %v2457
  %v4203 = vunpack.c.h.b16 %v2457
  %v4204 = vunpack.c.l.b16 %v2458
  %v4205 = vunpack.c.h.b16 %v2458
  %v4206 = vunpack.c.l.b16 %v2459
  %v4207 = vunpack.c.h.b16 %v2459
  %v4208 = vunpack.c.l.b16 %v2460
  %v4209 = vunpack.c.h.b16 %v2460
  %v4210 = vunpack.c.l.b16 %v2461
  %v4211 = vunpack.c.h.b16 %v2461
  %v4212 = vunpack.c.l.b16 %v2462
  %v4213 = vunpack.c.h.b16 %v2462
  %v4214 = vunpack.c.l.b16 %v2463
  %v4215 = vunpack.c.h.b16 %v2463
  %v4216 = vunpack.c.l.b16 %v2464
  %v4217 = vunpack.c.h.b16 %v2464
  %v4218 = vunpack.c.l.b16 %v2465
  %v4219 = vunpack.c.h.b16 %v2465
  %v4220 = vunpack.c.l.b16 %v2466
  %v4221 = vunpack.c.h.b16 %v2466
  %v4222 = vunpack.c.l.b16 %v2467
  %v4223 = vunpack.c.h.b16 %v2467
  %v4224 = vunpack.c.l.b16 %v2468
  %v4225 = vunpack.c.h.b16 %v2468
  %v4226 = vunpack.c.l.b16 %v2469
  %v4227 = vunpack.c.h.b16 %v2469
  %v4228 = vunpack.c.l.b16 %v2470
  %v4229 = vunpack.c.h.b16 %v2470
  %v4230 = vunpack.c.l.b16 %v2471
  %v4231 = vunpack.c.h.b16 %v2471
  %v4232 = vunpack.c.l.b16 %v2472
  %v4233 = vunpack.c.h.b16 %v2472
  %v4234 = vunpack.c.l.b16 %v2473
  %v4235 = vunpack.c.h.b16 %v2473
  %v4236 = vunpack.c.l.b16 %v2474
  %v4237 = vunpack.c.h.b16 %v2474
  %v4238 = vunpack.c.l.b16 %v2475
  %v4239 = vunpack.c.h.b16 %v2475
  %v4240 = vunpack.c.l.b16 %v2476
  %v4241 = vunpack.c.h.b16 %v2476
  %v4242 = vunpack.c.l.b16 %v2477
  %v4243 = vunpack.c.h.b16 %v2477
  %v4244 = vunpack.c.l.b16 %v2478
  %v4245 = vunpack.c.h.b16 %v2478
  %v4246 = vunpack.c.l.b16 %v2479
  %v4247 = vunpack.c.h.b16 %v2479
  %v4248 = vunpack.c.l.b16 %v2480
  %v4249 = vunpack.c.h.b16 %v2480
  %v4250 = vunpack.c.l.b16 %v2481
  %v4251 = vunpack.c.h.b16 %v2481
  %v4252 = vunpack.c.l.b16 %v2482
  %v4253 = vunpack.c.h.b16 %v2482
  %v4254 = vunpack.c.l.b16 %v2483
  %v4255 = vunpack.c.h.b16 %v2483
  %v4256 = vunpack.c.l.b16 %v2484
  %v4257 = vunpack.c.h.b16 %v2484
  %v4258 = vunpack.c.l.b16 %v2485
  %v4259 = vunpack.c.h.b16 %v2485
  %v4260 = vunpack.c.l.b16 %v2486
  %v4261 = vunpack.c.h.b16 %v2486
  %v4262 = vunpack.c.l.b16 %v2487
  %v4263 = vunpack.c.h.b16 %v2487
  %v4264 = vunpack.c.l.b16 %v2488
  %v4265 = vunpack.c.h.b16 %v2488
  %v4266 = vunpack.c.l.b16 %v2489
  %v4267 = vunpack.c.h.b16 %v2489
  %v4268 = vunpack.c.l.b16 %v2490
  %v4269 = vunpack.c.h.b16 %v2490
  %v4270 = vunpack.c.l.b16 %v2491
  %v4271 = vunpack.c.h.b16 %v2491
  %v4272 = vunpack.c.l.b16 %v2492
  %v4273 = vunpack.c.h.b16 %v2492
  %v4274 = vunpack.c.l.b16 %v2493
  %v4275 = vunpack.c.h.b16 %v2493
  %v4276 = vunpack.c.l.b16 %v2494
  %v4277 = vunpack.c.h.b16 %v2494
  %v4278 = vunpack.c.l.b16 %v2495
  %v4279 = vunpack.c.h.b16 %v2495
  %v4280 = vunpack.c.l.b16 %v2496
  %v4281 = vunpack.c.h.b16 %v2496
  %v4282 = vunpack.c.l.b16 %v2497
  %v4283 = vunpack.c.h.b16 %v2497
  %v4284 = vunpack.c.l.b16 %v2498
  %v4285 = vunpack.c.h.b16 %v2498
  %v4286 = vunpack.c.l.b16 %v2499
  %v4287 = vunpack.c.h.b16 %v2499
  %v4288 = vunpack.c.l.b16 %v2500
  %v4289 = vunpack.c.h.b16 %v2500
  %v4290 = vunpack.c.l.b16 %v2501
  %v4291 = vunpack.c.h.b16 %v2501
  %v4292 = vunpack.c.l.b16 %v2502
  %v4293 = vunpack.c.h.b16 %v2502
  %v4294 = vunpack.c.l.b16 %v2503
  %v4295 = vunpack.c.h.b16 %v2503
  %v4296 = vunpack.c.l.b16 %v2504
  %v4297 = vunpack.c.h.b16 %v2504
  %v4298 = vunpack.c.l.b16 %v2505
  %v4299 = vunpack.c.h.b16 %v2505
  %v4300 = vunpack.c.l.b16 %v2506
  %v4301 = vunpack.c.h.b16 %v2506
  %v4302 = vunpack.c.l.b16 %v2507
  %v4303 = vunpack.c.h.b16 %v2507
  %v4304 = vunpack.c.l.b16 %v2508
  %v4305 = vunpack.c.h.b16 %v2508
  %v4306 = vunpack.c.l.b16 %v2509
  %v4307 = vunpack.c.h.b16 %v2509
  %v4308 = vunpack.c.l.b16 %v2510
  %v4309 = vunpack.c.h.b16 %v2510
  %v4310 = vunpack.c.l.b16 %v2511
  %v4311 = vunpack.c.h.b16 %v2511
  %v4312 = vpack.c.b16 %v4188, %v4184
  %v4313 = vpack.c.b16 %v4189, %v4185
  %v4314 = vpack.c.b16 %v4190, %v4186
  %v4315 = vpack.c.b16 %v4191, %v4187
  %v4316 = vpack.c.b16 %v4196, %v4192
  %v4317 = vpack.c.b16 %v4197, %v4193
  %v4318 = vpack.c.b16 %v4198, %v4194
  %v4319 = vpack.c.b16 %v4199, %v4195
  %v4320 = vpack.c.b16 %v4204, %v4200
  %v4321 = vpack.c.b16 %v4205, %v4201
  %v4322 = vpack.c.b16 %v4206, %v4202
  %v4323 = vpack.c.b16 %v4207, %v4203
  %v4324 = vpack.c.b16 %v4212, %v4208
  %v4325 = vpack.c.b16 %v4213, %v4209
  %v4326 = vpack.c.b16 %v4214, %v4210
  %v4327 = vpack.c.b16 %v4215, %v4211
  %v4328 = vpack.c.b16 %v4220, %v4216
  %v4329 = vpack.c.b16 %v4221, %v4217
  %v4330 = vpack.c.b16 %v4222, %v4218
  %v4331 = vpack.c.b16 %v4223, %v4219
  %v4332 = vpack.c.b16 %v4228, %v4224
  %v4333 = vpack.c.b16 %v4229, %v4225
  %v4334 = vpack.c.b16 %v4230, %v4226
  %v4335 = vpack.c.b16 %v4231, %v4227
  %v4336 = vpack.c.b16 %v4236, %v4232
  %v4337 = vpack.c.b16 %v4237, %v4233
  %v4338 = vpack.c.b16 %v4238, %v4234
  %v4339 = vpack.c.b16 %v4239, %v4235
  %v4340 = vpack.c.b16 %v4244, %v4240
  %v4341 = vpack.c.b16 %v4245, %v4241
  %v4342 = vpack.c.b16 %v4246, %v4242
  %v4343 = vpack.c.b16 %v4247, %v4243
  %v4344 = vpack.c.b16 %v4252, %v4248
  %v4345 = vpack.c.b16 %v4253, %v4249
  %v4346 = vpack.c.b16 %v4254, %v4250
  %v4347 = vpack.c.b16 %v4255, %v4251
  %v4348 = vpack.c.b16 %v4260, %v4256
  %v4349 = vpack.c.b16 %v4261, %v4257
  %v4350 = vpack.c.b16 %v4262, %v4258
  %v4351 = vpack.c.b16 %v4263, %v4259
  %v4352 = vpack.c.b16 %v4268, %v4264
  %v4353 = vpack.c.b16 %v4269, %v4265
  %v4354 = vpack.c.b16 %v4270, %v4266
  %v4355 = vpack.c.b16 %v4271, %v4267
  %v4356 = vpack.c.b16 %v4276, %v4272
  %v4357 = vpack.c.b16 %v4277, %v4273
  %v4358 = vpack.c.b16 %v4278, %v4274
  %v4359 = vpack.c.b16 %v4279, %v4275
  %v4360 = vpack.c.b16 %v4284, %v4280
  %v4361 = vpack.c.b16 %v4285, %v4281
  %v4362 = vpack.c.b16 %v4286, %v4282
  %v4363 = vpack.c.b16 %v4287, %v4283
  %v4364 = vpack.c.b16 %v4292, %v4288
  %v4365 = vpack.c.b16 %v4293, %v4289
  %v4366 = vpack.c.b16 %v4294, %v4290
  %v4367 = vpack.c.b16 %v4295, %v4291
  %v4368 = vpack.c.b16 %v4300, %v4296
  %v4369 = vpack.c.b16 %v4301, %v4297
  %v4370 = vpack.c.b16 %v4302, %v4298
  %v4371 = vpack.c.b16 %v4303, %v4299
  %v4372 = vpack.c.b16 %v4308, %v4304
  %v4373 = vpack.c.b16 %v4309, %v4305
  %v4374 = vpack.c.b16 %v4310, %v4306
  %v4375 = vpack.c.b16 %v4311, %v4307
  %4440 = vmatpush.bf16.msra.mxu0 %v4340
  %4441 = vmatpush.bf16.msra.mxu0 %v4336
  %4442 = vmatpush.bf16.msra.mxu0 %v4332
  %4443 = vmatpush.bf16.msra.mxu0 %v4328
  %4444 = vmatpush.bf16.msra.mxu0 %v4324
  %4445 = vmatpush.bf16.msra.mxu0 %v4320
  %4446 = vmatpush.bf16.msra.mxu0 %v4316
  %4447 = vmatpush.bf16.msra.mxu0 %v4312
  %4448 = vmatmul.bf16.gmra.mxu0 %v4104
  %v4449 = vpop.f32.mrf.mxu0
  %v4450 = vadd.f32 %v3631, %v4449
  %v4451 = vpop.f32.mrf.mxu0
  %v4452 = vadd.f32 %v3633, %v4451
  %4453 = vmatmul.bf16.gmra.mxu0 %v4106
  %v4454 = vpop.f32.mrf.mxu0
  %v4455 = vadd.f32 %v3636, %v4454
  %v4456 = vpop.f32.mrf.mxu0
  %v4457 = vadd.f32 %v3638, %v4456
  %4458 = vmatmul.bf16.gmra.mxu0 %v4108
  %v4459 = vpop.f32.mrf.mxu0
  %v4460 = vadd.f32 %v3641, %v4459
  %v4461 = vpop.f32.mrf.mxu0
  %v4462 = vadd.f32 %v3643, %v4461
  %4463 = vmatmul.bf16.gmra.mxu0 %v4110
  %v4464 = vpop.f32.mrf.mxu0
  %v4465 = vadd.f32 %v3646, %v4464
  %v4466 = vpop.f32.mrf.mxu0
  %v4467 = vadd.f32 %v3648, %v4466
  %4468 = vdwg.mxu0
  %4469 = vmatpush.bf16.msra.mxu0 %v4372
  %4470 = vmatpush.bf16.msra.mxu0 %v4368
  %4471 = vmatpush.bf16.msra.mxu0 %v4364
  %4472 = vmatpush.bf16.msra.mxu0 %v4360
  %4473 = vmatpush.bf16.msra.mxu0 %v4356
  %4474 = vmatpush.bf16.msra.mxu0 %v4352
  %4475 = vmatpush.bf16.msra.mxu0 %v4348
  %4476 = vmatpush.bf16.msra.mxu0 %v4344
  %4477 = vmatmul.bf16.gmra.mxu0 %v4105
  %v4478 = vpop.f32.mrf.mxu0
  %v4479 = vadd.f32 %v4450, %v4478
  %v4480 = vpop.f32.mrf.mxu0
  %v4481 = vadd.f32 %v4452, %v4480
  %4482 = vmatmul.bf16.gmra.mxu0 %v4107
  %v4483 = vpop.f32.mrf.mxu0
  %v4484 = vadd.f32 %v4455, %v4483
  %v4485 = vpop.f32.mrf.mxu0
  %v4486 = vadd.f32 %v4457, %v4485
  %4487 = vmatmul.bf16.gmra.mxu0 %v4109
  %v4488 = vpop.f32.mrf.mxu0
  %v4489 = vadd.f32 %v4460, %v4488
  %v4490 = vpop.f32.mrf.mxu0
  %v4491 = vadd.f32 %v4462, %v4490
  %4492 = vmatmul.bf16.gmra.mxu0 %v4111
  %v4493 = vpop.f32.mrf.mxu0
  %v4494 = vadd.f32 %v4465, %v4493
  %v4495 = vpop.f32.mrf.mxu0
  %v4496 = vadd.f32 %v4467, %v4495
  %4497 = vdwg.mxu0
  %4498 = vmatpush.bf16.msra.mxu0 %v4341
  %4499 = vmatpush.bf16.msra.mxu0 %v4337
  %4500 = vmatpush.bf16.msra.mxu0 %v4333
  %4501 = vmatpush.bf16.msra.mxu0 %v4329
  %4502 = vmatpush.bf16.msra.mxu0 %v4325
  %4503 = vmatpush.bf16.msra.mxu0 %v4321
  %4504 = vmatpush.bf16.msra.mxu0 %v4317
  %4505 = vmatpush.bf16.msra.mxu0 %v4313
  %4506 = vmatmul.bf16.gmra.mxu0 %v4104
  %v4507 = vpop.f32.mrf.mxu0
  %v4508 = vadd.f32 %v3689, %v4507
  %v4509 = vpop.f32.mrf.mxu0
  %v4510 = vadd.f32 %v3691, %v4509
  %4511 = vmatmul.bf16.gmra.mxu0 %v4106
  %v4512 = vpop.f32.mrf.mxu0
  %v4513 = vadd.f32 %v3694, %v4512
  %v4514 = vpop.f32.mrf.mxu0
  %v4515 = vadd.f32 %v3696, %v4514
  %4516 = vmatmul.bf16.gmra.mxu0 %v4108
  %v4517 = vpop.f32.mrf.mxu0
  %v4518 = vadd.f32 %v3699, %v4517
  %v4519 = vpop.f32.mrf.mxu0
  %v4520 = vadd.f32 %v3701, %v4519
  %4521 = vmatmul.bf16.gmra.mxu0 %v4110
  %v4522 = vpop.f32.mrf.mxu0
  %v4523 = vadd.f32 %v3704, %v4522
  %v4524 = vpop.f32.mrf.mxu0
  %v4525 = vadd.f32 %v3706, %v4524
  %4526 = vdwg.mxu0
  %4527 = vmatpush.bf16.msra.mxu0 %v4373
  %4528 = vmatpush.bf16.msra.mxu0 %v4369
  %4529 = vmatpush.bf16.msra.mxu0 %v4365
  %4530 = vmatpush.bf16.msra.mxu0 %v4361
  %4531 = vmatpush.bf16.msra.mxu0 %v4357
  %4532 = vmatpush.bf16.msra.mxu0 %v4353
  %4533 = vmatpush.bf16.msra.mxu0 %v4349
  %4534 = vmatpush.bf16.msra.mxu0 %v4345
  %4535 = vmatmul.bf16.gmra.mxu0 %v4105
  %v4536 = vpop.f32.mrf.mxu0
  %v4537 = vadd.f32 %v4508, %v4536
  %v4538 = vpop.f32.mrf.mxu0
  %v4539 = vadd.f32 %v4510, %v4538
  %4540 = vmatmul.bf16.gmra.mxu0 %v4107
  %v4541 = vpop.f32.mrf.mxu0
  %v4542 = vadd.f32 %v4513, %v4541
  %v4543 = vpop.f32.mrf.mxu0
  %v4544 = vadd.f32 %v4515, %v4543
  %4545 = vmatmul.bf16.gmra.mxu0 %v4109
  %v4546 = vpop.f32.mrf.mxu0
  %v4547 = vadd.f32 %v4518, %v4546
  %v4548 = vpop.f32.mrf.mxu0
  %v4549 = vadd.f32 %v4520, %v4548
  %4550 = vmatmul.bf16.gmra.mxu0 %v4111
  %v4551 = vpop.f32.mrf.mxu0
  %v4552 = vadd.f32 %v4523, %v4551
  %v4553 = vpop.f32.mrf.mxu0
  %v4554 = vadd.f32 %v4525, %v4553
  %4555 = vdwg.mxu0
  %4556 = vmatpush.bf16.msra.mxu0 %v4342
  %4557 = vmatpush.bf16.msra.mxu0 %v4338
  %4558 = vmatpush.bf16.msra.mxu0 %v4334
  %4559 = vmatpush.bf16.msra.mxu0 %v4330
  %4560 = vmatpush.bf16.msra.mxu0 %v4326
  %4561 = vmatpush.bf16.msra.mxu0 %v4322
  %4562 = vmatpush.bf16.msra.mxu0 %v4318
  %4563 = vmatpush.bf16.msra.mxu0 %v4314
  %4564 = vmatmul.bf16.gmra.mxu0 %v4104
  %v4565 = vpop.f32.mrf.mxu0
  %v4566 = vadd.f32 %v3747, %v4565
  %v4567 = vpop.f32.mrf.mxu0
  %v4568 = vadd.f32 %v3749, %v4567
  %4569 = vmatmul.bf16.gmra.mxu0 %v4106
  %v4570 = vpop.f32.mrf.mxu0
  %v4571 = vadd.f32 %v3752, %v4570
  %v4572 = vpop.f32.mrf.mxu0
  %v4573 = vadd.f32 %v3754, %v4572
  %4574 = vmatmul.bf16.gmra.mxu0 %v4108
  %v4575 = vpop.f32.mrf.mxu0
  %v4576 = vadd.f32 %v3757, %v4575
  %v4577 = vpop.f32.mrf.mxu0
  %v4578 = vadd.f32 %v3759, %v4577
  %4579 = vmatmul.bf16.gmra.mxu0 %v4110
  %v4580 = vpop.f32.mrf.mxu0
  %v4581 = vadd.f32 %v3762, %v4580
  %v4582 = vpop.f32.mrf.mxu0
  %v4583 = vadd.f32 %v3764, %v4582
  %4584 = vdwg.mxu0
  %4585 = vmatpush.bf16.msra.mxu0 %v4374
  %4586 = vmatpush.bf16.msra.mxu0 %v4370
  %4587 = vmatpush.bf16.msra.mxu0 %v4366
  %4588 = vmatpush.bf16.msra.mxu0 %v4362
  %4589 = vmatpush.bf16.msra.mxu0 %v4358
  %4590 = vmatpush.bf16.msra.mxu0 %v4354
  %4591 = vmatpush.bf16.msra.mxu0 %v4350
  %4592 = vmatpush.bf16.msra.mxu0 %v4346
  %4593 = vmatmul.bf16.gmra.mxu0 %v4105
  %v4594 = vpop.f32.mrf.mxu0
  %v4595 = vadd.f32 %v4566, %v4594
  %v4596 = vpop.f32.mrf.mxu0
  %v4597 = vadd.f32 %v4568, %v4596
  %4598 = vmatmul.bf16.gmra.mxu0 %v4107
  %v4599 = vpop.f32.mrf.mxu0
  %v4600 = vadd.f32 %v4571, %v4599
  %v4601 = vpop.f32.mrf.mxu0
  %v4602 = vadd.f32 %v4573, %v4601
  %4603 = vmatmul.bf16.gmra.mxu0 %v4109
  %v4604 = vpop.f32.mrf.mxu0
  %v4605 = vadd.f32 %v4576, %v4604
  %v4606 = vpop.f32.mrf.mxu0
  %v4607 = vadd.f32 %v4578, %v4606
  %4608 = vmatmul.bf16.gmra.mxu0 %v4111
  %v4609 = vpop.f32.mrf.mxu0
  %v4610 = vadd.f32 %v4581, %v4609
  %v4611 = vpop.f32.mrf.mxu0
  %v4612 = vadd.f32 %v4583, %v4611
  %4613 = vdwg.mxu0
  %4614 = vmatpush.bf16.msra.mxu0 %v4343
  %4615 = vmatpush.bf16.msra.mxu0 %v4339
  %4616 = vmatpush.bf16.msra.mxu0 %v4335
  %4617 = vmatpush.bf16.msra.mxu0 %v4331
  %4618 = vmatpush.bf16.msra.mxu0 %v4327
  %4619 = vmatpush.bf16.msra.mxu0 %v4323
  %4620 = vmatpush.bf16.msra.mxu0 %v4319
  %4621 = vmatpush.bf16.msra.mxu0 %v4315
  %4622 = vmatmul.bf16.gmra.mxu0 %v4104
  %v4623 = vpop.f32.mrf.mxu0
  %v4624 = vadd.f32 %v3805, %v4623
  %v4625 = vpop.f32.mrf.mxu0
  %v4626 = vadd.f32 %v3807, %v4625
  %4627 = vmatmul.bf16.gmra.mxu0 %v4106
  %v4628 = vpop.f32.mrf.mxu0
  %v4629 = vadd.f32 %v3810, %v4628
  %v4630 = vpop.f32.mrf.mxu0
  %v4631 = vadd.f32 %v3812, %v4630
  %4632 = vmatmul.bf16.gmra.mxu0 %v4108
  %v4633 = vpop.f32.mrf.mxu0
  %v4634 = vadd.f32 %v3815, %v4633
  %v4635 = vpop.f32.mrf.mxu0
  %v4636 = vadd.f32 %v3817, %v4635
  %4637 = vmatmul.bf16.gmra.mxu0 %v4110
  %v4638 = vpop.f32.mrf.mxu0
  %v4639 = vadd.f32 %v3820, %v4638
  %v4640 = vpop.f32.mrf.mxu0
  %v4641 = vadd.f32 %v3822, %v4640
  %4642 = vdwg.mxu0
  %4643 = vmatpush.bf16.msra.mxu0 %v4375
  %4644 = vmatpush.bf16.msra.mxu0 %v4371
  %4645 = vmatpush.bf16.msra.mxu0 %v4367
  %4646 = vmatpush.bf16.msra.mxu0 %v4363
  %4647 = vmatpush.bf16.msra.mxu0 %v4359
  %4648 = vmatpush.bf16.msra.mxu0 %v4355
  %4649 = vmatpush.bf16.msra.mxu0 %v4351
  %4650 = vmatpush.bf16.msra.mxu0 %v4347
  %4651 = vmatmul.bf16.gmra.mxu0 %v4105
  %v4652 = vpop.f32.mrf.mxu0
  %v4653 = vadd.f32 %v4624, %v4652
  %v4654 = vpop.f32.mrf.mxu0
  %v4655 = vadd.f32 %v4626, %v4654
  %4656 = vmatmul.bf16.gmra.mxu0 %v4107
  %v4657 = vpop.f32.mrf.mxu0
  %v4658 = vadd.f32 %v4629, %v4657
  %v4659 = vpop.f32.mrf.mxu0
  %v4660 = vadd.f32 %v4631, %v4659
  %4661 = vmatmul.bf16.gmra.mxu0 %v4109
  %v4662 = vpop.f32.mrf.mxu0
  %v4663 = vadd.f32 %v4634, %v4662
  %v4664 = vpop.f32.mrf.mxu0
  %v4665 = vadd.f32 %v4636, %v4664
  %4666 = vmatmul.bf16.gmra.mxu0 %v4111
  %v4667 = vpop.f32.mrf.mxu0
  %v4668 = vadd.f32 %v4639, %v4667
  %v4669 = vpop.f32.mrf.mxu0
  %v4670 = vadd.f32 %v4641, %v4669
  %4671 = vdwg.mxu0
  %s4672 = scalar_lea.vmem %s3, 1024
  %v4673 = vld [vmem:[%s4672] sm:$0xff]
  %v4674 = vld [vmem:[%s4672 + $0x8] sm:$0xff]
  %v4675 = vld [vmem:[%s4672 + $0x10] sm:$0xff]
  %v4676 = vld [vmem:[%s4672 + $0x18] sm:$0xff]
  %v4677 = vld [vmem:[%s4672 + $0x20] sm:$0xff]
  %v4678 = vld [vmem:[%s4672 + $0x28] sm:$0xff]
  %v4679 = vld [vmem:[%s4672 + $0x30] sm:$0xff]
  %v4680 = vld [vmem:[%s4672 + $0x38] sm:$0xff]
  %v4681 = vld [vmem:[%s4672 + $0x40] sm:$0xff]
  %v4682 = vld [vmem:[%s4672 + $0x48] sm:$0xff]
  %v4683 = vld [vmem:[%s4672 + $0x50] sm:$0xff]
  %v4684 = vld [vmem:[%s4672 + $0x58] sm:$0xff]
  %v4685 = vld [vmem:[%s4672 + $0x60] sm:$0xff]
  %v4686 = vld [vmem:[%s4672 + $0x68] sm:$0xff]
  %v4687 = vld [vmem:[%s4672 + $0x70] sm:$0xff]
  %v4688 = vld [vmem:[%s4672 + $0x78] sm:$0xff]
  %v4689 = vld [vmem:[%s4672 + $0x80] sm:$0xff]
  %v4690 = vld [vmem:[%s4672 + $0x88] sm:$0xff]
  %v4691 = vld [vmem:[%s4672 + $0x90] sm:$0xff]
  %v4692 = vld [vmem:[%s4672 + $0x98] sm:$0xff]
  %v4693 = vld [vmem:[%s4672 + $0xa0] sm:$0xff]
  %v4694 = vld [vmem:[%s4672 + $0xa8] sm:$0xff]
  %v4695 = vld [vmem:[%s4672 + $0xb0] sm:$0xff]
  %v4696 = vld [vmem:[%s4672 + $0xb8] sm:$0xff]
  %v4697 = vld [vmem:[%s4672 + $0xc0] sm:$0xff]
  %v4698 = vld [vmem:[%s4672 + $0xc8] sm:$0xff]
  %v4699 = vld [vmem:[%s4672 + $0xd0] sm:$0xff]
  %v4700 = vld [vmem:[%s4672 + $0xd8] sm:$0xff]
  %v4701 = vld [vmem:[%s4672 + $0xe0] sm:$0xff]
  %v4702 = vld [vmem:[%s4672 + $0xe8] sm:$0xff]
  %v4703 = vld [vmem:[%s4672 + $0xf0] sm:$0xff]
  %v4704 = vld [vmem:[%s4672 + $0xf8] sm:$0xff]
  %v4705 = vld [vmem:[%s4672 + $0x100] sm:$0xff]
  %v4706 = vld [vmem:[%s4672 + $0x108] sm:$0xff]
  %v4707 = vld [vmem:[%s4672 + $0x110] sm:$0xff]
  %v4708 = vld [vmem:[%s4672 + $0x118] sm:$0xff]
  %v4709 = vld [vmem:[%s4672 + $0x120] sm:$0xff]
  %v4710 = vld [vmem:[%s4672 + $0x128] sm:$0xff]
  %v4711 = vld [vmem:[%s4672 + $0x130] sm:$0xff]
  %v4712 = vld [vmem:[%s4672 + $0x138] sm:$0xff]
  %v4713 = vld [vmem:[%s4672 + $0x140] sm:$0xff]
  %v4714 = vld [vmem:[%s4672 + $0x148] sm:$0xff]
  %v4715 = vld [vmem:[%s4672 + $0x150] sm:$0xff]
  %v4716 = vld [vmem:[%s4672 + $0x158] sm:$0xff]
  %v4717 = vld [vmem:[%s4672 + $0x160] sm:$0xff]
  %v4718 = vld [vmem:[%s4672 + $0x168] sm:$0xff]
  %v4719 = vld [vmem:[%s4672 + $0x170] sm:$0xff]
  %v4720 = vld [vmem:[%s4672 + $0x178] sm:$0xff]
  %v4721 = vld [vmem:[%s4672 + $0x180] sm:$0xff]
  %v4722 = vld [vmem:[%s4672 + $0x188] sm:$0xff]
  %v4723 = vld [vmem:[%s4672 + $0x190] sm:$0xff]
  %v4724 = vld [vmem:[%s4672 + $0x198] sm:$0xff]
  %v4725 = vld [vmem:[%s4672 + $0x1a0] sm:$0xff]
  %v4726 = vld [vmem:[%s4672 + $0x1a8] sm:$0xff]
  %v4727 = vld [vmem:[%s4672 + $0x1b0] sm:$0xff]
  %v4728 = vld [vmem:[%s4672 + $0x1b8] sm:$0xff]
  %v4729 = vld [vmem:[%s4672 + $0x1c0] sm:$0xff]
  %v4730 = vld [vmem:[%s4672 + $0x1c8] sm:$0xff]
  %v4731 = vld [vmem:[%s4672 + $0x1d0] sm:$0xff]
  %v4732 = vld [vmem:[%s4672 + $0x1d8] sm:$0xff]
  %v4733 = vld [vmem:[%s4672 + $0x1e0] sm:$0xff]
  %v4734 = vld [vmem:[%s4672 + $0x1e8] sm:$0xff]
  %v4735 = vld [vmem:[%s4672 + $0x1f0] sm:$0xff]
  %v4736 = vld [vmem:[%s4672 + $0x1f8] sm:$0xff]
  %v4745 = vunpack.c.l.b16 %v2369
  %v4746 = vunpack.c.h.b16 %v2369
  %v4747 = vunpack.c.l.b16 %v2380
  %v4748 = vunpack.c.h.b16 %v2380
  %v4749 = vunpack.c.l.b16 %v2391
  %v4750 = vunpack.c.h.b16 %v2391
  %v4751 = vunpack.c.l.b16 %v2402
  %v4752 = vunpack.c.h.b16 %v2402
  %v4753 = vunpack.c.l.b16 %v2413
  %v4754 = vunpack.c.h.b16 %v2413
  %v4755 = vunpack.c.l.b16 %v2424
  %v4756 = vunpack.c.h.b16 %v2424
  %v4757 = vunpack.c.l.b16 %v2435
  %v4758 = vunpack.c.h.b16 %v2435
  %v4759 = vunpack.c.l.b16 %v2446
  %v4760 = vunpack.c.h.b16 %v2446
  %v4761 = vpack.c.b16 %v4745, %v4745
  %v4762 = vpack.c.b16 %v4746, %v4746
  %v4763 = vpack.c.b16 %v4747, %v4747
  %v4764 = vpack.c.b16 %v4748, %v4748
  %v4765 = vpack.c.b16 %v4749, %v4749
  %v4766 = vpack.c.b16 %v4750, %v4750
  %v4767 = vpack.c.b16 %v4751, %v4751
  %v4768 = vpack.c.b16 %v4752, %v4752
  %v4769 = vpack.c.b16 %v4753, %v4753
  %v4770 = vpack.c.b16 %v4754, %v4754
  %v4771 = vpack.c.b16 %v4755, %v4755
  %v4772 = vpack.c.b16 %v4756, %v4756
  %v4773 = vpack.c.b16 %v4757, %v4757
  %v4774 = vpack.c.b16 %v4758, %v4758
  %v4775 = vpack.c.b16 %v4759, %v4759
  %v4776 = vpack.c.b16 %v4760, %v4760
  %v4777 = vunpack.c.l.b16 %v4761
  %v4778 = vunpack.c.l.b16 %v4762
  %v4779 = vunpack.c.l.b16 %v4763
  %v4780 = vunpack.c.l.b16 %v4764
  %v4781 = vunpack.c.l.b16 %v4765
  %v4782 = vunpack.c.l.b16 %v4766
  %v4783 = vunpack.c.l.b16 %v4767
  %v4784 = vunpack.c.l.b16 %v4768
  %v4785 = vunpack.c.l.b16 %v4769
  %v4786 = vunpack.c.l.b16 %v4770
  %v4787 = vunpack.c.l.b16 %v4771
  %v4788 = vunpack.c.l.b16 %v4772
  %v4789 = vunpack.c.l.b16 %v4773
  %v4790 = vunpack.c.l.b16 %v4774
  %v4791 = vunpack.c.l.b16 %v4775
  %v4792 = vunpack.c.l.b16 %v4776
  %v4793 = vrot.slane %v2901, 7
  %v4794 = vsel %vm3026, %v4793, %v2899
  %v4795 = vrot.slane %v2903, 6
  %v4796 = vsel %vm3029, %v4795, %v4794
  %v4797 = vrot.slane %v2905, 5
  %v4798 = vsel %vm3032, %v4797, %v4796
  %v4799 = vrot.slane %v2907, 4
  %v4800 = vsel %vm3035, %v4799, %v4798
  %v4801 = vrot.slane %v2909, 3
  %v4802 = vsel %vm3038, %v4801, %v4800
  %v4803 = vrot.slane %v2911, 2
  %v4804 = vsel %vm3041, %v4803, %v4802
  %v4805 = vrot.slane %v4777, 1
  %v4806 = vsel %vm3044, %v4805, %v4804
  %v4807 = vrot.slane %v2902, 7
  %v4808 = vsel %vm3026, %v4807, %v2900
  %v4809 = vrot.slane %v2904, 6
  %v4810 = vsel %vm3029, %v4809, %v4808
  %v4811 = vrot.slane %v2906, 5
  %v4812 = vsel %vm3032, %v4811, %v4810
  %v4813 = vrot.slane %v2908, 4
  %v4814 = vsel %vm3035, %v4813, %v4812
  %v4815 = vrot.slane %v2910, 3
  %v4816 = vsel %vm3038, %v4815, %v4814
  %v4817 = vrot.slane %v2912, 2
  %v4818 = vsel %vm3041, %v4817, %v4816
  %v4819 = vrot.slane %v4778, 1
  %v4820 = vsel %vm3044, %v4819, %v4818
  %v4821 = vrot.slane %v2917, 7
  %v4822 = vsel %vm3026, %v4821, %v2915
  %v4823 = vrot.slane %v2919, 6
  %v4824 = vsel %vm3029, %v4823, %v4822
  %v4825 = vrot.slane %v2921, 5
  %v4826 = vsel %vm3032, %v4825, %v4824
  %v4827 = vrot.slane %v2923, 4
  %v4828 = vsel %vm3035, %v4827, %v4826
  %v4829 = vrot.slane %v2925, 3
  %v4830 = vsel %vm3038, %v4829, %v4828
  %v4831 = vrot.slane %v2927, 2
  %v4832 = vsel %vm3041, %v4831, %v4830
  %v4833 = vrot.slane %v4779, 1
  %v4834 = vsel %vm3044, %v4833, %v4832
  %v4835 = vrot.slane %v2918, 7
  %v4836 = vsel %vm3026, %v4835, %v2916
  %v4837 = vrot.slane %v2920, 6
  %v4838 = vsel %vm3029, %v4837, %v4836
  %v4839 = vrot.slane %v2922, 5
  %v4840 = vsel %vm3032, %v4839, %v4838
  %v4841 = vrot.slane %v2924, 4
  %v4842 = vsel %vm3035, %v4841, %v4840
  %v4843 = vrot.slane %v2926, 3
  %v4844 = vsel %vm3038, %v4843, %v4842
  %v4845 = vrot.slane %v2928, 2
  %v4846 = vsel %vm3041, %v4845, %v4844
  %v4847 = vrot.slane %v4780, 1
  %v4848 = vsel %vm3044, %v4847, %v4846
  %v4849 = vrot.slane %v2933, 7
  %v4850 = vsel %vm3026, %v4849, %v2931
  %v4851 = vrot.slane %v2935, 6
  %v4852 = vsel %vm3029, %v4851, %v4850
  %v4853 = vrot.slane %v2937, 5
  %v4854 = vsel %vm3032, %v4853, %v4852
  %v4855 = vrot.slane %v2939, 4
  %v4856 = vsel %vm3035, %v4855, %v4854
  %v4857 = vrot.slane %v2941, 3
  %v4858 = vsel %vm3038, %v4857, %v4856
  %v4859 = vrot.slane %v2943, 2
  %v4860 = vsel %vm3041, %v4859, %v4858
  %v4861 = vrot.slane %v4781, 1
  %v4862 = vsel %vm3044, %v4861, %v4860
  %v4863 = vrot.slane %v2934, 7
  %v4864 = vsel %vm3026, %v4863, %v2932
  %v4865 = vrot.slane %v2936, 6
  %v4866 = vsel %vm3029, %v4865, %v4864
  %v4867 = vrot.slane %v2938, 5
  %v4868 = vsel %vm3032, %v4867, %v4866
  %v4869 = vrot.slane %v2940, 4
  %v4870 = vsel %vm3035, %v4869, %v4868
  %v4871 = vrot.slane %v2942, 3
  %v4872 = vsel %vm3038, %v4871, %v4870
  %v4873 = vrot.slane %v2944, 2
  %v4874 = vsel %vm3041, %v4873, %v4872
  %v4875 = vrot.slane %v4782, 1
  %v4876 = vsel %vm3044, %v4875, %v4874
  %v4877 = vrot.slane %v2949, 7
  %v4878 = vsel %vm3026, %v4877, %v2947
  %v4879 = vrot.slane %v2951, 6
  %v4880 = vsel %vm3029, %v4879, %v4878
  %v4881 = vrot.slane %v2953, 5
  %v4882 = vsel %vm3032, %v4881, %v4880
  %v4883 = vrot.slane %v2955, 4
  %v4884 = vsel %vm3035, %v4883, %v4882
  %v4885 = vrot.slane %v2957, 3
  %v4886 = vsel %vm3038, %v4885, %v4884
  %v4887 = vrot.slane %v2959, 2
  %v4888 = vsel %vm3041, %v4887, %v4886
  %v4889 = vrot.slane %v4783, 1
  %v4890 = vsel %vm3044, %v4889, %v4888
  %v4891 = vrot.slane %v2950, 7
  %v4892 = vsel %vm3026, %v4891, %v2948
  %v4893 = vrot.slane %v2952, 6
  %v4894 = vsel %vm3029, %v4893, %v4892
  %v4895 = vrot.slane %v2954, 5
  %v4896 = vsel %vm3032, %v4895, %v4894
  %v4897 = vrot.slane %v2956, 4
  %v4898 = vsel %vm3035, %v4897, %v4896
  %v4899 = vrot.slane %v2958, 3
  %v4900 = vsel %vm3038, %v4899, %v4898
  %v4901 = vrot.slane %v2960, 2
  %v4902 = vsel %vm3041, %v4901, %v4900
  %v4903 = vrot.slane %v4784, 1
  %v4904 = vsel %vm3044, %v4903, %v4902
  %v4905 = vrot.slane %v2965, 7
  %v4906 = vsel %vm3026, %v4905, %v2963
  %v4907 = vrot.slane %v2967, 6
  %v4908 = vsel %vm3029, %v4907, %v4906
  %v4909 = vrot.slane %v2969, 5
  %v4910 = vsel %vm3032, %v4909, %v4908
  %v4911 = vrot.slane %v2971, 4
  %v4912 = vsel %vm3035, %v4911, %v4910
  %v4913 = vrot.slane %v2973, 3
  %v4914 = vsel %vm3038, %v4913, %v4912
  %v4915 = vrot.slane %v2975, 2
  %v4916 = vsel %vm3041, %v4915, %v4914
  %v4917 = vrot.slane %v4785, 1
  %v4918 = vsel %vm3044, %v4917, %v4916
  %v4919 = vrot.slane %v2966, 7
  %v4920 = vsel %vm3026, %v4919, %v2964
  %v4921 = vrot.slane %v2968, 6
  %v4922 = vsel %vm3029, %v4921, %v4920
  %v4923 = vrot.slane %v2970, 5
  %v4924 = vsel %vm3032, %v4923, %v4922
  %v4925 = vrot.slane %v2972, 4
  %v4926 = vsel %vm3035, %v4925, %v4924
  %v4927 = vrot.slane %v2974, 3
  %v4928 = vsel %vm3038, %v4927, %v4926
  %v4929 = vrot.slane %v2976, 2
  %v4930 = vsel %vm3041, %v4929, %v4928
  %v4931 = vrot.slane %v4786, 1
  %v4932 = vsel %vm3044, %v4931, %v4930
  %v4933 = vrot.slane %v2981, 7
  %v4934 = vsel %vm3026, %v4933, %v2979
  %v4935 = vrot.slane %v2983, 6
  %v4936 = vsel %vm3029, %v4935, %v4934
  %v4937 = vrot.slane %v2985, 5
  %v4938 = vsel %vm3032, %v4937, %v4936
  %v4939 = vrot.slane %v2987, 4
  %v4940 = vsel %vm3035, %v4939, %v4938
  %v4941 = vrot.slane %v2989, 3
  %v4942 = vsel %vm3038, %v4941, %v4940
  %v4943 = vrot.slane %v2991, 2
  %v4944 = vsel %vm3041, %v4943, %v4942
  %v4945 = vrot.slane %v4787, 1
  %v4946 = vsel %vm3044, %v4945, %v4944
  %v4947 = vrot.slane %v2982, 7
  %v4948 = vsel %vm3026, %v4947, %v2980
  %v4949 = vrot.slane %v2984, 6
  %v4950 = vsel %vm3029, %v4949, %v4948
  %v4951 = vrot.slane %v2986, 5
  %v4952 = vsel %vm3032, %v4951, %v4950
  %v4953 = vrot.slane %v2988, 4
  %v4954 = vsel %vm3035, %v4953, %v4952
  %v4955 = vrot.slane %v2990, 3
  %v4956 = vsel %vm3038, %v4955, %v4954
  %v4957 = vrot.slane %v2992, 2
  %v4958 = vsel %vm3041, %v4957, %v4956
  %v4959 = vrot.slane %v4788, 1
  %v4960 = vsel %vm3044, %v4959, %v4958
  %v4961 = vrot.slane %v2997, 7
  %v4962 = vsel %vm3026, %v4961, %v2995
  %v4963 = vrot.slane %v2999, 6
  %v4964 = vsel %vm3029, %v4963, %v4962
  %v4965 = vrot.slane %v3001, 5
  %v4966 = vsel %vm3032, %v4965, %v4964
  %v4967 = vrot.slane %v3003, 4
  %v4968 = vsel %vm3035, %v4967, %v4966
  %v4969 = vrot.slane %v3005, 3
  %v4970 = vsel %vm3038, %v4969, %v4968
  %v4971 = vrot.slane %v3007, 2
  %v4972 = vsel %vm3041, %v4971, %v4970
  %v4973 = vrot.slane %v4789, 1
  %v4974 = vsel %vm3044, %v4973, %v4972
  %v4975 = vrot.slane %v2998, 7
  %v4976 = vsel %vm3026, %v4975, %v2996
  %v4977 = vrot.slane %v3000, 6
  %v4978 = vsel %vm3029, %v4977, %v4976
  %v4979 = vrot.slane %v3002, 5
  %v4980 = vsel %vm3032, %v4979, %v4978
  %v4981 = vrot.slane %v3004, 4
  %v4982 = vsel %vm3035, %v4981, %v4980
  %v4983 = vrot.slane %v3006, 3
  %v4984 = vsel %vm3038, %v4983, %v4982
  %v4985 = vrot.slane %v3008, 2
  %v4986 = vsel %vm3041, %v4985, %v4984
  %v4987 = vrot.slane %v4790, 1
  %v4988 = vsel %vm3044, %v4987, %v4986
  %v4989 = vrot.slane %v3013, 7
  %v4990 = vsel %vm3026, %v4989, %v3011
  %v4991 = vrot.slane %v3015, 6
  %v4992 = vsel %vm3029, %v4991, %v4990
  %v4993 = vrot.slane %v3017, 5
  %v4994 = vsel %vm3032, %v4993, %v4992
  %v4995 = vrot.slane %v3019, 4
  %v4996 = vsel %vm3035, %v4995, %v4994
  %v4997 = vrot.slane %v3021, 3
  %v4998 = vsel %vm3038, %v4997, %v4996
  %v4999 = vrot.slane %v3023, 2
  %v5000 = vsel %vm3041, %v4999, %v4998
  %v5001 = vrot.slane %v4791, 1
  %v5002 = vsel %vm3044, %v5001, %v5000
  %v5003 = vrot.slane %v3014, 7
  %v5004 = vsel %vm3026, %v5003, %v3012
  %v5005 = vrot.slane %v3016, 6
  %v5006 = vsel %vm3029, %v5005, %v5004
  %v5007 = vrot.slane %v3018, 5
  %v5008 = vsel %vm3032, %v5007, %v5006
  %v5009 = vrot.slane %v3020, 4
  %v5010 = vsel %vm3035, %v5009, %v5008
  %v5011 = vrot.slane %v3022, 3
  %v5012 = vsel %vm3038, %v5011, %v5010
  %v5013 = vrot.slane %v3024, 2
  %v5014 = vsel %vm3041, %v5013, %v5012
  %v5015 = vrot.slane %v4792, 1
  %v5016 = vsel %vm3044, %v5015, %v5014
  %v5017 = vpack.c.b16 %v4834, %v4806
  %v5018 = vpack.c.b16 %v4848, %v4820
  %v5019 = vpack.c.b16 %v4890, %v4862
  %v5020 = vpack.c.b16 %v4904, %v4876
  %v5021 = vpack.c.b16 %v4946, %v4918
  %v5022 = vpack.c.b16 %v4960, %v4932
  %v5023 = vpack.c.b16 %v5002, %v4974
  %v5024 = vpack.c.b16 %v5016, %v4988
  %v5097 = vunpack.c.l.b16 %v4673
  %v5098 = vunpack.c.h.b16 %v4673
  %v5099 = vunpack.c.l.b16 %v4674
  %v5100 = vunpack.c.h.b16 %v4674
  %v5101 = vunpack.c.l.b16 %v4675
  %v5102 = vunpack.c.h.b16 %v4675
  %v5103 = vunpack.c.l.b16 %v4676
  %v5104 = vunpack.c.h.b16 %v4676
  %v5105 = vunpack.c.l.b16 %v4677
  %v5106 = vunpack.c.h.b16 %v4677
  %v5107 = vunpack.c.l.b16 %v4678
  %v5108 = vunpack.c.h.b16 %v4678
  %v5109 = vunpack.c.l.b16 %v4679
  %v5110 = vunpack.c.h.b16 %v4679
  %v5111 = vunpack.c.l.b16 %v4680
  %v5112 = vunpack.c.h.b16 %v4680
  %v5113 = vunpack.c.l.b16 %v4681
  %v5114 = vunpack.c.h.b16 %v4681
  %v5115 = vunpack.c.l.b16 %v4682
  %v5116 = vunpack.c.h.b16 %v4682
  %v5117 = vunpack.c.l.b16 %v4683
  %v5118 = vunpack.c.h.b16 %v4683
  %v5119 = vunpack.c.l.b16 %v4684
  %v5120 = vunpack.c.h.b16 %v4684
  %v5121 = vunpack.c.l.b16 %v4685
  %v5122 = vunpack.c.h.b16 %v4685
  %v5123 = vunpack.c.l.b16 %v4686
  %v5124 = vunpack.c.h.b16 %v4686
  %v5125 = vunpack.c.l.b16 %v4687
  %v5126 = vunpack.c.h.b16 %v4687
  %v5127 = vunpack.c.l.b16 %v4688
  %v5128 = vunpack.c.h.b16 %v4688
  %v5129 = vunpack.c.l.b16 %v4689
  %v5130 = vunpack.c.h.b16 %v4689
  %v5131 = vunpack.c.l.b16 %v4690
  %v5132 = vunpack.c.h.b16 %v4690
  %v5133 = vunpack.c.l.b16 %v4691
  %v5134 = vunpack.c.h.b16 %v4691
  %v5135 = vunpack.c.l.b16 %v4692
  %v5136 = vunpack.c.h.b16 %v4692
  %v5137 = vunpack.c.l.b16 %v4693
  %v5138 = vunpack.c.h.b16 %v4693
  %v5139 = vunpack.c.l.b16 %v4694
  %v5140 = vunpack.c.h.b16 %v4694
  %v5141 = vunpack.c.l.b16 %v4695
  %v5142 = vunpack.c.h.b16 %v4695
  %v5143 = vunpack.c.l.b16 %v4696
  %v5144 = vunpack.c.h.b16 %v4696
  %v5145 = vunpack.c.l.b16 %v4697
  %v5146 = vunpack.c.h.b16 %v4697
  %v5147 = vunpack.c.l.b16 %v4698
  %v5148 = vunpack.c.h.b16 %v4698
  %v5149 = vunpack.c.l.b16 %v4699
  %v5150 = vunpack.c.h.b16 %v4699
  %v5151 = vunpack.c.l.b16 %v4700
  %v5152 = vunpack.c.h.b16 %v4700
  %v5153 = vunpack.c.l.b16 %v4701
  %v5154 = vunpack.c.h.b16 %v4701
  %v5155 = vunpack.c.l.b16 %v4702
  %v5156 = vunpack.c.h.b16 %v4702
  %v5157 = vunpack.c.l.b16 %v4703
  %v5158 = vunpack.c.h.b16 %v4703
  %v5159 = vunpack.c.l.b16 %v4704
  %v5160 = vunpack.c.h.b16 %v4704
  %v5161 = vunpack.c.l.b16 %v4705
  %v5162 = vunpack.c.h.b16 %v4705
  %v5163 = vunpack.c.l.b16 %v4706
  %v5164 = vunpack.c.h.b16 %v4706
  %v5165 = vunpack.c.l.b16 %v4707
  %v5166 = vunpack.c.h.b16 %v4707
  %v5167 = vunpack.c.l.b16 %v4708
  %v5168 = vunpack.c.h.b16 %v4708
  %v5169 = vunpack.c.l.b16 %v4709
  %v5170 = vunpack.c.h.b16 %v4709
  %v5171 = vunpack.c.l.b16 %v4710
  %v5172 = vunpack.c.h.b16 %v4710
  %v5173 = vunpack.c.l.b16 %v4711
  %v5174 = vunpack.c.h.b16 %v4711
  %v5175 = vunpack.c.l.b16 %v4712
  %v5176 = vunpack.c.h.b16 %v4712
  %v5177 = vunpack.c.l.b16 %v4713
  %v5178 = vunpack.c.h.b16 %v4713
  %v5179 = vunpack.c.l.b16 %v4714
  %v5180 = vunpack.c.h.b16 %v4714
  %v5181 = vunpack.c.l.b16 %v4715
  %v5182 = vunpack.c.h.b16 %v4715
  %v5183 = vunpack.c.l.b16 %v4716
  %v5184 = vunpack.c.h.b16 %v4716
  %v5185 = vunpack.c.l.b16 %v4717
  %v5186 = vunpack.c.h.b16 %v4717
  %v5187 = vunpack.c.l.b16 %v4718
  %v5188 = vunpack.c.h.b16 %v4718
  %v5189 = vunpack.c.l.b16 %v4719
  %v5190 = vunpack.c.h.b16 %v4719
  %v5191 = vunpack.c.l.b16 %v4720
  %v5192 = vunpack.c.h.b16 %v4720
  %v5193 = vunpack.c.l.b16 %v4721
  %v5194 = vunpack.c.h.b16 %v4721
  %v5195 = vunpack.c.l.b16 %v4722
  %v5196 = vunpack.c.h.b16 %v4722
  %v5197 = vunpack.c.l.b16 %v4723
  %v5198 = vunpack.c.h.b16 %v4723
  %v5199 = vunpack.c.l.b16 %v4724
  %v5200 = vunpack.c.h.b16 %v4724
  %v5201 = vunpack.c.l.b16 %v4725
  %v5202 = vunpack.c.h.b16 %v4725
  %v5203 = vunpack.c.l.b16 %v4726
  %v5204 = vunpack.c.h.b16 %v4726
  %v5205 = vunpack.c.l.b16 %v4727
  %v5206 = vunpack.c.h.b16 %v4727
  %v5207 = vunpack.c.l.b16 %v4728
  %v5208 = vunpack.c.h.b16 %v4728
  %v5209 = vunpack.c.l.b16 %v4729
  %v5210 = vunpack.c.h.b16 %v4729
  %v5211 = vunpack.c.l.b16 %v4730
  %v5212 = vunpack.c.h.b16 %v4730
  %v5213 = vunpack.c.l.b16 %v4731
  %v5214 = vunpack.c.h.b16 %v4731
  %v5215 = vunpack.c.l.b16 %v4732
  %v5216 = vunpack.c.h.b16 %v4732
  %v5217 = vunpack.c.l.b16 %v4733
  %v5218 = vunpack.c.h.b16 %v4733
  %v5219 = vunpack.c.l.b16 %v4734
  %v5220 = vunpack.c.h.b16 %v4734
  %v5221 = vunpack.c.l.b16 %v4735
  %v5222 = vunpack.c.h.b16 %v4735
  %v5223 = vunpack.c.l.b16 %v4736
  %v5224 = vunpack.c.h.b16 %v4736
  %v5225 = vpack.c.b16 %v5101, %v5097
  %v5226 = vpack.c.b16 %v5102, %v5098
  %v5227 = vpack.c.b16 %v5103, %v5099
  %v5228 = vpack.c.b16 %v5104, %v5100
  %v5229 = vpack.c.b16 %v5109, %v5105
  %v5230 = vpack.c.b16 %v5110, %v5106
  %v5231 = vpack.c.b16 %v5111, %v5107
  %v5232 = vpack.c.b16 %v5112, %v5108
  %v5233 = vpack.c.b16 %v5117, %v5113
  %v5234 = vpack.c.b16 %v5118, %v5114
  %v5235 = vpack.c.b16 %v5119, %v5115
  %v5236 = vpack.c.b16 %v5120, %v5116
  %v5237 = vpack.c.b16 %v5125, %v5121
  %v5238 = vpack.c.b16 %v5126, %v5122
  %v5239 = vpack.c.b16 %v5127, %v5123
  %v5240 = vpack.c.b16 %v5128, %v5124
  %v5241 = vpack.c.b16 %v5133, %v5129
  %v5242 = vpack.c.b16 %v5134, %v5130
  %v5243 = vpack.c.b16 %v5135, %v5131
  %v5244 = vpack.c.b16 %v5136, %v5132
  %v5245 = vpack.c.b16 %v5141, %v5137
  %v5246 = vpack.c.b16 %v5142, %v5138
  %v5247 = vpack.c.b16 %v5143, %v5139
  %v5248 = vpack.c.b16 %v5144, %v5140
  %v5249 = vpack.c.b16 %v5149, %v5145
  %v5250 = vpack.c.b16 %v5150, %v5146
  %v5251 = vpack.c.b16 %v5151, %v5147
  %v5252 = vpack.c.b16 %v5152, %v5148
  %v5253 = vpack.c.b16 %v5157, %v5153
  %v5254 = vpack.c.b16 %v5158, %v5154
  %v5255 = vpack.c.b16 %v5159, %v5155
  %v5256 = vpack.c.b16 %v5160, %v5156
  %v5257 = vpack.c.b16 %v5165, %v5161
  %v5258 = vpack.c.b16 %v5166, %v5162
  %v5259 = vpack.c.b16 %v5167, %v5163
  %v5260 = vpack.c.b16 %v5168, %v5164
  %v5261 = vpack.c.b16 %v5173, %v5169
  %v5262 = vpack.c.b16 %v5174, %v5170
  %v5263 = vpack.c.b16 %v5175, %v5171
  %v5264 = vpack.c.b16 %v5176, %v5172
  %v5265 = vpack.c.b16 %v5181, %v5177
  %v5266 = vpack.c.b16 %v5182, %v5178
  %v5267 = vpack.c.b16 %v5183, %v5179
  %v5268 = vpack.c.b16 %v5184, %v5180
  %v5269 = vpack.c.b16 %v5189, %v5185
  %v5270 = vpack.c.b16 %v5190, %v5186
  %v5271 = vpack.c.b16 %v5191, %v5187
  %v5272 = vpack.c.b16 %v5192, %v5188
  %v5273 = vpack.c.b16 %v5197, %v5193
  %v5274 = vpack.c.b16 %v5198, %v5194
  %v5275 = vpack.c.b16 %v5199, %v5195
  %v5276 = vpack.c.b16 %v5200, %v5196
  %v5277 = vpack.c.b16 %v5205, %v5201
  %v5278 = vpack.c.b16 %v5206, %v5202
  %v5279 = vpack.c.b16 %v5207, %v5203
  %v5280 = vpack.c.b16 %v5208, %v5204
  %v5281 = vpack.c.b16 %v5213, %v5209
  %v5282 = vpack.c.b16 %v5214, %v5210
  %v5283 = vpack.c.b16 %v5215, %v5211
  %v5284 = vpack.c.b16 %v5216, %v5212
  %v5285 = vpack.c.b16 %v5221, %v5217
  %v5286 = vpack.c.b16 %v5222, %v5218
  %v5287 = vpack.c.b16 %v5223, %v5219
  %v5288 = vpack.c.b16 %v5224, %v5220
  %5353 = vmatpush.bf16.msra.mxu0 %v5253
  %5354 = vmatpush.bf16.msra.mxu0 %v5249
  %5355 = vmatpush.bf16.msra.mxu0 %v5245
  %5356 = vmatpush.bf16.msra.mxu0 %v5241
  %5357 = vmatpush.bf16.msra.mxu0 %v5237
  %5358 = vmatpush.bf16.msra.mxu0 %v5233
  %5359 = vmatpush.bf16.msra.mxu0 %v5229
  %5360 = vmatpush.bf16.msra.mxu0 %v5225
  %5361 = vmatmul.bf16.gmra.mxu0 %v5017
  %v5362 = vpop.f32.mrf.mxu0
  %v5363 = vadd.f32 0.0, %v5362
  %v5364 = vpop.f32.mrf.mxu0
  %v5365 = vadd.f32 0.0, %v5364
  %5366 = vmatmul.bf16.gmra.mxu0 %v5019
  %v5367 = vpop.f32.mrf.mxu0
  %v5368 = vadd.f32 0.0, %v5367
  %v5369 = vpop.f32.mrf.mxu0
  %v5370 = vadd.f32 0.0, %v5369
  %5371 = vmatmul.bf16.gmra.mxu0 %v5021
  %v5372 = vpop.f32.mrf.mxu0
  %v5373 = vadd.f32 0.0, %v5372
  %v5374 = vpop.f32.mrf.mxu0
  %v5375 = vadd.f32 0.0, %v5374
  %5376 = vmatmul.bf16.gmra.mxu0 %v5023
  %v5377 = vpop.f32.mrf.mxu0
  %v5378 = vadd.f32 0.0, %v5377
  %v5379 = vpop.f32.mrf.mxu0
  %v5380 = vadd.f32 0.0, %v5379
  %5381 = vdwg.mxu0
  %5382 = vmatpush.bf16.msra.mxu0 %v5285
  %5383 = vmatpush.bf16.msra.mxu0 %v5281
  %5384 = vmatpush.bf16.msra.mxu0 %v5277
  %5385 = vmatpush.bf16.msra.mxu0 %v5273
  %5386 = vmatpush.bf16.msra.mxu0 %v5269
  %5387 = vmatpush.bf16.msra.mxu0 %v5265
  %5388 = vmatpush.bf16.msra.mxu0 %v5261
  %5389 = vmatpush.bf16.msra.mxu0 %v5257
  %5390 = vmatmul.bf16.gmra.mxu0 %v5018
  %v5391 = vpop.f32.mrf.mxu0
  %v5392 = vadd.f32 %v5363, %v5391
  %v5393 = vpop.f32.mrf.mxu0
  %v5394 = vadd.f32 %v5365, %v5393
  %5395 = vmatmul.bf16.gmra.mxu0 %v5020
  %v5396 = vpop.f32.mrf.mxu0
  %v5397 = vadd.f32 %v5368, %v5396
  %v5398 = vpop.f32.mrf.mxu0
  %v5399 = vadd.f32 %v5370, %v5398
  %5400 = vmatmul.bf16.gmra.mxu0 %v5022
  %v5401 = vpop.f32.mrf.mxu0
  %v5402 = vadd.f32 %v5373, %v5401
  %v5403 = vpop.f32.mrf.mxu0
  %v5404 = vadd.f32 %v5375, %v5403
  %5405 = vmatmul.bf16.gmra.mxu0 %v5024
  %v5406 = vpop.f32.mrf.mxu0
  %v5407 = vadd.f32 %v5378, %v5406
  %v5408 = vpop.f32.mrf.mxu0
  %v5409 = vadd.f32 %v5380, %v5408
  %5410 = vdwg.mxu0
  %5411 = vmatpush.bf16.msra.mxu0 %v5254
  %5412 = vmatpush.bf16.msra.mxu0 %v5250
  %5413 = vmatpush.bf16.msra.mxu0 %v5246
  %5414 = vmatpush.bf16.msra.mxu0 %v5242
  %5415 = vmatpush.bf16.msra.mxu0 %v5238
  %5416 = vmatpush.bf16.msra.mxu0 %v5234
  %5417 = vmatpush.bf16.msra.mxu0 %v5230
  %5418 = vmatpush.bf16.msra.mxu0 %v5226
  %5419 = vmatmul.bf16.gmra.mxu0 %v5017
  %v5420 = vpop.f32.mrf.mxu0
  %v5421 = vadd.f32 0.0, %v5420
  %v5422 = vpop.f32.mrf.mxu0
  %v5423 = vadd.f32 0.0, %v5422
  %5424 = vmatmul.bf16.gmra.mxu0 %v5019
  %v5425 = vpop.f32.mrf.mxu0
  %v5426 = vadd.f32 0.0, %v5425
  %v5427 = vpop.f32.mrf.mxu0
  %v5428 = vadd.f32 0.0, %v5427
  %5429 = vmatmul.bf16.gmra.mxu0 %v5021
  %v5430 = vpop.f32.mrf.mxu0
  %v5431 = vadd.f32 0.0, %v5430
  %v5432 = vpop.f32.mrf.mxu0
  %v5433 = vadd.f32 0.0, %v5432
  %5434 = vmatmul.bf16.gmra.mxu0 %v5023
  %v5435 = vpop.f32.mrf.mxu0
  %v5436 = vadd.f32 0.0, %v5435
  %v5437 = vpop.f32.mrf.mxu0
  %v5438 = vadd.f32 0.0, %v5437
  %5439 = vdwg.mxu0
  %5440 = vmatpush.bf16.msra.mxu0 %v5286
  %5441 = vmatpush.bf16.msra.mxu0 %v5282
  %5442 = vmatpush.bf16.msra.mxu0 %v5278
  %5443 = vmatpush.bf16.msra.mxu0 %v5274
  %5444 = vmatpush.bf16.msra.mxu0 %v5270
  %5445 = vmatpush.bf16.msra.mxu0 %v5266
  %5446 = vmatpush.bf16.msra.mxu0 %v5262
  %5447 = vmatpush.bf16.msra.mxu0 %v5258
  %5448 = vmatmul.bf16.gmra.mxu0 %v5018
  %v5449 = vpop.f32.mrf.mxu0
  %v5450 = vadd.f32 %v5421, %v5449
  %v5451 = vpop.f32.mrf.mxu0
  %v5452 = vadd.f32 %v5423, %v5451
  %5453 = vmatmul.bf16.gmra.mxu0 %v5020
  %v5454 = vpop.f32.mrf.mxu0
  %v5455 = vadd.f32 %v5426, %v5454
  %v5456 = vpop.f32.mrf.mxu0
  %v5457 = vadd.f32 %v5428, %v5456
  %5458 = vmatmul.bf16.gmra.mxu0 %v5022
  %v5459 = vpop.f32.mrf.mxu0
  %v5460 = vadd.f32 %v5431, %v5459
  %v5461 = vpop.f32.mrf.mxu0
  %v5462 = vadd.f32 %v5433, %v5461
  %5463 = vmatmul.bf16.gmra.mxu0 %v5024
  %v5464 = vpop.f32.mrf.mxu0
  %v5465 = vadd.f32 %v5436, %v5464
  %v5466 = vpop.f32.mrf.mxu0
  %v5467 = vadd.f32 %v5438, %v5466
  %5468 = vdwg.mxu0
  %5469 = vmatpush.bf16.msra.mxu0 %v5255
  %5470 = vmatpush.bf16.msra.mxu0 %v5251
  %5471 = vmatpush.bf16.msra.mxu0 %v5247
  %5472 = vmatpush.bf16.msra.mxu0 %v5243
  %5473 = vmatpush.bf16.msra.mxu0 %v5239
  %5474 = vmatpush.bf16.msra.mxu0 %v5235
  %5475 = vmatpush.bf16.msra.mxu0 %v5231
  %5476 = vmatpush.bf16.msra.mxu0 %v5227
  %5477 = vmatmul.bf16.gmra.mxu0 %v5017
  %v5478 = vpop.f32.mrf.mxu0
  %v5479 = vadd.f32 0.0, %v5478
  %v5480 = vpop.f32.mrf.mxu0
  %v5481 = vadd.f32 0.0, %v5480
  %5482 = vmatmul.bf16.gmra.mxu0 %v5019
  %v5483 = vpop.f32.mrf.mxu0
  %v5484 = vadd.f32 0.0, %v5483
  %v5485 = vpop.f32.mrf.mxu0
  %v5486 = vadd.f32 0.0, %v5485
  %5487 = vmatmul.bf16.gmra.mxu0 %v5021
  %v5488 = vpop.f32.mrf.mxu0
  %v5489 = vadd.f32 0.0, %v5488
  %v5490 = vpop.f32.mrf.mxu0
  %v5491 = vadd.f32 0.0, %v5490
  %5492 = vmatmul.bf16.gmra.mxu0 %v5023
  %v5493 = vpop.f32.mrf.mxu0
  %v5494 = vadd.f32 0.0, %v5493
  %v5495 = vpop.f32.mrf.mxu0
  %v5496 = vadd.f32 0.0, %v5495
  %5497 = vdwg.mxu0
  %5498 = vmatpush.bf16.msra.mxu0 %v5287
  %5499 = vmatpush.bf16.msra.mxu0 %v5283
  %5500 = vmatpush.bf16.msra.mxu0 %v5279
  %5501 = vmatpush.bf16.msra.mxu0 %v5275
  %5502 = vmatpush.bf16.msra.mxu0 %v5271
  %5503 = vmatpush.bf16.msra.mxu0 %v5267
  %5504 = vmatpush.bf16.msra.mxu0 %v5263
  %5505 = vmatpush.bf16.msra.mxu0 %v5259
  %5506 = vmatmul.bf16.gmra.mxu0 %v5018
  %v5507 = vpop.f32.mrf.mxu0
  %v5508 = vadd.f32 %v5479, %v5507
  %v5509 = vpop.f32.mrf.mxu0
  %v5510 = vadd.f32 %v5481, %v5509
  %5511 = vmatmul.bf16.gmra.mxu0 %v5020
  %v5512 = vpop.f32.mrf.mxu0
  %v5513 = vadd.f32 %v5484, %v5512
  %v5514 = vpop.f32.mrf.mxu0
  %v5515 = vadd.f32 %v5486, %v5514
  %5516 = vmatmul.bf16.gmra.mxu0 %v5022
  %v5517 = vpop.f32.mrf.mxu0
  %v5518 = vadd.f32 %v5489, %v5517
  %v5519 = vpop.f32.mrf.mxu0
  %v5520 = vadd.f32 %v5491, %v5519
  %5521 = vmatmul.bf16.gmra.mxu0 %v5024
  %v5522 = vpop.f32.mrf.mxu0
  %v5523 = vadd.f32 %v5494, %v5522
  %v5524 = vpop.f32.mrf.mxu0
  %v5525 = vadd.f32 %v5496, %v5524
  %5526 = vdwg.mxu0
  %5527 = vmatpush.bf16.msra.mxu0 %v5256
  %5528 = vmatpush.bf16.msra.mxu0 %v5252
  %5529 = vmatpush.bf16.msra.mxu0 %v5248
  %5530 = vmatpush.bf16.msra.mxu0 %v5244
  %5531 = vmatpush.bf16.msra.mxu0 %v5240
  %5532 = vmatpush.bf16.msra.mxu0 %v5236
  %5533 = vmatpush.bf16.msra.mxu0 %v5232
  %5534 = vmatpush.bf16.msra.mxu0 %v5228
  %5535 = vmatmul.bf16.gmra.mxu0 %v5017
  %v5536 = vpop.f32.mrf.mxu0
  %v5537 = vadd.f32 0.0, %v5536
  %v5538 = vpop.f32.mrf.mxu0
  %v5539 = vadd.f32 0.0, %v5538
  %5540 = vmatmul.bf16.gmra.mxu0 %v5019
  %v5541 = vpop.f32.mrf.mxu0
  %v5542 = vadd.f32 0.0, %v5541
  %v5543 = vpop.f32.mrf.mxu0
  %v5544 = vadd.f32 0.0, %v5543
  %5545 = vmatmul.bf16.gmra.mxu0 %v5021
  %v5546 = vpop.f32.mrf.mxu0
  %v5547 = vadd.f32 0.0, %v5546
  %v5548 = vpop.f32.mrf.mxu0
  %v5549 = vadd.f32 0.0, %v5548
  %5550 = vmatmul.bf16.gmra.mxu0 %v5023
  %v5551 = vpop.f32.mrf.mxu0
  %v5552 = vadd.f32 0.0, %v5551
  %v5553 = vpop.f32.mrf.mxu0
  %v5554 = vadd.f32 0.0, %v5553
  %5555 = vdwg.mxu0
  %5556 = vmatpush.bf16.msra.mxu0 %v5288
  %5557 = vmatpush.bf16.msra.mxu0 %v5284
  %5558 = vmatpush.bf16.msra.mxu0 %v5280
  %5559 = vmatpush.bf16.msra.mxu0 %v5276
  %5560 = vmatpush.bf16.msra.mxu0 %v5272
  %5561 = vmatpush.bf16.msra.mxu0 %v5268
  %5562 = vmatpush.bf16.msra.mxu0 %v5264
  %5563 = vmatpush.bf16.msra.mxu0 %v5260
  %5564 = vmatmul.bf16.gmra.mxu0 %v5018
  %v5565 = vpop.f32.mrf.mxu0
  %v5566 = vadd.f32 %v5537, %v5565
  %v5567 = vpop.f32.mrf.mxu0
  %v5568 = vadd.f32 %v5539, %v5567
  %5569 = vmatmul.bf16.gmra.mxu0 %v5020
  %v5570 = vpop.f32.mrf.mxu0
  %v5571 = vadd.f32 %v5542, %v5570
  %v5572 = vpop.f32.mrf.mxu0
  %v5573 = vadd.f32 %v5544, %v5572
  %5574 = vmatmul.bf16.gmra.mxu0 %v5022
  %v5575 = vpop.f32.mrf.mxu0
  %v5576 = vadd.f32 %v5547, %v5575
  %v5577 = vpop.f32.mrf.mxu0
  %v5578 = vadd.f32 %v5549, %v5577
  %5579 = vmatmul.bf16.gmra.mxu0 %v5024
  %v5580 = vpop.f32.mrf.mxu0
  %v5581 = vadd.f32 %v5552, %v5580
  %v5582 = vpop.f32.mrf.mxu0
  %v5583 = vadd.f32 %v5554, %v5582
  %5584 = vdwg.mxu0
  %v5585 = vadd.f32 %v4479, %v5392
  %v5586 = vadd.f32 %v4537, %v5450
  %v5587 = vadd.f32 %v4595, %v5508
  %v5588 = vadd.f32 %v4653, %v5566
  %v5589 = vadd.f32 %v4481, %v5394
  %v5590 = vadd.f32 %v4539, %v5452
  %v5591 = vadd.f32 %v4597, %v5510
  %v5592 = vadd.f32 %v4655, %v5568
  %v5593 = vadd.f32 %v4484, %v5397
  %v5594 = vadd.f32 %v4542, %v5455
  %v5595 = vadd.f32 %v4600, %v5513
  %v5596 = vadd.f32 %v4658, %v5571
  %v5597 = vadd.f32 %v4486, %v5399
  %v5598 = vadd.f32 %v4544, %v5457
  %v5599 = vadd.f32 %v4602, %v5515
  %v5600 = vadd.f32 %v4660, %v5573
  %v5601 = vadd.f32 %v4489, %v5402
  %v5602 = vadd.f32 %v4547, %v5460
  %v5603 = vadd.f32 %v4605, %v5518
  %v5604 = vadd.f32 %v4663, %v5576
  %v5605 = vadd.f32 %v4491, %v5404
  %v5606 = vadd.f32 %v4549, %v5462
  %v5607 = vadd.f32 %v4607, %v5520
  %v5608 = vadd.f32 %v4665, %v5578
  %v5609 = vadd.f32 %v4494, %v5407
  %v5610 = vadd.f32 %v4552, %v5465
  %v5611 = vadd.f32 %v4610, %v5523
  %v5612 = vadd.f32 %v4668, %v5581
  %v5613 = vadd.f32 %v4496, %v5409
  %v5614 = vadd.f32 %v4554, %v5467
  %v5615 = vadd.f32 %v4612, %v5525
  %v5616 = vadd.f32 %v4670, %v5583
  %s5617 = scalar_lea.vmem %s3, 1536
  %v5618 = vld [vmem:[%s5617] sm:$0xff]
  %v5619 = vld [vmem:[%s5617 + $0x8] sm:$0xff]
  %v5620 = vld [vmem:[%s5617 + $0x10] sm:$0xff]
  %v5621 = vld [vmem:[%s5617 + $0x18] sm:$0xff]
  %v5622 = vld [vmem:[%s5617 + $0x20] sm:$0xff]
  %v5623 = vld [vmem:[%s5617 + $0x28] sm:$0xff]
  %v5624 = vld [vmem:[%s5617 + $0x30] sm:$0xff]
  %v5625 = vld [vmem:[%s5617 + $0x38] sm:$0xff]
  %v5626 = vld [vmem:[%s5617 + $0x40] sm:$0xff]
  %v5627 = vld [vmem:[%s5617 + $0x48] sm:$0xff]
  %v5628 = vld [vmem:[%s5617 + $0x50] sm:$0xff]
  %v5629 = vld [vmem:[%s5617 + $0x58] sm:$0xff]
  %v5630 = vld [vmem:[%s5617 + $0x60] sm:$0xff]
  %v5631 = vld [vmem:[%s5617 + $0x68] sm:$0xff]
  %v5632 = vld [vmem:[%s5617 + $0x70] sm:$0xff]
  %v5633 = vld [vmem:[%s5617 + $0x78] sm:$0xff]
  %v5634 = vld [vmem:[%s5617 + $0x80] sm:$0xff]
  %v5635 = vld [vmem:[%s5617 + $0x88] sm:$0xff]
  %v5636 = vld [vmem:[%s5617 + $0x90] sm:$0xff]
  %v5637 = vld [vmem:[%s5617 + $0x98] sm:$0xff]
  %v5638 = vld [vmem:[%s5617 + $0xa0] sm:$0xff]
  %v5639 = vld [vmem:[%s5617 + $0xa8] sm:$0xff]
  %v5640 = vld [vmem:[%s5617 + $0xb0] sm:$0xff]
  %v5641 = vld [vmem:[%s5617 + $0xb8] sm:$0xff]
  %v5642 = vld [vmem:[%s5617 + $0xc0] sm:$0xff]
  %v5643 = vld [vmem:[%s5617 + $0xc8] sm:$0xff]
  %v5644 = vld [vmem:[%s5617 + $0xd0] sm:$0xff]
  %v5645 = vld [vmem:[%s5617 + $0xd8] sm:$0xff]
  %v5646 = vld [vmem:[%s5617 + $0xe0] sm:$0xff]
  %v5647 = vld [vmem:[%s5617 + $0xe8] sm:$0xff]
  %v5648 = vld [vmem:[%s5617 + $0xf0] sm:$0xff]
  %v5649 = vld [vmem:[%s5617 + $0xf8] sm:$0xff]
  %v5650 = vld [vmem:[%s5617 + $0x100] sm:$0xff]
  %v5651 = vld [vmem:[%s5617 + $0x108] sm:$0xff]
  %v5652 = vld [vmem:[%s5617 + $0x110] sm:$0xff]
  %v5653 = vld [vmem:[%s5617 + $0x118] sm:$0xff]
  %v5654 = vld [vmem:[%s5617 + $0x120] sm:$0xff]
  %v5655 = vld [vmem:[%s5617 + $0x128] sm:$0xff]
  %v5656 = vld [vmem:[%s5617 + $0x130] sm:$0xff]
  %v5657 = vld [vmem:[%s5617 + $0x138] sm:$0xff]
  %v5658 = vld [vmem:[%s5617 + $0x140] sm:$0xff]
  %v5659 = vld [vmem:[%s5617 + $0x148] sm:$0xff]
  %v5660 = vld [vmem:[%s5617 + $0x150] sm:$0xff]
  %v5661 = vld [vmem:[%s5617 + $0x158] sm:$0xff]
  %v5662 = vld [vmem:[%s5617 + $0x160] sm:$0xff]
  %v5663 = vld [vmem:[%s5617 + $0x168] sm:$0xff]
  %v5664 = vld [vmem:[%s5617 + $0x170] sm:$0xff]
  %v5665 = vld [vmem:[%s5617 + $0x178] sm:$0xff]
  %v5666 = vld [vmem:[%s5617 + $0x180] sm:$0xff]
  %v5667 = vld [vmem:[%s5617 + $0x188] sm:$0xff]
  %v5668 = vld [vmem:[%s5617 + $0x190] sm:$0xff]
  %v5669 = vld [vmem:[%s5617 + $0x198] sm:$0xff]
  %v5670 = vld [vmem:[%s5617 + $0x1a0] sm:$0xff]
  %v5671 = vld [vmem:[%s5617 + $0x1a8] sm:$0xff]
  %v5672 = vld [vmem:[%s5617 + $0x1b0] sm:$0xff]
  %v5673 = vld [vmem:[%s5617 + $0x1b8] sm:$0xff]
  %v5674 = vld [vmem:[%s5617 + $0x1c0] sm:$0xff]
  %v5675 = vld [vmem:[%s5617 + $0x1c8] sm:$0xff]
  %v5676 = vld [vmem:[%s5617 + $0x1d0] sm:$0xff]
  %v5677 = vld [vmem:[%s5617 + $0x1d8] sm:$0xff]
  %v5678 = vld [vmem:[%s5617 + $0x1e0] sm:$0xff]
  %v5679 = vld [vmem:[%s5617 + $0x1e8] sm:$0xff]
  %v5680 = vld [vmem:[%s5617 + $0x1f0] sm:$0xff]
  %v5681 = vld [vmem:[%s5617 + $0x1f8] sm:$0xff]
  %v5690 = vunpack.c.l.b16 %v2370
  %v5691 = vunpack.c.h.b16 %v2370
  %v5692 = vunpack.c.l.b16 %v2381
  %v5693 = vunpack.c.h.b16 %v2381
  %v5694 = vunpack.c.l.b16 %v2392
  %v5695 = vunpack.c.h.b16 %v2392
  %v5696 = vunpack.c.l.b16 %v2403
  %v5697 = vunpack.c.h.b16 %v2403
  %v5698 = vunpack.c.l.b16 %v2414
  %v5699 = vunpack.c.h.b16 %v2414
  %v5700 = vunpack.c.l.b16 %v2425
  %v5701 = vunpack.c.h.b16 %v2425
  %v5702 = vunpack.c.l.b16 %v2436
  %v5703 = vunpack.c.h.b16 %v2436
  %v5704 = vunpack.c.l.b16 %v2447
  %v5705 = vunpack.c.h.b16 %v2447
  %v5706 = vpack.c.b16 %v5690, %v5690
  %v5707 = vpack.c.b16 %v5691, %v5691
  %v5708 = vpack.c.b16 %v5692, %v5692
  %v5709 = vpack.c.b16 %v5693, %v5693
  %v5710 = vpack.c.b16 %v5694, %v5694
  %v5711 = vpack.c.b16 %v5695, %v5695
  %v5712 = vpack.c.b16 %v5696, %v5696
  %v5713 = vpack.c.b16 %v5697, %v5697
  %v5714 = vpack.c.b16 %v5698, %v5698
  %v5715 = vpack.c.b16 %v5699, %v5699
  %v5716 = vpack.c.b16 %v5700, %v5700
  %v5717 = vpack.c.b16 %v5701, %v5701
  %v5718 = vpack.c.b16 %v5702, %v5702
  %v5719 = vpack.c.b16 %v5703, %v5703
  %v5720 = vpack.c.b16 %v5704, %v5704
  %v5721 = vpack.c.b16 %v5705, %v5705
  %v5722 = vunpack.c.l.b16 %v5706
  %v5723 = vunpack.c.l.b16 %v5707
  %v5724 = vunpack.c.l.b16 %v5708
  %v5725 = vunpack.c.l.b16 %v5709
  %v5726 = vunpack.c.l.b16 %v5710
  %v5727 = vunpack.c.l.b16 %v5711
  %v5728 = vunpack.c.l.b16 %v5712
  %v5729 = vunpack.c.l.b16 %v5713
  %v5730 = vunpack.c.l.b16 %v5714
  %v5731 = vunpack.c.l.b16 %v5715
  %v5732 = vunpack.c.l.b16 %v5716
  %v5733 = vunpack.c.l.b16 %v5717
  %v5734 = vunpack.c.l.b16 %v5718
  %v5735 = vunpack.c.l.b16 %v5719
  %v5736 = vunpack.c.l.b16 %v5720
  %v5737 = vunpack.c.l.b16 %v5721
  %v5738 = vrot.slane %v2903, 7
  %v5739 = vsel %vm3026, %v5738, %v2901
  %v5740 = vrot.slane %v2905, 6
  %v5741 = vsel %vm3029, %v5740, %v5739
  %v5742 = vrot.slane %v2907, 5
  %v5743 = vsel %vm3032, %v5742, %v5741
  %v5744 = vrot.slane %v2909, 4
  %v5745 = vsel %vm3035, %v5744, %v5743
  %v5746 = vrot.slane %v2911, 3
  %v5747 = vsel %vm3038, %v5746, %v5745
  %v5748 = vrot.slane %v4777, 2
  %v5749 = vsel %vm3041, %v5748, %v5747
  %v5750 = vrot.slane %v5722, 1
  %v5751 = vsel %vm3044, %v5750, %v5749
  %v5752 = vrot.slane %v2904, 7
  %v5753 = vsel %vm3026, %v5752, %v2902
  %v5754 = vrot.slane %v2906, 6
  %v5755 = vsel %vm3029, %v5754, %v5753
  %v5756 = vrot.slane %v2908, 5
  %v5757 = vsel %vm3032, %v5756, %v5755
  %v5758 = vrot.slane %v2910, 4
  %v5759 = vsel %vm3035, %v5758, %v5757
  %v5760 = vrot.slane %v2912, 3
  %v5761 = vsel %vm3038, %v5760, %v5759
  %v5762 = vrot.slane %v4778, 2
  %v5763 = vsel %vm3041, %v5762, %v5761
  %v5764 = vrot.slane %v5723, 1
  %v5765 = vsel %vm3044, %v5764, %v5763
  %v5766 = vrot.slane %v2919, 7
  %v5767 = vsel %vm3026, %v5766, %v2917
  %v5768 = vrot.slane %v2921, 6
  %v5769 = vsel %vm3029, %v5768, %v5767
  %v5770 = vrot.slane %v2923, 5
  %v5771 = vsel %vm3032, %v5770, %v5769
  %v5772 = vrot.slane %v2925, 4
  %v5773 = vsel %vm3035, %v5772, %v5771
  %v5774 = vrot.slane %v2927, 3
  %v5775 = vsel %vm3038, %v5774, %v5773
  %v5776 = vrot.slane %v4779, 2
  %v5777 = vsel %vm3041, %v5776, %v5775
  %v5778 = vrot.slane %v5724, 1
  %v5779 = vsel %vm3044, %v5778, %v5777
  %v5780 = vrot.slane %v2920, 7
  %v5781 = vsel %vm3026, %v5780, %v2918
  %v5782 = vrot.slane %v2922, 6
  %v5783 = vsel %vm3029, %v5782, %v5781
  %v5784 = vrot.slane %v2924, 5
  %v5785 = vsel %vm3032, %v5784, %v5783
  %v5786 = vrot.slane %v2926, 4
  %v5787 = vsel %vm3035, %v5786, %v5785
  %v5788 = vrot.slane %v2928, 3
  %v5789 = vsel %vm3038, %v5788, %v5787
  %v5790 = vrot.slane %v4780, 2
  %v5791 = vsel %vm3041, %v5790, %v5789
  %v5792 = vrot.slane %v5725, 1
  %v5793 = vsel %vm3044, %v5792, %v5791
  %v5794 = vrot.slane %v2935, 7
  %v5795 = vsel %vm3026, %v5794, %v2933
  %v5796 = vrot.slane %v2937, 6
  %v5797 = vsel %vm3029, %v5796, %v5795
  %v5798 = vrot.slane %v2939, 5
  %v5799 = vsel %vm3032, %v5798, %v5797
  %v5800 = vrot.slane %v2941, 4
  %v5801 = vsel %vm3035, %v5800, %v5799
  %v5802 = vrot.slane %v2943, 3
  %v5803 = vsel %vm3038, %v5802, %v5801
  %v5804 = vrot.slane %v4781, 2
  %v5805 = vsel %vm3041, %v5804, %v5803
  %v5806 = vrot.slane %v5726, 1
  %v5807 = vsel %vm3044, %v5806, %v5805
  %v5808 = vrot.slane %v2936, 7
  %v5809 = vsel %vm3026, %v5808, %v2934
  %v5810 = vrot.slane %v2938, 6
  %v5811 = vsel %vm3029, %v5810, %v5809
  %v5812 = vrot.slane %v2940, 5
  %v5813 = vsel %vm3032, %v5812, %v5811
  %v5814 = vrot.slane %v2942, 4
  %v5815 = vsel %vm3035, %v5814, %v5813
  %v5816 = vrot.slane %v2944, 3
  %v5817 = vsel %vm3038, %v5816, %v5815
  %v5818 = vrot.slane %v4782, 2
  %v5819 = vsel %vm3041, %v5818, %v5817
  %v5820 = vrot.slane %v5727, 1
  %v5821 = vsel %vm3044, %v5820, %v5819
  %v5822 = vrot.slane %v2951, 7
  %v5823 = vsel %vm3026, %v5822, %v2949
  %v5824 = vrot.slane %v2953, 6
  %v5825 = vsel %vm3029, %v5824, %v5823
  %v5826 = vrot.slane %v2955, 5
  %v5827 = vsel %vm3032, %v5826, %v5825
  %v5828 = vrot.slane %v2957, 4
  %v5829 = vsel %vm3035, %v5828, %v5827
  %v5830 = vrot.slane %v2959, 3
  %v5831 = vsel %vm3038, %v5830, %v5829
  %v5832 = vrot.slane %v4783, 2
  %v5833 = vsel %vm3041, %v5832, %v5831
  %v5834 = vrot.slane %v5728, 1
  %v5835 = vsel %vm3044, %v5834, %v5833
  %v5836 = vrot.slane %v2952, 7
  %v5837 = vsel %vm3026, %v5836, %v2950
  %v5838 = vrot.slane %v2954, 6
  %v5839 = vsel %vm3029, %v5838, %v5837
  %v5840 = vrot.slane %v2956, 5
  %v5841 = vsel %vm3032, %v5840, %v5839
  %v5842 = vrot.slane %v2958, 4
  %v5843 = vsel %vm3035, %v5842, %v5841
  %v5844 = vrot.slane %v2960, 3
  %v5845 = vsel %vm3038, %v5844, %v5843
  %v5846 = vrot.slane %v4784, 2
  %v5847 = vsel %vm3041, %v5846, %v5845
  %v5848 = vrot.slane %v5729, 1
  %v5849 = vsel %vm3044, %v5848, %v5847
  %v5850 = vrot.slane %v2967, 7
  %v5851 = vsel %vm3026, %v5850, %v2965
  %v5852 = vrot.slane %v2969, 6
  %v5853 = vsel %vm3029, %v5852, %v5851
  %v5854 = vrot.slane %v2971, 5
  %v5855 = vsel %vm3032, %v5854, %v5853
  %v5856 = vrot.slane %v2973, 4
  %v5857 = vsel %vm3035, %v5856, %v5855
  %v5858 = vrot.slane %v2975, 3
  %v5859 = vsel %vm3038, %v5858, %v5857
  %v5860 = vrot.slane %v4785, 2
  %v5861 = vsel %vm3041, %v5860, %v5859
  %v5862 = vrot.slane %v5730, 1
  %v5863 = vsel %vm3044, %v5862, %v5861
  %v5864 = vrot.slane %v2968, 7
  %v5865 = vsel %vm3026, %v5864, %v2966
  %v5866 = vrot.slane %v2970, 6
  %v5867 = vsel %vm3029, %v5866, %v5865
  %v5868 = vrot.slane %v2972, 5
  %v5869 = vsel %vm3032, %v5868, %v5867
  %v5870 = vrot.slane %v2974, 4
  %v5871 = vsel %vm3035, %v5870, %v5869
  %v5872 = vrot.slane %v2976, 3
  %v5873 = vsel %vm3038, %v5872, %v5871
  %v5874 = vrot.slane %v4786, 2
  %v5875 = vsel %vm3041, %v5874, %v5873
  %v5876 = vrot.slane %v5731, 1
  %v5877 = vsel %vm3044, %v5876, %v5875
  %v5878 = vrot.slane %v2983, 7
  %v5879 = vsel %vm3026, %v5878, %v2981
  %v5880 = vrot.slane %v2985, 6
  %v5881 = vsel %vm3029, %v5880, %v5879
  %v5882 = vrot.slane %v2987, 5
  %v5883 = vsel %vm3032, %v5882, %v5881
  %v5884 = vrot.slane %v2989, 4
  %v5885 = vsel %vm3035, %v5884, %v5883
  %v5886 = vrot.slane %v2991, 3
  %v5887 = vsel %vm3038, %v5886, %v5885
  %v5888 = vrot.slane %v4787, 2
  %v5889 = vsel %vm3041, %v5888, %v5887
  %v5890 = vrot.slane %v5732, 1
  %v5891 = vsel %vm3044, %v5890, %v5889
  %v5892 = vrot.slane %v2984, 7
  %v5893 = vsel %vm3026, %v5892, %v2982
  %v5894 = vrot.slane %v2986, 6
  %v5895 = vsel %vm3029, %v5894, %v5893
  %v5896 = vrot.slane %v2988, 5
  %v5897 = vsel %vm3032, %v5896, %v5895
  %v5898 = vrot.slane %v2990, 4
  %v5899 = vsel %vm3035, %v5898, %v5897
  %v5900 = vrot.slane %v2992, 3
  %v5901 = vsel %vm3038, %v5900, %v5899
  %v5902 = vrot.slane %v4788, 2
  %v5903 = vsel %vm3041, %v5902, %v5901
  %v5904 = vrot.slane %v5733, 1
  %v5905 = vsel %vm3044, %v5904, %v5903
  %v5906 = vrot.slane %v2999, 7
  %v5907 = vsel %vm3026, %v5906, %v2997
  %v5908 = vrot.slane %v3001, 6
  %v5909 = vsel %vm3029, %v5908, %v5907
  %v5910 = vrot.slane %v3003, 5
  %v5911 = vsel %vm3032, %v5910, %v5909
  %v5912 = vrot.slane %v3005, 4
  %v5913 = vsel %vm3035, %v5912, %v5911
  %v5914 = vrot.slane %v3007, 3
  %v5915 = vsel %vm3038, %v5914, %v5913
  %v5916 = vrot.slane %v4789, 2
  %v5917 = vsel %vm3041, %v5916, %v5915
  %v5918 = vrot.slane %v5734, 1
  %v5919 = vsel %vm3044, %v5918, %v5917
  %v5920 = vrot.slane %v3000, 7
  %v5921 = vsel %vm3026, %v5920, %v2998
  %v5922 = vrot.slane %v3002, 6
  %v5923 = vsel %vm3029, %v5922, %v5921
  %v5924 = vrot.slane %v3004, 5
  %v5925 = vsel %vm3032, %v5924, %v5923
  %v5926 = vrot.slane %v3006, 4
  %v5927 = vsel %vm3035, %v5926, %v5925
  %v5928 = vrot.slane %v3008, 3
  %v5929 = vsel %vm3038, %v5928, %v5927
  %v5930 = vrot.slane %v4790, 2
  %v5931 = vsel %vm3041, %v5930, %v5929
  %v5932 = vrot.slane %v5735, 1
  %v5933 = vsel %vm3044, %v5932, %v5931
  %v5934 = vrot.slane %v3015, 7
  %v5935 = vsel %vm3026, %v5934, %v3013
  %v5936 = vrot.slane %v3017, 6
  %v5937 = vsel %vm3029, %v5936, %v5935
  %v5938 = vrot.slane %v3019, 5
  %v5939 = vsel %vm3032, %v5938, %v5937
  %v5940 = vrot.slane %v3021, 4
  %v5941 = vsel %vm3035, %v5940, %v5939
  %v5942 = vrot.slane %v3023, 3
  %v5943 = vsel %vm3038, %v5942, %v5941
  %v5944 = vrot.slane %v4791, 2
  %v5945 = vsel %vm3041, %v5944, %v5943
  %v5946 = vrot.slane %v5736, 1
  %v5947 = vsel %vm3044, %v5946, %v5945
  %v5948 = vrot.slane %v3016, 7
  %v5949 = vsel %vm3026, %v5948, %v3014
  %v5950 = vrot.slane %v3018, 6
  %v5951 = vsel %vm3029, %v5950, %v5949
  %v5952 = vrot.slane %v3020, 5
  %v5953 = vsel %vm3032, %v5952, %v5951
  %v5954 = vrot.slane %v3022, 4
  %v5955 = vsel %vm3035, %v5954, %v5953
  %v5956 = vrot.slane %v3024, 3
  %v5957 = vsel %vm3038, %v5956, %v5955
  %v5958 = vrot.slane %v4792, 2
  %v5959 = vsel %vm3041, %v5958, %v5957
  %v5960 = vrot.slane %v5737, 1
  %v5961 = vsel %vm3044, %v5960, %v5959
  %v5962 = vpack.c.b16 %v5779, %v5751
  %v5963 = vpack.c.b16 %v5793, %v5765
  %v5964 = vpack.c.b16 %v5835, %v5807
  %v5965 = vpack.c.b16 %v5849, %v5821
  %v5966 = vpack.c.b16 %v5891, %v5863
  %v5967 = vpack.c.b16 %v5905, %v5877
  %v5968 = vpack.c.b16 %v5947, %v5919
  %v5969 = vpack.c.b16 %v5961, %v5933
  %v6042 = vunpack.c.l.b16 %v5618
  %v6043 = vunpack.c.h.b16 %v5618
  %v6044 = vunpack.c.l.b16 %v5619
  %v6045 = vunpack.c.h.b16 %v5619
  %v6046 = vunpack.c.l.b16 %v5620
  %v6047 = vunpack.c.h.b16 %v5620
  %v6048 = vunpack.c.l.b16 %v5621
  %v6049 = vunpack.c.h.b16 %v5621
  %v6050 = vunpack.c.l.b16 %v5622
  %v6051 = vunpack.c.h.b16 %v5622
  %v6052 = vunpack.c.l.b16 %v5623
  %v6053 = vunpack.c.h.b16 %v5623
  %v6054 = vunpack.c.l.b16 %v5624
  %v6055 = vunpack.c.h.b16 %v5624
  %v6056 = vunpack.c.l.b16 %v5625
  %v6057 = vunpack.c.h.b16 %v5625
  %v6058 = vunpack.c.l.b16 %v5626
  %v6059 = vunpack.c.h.b16 %v5626
  %v6060 = vunpack.c.l.b16 %v5627
  %v6061 = vunpack.c.h.b16 %v5627
  %v6062 = vunpack.c.l.b16 %v5628
  %v6063 = vunpack.c.h.b16 %v5628
  %v6064 = vunpack.c.l.b16 %v5629
  %v6065 = vunpack.c.h.b16 %v5629
  %v6066 = vunpack.c.l.b16 %v5630
  %v6067 = vunpack.c.h.b16 %v5630
  %v6068 = vunpack.c.l.b16 %v5631
  %v6069 = vunpack.c.h.b16 %v5631
  %v6070 = vunpack.c.l.b16 %v5632
  %v6071 = vunpack.c.h.b16 %v5632
  %v6072 = vunpack.c.l.b16 %v5633
  %v6073 = vunpack.c.h.b16 %v5633
  %v6074 = vunpack.c.l.b16 %v5634
  %v6075 = vunpack.c.h.b16 %v5634
  %v6076 = vunpack.c.l.b16 %v5635
  %v6077 = vunpack.c.h.b16 %v5635
  %v6078 = vunpack.c.l.b16 %v5636
  %v6079 = vunpack.c.h.b16 %v5636
  %v6080 = vunpack.c.l.b16 %v5637
  %v6081 = vunpack.c.h.b16 %v5637
  %v6082 = vunpack.c.l.b16 %v5638
  %v6083 = vunpack.c.h.b16 %v5638
  %v6084 = vunpack.c.l.b16 %v5639
  %v6085 = vunpack.c.h.b16 %v5639
  %v6086 = vunpack.c.l.b16 %v5640
  %v6087 = vunpack.c.h.b16 %v5640
  %v6088 = vunpack.c.l.b16 %v5641
  %v6089 = vunpack.c.h.b16 %v5641
  %v6090 = vunpack.c.l.b16 %v5642
  %v6091 = vunpack.c.h.b16 %v5642
  %v6092 = vunpack.c.l.b16 %v5643
  %v6093 = vunpack.c.h.b16 %v5643
  %v6094 = vunpack.c.l.b16 %v5644
  %v6095 = vunpack.c.h.b16 %v5644
  %v6096 = vunpack.c.l.b16 %v5645
  %v6097 = vunpack.c.h.b16 %v5645
  %v6098 = vunpack.c.l.b16 %v5646
  %v6099 = vunpack.c.h.b16 %v5646
  %v6100 = vunpack.c.l.b16 %v5647
  %v6101 = vunpack.c.h.b16 %v5647
  %v6102 = vunpack.c.l.b16 %v5648
  %v6103 = vunpack.c.h.b16 %v5648
  %v6104 = vunpack.c.l.b16 %v5649
  %v6105 = vunpack.c.h.b16 %v5649
  %v6106 = vunpack.c.l.b16 %v5650
  %v6107 = vunpack.c.h.b16 %v5650
  %v6108 = vunpack.c.l.b16 %v5651
  %v6109 = vunpack.c.h.b16 %v5651
  %v6110 = vunpack.c.l.b16 %v5652
  %v6111 = vunpack.c.h.b16 %v5652
  %v6112 = vunpack.c.l.b16 %v5653
  %v6113 = vunpack.c.h.b16 %v5653
  %v6114 = vunpack.c.l.b16 %v5654
  %v6115 = vunpack.c.h.b16 %v5654
  %v6116 = vunpack.c.l.b16 %v5655
  %v6117 = vunpack.c.h.b16 %v5655
  %v6118 = vunpack.c.l.b16 %v5656
  %v6119 = vunpack.c.h.b16 %v5656
  %v6120 = vunpack.c.l.b16 %v5657
  %v6121 = vunpack.c.h.b16 %v5657
  %v6122 = vunpack.c.l.b16 %v5658
  %v6123 = vunpack.c.h.b16 %v5658
  %v6124 = vunpack.c.l.b16 %v5659
  %v6125 = vunpack.c.h.b16 %v5659
  %v6126 = vunpack.c.l.b16 %v5660
  %v6127 = vunpack.c.h.b16 %v5660
  %v6128 = vunpack.c.l.b16 %v5661
  %v6129 = vunpack.c.h.b16 %v5661
  %v6130 = vunpack.c.l.b16 %v5662
  %v6131 = vunpack.c.h.b16 %v5662
  %v6132 = vunpack.c.l.b16 %v5663
  %v6133 = vunpack.c.h.b16 %v5663
  %v6134 = vunpack.c.l.b16 %v5664
  %v6135 = vunpack.c.h.b16 %v5664
  %v6136 = vunpack.c.l.b16 %v5665
  %v6137 = vunpack.c.h.b16 %v5665
  %v6138 = vunpack.c.l.b16 %v5666
  %v6139 = vunpack.c.h.b16 %v5666
  %v6140 = vunpack.c.l.b16 %v5667
  %v6141 = vunpack.c.h.b16 %v5667
  %v6142 = vunpack.c.l.b16 %v5668
  %v6143 = vunpack.c.h.b16 %v5668
  %v6144 = vunpack.c.l.b16 %v5669
  %v6145 = vunpack.c.h.b16 %v5669
  %v6146 = vunpack.c.l.b16 %v5670
  %v6147 = vunpack.c.h.b16 %v5670
  %v6148 = vunpack.c.l.b16 %v5671
  %v6149 = vunpack.c.h.b16 %v5671
  %v6150 = vunpack.c.l.b16 %v5672
  %v6151 = vunpack.c.h.b16 %v5672
  %v6152 = vunpack.c.l.b16 %v5673
  %v6153 = vunpack.c.h.b16 %v5673
  %v6154 = vunpack.c.l.b16 %v5674
  %v6155 = vunpack.c.h.b16 %v5674
  %v6156 = vunpack.c.l.b16 %v5675
  %v6157 = vunpack.c.h.b16 %v5675
  %v6158 = vunpack.c.l.b16 %v5676
  %v6159 = vunpack.c.h.b16 %v5676
  %v6160 = vunpack.c.l.b16 %v5677
  %v6161 = vunpack.c.h.b16 %v5677
  %v6162 = vunpack.c.l.b16 %v5678
  %v6163 = vunpack.c.h.b16 %v5678
  %v6164 = vunpack.c.l.b16 %v5679
  %v6165 = vunpack.c.h.b16 %v5679
  %v6166 = vunpack.c.l.b16 %v5680
  %v6167 = vunpack.c.h.b16 %v5680
  %v6168 = vunpack.c.l.b16 %v5681
  %v6169 = vunpack.c.h.b16 %v5681
  %v6170 = vpack.c.b16 %v6046, %v6042
  %v6171 = vpack.c.b16 %v6047, %v6043
  %v6172 = vpack.c.b16 %v6048, %v6044
  %v6173 = vpack.c.b16 %v6049, %v6045
  %v6174 = vpack.c.b16 %v6054, %v6050
  %v6175 = vpack.c.b16 %v6055, %v6051
  %v6176 = vpack.c.b16 %v6056, %v6052
  %v6177 = vpack.c.b16 %v6057, %v6053
  %v6178 = vpack.c.b16 %v6062, %v6058
  %v6179 = vpack.c.b16 %v6063, %v6059
  %v6180 = vpack.c.b16 %v6064, %v6060
  %v6181 = vpack.c.b16 %v6065, %v6061
  %v6182 = vpack.c.b16 %v6070, %v6066
  %v6183 = vpack.c.b16 %v6071, %v6067
  %v6184 = vpack.c.b16 %v6072, %v6068
  %v6185 = vpack.c.b16 %v6073, %v6069
  %v6186 = vpack.c.b16 %v6078, %v6074
  %v6187 = vpack.c.b16 %v6079, %v6075
  %v6188 = vpack.c.b16 %v6080, %v6076
  %v6189 = vpack.c.b16 %v6081, %v6077
  %v6190 = vpack.c.b16 %v6086, %v6082
  %v6191 = vpack.c.b16 %v6087, %v6083
  %v6192 = vpack.c.b16 %v6088, %v6084
  %v6193 = vpack.c.b16 %v6089, %v6085
  %v6194 = vpack.c.b16 %v6094, %v6090
  %v6195 = vpack.c.b16 %v6095, %v6091
  %v6196 = vpack.c.b16 %v6096, %v6092
  %v6197 = vpack.c.b16 %v6097, %v6093
  %v6198 = vpack.c.b16 %v6102, %v6098
  %v6199 = vpack.c.b16 %v6103, %v6099
  %v6200 = vpack.c.b16 %v6104, %v6100
  %v6201 = vpack.c.b16 %v6105, %v6101
  %v6202 = vpack.c.b16 %v6110, %v6106
  %v6203 = vpack.c.b16 %v6111, %v6107
  %v6204 = vpack.c.b16 %v6112, %v6108
  %v6205 = vpack.c.b16 %v6113, %v6109
  %v6206 = vpack.c.b16 %v6118, %v6114
  %v6207 = vpack.c.b16 %v6119, %v6115
  %v6208 = vpack.c.b16 %v6120, %v6116
  %v6209 = vpack.c.b16 %v6121, %v6117
  %v6210 = vpack.c.b16 %v6126, %v6122
  %v6211 = vpack.c.b16 %v6127, %v6123
  %v6212 = vpack.c.b16 %v6128, %v6124
  %v6213 = vpack.c.b16 %v6129, %v6125
  %v6214 = vpack.c.b16 %v6134, %v6130
  %v6215 = vpack.c.b16 %v6135, %v6131
  %v6216 = vpack.c.b16 %v6136, %v6132
  %v6217 = vpack.c.b16 %v6137, %v6133
  %v6218 = vpack.c.b16 %v6142, %v6138
  %v6219 = vpack.c.b16 %v6143, %v6139
  %v6220 = vpack.c.b16 %v6144, %v6140
  %v6221 = vpack.c.b16 %v6145, %v6141
  %v6222 = vpack.c.b16 %v6150, %v6146
  %v6223 = vpack.c.b16 %v6151, %v6147
  %v6224 = vpack.c.b16 %v6152, %v6148
  %v6225 = vpack.c.b16 %v6153, %v6149
  %v6226 = vpack.c.b16 %v6158, %v6154
  %v6227 = vpack.c.b16 %v6159, %v6155
  %v6228 = vpack.c.b16 %v6160, %v6156
  %v6229 = vpack.c.b16 %v6161, %v6157
  %v6230 = vpack.c.b16 %v6166, %v6162
  %v6231 = vpack.c.b16 %v6167, %v6163
  %v6232 = vpack.c.b16 %v6168, %v6164
  %v6233 = vpack.c.b16 %v6169, %v6165
  %6298 = vmatpush.bf16.msra.mxu0 %v6198
  %6299 = vmatpush.bf16.msra.mxu0 %v6194
  %6300 = vmatpush.bf16.msra.mxu0 %v6190
  %6301 = vmatpush.bf16.msra.mxu0 %v6186
  %6302 = vmatpush.bf16.msra.mxu0 %v6182
  %6303 = vmatpush.bf16.msra.mxu0 %v6178
  %6304 = vmatpush.bf16.msra.mxu0 %v6174
  %6305 = vmatpush.bf16.msra.mxu0 %v6170
  %6306 = vmatmul.bf16.gmra.mxu0 %v5962
  %v6307 = vpop.f32.mrf.mxu0
  %v6308 = vadd.f32 0.0, %v6307
  %v6309 = vpop.f32.mrf.mxu0
  %v6310 = vadd.f32 0.0, %v6309
  %6311 = vmatmul.bf16.gmra.mxu0 %v5964
  %v6312 = vpop.f32.mrf.mxu0
  %v6313 = vadd.f32 0.0, %v6312
  %v6314 = vpop.f32.mrf.mxu0
  %v6315 = vadd.f32 0.0, %v6314
  %6316 = vmatmul.bf16.gmra.mxu0 %v5966
  %v6317 = vpop.f32.mrf.mxu0
  %v6318 = vadd.f32 0.0, %v6317
  %v6319 = vpop.f32.mrf.mxu0
  %v6320 = vadd.f32 0.0, %v6319
  %6321 = vmatmul.bf16.gmra.mxu0 %v5968
  %v6322 = vpop.f32.mrf.mxu0
  %v6323 = vadd.f32 0.0, %v6322
  %v6324 = vpop.f32.mrf.mxu0
  %v6325 = vadd.f32 0.0, %v6324
  %6326 = vdwg.mxu0
  %6327 = vmatpush.bf16.msra.mxu0 %v6230
  %6328 = vmatpush.bf16.msra.mxu0 %v6226
  %6329 = vmatpush.bf16.msra.mxu0 %v6222
  %6330 = vmatpush.bf16.msra.mxu0 %v6218
  %6331 = vmatpush.bf16.msra.mxu0 %v6214
  %6332 = vmatpush.bf16.msra.mxu0 %v6210
  %6333 = vmatpush.bf16.msra.mxu0 %v6206
  %6334 = vmatpush.bf16.msra.mxu0 %v6202
  %6335 = vmatmul.bf16.gmra.mxu0 %v5963
  %v6336 = vpop.f32.mrf.mxu0
  %v6337 = vadd.f32 %v6308, %v6336
  %v6338 = vpop.f32.mrf.mxu0
  %v6339 = vadd.f32 %v6310, %v6338
  %6340 = vmatmul.bf16.gmra.mxu0 %v5965
  %v6341 = vpop.f32.mrf.mxu0
  %v6342 = vadd.f32 %v6313, %v6341
  %v6343 = vpop.f32.mrf.mxu0
  %v6344 = vadd.f32 %v6315, %v6343
  %6345 = vmatmul.bf16.gmra.mxu0 %v5967
  %v6346 = vpop.f32.mrf.mxu0
  %v6347 = vadd.f32 %v6318, %v6346
  %v6348 = vpop.f32.mrf.mxu0
  %v6349 = vadd.f32 %v6320, %v6348
  %6350 = vmatmul.bf16.gmra.mxu0 %v5969
  %v6351 = vpop.f32.mrf.mxu0
  %v6352 = vadd.f32 %v6323, %v6351
  %v6353 = vpop.f32.mrf.mxu0
  %v6354 = vadd.f32 %v6325, %v6353
  %6355 = vdwg.mxu0
  %6356 = vmatpush.bf16.msra.mxu0 %v6199
  %6357 = vmatpush.bf16.msra.mxu0 %v6195
  %6358 = vmatpush.bf16.msra.mxu0 %v6191
  %6359 = vmatpush.bf16.msra.mxu0 %v6187
  %6360 = vmatpush.bf16.msra.mxu0 %v6183
  %6361 = vmatpush.bf16.msra.mxu0 %v6179
  %6362 = vmatpush.bf16.msra.mxu0 %v6175
  %6363 = vmatpush.bf16.msra.mxu0 %v6171
  %6364 = vmatmul.bf16.gmra.mxu0 %v5962
  %v6365 = vpop.f32.mrf.mxu0
  %v6366 = vadd.f32 0.0, %v6365
  %v6367 = vpop.f32.mrf.mxu0
  %v6368 = vadd.f32 0.0, %v6367
  %6369 = vmatmul.bf16.gmra.mxu0 %v5964
  %v6370 = vpop.f32.mrf.mxu0
  %v6371 = vadd.f32 0.0, %v6370
  %v6372 = vpop.f32.mrf.mxu0
  %v6373 = vadd.f32 0.0, %v6372
  %6374 = vmatmul.bf16.gmra.mxu0 %v5966
  %v6375 = vpop.f32.mrf.mxu0
  %v6376 = vadd.f32 0.0, %v6375
  %v6377 = vpop.f32.mrf.mxu0
  %v6378 = vadd.f32 0.0, %v6377
  %6379 = vmatmul.bf16.gmra.mxu0 %v5968
  %v6380 = vpop.f32.mrf.mxu0
  %v6381 = vadd.f32 0.0, %v6380
  %v6382 = vpop.f32.mrf.mxu0
  %v6383 = vadd.f32 0.0, %v6382
  %6384 = vdwg.mxu0
  %6385 = vmatpush.bf16.msra.mxu0 %v6231
  %6386 = vmatpush.bf16.msra.mxu0 %v6227
  %6387 = vmatpush.bf16.msra.mxu0 %v6223
  %6388 = vmatpush.bf16.msra.mxu0 %v6219
  %6389 = vmatpush.bf16.msra.mxu0 %v6215
  %6390 = vmatpush.bf16.msra.mxu0 %v6211
  %6391 = vmatpush.bf16.msra.mxu0 %v6207
  %6392 = vmatpush.bf16.msra.mxu0 %v6203
  %6393 = vmatmul.bf16.gmra.mxu0 %v5963
  %v6394 = vpop.f32.mrf.mxu0
  %v6395 = vadd.f32 %v6366, %v6394
  %v6396 = vpop.f32.mrf.mxu0
  %v6397 = vadd.f32 %v6368, %v6396
  %6398 = vmatmul.bf16.gmra.mxu0 %v5965
  %v6399 = vpop.f32.mrf.mxu0
  %v6400 = vadd.f32 %v6371, %v6399
  %v6401 = vpop.f32.mrf.mxu0
  %v6402 = vadd.f32 %v6373, %v6401
  %6403 = vmatmul.bf16.gmra.mxu0 %v5967
  %v6404 = vpop.f32.mrf.mxu0
  %v6405 = vadd.f32 %v6376, %v6404
  %v6406 = vpop.f32.mrf.mxu0
  %v6407 = vadd.f32 %v6378, %v6406
  %6408 = vmatmul.bf16.gmra.mxu0 %v5969
  %v6409 = vpop.f32.mrf.mxu0
  %v6410 = vadd.f32 %v6381, %v6409
  %v6411 = vpop.f32.mrf.mxu0
  %v6412 = vadd.f32 %v6383, %v6411
  %6413 = vdwg.mxu0
  %6414 = vmatpush.bf16.msra.mxu0 %v6200
  %6415 = vmatpush.bf16.msra.mxu0 %v6196
  %6416 = vmatpush.bf16.msra.mxu0 %v6192
  %6417 = vmatpush.bf16.msra.mxu0 %v6188
  %6418 = vmatpush.bf16.msra.mxu0 %v6184
  %6419 = vmatpush.bf16.msra.mxu0 %v6180
  %6420 = vmatpush.bf16.msra.mxu0 %v6176
  %6421 = vmatpush.bf16.msra.mxu0 %v6172
  %6422 = vmatmul.bf16.gmra.mxu0 %v5962
  %v6423 = vpop.f32.mrf.mxu0
  %v6424 = vadd.f32 0.0, %v6423
  %v6425 = vpop.f32.mrf.mxu0
  %v6426 = vadd.f32 0.0, %v6425
  %6427 = vmatmul.bf16.gmra.mxu0 %v5964
  %v6428 = vpop.f32.mrf.mxu0
  %v6429 = vadd.f32 0.0, %v6428
  %v6430 = vpop.f32.mrf.mxu0
  %v6431 = vadd.f32 0.0, %v6430
  %6432 = vmatmul.bf16.gmra.mxu0 %v5966
  %v6433 = vpop.f32.mrf.mxu0
  %v6434 = vadd.f32 0.0, %v6433
  %v6435 = vpop.f32.mrf.mxu0
  %v6436 = vadd.f32 0.0, %v6435
  %6437 = vmatmul.bf16.gmra.mxu0 %v5968
  %v6438 = vpop.f32.mrf.mxu0
  %v6439 = vadd.f32 0.0, %v6438
  %v6440 = vpop.f32.mrf.mxu0
  %v6441 = vadd.f32 0.0, %v6440
  %6442 = vdwg.mxu0
  %6443 = vmatpush.bf16.msra.mxu0 %v6232
  %6444 = vmatpush.bf16.msra.mxu0 %v6228
  %6445 = vmatpush.bf16.msra.mxu0 %v6224
  %6446 = vmatpush.bf16.msra.mxu0 %v6220
  %6447 = vmatpush.bf16.msra.mxu0 %v6216
  %6448 = vmatpush.bf16.msra.mxu0 %v6212
  %6449 = vmatpush.bf16.msra.mxu0 %v6208
  %6450 = vmatpush.bf16.msra.mxu0 %v6204
  %6451 = vmatmul.bf16.gmra.mxu0 %v5963
  %v6452 = vpop.f32.mrf.mxu0
  %v6453 = vadd.f32 %v6424, %v6452
  %v6454 = vpop.f32.mrf.mxu0
  %v6455 = vadd.f32 %v6426, %v6454
  %6456 = vmatmul.bf16.gmra.mxu0 %v5965
  %v6457 = vpop.f32.mrf.mxu0
  %v6458 = vadd.f32 %v6429, %v6457
  %v6459 = vpop.f32.mrf.mxu0
  %v6460 = vadd.f32 %v6431, %v6459
  %6461 = vmatmul.bf16.gmra.mxu0 %v5967
  %v6462 = vpop.f32.mrf.mxu0
  %v6463 = vadd.f32 %v6434, %v6462
  %v6464 = vpop.f32.mrf.mxu0
  %v6465 = vadd.f32 %v6436, %v6464
  %6466 = vmatmul.bf16.gmra.mxu0 %v5969
  %v6467 = vpop.f32.mrf.mxu0
  %v6468 = vadd.f32 %v6439, %v6467
  %v6469 = vpop.f32.mrf.mxu0
  %v6470 = vadd.f32 %v6441, %v6469
  %6471 = vdwg.mxu0
  %6472 = vmatpush.bf16.msra.mxu0 %v6201
  %6473 = vmatpush.bf16.msra.mxu0 %v6197
  %6474 = vmatpush.bf16.msra.mxu0 %v6193
  %6475 = vmatpush.bf16.msra.mxu0 %v6189
  %6476 = vmatpush.bf16.msra.mxu0 %v6185
  %6477 = vmatpush.bf16.msra.mxu0 %v6181
  %6478 = vmatpush.bf16.msra.mxu0 %v6177
  %6479 = vmatpush.bf16.msra.mxu0 %v6173
  %6480 = vmatmul.bf16.gmra.mxu0 %v5962
  %v6481 = vpop.f32.mrf.mxu0
  %v6482 = vadd.f32 0.0, %v6481
  %v6483 = vpop.f32.mrf.mxu0
  %v6484 = vadd.f32 0.0, %v6483
  %6485 = vmatmul.bf16.gmra.mxu0 %v5964
  %v6486 = vpop.f32.mrf.mxu0
  %v6487 = vadd.f32 0.0, %v6486
  %v6488 = vpop.f32.mrf.mxu0
  %v6489 = vadd.f32 0.0, %v6488
  %6490 = vmatmul.bf16.gmra.mxu0 %v5966
  %v6491 = vpop.f32.mrf.mxu0
  %v6492 = vadd.f32 0.0, %v6491
  %v6493 = vpop.f32.mrf.mxu0
  %v6494 = vadd.f32 0.0, %v6493
  %6495 = vmatmul.bf16.gmra.mxu0 %v5968
  %v6496 = vpop.f32.mrf.mxu0
  %v6497 = vadd.f32 0.0, %v6496
  %v6498 = vpop.f32.mrf.mxu0
  %v6499 = vadd.f32 0.0, %v6498
  %6500 = vdwg.mxu0
  %6501 = vmatpush.bf16.msra.mxu0 %v6233
  %6502 = vmatpush.bf16.msra.mxu0 %v6229
  %6503 = vmatpush.bf16.msra.mxu0 %v6225
  %6504 = vmatpush.bf16.msra.mxu0 %v6221
  %6505 = vmatpush.bf16.msra.mxu0 %v6217
  %6506 = vmatpush.bf16.msra.mxu0 %v6213
  %6507 = vmatpush.bf16.msra.mxu0 %v6209
  %6508 = vmatpush.bf16.msra.mxu0 %v6205
  %6509 = vmatmul.bf16.gmra.mxu0 %v5963
  %v6510 = vpop.f32.mrf.mxu0
  %v6511 = vadd.f32 %v6482, %v6510
  %v6512 = vpop.f32.mrf.mxu0
  %v6513 = vadd.f32 %v6484, %v6512
  %6514 = vmatmul.bf16.gmra.mxu0 %v5965
  %v6515 = vpop.f32.mrf.mxu0
  %v6516 = vadd.f32 %v6487, %v6515
  %v6517 = vpop.f32.mrf.mxu0
  %v6518 = vadd.f32 %v6489, %v6517
  %6519 = vmatmul.bf16.gmra.mxu0 %v5967
  %v6520 = vpop.f32.mrf.mxu0
  %v6521 = vadd.f32 %v6492, %v6520
  %v6522 = vpop.f32.mrf.mxu0
  %v6523 = vadd.f32 %v6494, %v6522
  %6524 = vmatmul.bf16.gmra.mxu0 %v5969
  %v6525 = vpop.f32.mrf.mxu0
  %v6526 = vadd.f32 %v6497, %v6525
  %v6527 = vpop.f32.mrf.mxu0
  %v6528 = vadd.f32 %v6499, %v6527
  %6529 = vdwg.mxu0
  %v6530 = vadd.f32 %v5585, %v6337
  %v6531 = vadd.f32 %v5586, %v6395
  %v6532 = vadd.f32 %v5587, %v6453
  %v6533 = vadd.f32 %v5588, %v6511
  %v6534 = vadd.f32 %v5589, %v6339
  %v6535 = vadd.f32 %v5590, %v6397
  %v6536 = vadd.f32 %v5591, %v6455
  %v6537 = vadd.f32 %v5592, %v6513
  %v6538 = vadd.f32 %v5593, %v6342
  %v6539 = vadd.f32 %v5594, %v6400
  %v6540 = vadd.f32 %v5595, %v6458
  %v6541 = vadd.f32 %v5596, %v6516
  %v6542 = vadd.f32 %v5597, %v6344
  %v6543 = vadd.f32 %v5598, %v6402
  %v6544 = vadd.f32 %v5599, %v6460
  %v6545 = vadd.f32 %v5600, %v6518
  %v6546 = vadd.f32 %v5601, %v6347
  %v6547 = vadd.f32 %v5602, %v6405
  %v6548 = vadd.f32 %v5603, %v6463
  %v6549 = vadd.f32 %v5604, %v6521
  %v6550 = vadd.f32 %v5605, %v6349
  %v6551 = vadd.f32 %v5606, %v6407
  %v6552 = vadd.f32 %v5607, %v6465
  %v6553 = vadd.f32 %v5608, %v6523
  %v6554 = vadd.f32 %v5609, %v6352
  %v6555 = vadd.f32 %v5610, %v6410
  %v6556 = vadd.f32 %v5611, %v6468
  %v6557 = vadd.f32 %v5612, %v6526
  %v6558 = vadd.f32 %v5613, %v6354
  %v6559 = vadd.f32 %v5614, %v6412
  %v6560 = vadd.f32 %v5615, %v6470
  %v6561 = vadd.f32 %v5616, %v6528
  %v6562 = vmax.f32 %v6530, %v6532
  %v6563 = vmax.f32 %v6531, %v6533
  %v6564 = vmax.f32 %v6534, %v6536
  %v6565 = vmax.f32 %v6535, %v6537
  %v6566 = vmax.f32 %v6538, %v6540
  %v6567 = vmax.f32 %v6539, %v6541
  %v6568 = vmax.f32 %v6542, %v6544
  %v6569 = vmax.f32 %v6543, %v6545
  %v6570 = vmax.f32 %v6546, %v6548
  %v6571 = vmax.f32 %v6547, %v6549
  %v6572 = vmax.f32 %v6550, %v6552
  %v6573 = vmax.f32 %v6551, %v6553
  %v6574 = vmax.f32 %v6554, %v6556
  %v6575 = vmax.f32 %v6555, %v6557
  %v6576 = vmax.f32 %v6558, %v6560
  %v6577 = vmax.f32 %v6559, %v6561
  %v6594 = vrot.slane %v6563, 6
  %v6595 = vrot.slane %v6565, 6
  %v6596 = vrot.slane %v6567, 6
  %v6597 = vrot.slane %v6569, 6
  %v6598 = vrot.slane %v6571, 6
  %v6599 = vrot.slane %v6573, 6
  %v6600 = vrot.slane %v6575, 6
  %v6601 = vrot.slane %v6577, 6
  %v6602 = vsel %vm488, %v6562, %v6594
  %v6603 = vsel %vm1124, %v6562, %v6594
  %v6604 = vrot.slane %v6603, 2
  %v6605 = vsel %vm1127, %v6562, %v6594
  %v6606 = vrot.slane %v6605, 4
  %v6607 = vsel %vm1130, %v6594, %v6562
  %v6608 = vrot.slane %v6607, 6
  %v6609 = vsel %vm488, %v6564, %v6595
  %v6610 = vsel %vm1124, %v6564, %v6595
  %v6611 = vrot.slane %v6610, 2
  %v6612 = vsel %vm1127, %v6564, %v6595
  %v6613 = vrot.slane %v6612, 4
  %v6614 = vsel %vm1130, %v6595, %v6564
  %v6615 = vrot.slane %v6614, 6
  %v6616 = vsel %vm488, %v6566, %v6596
  %v6617 = vsel %vm1124, %v6566, %v6596
  %v6618 = vrot.slane %v6617, 2
  %v6619 = vsel %vm1127, %v6566, %v6596
  %v6620 = vrot.slane %v6619, 4
  %v6621 = vsel %vm1130, %v6596, %v6566
  %v6622 = vrot.slane %v6621, 6
  %v6623 = vsel %vm488, %v6568, %v6597
  %v6624 = vsel %vm1124, %v6568, %v6597
  %v6625 = vrot.slane %v6624, 2
  %v6626 = vsel %vm1127, %v6568, %v6597
  %v6627 = vrot.slane %v6626, 4
  %v6628 = vsel %vm1130, %v6597, %v6568
  %v6629 = vrot.slane %v6628, 6
  %v6630 = vsel %vm488, %v6570, %v6598
  %v6631 = vsel %vm1124, %v6570, %v6598
  %v6632 = vrot.slane %v6631, 2
  %v6633 = vsel %vm1127, %v6570, %v6598
  %v6634 = vrot.slane %v6633, 4
  %v6635 = vsel %vm1130, %v6598, %v6570
  %v6636 = vrot.slane %v6635, 6
  %v6637 = vsel %vm488, %v6572, %v6599
  %v6638 = vsel %vm1124, %v6572, %v6599
  %v6639 = vrot.slane %v6638, 2
  %v6640 = vsel %vm1127, %v6572, %v6599
  %v6641 = vrot.slane %v6640, 4
  %v6642 = vsel %vm1130, %v6599, %v6572
  %v6643 = vrot.slane %v6642, 6
  %v6644 = vsel %vm488, %v6574, %v6600
  %v6645 = vsel %vm1124, %v6574, %v6600
  %v6646 = vrot.slane %v6645, 2
  %v6647 = vsel %vm1127, %v6574, %v6600
  %v6648 = vrot.slane %v6647, 4
  %v6649 = vsel %vm1130, %v6600, %v6574
  %v6650 = vrot.slane %v6649, 6
  %v6651 = vsel %vm488, %v6576, %v6601
  %v6652 = vsel %vm1124, %v6576, %v6601
  %v6653 = vrot.slane %v6652, 2
  %v6654 = vsel %vm1127, %v6576, %v6601
  %v6655 = vrot.slane %v6654, 4
  %v6656 = vsel %vm1130, %v6601, %v6576
  %v6657 = vrot.slane %v6656, 6
  %v6690 = vrot.slane %v6602, 7
  %v6691 = vrot.slane %v6690, 2
  %v6692 = vrot.slane %v6604, 7
  %v6693 = vrot.slane %v6692, 2
  %v6694 = vrot.slane %v6606, 7
  %v6695 = vrot.slane %v6694, 2
  %v6696 = vrot.slane %v6608, 7
  %v6697 = vrot.slane %v6696, 2
  %v6698 = vrot.slane %v6609, 7
  %v6699 = vrot.slane %v6698, 2
  %v6700 = vrot.slane %v6611, 7
  %v6701 = vrot.slane %v6700, 2
  %v6702 = vrot.slane %v6613, 7
  %v6703 = vrot.slane %v6702, 2
  %v6704 = vrot.slane %v6615, 7
  %v6705 = vrot.slane %v6704, 2
  %v6706 = vrot.slane %v6616, 7
  %v6707 = vrot.slane %v6706, 2
  %v6708 = vrot.slane %v6618, 7
  %v6709 = vrot.slane %v6708, 2
  %v6710 = vrot.slane %v6620, 7
  %v6711 = vrot.slane %v6710, 2
  %v6712 = vrot.slane %v6622, 7
  %v6713 = vrot.slane %v6712, 2
  %v6714 = vrot.slane %v6623, 7
  %v6715 = vrot.slane %v6714, 2
  %v6716 = vrot.slane %v6625, 7
  %v6717 = vrot.slane %v6716, 2
  %v6718 = vrot.slane %v6627, 7
  %v6719 = vrot.slane %v6718, 2
  %v6720 = vrot.slane %v6629, 7
  %v6721 = vrot.slane %v6720, 2
  %v6722 = vrot.slane %v6630, 7
  %v6723 = vrot.slane %v6722, 2
  %v6724 = vrot.slane %v6632, 7
  %v6725 = vrot.slane %v6724, 2
  %v6726 = vrot.slane %v6634, 7
  %v6727 = vrot.slane %v6726, 2
  %v6728 = vrot.slane %v6636, 7
  %v6729 = vrot.slane %v6728, 2
  %v6730 = vrot.slane %v6637, 7
  %v6731 = vrot.slane %v6730, 2
  %v6732 = vrot.slane %v6639, 7
  %v6733 = vrot.slane %v6732, 2
  %v6734 = vrot.slane %v6641, 7
  %v6735 = vrot.slane %v6734, 2
  %v6736 = vrot.slane %v6643, 7
  %v6737 = vrot.slane %v6736, 2
  %v6738 = vrot.slane %v6644, 7
  %v6739 = vrot.slane %v6738, 2
  %v6740 = vrot.slane %v6646, 7
  %v6741 = vrot.slane %v6740, 2
  %v6742 = vrot.slane %v6648, 7
  %v6743 = vrot.slane %v6742, 2
  %v6744 = vrot.slane %v6650, 7
  %v6745 = vrot.slane %v6744, 2
  %v6746 = vrot.slane %v6651, 7
  %v6747 = vrot.slane %v6746, 2
  %v6748 = vrot.slane %v6653, 7
  %v6749 = vrot.slane %v6748, 2
  %v6750 = vrot.slane %v6655, 7
  %v6751 = vrot.slane %v6750, 2
  %v6752 = vrot.slane %v6657, 7
  %v6753 = vrot.slane %v6752, 2
  %v6786 = vmax.f32 %v6602, %v6691
  %v6787 = vmax.f32 %v6604, %v6693
  %v6788 = vmax.f32 %v6606, %v6695
  %v6789 = vmax.f32 %v6608, %v6697
  %v6790 = vmax.f32 %v6609, %v6699
  %v6791 = vmax.f32 %v6611, %v6701
  %v6792 = vmax.f32 %v6613, %v6703
  %v6793 = vmax.f32 %v6615, %v6705
  %v6794 = vmax.f32 %v6616, %v6707
  %v6795 = vmax.f32 %v6618, %v6709
  %v6796 = vmax.f32 %v6620, %v6711
  %v6797 = vmax.f32 %v6622, %v6713
  %v6798 = vmax.f32 %v6623, %v6715
  %v6799 = vmax.f32 %v6625, %v6717
  %v6800 = vmax.f32 %v6627, %v6719
  %v6801 = vmax.f32 %v6629, %v6721
  %v6802 = vmax.f32 %v6630, %v6723
  %v6803 = vmax.f32 %v6632, %v6725
  %v6804 = vmax.f32 %v6634, %v6727
  %v6805 = vmax.f32 %v6636, %v6729
  %v6806 = vmax.f32 %v6637, %v6731
  %v6807 = vmax.f32 %v6639, %v6733
  %v6808 = vmax.f32 %v6641, %v6735
  %v6809 = vmax.f32 %v6643, %v6737
  %v6810 = vmax.f32 %v6644, %v6739
  %v6811 = vmax.f32 %v6646, %v6741
  %v6812 = vmax.f32 %v6648, %v6743
  %v6813 = vmax.f32 %v6650, %v6745
  %v6814 = vmax.f32 %v6651, %v6747
  %v6815 = vmax.f32 %v6653, %v6749
  %v6816 = vmax.f32 %v6655, %v6751
  %v6817 = vmax.f32 %v6657, %v6753
  %v6818 = vld [vmem:[%s4] sm:$0x3]
  %v6820 = vperm.slane %v6818, 0
  %v6821 = vperm.slane %v6818, 1
  %v6822 = vrot.slane %v6821, 6
  %v6823 = vsel %vm488, %v6820, %v6822
  %v6824 = vsel %vm1124, %v6820, %v6822
  %v6825 = vrot.slane %v6824, 2
  %v6826 = vsel %vm1127, %v6820, %v6822
  %v6827 = vrot.slane %v6826, 4
  %v6828 = vsel %vm1130, %v6822, %v6820
  %v6829 = vrot.slane %v6828, 6
  %v6830 = vrot.slane %v6823, 1
  %v6831 = vrot.slane %v6825, 1
  %v6832 = vrot.slane %v6827, 1
  %v6833 = vrot.slane %v6829, 1
  %v6842 = vadd.f32 %v6786, %v6823
  %v6843 = vadd.f32 %v6787, %v6830
  %v6844 = vadd.f32 %v6788, %v6825
  %v6845 = vadd.f32 %v6789, %v6831
  %v6846 = vadd.f32 %v6790, %v6827
  %v6847 = vadd.f32 %v6791, %v6832
  %v6848 = vadd.f32 %v6792, %v6829
  %v6849 = vadd.f32 %v6793, %v6833
  %v6850 = vadd.f32 %v6794, %v6823
  %v6851 = vadd.f32 %v6795, %v6830
  %v6852 = vadd.f32 %v6796, %v6825
  %v6853 = vadd.f32 %v6797, %v6831
  %v6854 = vadd.f32 %v6798, %v6827
  %v6855 = vadd.f32 %v6799, %v6832
  %v6856 = vadd.f32 %v6800, %v6829
  %v6857 = vadd.f32 %v6801, %v6833
  %v6858 = vadd.f32 %v6802, %v6823
  %v6859 = vadd.f32 %v6803, %v6830
  %v6860 = vadd.f32 %v6804, %v6825
  %v6861 = vadd.f32 %v6805, %v6831
  %v6862 = vadd.f32 %v6806, %v6827
  %v6863 = vadd.f32 %v6807, %v6832
  %v6864 = vadd.f32 %v6808, %v6829
  %v6865 = vadd.f32 %v6809, %v6833
  %v6866 = vadd.f32 %v6810, %v6823
  %v6867 = vadd.f32 %v6811, %v6830
  %v6868 = vadd.f32 %v6812, %v6825
  %v6869 = vadd.f32 %v6813, %v6831
  %v6870 = vadd.f32 %v6814, %v6827
  %v6871 = vadd.f32 %v6815, %v6832
  %v6872 = vadd.f32 %v6816, %v6829
  %v6873 = vadd.f32 %v6817, %v6833
  %v6874 = vmax.f32 %v6842, 0.0
  %v6875 = vmax.f32 %v6843, 0.0
  %v6876 = vmax.f32 %v6844, 0.0
  %v6877 = vmax.f32 %v6845, 0.0
  %v6878 = vmax.f32 %v6846, 0.0
  %v6879 = vmax.f32 %v6847, 0.0
  %v6880 = vmax.f32 %v6848, 0.0
  %v6881 = vmax.f32 %v6849, 0.0
  %v6882 = vmax.f32 %v6850, 0.0
  %v6883 = vmax.f32 %v6851, 0.0
  %v6884 = vmax.f32 %v6852, 0.0
  %v6885 = vmax.f32 %v6853, 0.0
  %v6886 = vmax.f32 %v6854, 0.0
  %v6887 = vmax.f32 %v6855, 0.0
  %v6888 = vmax.f32 %v6856, 0.0
  %v6889 = vmax.f32 %v6857, 0.0
  %v6890 = vmax.f32 %v6858, 0.0
  %v6891 = vmax.f32 %v6859, 0.0
  %v6892 = vmax.f32 %v6860, 0.0
  %v6893 = vmax.f32 %v6861, 0.0
  %v6894 = vmax.f32 %v6862, 0.0
  %v6895 = vmax.f32 %v6863, 0.0
  %v6896 = vmax.f32 %v6864, 0.0
  %v6897 = vmax.f32 %v6865, 0.0
  %v6898 = vmax.f32 %v6866, 0.0
  %v6899 = vmax.f32 %v6867, 0.0
  %v6900 = vmax.f32 %v6868, 0.0
  %v6901 = vmax.f32 %v6869, 0.0
  %v6902 = vmax.f32 %v6870, 0.0
  %v6903 = vmax.f32 %v6871, 0.0
  %v6904 = vmax.f32 %v6872, 0.0
  %v6905 = vmax.f32 %v6873, 0.0
  %v6938 = vperm.slane %v6874, 0
  %v6939 = vperm.slane %v6874, 2
  %v6940 = vperm.slane %v6875, 0
  %v6941 = vperm.slane %v6875, 2
  %v6942 = vperm.slane %v6876, 0
  %v6943 = vperm.slane %v6876, 2
  %v6944 = vperm.slane %v6877, 0
  %v6945 = vperm.slane %v6877, 2
  %v6946 = vperm.slane %v6878, 0
  %v6947 = vperm.slane %v6878, 2
  %v6948 = vperm.slane %v6879, 0
  %v6949 = vperm.slane %v6879, 2
  %v6950 = vperm.slane %v6880, 0
  %v6951 = vperm.slane %v6880, 2
  %v6952 = vperm.slane %v6881, 0
  %v6953 = vperm.slane %v6881, 2
  %v6954 = vperm.slane %v6882, 0
  %v6955 = vperm.slane %v6882, 2
  %v6956 = vperm.slane %v6883, 0
  %v6957 = vperm.slane %v6883, 2
  %v6958 = vperm.slane %v6884, 0
  %v6959 = vperm.slane %v6884, 2
  %v6960 = vperm.slane %v6885, 0
  %v6961 = vperm.slane %v6885, 2
  %v6962 = vperm.slane %v6886, 0
  %v6963 = vperm.slane %v6886, 2
  %v6964 = vperm.slane %v6887, 0
  %v6965 = vperm.slane %v6887, 2
  %v6966 = vperm.slane %v6888, 0
  %v6967 = vperm.slane %v6888, 2
  %v6968 = vperm.slane %v6889, 0
  %v6969 = vperm.slane %v6889, 2
  %v6970 = vperm.slane %v6890, 0
  %v6971 = vperm.slane %v6890, 2
  %v6972 = vperm.slane %v6891, 0
  %v6973 = vperm.slane %v6891, 2
  %v6974 = vperm.slane %v6892, 0
  %v6975 = vperm.slane %v6892, 2
  %v6976 = vperm.slane %v6893, 0
  %v6977 = vperm.slane %v6893, 2
  %v6978 = vperm.slane %v6894, 0
  %v6979 = vperm.slane %v6894, 2
  %v6980 = vperm.slane %v6895, 0
  %v6981 = vperm.slane %v6895, 2
  %v6982 = vperm.slane %v6896, 0
  %v6983 = vperm.slane %v6896, 2
  %v6984 = vperm.slane %v6897, 0
  %v6985 = vperm.slane %v6897, 2
  %v6986 = vperm.slane %v6898, 0
  %v6987 = vperm.slane %v6898, 2
  %v6988 = vperm.slane %v6899, 0
  %v6989 = vperm.slane %v6899, 2
  %v6990 = vperm.slane %v6900, 0
  %v6991 = vperm.slane %v6900, 2
  %v6992 = vperm.slane %v6901, 0
  %v6993 = vperm.slane %v6901, 2
  %v6994 = vperm.slane %v6902, 0
  %v6995 = vperm.slane %v6902, 2
  %v6996 = vperm.slane %v6903, 0
  %v6997 = vperm.slane %v6903, 2
  %v6998 = vperm.slane %v6904, 0
  %v6999 = vperm.slane %v6904, 2
  %v7000 = vperm.slane %v6905, 0
  %v7001 = vperm.slane %v6905, 2
  %v7066 = vpack.c.bf16 %v6939, %v6938
  %v7067 = vpack.c.bf16 %v6941, %v6940
  %v7068 = vpack.c.bf16 %v6943, %v6942
  %v7069 = vpack.c.bf16 %v6945, %v6944
  %v7070 = vpack.c.bf16 %v6947, %v6946
  %v7071 = vpack.c.bf16 %v6949, %v6948
  %v7072 = vpack.c.bf16 %v6951, %v6950
  %v7073 = vpack.c.bf16 %v6953, %v6952
  %v7074 = vpack.c.bf16 %v6955, %v6954
  %v7075 = vpack.c.bf16 %v6957, %v6956
  %v7076 = vpack.c.bf16 %v6959, %v6958
  %v7077 = vpack.c.bf16 %v6961, %v6960
  %v7078 = vpack.c.bf16 %v6963, %v6962
  %v7079 = vpack.c.bf16 %v6965, %v6964
  %v7080 = vpack.c.bf16 %v6967, %v6966
  %v7081 = vpack.c.bf16 %v6969, %v6968
  %v7082 = vpack.c.bf16 %v6971, %v6970
  %v7083 = vpack.c.bf16 %v6973, %v6972
  %v7084 = vpack.c.bf16 %v6975, %v6974
  %v7085 = vpack.c.bf16 %v6977, %v6976
  %v7086 = vpack.c.bf16 %v6979, %v6978
  %v7087 = vpack.c.bf16 %v6981, %v6980
  %v7088 = vpack.c.bf16 %v6983, %v6982
  %v7089 = vpack.c.bf16 %v6985, %v6984
  %v7090 = vpack.c.bf16 %v6987, %v6986
  %v7091 = vpack.c.bf16 %v6989, %v6988
  %v7092 = vpack.c.bf16 %v6991, %v6990
  %v7093 = vpack.c.bf16 %v6993, %v6992
  %v7094 = vpack.c.bf16 %v6995, %v6994
  %v7095 = vpack.c.bf16 %v6997, %v6996
  %v7096 = vpack.c.bf16 %v6999, %v6998
  %v7097 = vpack.c.bf16 %v7001, %v7000
  %v7130 = vunpack.c.l.b16 %v7066
  %v7131 = vunpack.c.h.b16 %v7066
  %v7132 = vunpack.c.l.b16 %v7067
  %v7133 = vunpack.c.h.b16 %v7067
  %v7134 = vunpack.c.l.b16 %v7068
  %v7135 = vunpack.c.h.b16 %v7068
  %v7136 = vunpack.c.l.b16 %v7069
  %v7137 = vunpack.c.h.b16 %v7069
  %v7138 = vunpack.c.l.b16 %v7070
  %v7139 = vunpack.c.h.b16 %v7070
  %v7140 = vunpack.c.l.b16 %v7071
  %v7141 = vunpack.c.h.b16 %v7071
  %v7142 = vunpack.c.l.b16 %v7072
  %v7143 = vunpack.c.h.b16 %v7072
  %v7144 = vunpack.c.l.b16 %v7073
  %v7145 = vunpack.c.h.b16 %v7073
  %v7146 = vunpack.c.l.b16 %v7074
  %v7147 = vunpack.c.h.b16 %v7074
  %v7148 = vunpack.c.l.b16 %v7075
  %v7149 = vunpack.c.h.b16 %v7075
  %v7150 = vunpack.c.l.b16 %v7076
  %v7151 = vunpack.c.h.b16 %v7076
  %v7152 = vunpack.c.l.b16 %v7077
  %v7153 = vunpack.c.h.b16 %v7077
  %v7154 = vunpack.c.l.b16 %v7078
  %v7155 = vunpack.c.h.b16 %v7078
  %v7156 = vunpack.c.l.b16 %v7079
  %v7157 = vunpack.c.h.b16 %v7079
  %v7158 = vunpack.c.l.b16 %v7080
  %v7159 = vunpack.c.h.b16 %v7080
  %v7160 = vunpack.c.l.b16 %v7081
  %v7161 = vunpack.c.h.b16 %v7081
  %v7162 = vunpack.c.l.b16 %v7082
  %v7163 = vunpack.c.h.b16 %v7082
  %v7164 = vunpack.c.l.b16 %v7083
  %v7165 = vunpack.c.h.b16 %v7083
  %v7166 = vunpack.c.l.b16 %v7084
  %v7167 = vunpack.c.h.b16 %v7084
  %v7168 = vunpack.c.l.b16 %v7085
  %v7169 = vunpack.c.h.b16 %v7085
  %v7170 = vunpack.c.l.b16 %v7086
  %v7171 = vunpack.c.h.b16 %v7086
  %v7172 = vunpack.c.l.b16 %v7087
  %v7173 = vunpack.c.h.b16 %v7087
  %v7174 = vunpack.c.l.b16 %v7088
  %v7175 = vunpack.c.h.b16 %v7088
  %v7176 = vunpack.c.l.b16 %v7089
  %v7177 = vunpack.c.h.b16 %v7089
  %v7178 = vunpack.c.l.b16 %v7090
  %v7179 = vunpack.c.h.b16 %v7090
  %v7180 = vunpack.c.l.b16 %v7091
  %v7181 = vunpack.c.h.b16 %v7091
  %v7182 = vunpack.c.l.b16 %v7092
  %v7183 = vunpack.c.h.b16 %v7092
  %v7184 = vunpack.c.l.b16 %v7093
  %v7185 = vunpack.c.h.b16 %v7093
  %v7186 = vunpack.c.l.b16 %v7094
  %v7187 = vunpack.c.h.b16 %v7094
  %v7188 = vunpack.c.l.b16 %v7095
  %v7189 = vunpack.c.h.b16 %v7095
  %v7190 = vunpack.c.l.b16 %v7096
  %v7191 = vunpack.c.h.b16 %v7096
  %v7192 = vunpack.c.l.b16 %v7097
  %v7193 = vunpack.c.h.b16 %v7097
  %v7194 = vrot.slane %v7132, 7
  %v7195 = vsel %vm3026, %v7194, %v7130
  %v7196 = vrot.slane %v7134, 6
  %v7197 = vsel %vm3029, %v7196, %v7195
  %v7198 = vrot.slane %v7136, 5
  %v7199 = vsel %vm3032, %v7198, %v7197
  %v7200 = vrot.slane %v7138, 4
  %v7201 = vsel %vm3035, %v7200, %v7199
  %v7202 = vrot.slane %v7140, 3
  %v7203 = vsel %vm3038, %v7202, %v7201
  %v7204 = vrot.slane %v7142, 2
  %v7205 = vsel %vm3041, %v7204, %v7203
  %v7206 = vrot.slane %v7144, 1
  %v7207 = vsel %vm3044, %v7206, %v7205
  %v7208 = vrot.slane %v7133, 7
  %v7209 = vsel %vm3026, %v7208, %v7131
  %v7210 = vrot.slane %v7135, 6
  %v7211 = vsel %vm3029, %v7210, %v7209
  %v7212 = vrot.slane %v7137, 5
  %v7213 = vsel %vm3032, %v7212, %v7211
  %v7214 = vrot.slane %v7139, 4
  %v7215 = vsel %vm3035, %v7214, %v7213
  %v7216 = vrot.slane %v7141, 3
  %v7217 = vsel %vm3038, %v7216, %v7215
  %v7218 = vrot.slane %v7143, 2
  %v7219 = vsel %vm3041, %v7218, %v7217
  %v7220 = vrot.slane %v7145, 1
  %v7221 = vsel %vm3044, %v7220, %v7219
  %v7222 = vrot.slane %v7148, 7
  %v7223 = vsel %vm3026, %v7222, %v7146
  %v7224 = vrot.slane %v7150, 6
  %v7225 = vsel %vm3029, %v7224, %v7223
  %v7226 = vrot.slane %v7152, 5
  %v7227 = vsel %vm3032, %v7226, %v7225
  %v7228 = vrot.slane %v7154, 4
  %v7229 = vsel %vm3035, %v7228, %v7227
  %v7230 = vrot.slane %v7156, 3
  %v7231 = vsel %vm3038, %v7230, %v7229
  %v7232 = vrot.slane %v7158, 2
  %v7233 = vsel %vm3041, %v7232, %v7231
  %v7234 = vrot.slane %v7160, 1
  %v7235 = vsel %vm3044, %v7234, %v7233
  %v7236 = vrot.slane %v7149, 7
  %v7237 = vsel %vm3026, %v7236, %v7147
  %v7238 = vrot.slane %v7151, 6
  %v7239 = vsel %vm3029, %v7238, %v7237
  %v7240 = vrot.slane %v7153, 5
  %v7241 = vsel %vm3032, %v7240, %v7239
  %v7242 = vrot.slane %v7155, 4
  %v7243 = vsel %vm3035, %v7242, %v7241
  %v7244 = vrot.slane %v7157, 3
  %v7245 = vsel %vm3038, %v7244, %v7243
  %v7246 = vrot.slane %v7159, 2
  %v7247 = vsel %vm3041, %v7246, %v7245
  %v7248 = vrot.slane %v7161, 1
  %v7249 = vsel %vm3044, %v7248, %v7247
  %v7250 = vrot.slane %v7164, 7
  %v7251 = vsel %vm3026, %v7250, %v7162
  %v7252 = vrot.slane %v7166, 6
  %v7253 = vsel %vm3029, %v7252, %v7251
  %v7254 = vrot.slane %v7168, 5
  %v7255 = vsel %vm3032, %v7254, %v7253
  %v7256 = vrot.slane %v7170, 4
  %v7257 = vsel %vm3035, %v7256, %v7255
  %v7258 = vrot.slane %v7172, 3
  %v7259 = vsel %vm3038, %v7258, %v7257
  %v7260 = vrot.slane %v7174, 2
  %v7261 = vsel %vm3041, %v7260, %v7259
  %v7262 = vrot.slane %v7176, 1
  %v7263 = vsel %vm3044, %v7262, %v7261
  %v7264 = vrot.slane %v7165, 7
  %v7265 = vsel %vm3026, %v7264, %v7163
  %v7266 = vrot.slane %v7167, 6
  %v7267 = vsel %vm3029, %v7266, %v7265
  %v7268 = vrot.slane %v7169, 5
  %v7269 = vsel %vm3032, %v7268, %v7267
  %v7270 = vrot.slane %v7171, 4
  %v7271 = vsel %vm3035, %v7270, %v7269
  %v7272 = vrot.slane %v7173, 3
  %v7273 = vsel %vm3038, %v7272, %v7271
  %v7274 = vrot.slane %v7175, 2
  %v7275 = vsel %vm3041, %v7274, %v7273
  %v7276 = vrot.slane %v7177, 1
  %v7277 = vsel %vm3044, %v7276, %v7275
  %v7278 = vrot.slane %v7180, 7
  %v7279 = vsel %vm3026, %v7278, %v7178
  %v7280 = vrot.slane %v7182, 6
  %v7281 = vsel %vm3029, %v7280, %v7279
  %v7282 = vrot.slane %v7184, 5
  %v7283 = vsel %vm3032, %v7282, %v7281
  %v7284 = vrot.slane %v7186, 4
  %v7285 = vsel %vm3035, %v7284, %v7283
  %v7286 = vrot.slane %v7188, 3
  %v7287 = vsel %vm3038, %v7286, %v7285
  %v7288 = vrot.slane %v7190, 2
  %v7289 = vsel %vm3041, %v7288, %v7287
  %v7290 = vrot.slane %v7192, 1
  %v7291 = vsel %vm3044, %v7290, %v7289
  %v7292 = vrot.slane %v7181, 7
  %v7293 = vsel %vm3026, %v7292, %v7179
  %v7294 = vrot.slane %v7183, 6
  %v7295 = vsel %vm3029, %v7294, %v7293
  %v7296 = vrot.slane %v7185, 5
  %v7297 = vsel %vm3032, %v7296, %v7295
  %v7298 = vrot.slane %v7187, 4
  %v7299 = vsel %vm3035, %v7298, %v7297
  %v7300 = vrot.slane %v7189, 3
  %v7301 = vsel %vm3038, %v7300, %v7299
  %v7302 = vrot.slane %v7191, 2
  %v7303 = vsel %vm3041, %v7302, %v7301
  %v7304 = vrot.slane %v7193, 1
  %v7305 = vsel %vm3044, %v7304, %v7303
  %v7306 = vpack.c.b16 %v7221, %v7207
  %v7307 = vpack.c.b16 %v7249, %v7235
  %v7308 = vpack.c.b16 %v7277, %v7263
  %v7309 = vpack.c.b16 %v7305, %v7291
  %v7310 = vunpack.i.l.s16 %v7306
  %v7311 = vunpack.i.h.s16 %v7306
  %v7312 = vpack.c.b16 %v7311, %v7310
  %v7313 = vunpack.i.l.s16 %v7312
  %v7314 = vunpack.i.h.s16 %v7312
  %v7315 = vpack.c.b16 %v7314, %v7313
  %v7316 = vunpack.i.l.s16 %v7307
  %v7317 = vunpack.i.h.s16 %v7307
  %v7318 = vpack.c.b16 %v7317, %v7316
  %v7319 = vunpack.i.l.s16 %v7318
  %v7320 = vunpack.i.h.s16 %v7318
  %v7321 = vpack.c.b16 %v7320, %v7319
  %v7322 = vunpack.i.l.s16 %v7308
  %v7323 = vunpack.i.h.s16 %v7308
  %v7324 = vpack.c.b16 %v7323, %v7322
  %v7325 = vunpack.i.l.s16 %v7324
  %v7326 = vunpack.i.h.s16 %v7324
  %v7327 = vpack.c.b16 %v7326, %v7325
  %v7328 = vunpack.i.l.s16 %v7309
  %v7329 = vunpack.i.h.s16 %v7309
  %v7330 = vpack.c.b16 %v7329, %v7328
  %v7331 = vunpack.i.l.s16 %v7330
  %v7332 = vunpack.i.h.s16 %v7330
  %v7333 = vpack.c.b16 %v7332, %v7331
  %v7334 = vld [vmem:[%s5] sm:$0xff]
  %v7335 = vld [vmem:[%s5 + $0x8] sm:$0xf]
  %v7336 = vld [vmem:[%s5 + $0xc] sm:$0xff]
  %v7337 = vld [vmem:[%s5 + $0x14] sm:$0xf]
  %v7338 = vld [vmem:[%s5 + $0x18] sm:$0xff]
  %v7339 = vld [vmem:[%s5 + $0x20] sm:$0xf]
  %v7340 = vld [vmem:[%s5 + $0x24] sm:$0xff]
  %v7341 = vld [vmem:[%s5 + $0x2c] sm:$0xf]
  %v7342 = vld [vmem:[%s5 + $0x30] sm:$0xff]
  %v7343 = vld [vmem:[%s5 + $0x38] sm:$0xf]
  %v7344 = vld [vmem:[%s5 + $0x3c] sm:$0xff]
  %v7345 = vld [vmem:[%s5 + $0x44] sm:$0xf]
  %v7346 = vld [vmem:[%s5 + $0x48] sm:$0xff]
  %v7347 = vld [vmem:[%s5 + $0x50] sm:$0xf]
  %v7348 = vld [vmem:[%s5 + $0x54] sm:$0xff]
  %v7349 = vld [vmem:[%s5 + $0x5c] sm:$0xf]
  %v7350 = vld [vmem:[%s5 + $0x60] sm:$0xff]
  %v7351 = vld [vmem:[%s5 + $0x68] sm:$0xf]
  %v7352 = vld [vmem:[%s5 + $0x6c] sm:$0xff]
  %v7353 = vld [vmem:[%s5 + $0x74] sm:$0xf]
  %v7354 = vld [vmem:[%s5 + $0x78] sm:$0xff]
  %v7355 = vld [vmem:[%s5 + $0x80] sm:$0xf]
  %v7356 = vld [vmem:[%s5 + $0x84] sm:$0xff]
  %v7357 = vld [vmem:[%s5 + $0x8c] sm:$0xf]
  %v7358 = vld [vmem:[%s5 + $0x90] sm:$0xff]
  %v7359 = vld [vmem:[%s5 + $0x98] sm:$0xf]
  %v7360 = vld [vmem:[%s5 + $0x9c] sm:$0xff]
  %v7361 = vld [vmem:[%s5 + $0xa4] sm:$0xf]
  %v7362 = vld [vmem:[%s5 + $0xa8] sm:$0xff]
  %v7363 = vld [vmem:[%s5 + $0xb0] sm:$0xf]
  %v7364 = vld [vmem:[%s5 + $0xb4] sm:$0xff]
  %v7365 = vld [vmem:[%s5 + $0xbc] sm:$0xf]
  %v7366 = vld [vmem:[%s5 + $0xc0] sm:$0xff]
  %v7367 = vld [vmem:[%s5 + $0xc8] sm:$0xf]
  %v7368 = vld [vmem:[%s5 + $0xcc] sm:$0xff]
  %v7369 = vld [vmem:[%s5 + $0xd4] sm:$0xf]
  %v7370 = vld [vmem:[%s5 + $0xd8] sm:$0xff]
  %v7371 = vld [vmem:[%s5 + $0xe0] sm:$0xf]
  %v7372 = vld [vmem:[%s5 + $0xe4] sm:$0xff]
  %v7373 = vld [vmem:[%s5 + $0xec] sm:$0xf]
  %v7374 = vld [vmem:[%s5 + $0xf0] sm:$0xff]
  %v7375 = vld [vmem:[%s5 + $0xf8] sm:$0xf]
  %v7376 = vld [vmem:[%s5 + $0xfc] sm:$0xff]
  %v7377 = vld [vmem:[%s5 + $0x104] sm:$0xf]
  %v7378 = vld [vmem:[%s5 + $0x108] sm:$0xff]
  %v7379 = vld [vmem:[%s5 + $0x110] sm:$0xf]
  %v7380 = vld [vmem:[%s5 + $0x114] sm:$0xff]
  %v7381 = vld [vmem:[%s5 + $0x11c] sm:$0xf]
  %v7382 = vld [vmem:[%s5 + $0x120] sm:$0xff]
  %v7383 = vld [vmem:[%s5 + $0x128] sm:$0xf]
  %v7384 = vld [vmem:[%s5 + $0x12c] sm:$0xff]
  %v7385 = vld [vmem:[%s5 + $0x134] sm:$0xf]
  %v7386 = vld [vmem:[%s5 + $0x138] sm:$0xff]
  %v7387 = vld [vmem:[%s5 + $0x140] sm:$0xf]
  %v7388 = vld [vmem:[%s5 + $0x144] sm:$0xff]
  %v7389 = vld [vmem:[%s5 + $0x14c] sm:$0xf]
  %v7390 = vld [vmem:[%s5 + $0x150] sm:$0xff]
  %v7391 = vld [vmem:[%s5 + $0x158] sm:$0xf]
  %v7392 = vld [vmem:[%s5 + $0x15c] sm:$0xff]
  %v7393 = vld [vmem:[%s5 + $0x164] sm:$0xf]
  %v7394 = vld [vmem:[%s5 + $0x168] sm:$0xff]
  %v7395 = vld [vmem:[%s5 + $0x170] sm:$0xf]
  %v7396 = vld [vmem:[%s5 + $0x174] sm:$0xff]
  %v7397 = vld [vmem:[%s5 + $0x17c] sm:$0xf]
  %v7398 = vld [vmem:[%s5 + $0x180] sm:$0xff]
  %v7399 = vld [vmem:[%s5 + $0x188] sm:$0xf]
  %v7400 = vld [vmem:[%s5 + $0x18c] sm:$0xff]
  %v7401 = vld [vmem:[%s5 + $0x194] sm:$0xf]
  %v7402 = vld [vmem:[%s5 + $0x198] sm:$0xff]
  %v7403 = vld [vmem:[%s5 + $0x1a0] sm:$0xf]
  %v7404 = vld [vmem:[%s5 + $0x1a4] sm:$0xff]
  %v7405 = vld [vmem:[%s5 + $0x1ac] sm:$0xf]
  %v7406 = vld [vmem:[%s5 + $0x1b0] sm:$0xff]
  %v7407 = vld [vmem:[%s5 + $0x1b8] sm:$0xf]
  %v7408 = vld [vmem:[%s5 + $0x1bc] sm:$0xff]
  %v7409 = vld [vmem:[%s5 + $0x1c4] sm:$0xf]
  %v7410 = vld [vmem:[%s5 + $0x1c8] sm:$0xff]
  %v7411 = vld [vmem:[%s5 + $0x1d0] sm:$0xf]
  %v7412 = vld [vmem:[%s5 + $0x1d4] sm:$0xff]
  %v7413 = vld [vmem:[%s5 + $0x1dc] sm:$0xf]
  %v7414 = vld [vmem:[%s5 + $0x1e0] sm:$0xff]
  %v7415 = vld [vmem:[%s5 + $0x1e8] sm:$0xf]
  %v7416 = vld [vmem:[%s5 + $0x1ec] sm:$0xff]
  %v7417 = vld [vmem:[%s5 + $0x1f4] sm:$0xf]
  %v7418 = vld [vmem:[%s5 + $0x1f8] sm:$0xff]
  %v7419 = vld [vmem:[%s5 + $0x200] sm:$0xf]
  %v7420 = vld [vmem:[%s5 + $0x204] sm:$0xff]
  %v7421 = vld [vmem:[%s5 + $0x20c] sm:$0xf]
  %v7422 = vld [vmem:[%s5 + $0x210] sm:$0xff]
  %v7423 = vld [vmem:[%s5 + $0x218] sm:$0xf]
  %v7424 = vld [vmem:[%s5 + $0x21c] sm:$0xff]
  %v7425 = vld [vmem:[%s5 + $0x224] sm:$0xf]
  %v7426 = vld [vmem:[%s5 + $0x228] sm:$0xff]
  %v7427 = vld [vmem:[%s5 + $0x230] sm:$0xf]
  %v7428 = vld [vmem:[%s5 + $0x234] sm:$0xff]
  %v7429 = vld [vmem:[%s5 + $0x23c] sm:$0xf]
  %v7430 = vld [vmem:[%s5 + $0x240] sm:$0xff]
  %v7431 = vld [vmem:[%s5 + $0x248] sm:$0xf]
  %v7432 = vld [vmem:[%s5 + $0x24c] sm:$0xff]
  %v7433 = vld [vmem:[%s5 + $0x254] sm:$0xf]
  %v7434 = vld [vmem:[%s5 + $0x258] sm:$0xff]
  %v7435 = vld [vmem:[%s5 + $0x260] sm:$0xf]
  %v7436 = vld [vmem:[%s5 + $0x264] sm:$0xff]
  %v7437 = vld [vmem:[%s5 + $0x26c] sm:$0xf]
  %v7438 = vld [vmem:[%s5 + $0x270] sm:$0xff]
  %v7439 = vld [vmem:[%s5 + $0x278] sm:$0xf]
  %v7440 = vld [vmem:[%s5 + $0x27c] sm:$0xff]
  %v7441 = vld [vmem:[%s5 + $0x284] sm:$0xf]
  %v7442 = vld [vmem:[%s5 + $0x288] sm:$0xff]
  %v7443 = vld [vmem:[%s5 + $0x290] sm:$0xf]
  %v7444 = vld [vmem:[%s5 + $0x294] sm:$0xff]
  %v7445 = vld [vmem:[%s5 + $0x29c] sm:$0xf]
  %v7446 = vld [vmem:[%s5 + $0x2a0] sm:$0xff]
  %v7447 = vld [vmem:[%s5 + $0x2a8] sm:$0xf]
  %v7448 = vld [vmem:[%s5 + $0x2ac] sm:$0xff]
  %v7449 = vld [vmem:[%s5 + $0x2b4] sm:$0xf]
  %v7450 = vld [vmem:[%s5 + $0x2b8] sm:$0xff]
  %v7451 = vld [vmem:[%s5 + $0x2c0] sm:$0xf]
  %v7452 = vld [vmem:[%s5 + $0x2c4] sm:$0xff]
  %v7453 = vld [vmem:[%s5 + $0x2cc] sm:$0xf]
  %v7454 = vld [vmem:[%s5 + $0x2d0] sm:$0xff]
  %v7455 = vld [vmem:[%s5 + $0x2d8] sm:$0xf]
  %v7456 = vld [vmem:[%s5 + $0x2dc] sm:$0xff]
  %v7457 = vld [vmem:[%s5 + $0x2e4] sm:$0xf]
  %v7458 = vld [vmem:[%s5 + $0x2e8] sm:$0xff]
  %v7459 = vld [vmem:[%s5 + $0x2f0] sm:$0xf]
  %v7460 = vld [vmem:[%s5 + $0x2f4] sm:$0xff]
  %v7461 = vld [vmem:[%s5 + $0x2fc] sm:$0xf]
  %v7462 = vld [vmem:[%s5 + $0x300] sm:$0xff]
  %v7463 = vld [vmem:[%s5 + $0x308] sm:$0xf]
  %v7464 = vld [vmem:[%s5 + $0x30c] sm:$0xff]
  %v7465 = vld [vmem:[%s5 + $0x314] sm:$0xf]
  %v7466 = vld [vmem:[%s5 + $0x318] sm:$0xff]
  %v7467 = vld [vmem:[%s5 + $0x320] sm:$0xf]
  %v7468 = vld [vmem:[%s5 + $0x324] sm:$0xff]
  %v7469 = vld [vmem:[%s5 + $0x32c] sm:$0xf]
  %v7470 = vld [vmem:[%s5 + $0x330] sm:$0xff]
  %v7471 = vld [vmem:[%s5 + $0x338] sm:$0xf]
  %v7472 = vld [vmem:[%s5 + $0x33c] sm:$0xff]
  %v7473 = vld [vmem:[%s5 + $0x344] sm:$0xf]
  %v7474 = vld [vmem:[%s5 + $0x348] sm:$0xff]
  %v7475 = vld [vmem:[%s5 + $0x350] sm:$0xf]
  %v7476 = vld [vmem:[%s5 + $0x354] sm:$0xff]
  %v7477 = vld [vmem:[%s5 + $0x35c] sm:$0xf]
  %v7478 = vld [vmem:[%s5 + $0x360] sm:$0xff]
  %v7479 = vld [vmem:[%s5 + $0x368] sm:$0xf]
  %v7480 = vld [vmem:[%s5 + $0x36c] sm:$0xff]
  %v7481 = vld [vmem:[%s5 + $0x374] sm:$0xf]
  %v7482 = vld [vmem:[%s5 + $0x378] sm:$0xff]
  %v7483 = vld [vmem:[%s5 + $0x380] sm:$0xf]
  %v7484 = vld [vmem:[%s5 + $0x384] sm:$0xff]
  %v7485 = vld [vmem:[%s5 + $0x38c] sm:$0xf]
  %v7486 = vld [vmem:[%s5 + $0x390] sm:$0xff]
  %v7487 = vld [vmem:[%s5 + $0x398] sm:$0xf]
  %v7488 = vld [vmem:[%s5 + $0x39c] sm:$0xff]
  %v7489 = vld [vmem:[%s5 + $0x3a4] sm:$0xf]
  %v7490 = vld [vmem:[%s5 + $0x3a8] sm:$0xff]
  %v7491 = vld [vmem:[%s5 + $0x3b0] sm:$0xf]
  %v7492 = vld [vmem:[%s5 + $0x3b4] sm:$0xff]
  %v7493 = vld [vmem:[%s5 + $0x3bc] sm:$0xf]
  %v7494 = vld [vmem:[%s5 + $0x3c0] sm:$0xff]
  %v7495 = vld [vmem:[%s5 + $0x3c8] sm:$0xf]
  %v7496 = vld [vmem:[%s5 + $0x3cc] sm:$0xff]
  %v7497 = vld [vmem:[%s5 + $0x3d4] sm:$0xf]
  %v7498 = vld [vmem:[%s5 + $0x3d8] sm:$0xff]
  %v7499 = vld [vmem:[%s5 + $0x3e0] sm:$0xf]
  %v7500 = vld [vmem:[%s5 + $0x3e4] sm:$0xff]
  %v7501 = vld [vmem:[%s5 + $0x3ec] sm:$0xf]
  %v7502 = vld [vmem:[%s5 + $0x3f0] sm:$0xff]
  %v7503 = vld [vmem:[%s5 + $0x3f8] sm:$0xf]
  %v7504 = vld [vmem:[%s5 + $0x3fc] sm:$0xff]
  %v7505 = vld [vmem:[%s5 + $0x404] sm:$0xf]
  %v7506 = vld [vmem:[%s5 + $0x408] sm:$0xff]
  %v7507 = vld [vmem:[%s5 + $0x410] sm:$0xf]
  %v7508 = vld [vmem:[%s5 + $0x414] sm:$0xff]
  %v7509 = vld [vmem:[%s5 + $0x41c] sm:$0xf]
  %v7510 = vld [vmem:[%s5 + $0x420] sm:$0xff]
  %v7511 = vld [vmem:[%s5 + $0x428] sm:$0xf]
  %v7512 = vld [vmem:[%s5 + $0x42c] sm:$0xff]
  %v7513 = vld [vmem:[%s5 + $0x434] sm:$0xf]
  %v7514 = vld [vmem:[%s5 + $0x438] sm:$0xff]
  %v7515 = vld [vmem:[%s5 + $0x440] sm:$0xf]
  %v7516 = vld [vmem:[%s5 + $0x444] sm:$0xff]
  %v7517 = vld [vmem:[%s5 + $0x44c] sm:$0xf]
  %v7518 = vld [vmem:[%s5 + $0x450] sm:$0xff]
  %v7519 = vld [vmem:[%s5 + $0x458] sm:$0xf]
  %v7520 = vld [vmem:[%s5 + $0x45c] sm:$0xff]
  %v7521 = vld [vmem:[%s5 + $0x464] sm:$0xf]
  %v7522 = vld [vmem:[%s5 + $0x468] sm:$0xff]
  %v7523 = vld [vmem:[%s5 + $0x470] sm:$0xf]
  %v7524 = vld [vmem:[%s5 + $0x474] sm:$0xff]
  %v7525 = vld [vmem:[%s5 + $0x47c] sm:$0xf]
  %v7526 = vld [vmem:[%s5 + $0x480] sm:$0xff]
  %v7527 = vld [vmem:[%s5 + $0x488] sm:$0xf]
  %v7528 = vld [vmem:[%s5 + $0x48c] sm:$0xff]
  %v7529 = vld [vmem:[%s5 + $0x494] sm:$0xf]
  %v7530 = vld [vmem:[%s5 + $0x498] sm:$0xff]
  %v7531 = vld [vmem:[%s5 + $0x4a0] sm:$0xf]
  %v7532 = vld [vmem:[%s5 + $0x4a4] sm:$0xff]
  %v7533 = vld [vmem:[%s5 + $0x4ac] sm:$0xf]
  %v7534 = vld [vmem:[%s5 + $0x4b0] sm:$0xff]
  %v7535 = vld [vmem:[%s5 + $0x4b8] sm:$0xf]
  %v7536 = vld [vmem:[%s5 + $0x4bc] sm:$0xff]
  %v7537 = vld [vmem:[%s5 + $0x4c4] sm:$0xf]
  %v7538 = vld [vmem:[%s5 + $0x4c8] sm:$0xff]
  %v7539 = vld [vmem:[%s5 + $0x4d0] sm:$0xf]
  %v7540 = vld [vmem:[%s5 + $0x4d4] sm:$0xff]
  %v7541 = vld [vmem:[%s5 + $0x4dc] sm:$0xf]
  %v7542 = vld [vmem:[%s5 + $0x4e0] sm:$0xff]
  %v7543 = vld [vmem:[%s5 + $0x4e8] sm:$0xf]
  %v7544 = vld [vmem:[%s5 + $0x4ec] sm:$0xff]
  %v7545 = vld [vmem:[%s5 + $0x4f4] sm:$0xf]
  %v7546 = vld [vmem:[%s5 + $0x4f8] sm:$0xff]
  %v7547 = vld [vmem:[%s5 + $0x500] sm:$0xf]
  %v7548 = vld [vmem:[%s5 + $0x504] sm:$0xff]
  %v7549 = vld [vmem:[%s5 + $0x50c] sm:$0xf]
  %v7550 = vld [vmem:[%s5 + $0x510] sm:$0xff]
  %v7551 = vld [vmem:[%s5 + $0x518] sm:$0xf]
  %v7552 = vld [vmem:[%s5 + $0x51c] sm:$0xff]
  %v7553 = vld [vmem:[%s5 + $0x524] sm:$0xf]
  %v7554 = vld [vmem:[%s5 + $0x528] sm:$0xff]
  %v7555 = vld [vmem:[%s5 + $0x530] sm:$0xf]
  %v7556 = vld [vmem:[%s5 + $0x534] sm:$0xff]
  %v7557 = vld [vmem:[%s5 + $0x53c] sm:$0xf]
  %v7558 = vld [vmem:[%s5 + $0x540] sm:$0xff]
  %v7559 = vld [vmem:[%s5 + $0x548] sm:$0xf]
  %v7560 = vld [vmem:[%s5 + $0x54c] sm:$0xff]
  %v7561 = vld [vmem:[%s5 + $0x554] sm:$0xf]
  %v7562 = vld [vmem:[%s5 + $0x558] sm:$0xff]
  %v7563 = vld [vmem:[%s5 + $0x560] sm:$0xf]
  %v7564 = vld [vmem:[%s5 + $0x564] sm:$0xff]
  %v7565 = vld [vmem:[%s5 + $0x56c] sm:$0xf]
  %v7566 = vld [vmem:[%s5 + $0x570] sm:$0xff]
  %v7567 = vld [vmem:[%s5 + $0x578] sm:$0xf]
  %v7568 = vld [vmem:[%s5 + $0x57c] sm:$0xff]
  %v7569 = vld [vmem:[%s5 + $0x584] sm:$0xf]
  %v7570 = vld [vmem:[%s5 + $0x588] sm:$0xff]
  %v7571 = vld [vmem:[%s5 + $0x590] sm:$0xf]
  %v7572 = vld [vmem:[%s5 + $0x594] sm:$0xff]
  %v7573 = vld [vmem:[%s5 + $0x59c] sm:$0xf]
  %v7574 = vld [vmem:[%s5 + $0x5a0] sm:$0xff]
  %v7575 = vld [vmem:[%s5 + $0x5a8] sm:$0xf]
  %v7576 = vld [vmem:[%s5 + $0x5ac] sm:$0xff]
  %v7577 = vld [vmem:[%s5 + $0x5b4] sm:$0xf]
  %v7578 = vld [vmem:[%s5 + $0x5b8] sm:$0xff]
  %v7579 = vld [vmem:[%s5 + $0x5c0] sm:$0xf]
  %v7580 = vld [vmem:[%s5 + $0x5c4] sm:$0xff]
  %v7581 = vld [vmem:[%s5 + $0x5cc] sm:$0xf]
  %v7582 = vld [vmem:[%s5 + $0x5d0] sm:$0xff]
  %v7583 = vld [vmem:[%s5 + $0x5d8] sm:$0xf]
  %v7584 = vld [vmem:[%s5 + $0x5dc] sm:$0xff]
  %v7585 = vld [vmem:[%s5 + $0x5e4] sm:$0xf]
  %v7586 = vld [vmem:[%s5 + $0x5e8] sm:$0xff]
  %v7587 = vld [vmem:[%s5 + $0x5f0] sm:$0xf]
  %v7588 = vld [vmem:[%s5 + $0x5f4] sm:$0xff]
  %v7589 = vld [vmem:[%s5 + $0x5fc] sm:$0xf]
  %v7590 = vld [vmem:[%s6] sm:$0x7]
  %v7592 = vperm.slane %v7590, 0
  %v7593 = vperm.slane %v7590, 1
  %v7594 = vperm.slane %v7590, 2
  %7599 = vst [vmem:[#allocation1] ss:$9 sm:$0xff] %v7315
  %s7601 = scalar_lea.vmem [#allocation1], 1
  %7602 = vst [vmem:[%s7601] ss:$9 sm:$0xff] %v7321
  %s7604 = scalar_lea.vmem [#allocation1], 2
  %7605 = vst [vmem:[%s7604] ss:$9 sm:$0xff] %v7327
  %s7607 = scalar_lea.vmem [#allocation1], 3
  %7608 = vst [vmem:[%s7607] ss:$9 sm:$0xff] %v7333
  %v7609 = vld [vmem:[#allocation1] sm:$0xff]
  %v7610 = vld [vmem:[#allocation1 + $0x9] sm:$0xff]
  %v7611 = vld [vmem:[#allocation1 + $0x12] sm:$0xff]
  %v7612 = vld [vmem:[#allocation1 + $0x1b] sm:$0xff]
  %v7613 = vld [vmem:[#allocation1 + $0x24] sm:$0xff]
  %v7614 = vld [vmem:[#allocation1 + $0x2d] sm:$0xff]
  %v7615 = vld [vmem:[#allocation1 + $0x36] sm:$0xff]
  %v7616 = vld [vmem:[#allocation1 + $0x3f] sm:$0xff]
  %v7881 = vunpack.c.l.b16 %v7334
  %v7882 = vunpack.c.h.b16 %v7334
  %v7883 = vunpack.c.l.b16 %v7335
  %v7884 = vunpack.c.l.b16 %v7336
  %v7885 = vunpack.c.h.b16 %v7336
  %v7886 = vunpack.c.l.b16 %v7337
  %v7887 = vunpack.c.l.b16 %v7338
  %v7888 = vunpack.c.h.b16 %v7338
  %v7889 = vunpack.c.l.b16 %v7339
  %v7890 = vunpack.c.l.b16 %v7340
  %v7891 = vunpack.c.h.b16 %v7340
  %v7892 = vunpack.c.l.b16 %v7341
  %v7893 = vunpack.c.l.b16 %v7342
  %v7894 = vunpack.c.h.b16 %v7342
  %v7895 = vunpack.c.l.b16 %v7343
  %v7896 = vunpack.c.l.b16 %v7344
  %v7897 = vunpack.c.h.b16 %v7344
  %v7898 = vunpack.c.l.b16 %v7345
  %v7899 = vunpack.c.l.b16 %v7346
  %v7900 = vunpack.c.h.b16 %v7346
  %v7901 = vunpack.c.l.b16 %v7347
  %v7902 = vunpack.c.l.b16 %v7348
  %v7903 = vunpack.c.h.b16 %v7348
  %v7904 = vunpack.c.l.b16 %v7349
  %v7905 = vunpack.c.l.b16 %v7350
  %v7906 = vunpack.c.h.b16 %v7350
  %v7907 = vunpack.c.l.b16 %v7351
  %v7908 = vunpack.c.l.b16 %v7352
  %v7909 = vunpack.c.h.b16 %v7352
  %v7910 = vunpack.c.l.b16 %v7353
  %v7911 = vunpack.c.l.b16 %v7354
  %v7912 = vunpack.c.h.b16 %v7354
  %v7913 = vunpack.c.l.b16 %v7355
  %v7914 = vunpack.c.l.b16 %v7356
  %v7915 = vunpack.c.h.b16 %v7356
  %v7916 = vunpack.c.l.b16 %v7357
  %v7917 = vunpack.c.l.b16 %v7358
  %v7918 = vunpack.c.h.b16 %v7358
  %v7919 = vunpack.c.l.b16 %v7359
  %v7920 = vunpack.c.l.b16 %v7360
  %v7921 = vunpack.c.h.b16 %v7360
  %v7922 = vunpack.c.l.b16 %v7361
  %v7923 = vunpack.c.l.b16 %v7362
  %v7924 = vunpack.c.h.b16 %v7362
  %v7925 = vunpack.c.l.b16 %v7363
  %v7926 = vunpack.c.l.b16 %v7364
  %v7927 = vunpack.c.h.b16 %v7364
  %v7928 = vunpack.c.l.b16 %v7365
  %v7929 = vunpack.c.l.b16 %v7366
  %v7930 = vunpack.c.h.b16 %v7366
  %v7931 = vunpack.c.l.b16 %v7367
  %v7932 = vunpack.c.l.b16 %v7368
  %v7933 = vunpack.c.h.b16 %v7368
  %v7934 = vunpack.c.l.b16 %v7369
  %v7935 = vunpack.c.l.b16 %v7370
  %v7936 = vunpack.c.h.b16 %v7370
  %v7937 = vunpack.c.l.b16 %v7371
  %v7938 = vunpack.c.l.b16 %v7372
  %v7939 = vunpack.c.h.b16 %v7372
  %v7940 = vunpack.c.l.b16 %v7373
  %v7941 = vunpack.c.l.b16 %v7374
  %v7942 = vunpack.c.h.b16 %v7374
  %v7943 = vunpack.c.l.b16 %v7375
  %v7944 = vunpack.c.l.b16 %v7376
  %v7945 = vunpack.c.h.b16 %v7376
  %v7946 = vunpack.c.l.b16 %v7377
  %v7947 = vunpack.c.l.b16 %v7378
  %v7948 = vunpack.c.h.b16 %v7378
  %v7949 = vunpack.c.l.b16 %v7379
  %v7950 = vunpack.c.l.b16 %v7380
  %v7951 = vunpack.c.h.b16 %v7380
  %v7952 = vunpack.c.l.b16 %v7381
  %v7953 = vunpack.c.l.b16 %v7382
  %v7954 = vunpack.c.h.b16 %v7382
  %v7955 = vunpack.c.l.b16 %v7383
  %v7956 = vunpack.c.l.b16 %v7384
  %v7957 = vunpack.c.h.b16 %v7384
  %v7958 = vunpack.c.l.b16 %v7385
  %v7959 = vunpack.c.l.b16 %v7386
  %v7960 = vunpack.c.h.b16 %v7386
  %v7961 = vunpack.c.l.b16 %v7387
  %v7962 = vunpack.c.l.b16 %v7388
  %v7963 = vunpack.c.h.b16 %v7388
  %v7964 = vunpack.c.l.b16 %v7389
  %v7965 = vunpack.c.l.b16 %v7390
  %v7966 = vunpack.c.h.b16 %v7390
  %v7967 = vunpack.c.l.b16 %v7391
  %v7968 = vunpack.c.l.b16 %v7392
  %v7969 = vunpack.c.h.b16 %v7392
  %v7970 = vunpack.c.l.b16 %v7393
  %v7971 = vunpack.c.l.b16 %v7394
  %v7972 = vunpack.c.h.b16 %v7394
  %v7973 = vunpack.c.l.b16 %v7395
  %v7974 = vunpack.c.l.b16 %v7396
  %v7975 = vunpack.c.h.b16 %v7396
  %v7976 = vunpack.c.l.b16 %v7397
  %v7977 = vunpack.c.l.b16 %v7398
  %v7978 = vunpack.c.h.b16 %v7398
  %v7979 = vunpack.c.l.b16 %v7399
  %v7980 = vunpack.c.l.b16 %v7400
  %v7981 = vunpack.c.h.b16 %v7400
  %v7982 = vunpack.c.l.b16 %v7401
  %v7983 = vunpack.c.l.b16 %v7402
  %v7984 = vunpack.c.h.b16 %v7402
  %v7985 = vunpack.c.l.b16 %v7403
  %v7986 = vunpack.c.l.b16 %v7404
  %v7987 = vunpack.c.h.b16 %v7404
  %v7988 = vunpack.c.l.b16 %v7405
  %v7989 = vunpack.c.l.b16 %v7406
  %v7990 = vunpack.c.h.b16 %v7406
  %v7991 = vunpack.c.l.b16 %v7407
  %v7992 = vunpack.c.l.b16 %v7408
  %v7993 = vunpack.c.h.b16 %v7408
  %v7994 = vunpack.c.l.b16 %v7409
  %v7995 = vunpack.c.l.b16 %v7410
  %v7996 = vunpack.c.h.b16 %v7410
  %v7997 = vunpack.c.l.b16 %v7411
  %v7998 = vunpack.c.l.b16 %v7412
  %v7999 = vunpack.c.h.b16 %v7412
  %v8000 = vunpack.c.l.b16 %v7413
  %v8001 = vunpack.c.l.b16 %v7414
  %v8002 = vunpack.c.h.b16 %v7414
  %v8003 = vunpack.c.l.b16 %v7415
  %v8004 = vunpack.c.l.b16 %v7416
  %v8005 = vunpack.c.h.b16 %v7416
  %v8006 = vunpack.c.l.b16 %v7417
  %v8007 = vunpack.c.l.b16 %v7418
  %v8008 = vunpack.c.h.b16 %v7418
  %v8009 = vunpack.c.l.b16 %v7419
  %v8010 = vunpack.c.l.b16 %v7420
  %v8011 = vunpack.c.h.b16 %v7420
  %v8012 = vunpack.c.l.b16 %v7421
  %v8013 = vunpack.c.l.b16 %v7422
  %v8014 = vunpack.c.h.b16 %v7422
  %v8015 = vunpack.c.l.b16 %v7423
  %v8016 = vunpack.c.l.b16 %v7424
  %v8017 = vunpack.c.h.b16 %v7424
  %v8018 = vunpack.c.l.b16 %v7425
  %v8019 = vunpack.c.l.b16 %v7426
  %v8020 = vunpack.c.h.b16 %v7426
  %v8021 = vunpack.c.l.b16 %v7427
  %v8022 = vunpack.c.l.b16 %v7428
  %v8023 = vunpack.c.h.b16 %v7428
  %v8024 = vunpack.c.l.b16 %v7429
  %v8025 = vunpack.c.l.b16 %v7430
  %v8026 = vunpack.c.h.b16 %v7430
  %v8027 = vunpack.c.l.b16 %v7431
  %v8028 = vunpack.c.l.b16 %v7432
  %v8029 = vunpack.c.h.b16 %v7432
  %v8030 = vunpack.c.l.b16 %v7433
  %v8031 = vunpack.c.l.b16 %v7434
  %v8032 = vunpack.c.h.b16 %v7434
  %v8033 = vunpack.c.l.b16 %v7435
  %v8034 = vunpack.c.l.b16 %v7436
  %v8035 = vunpack.c.h.b16 %v7436
  %v8036 = vunpack.c.l.b16 %v7437
  %v8037 = vunpack.c.l.b16 %v7438
  %v8038 = vunpack.c.h.b16 %v7438
  %v8039 = vunpack.c.l.b16 %v7439
  %v8040 = vunpack.c.l.b16 %v7440
  %v8041 = vunpack.c.h.b16 %v7440
  %v8042 = vunpack.c.l.b16 %v7441
  %v8043 = vunpack.c.l.b16 %v7442
  %v8044 = vunpack.c.h.b16 %v7442
  %v8045 = vunpack.c.l.b16 %v7443
  %v8046 = vunpack.c.l.b16 %v7444
  %v8047 = vunpack.c.h.b16 %v7444
  %v8048 = vunpack.c.l.b16 %v7445
  %v8049 = vunpack.c.l.b16 %v7446
  %v8050 = vunpack.c.h.b16 %v7446
  %v8051 = vunpack.c.l.b16 %v7447
  %v8052 = vunpack.c.l.b16 %v7448
  %v8053 = vunpack.c.h.b16 %v7448
  %v8054 = vunpack.c.l.b16 %v7449
  %v8055 = vunpack.c.l.b16 %v7450
  %v8056 = vunpack.c.h.b16 %v7450
  %v8057 = vunpack.c.l.b16 %v7451
  %v8058 = vunpack.c.l.b16 %v7452
  %v8059 = vunpack.c.h.b16 %v7452
  %v8060 = vunpack.c.l.b16 %v7453
  %v8061 = vunpack.c.l.b16 %v7454
  %v8062 = vunpack.c.h.b16 %v7454
  %v8063 = vunpack.c.l.b16 %v7455
  %v8064 = vunpack.c.l.b16 %v7456
  %v8065 = vunpack.c.h.b16 %v7456
  %v8066 = vunpack.c.l.b16 %v7457
  %v8067 = vunpack.c.l.b16 %v7458
  %v8068 = vunpack.c.h.b16 %v7458
  %v8069 = vunpack.c.l.b16 %v7459
  %v8070 = vunpack.c.l.b16 %v7460
  %v8071 = vunpack.c.h.b16 %v7460
  %v8072 = vunpack.c.l.b16 %v7461
  %v8073 = vunpack.c.l.b16 %v7462
  %v8074 = vunpack.c.h.b16 %v7462
  %v8075 = vunpack.c.l.b16 %v7463
  %v8076 = vunpack.c.l.b16 %v7464
  %v8077 = vunpack.c.h.b16 %v7464
  %v8078 = vunpack.c.l.b16 %v7465
  %v8079 = vunpack.c.l.b16 %v7466
  %v8080 = vunpack.c.h.b16 %v7466
  %v8081 = vunpack.c.l.b16 %v7467
  %v8082 = vunpack.c.l.b16 %v7468
  %v8083 = vunpack.c.h.b16 %v7468
  %v8084 = vunpack.c.l.b16 %v7469
  %v8085 = vunpack.c.l.b16 %v7470
  %v8086 = vunpack.c.h.b16 %v7470
  %v8087 = vunpack.c.l.b16 %v7471
  %v8088 = vunpack.c.l.b16 %v7472
  %v8089 = vunpack.c.h.b16 %v7472
  %v8090 = vunpack.c.l.b16 %v7473
  %v8091 = vunpack.c.l.b16 %v7474
  %v8092 = vunpack.c.h.b16 %v7474
  %v8093 = vunpack.c.l.b16 %v7475
  %v8094 = vunpack.c.l.b16 %v7476
  %v8095 = vunpack.c.h.b16 %v7476
  %v8096 = vunpack.c.l.b16 %v7477
  %v8097 = vunpack.c.l.b16 %v7478
  %v8098 = vunpack.c.h.b16 %v7478
  %v8099 = vunpack.c.l.b16 %v7479
  %v8100 = vunpack.c.l.b16 %v7480
  %v8101 = vunpack.c.h.b16 %v7480
  %v8102 = vunpack.c.l.b16 %v7481
  %v8103 = vunpack.c.l.b16 %v7482
  %v8104 = vunpack.c.h.b16 %v7482
  %v8105 = vunpack.c.l.b16 %v7483
  %v8106 = vunpack.c.l.b16 %v7484
  %v8107 = vunpack.c.h.b16 %v7484
  %v8108 = vunpack.c.l.b16 %v7485
  %v8109 = vunpack.c.l.b16 %v7486
  %v8110 = vunpack.c.h.b16 %v7486
  %v8111 = vunpack.c.l.b16 %v7487
  %v8112 = vunpack.c.l.b16 %v7488
  %v8113 = vunpack.c.h.b16 %v7488
  %v8114 = vunpack.c.l.b16 %v7489
  %v8115 = vunpack.c.l.b16 %v7490
  %v8116 = vunpack.c.h.b16 %v7490
  %v8117 = vunpack.c.l.b16 %v7491
  %v8118 = vunpack.c.l.b16 %v7492
  %v8119 = vunpack.c.h.b16 %v7492
  %v8120 = vunpack.c.l.b16 %v7493
  %v8121 = vunpack.c.l.b16 %v7494
  %v8122 = vunpack.c.h.b16 %v7494
  %v8123 = vunpack.c.l.b16 %v7495
  %v8124 = vunpack.c.l.b16 %v7496
  %v8125 = vunpack.c.h.b16 %v7496
  %v8126 = vunpack.c.l.b16 %v7497
  %v8127 = vunpack.c.l.b16 %v7498
  %v8128 = vunpack.c.h.b16 %v7498
  %v8129 = vunpack.c.l.b16 %v7499
  %v8130 = vunpack.c.l.b16 %v7500
  %v8131 = vunpack.c.h.b16 %v7500
  %v8132 = vunpack.c.l.b16 %v7501
  %v8133 = vunpack.c.l.b16 %v7502
  %v8134 = vunpack.c.h.b16 %v7502
  %v8135 = vunpack.c.l.b16 %v7503
  %v8136 = vunpack.c.l.b16 %v7504
  %v8137 = vunpack.c.h.b16 %v7504
  %v8138 = vunpack.c.l.b16 %v7505
  %v8139 = vunpack.c.l.b16 %v7506
  %v8140 = vunpack.c.h.b16 %v7506
  %v8141 = vunpack.c.l.b16 %v7507
  %v8142 = vunpack.c.l.b16 %v7508
  %v8143 = vunpack.c.h.b16 %v7508
  %v8144 = vunpack.c.l.b16 %v7509
  %v8145 = vunpack.c.l.b16 %v7510
  %v8146 = vunpack.c.h.b16 %v7510
  %v8147 = vunpack.c.l.b16 %v7511
  %v8148 = vunpack.c.l.b16 %v7512
  %v8149 = vunpack.c.h.b16 %v7512
  %v8150 = vunpack.c.l.b16 %v7513
  %v8151 = vunpack.c.l.b16 %v7514
  %v8152 = vunpack.c.h.b16 %v7514
  %v8153 = vunpack.c.l.b16 %v7515
  %v8154 = vunpack.c.l.b16 %v7516
  %v8155 = vunpack.c.h.b16 %v7516
  %v8156 = vunpack.c.l.b16 %v7517
  %v8157 = vunpack.c.l.b16 %v7518
  %v8158 = vunpack.c.h.b16 %v7518
  %v8159 = vunpack.c.l.b16 %v7519
  %v8160 = vunpack.c.l.b16 %v7520
  %v8161 = vunpack.c.h.b16 %v7520
  %v8162 = vunpack.c.l.b16 %v7521
  %v8163 = vunpack.c.l.b16 %v7522
  %v8164 = vunpack.c.h.b16 %v7522
  %v8165 = vunpack.c.l.b16 %v7523
  %v8166 = vunpack.c.l.b16 %v7524
  %v8167 = vunpack.c.h.b16 %v7524
  %v8168 = vunpack.c.l.b16 %v7525
  %v8169 = vunpack.c.l.b16 %v7526
  %v8170 = vunpack.c.h.b16 %v7526
  %v8171 = vunpack.c.l.b16 %v7527
  %v8172 = vunpack.c.l.b16 %v7528
  %v8173 = vunpack.c.h.b16 %v7528
  %v8174 = vunpack.c.l.b16 %v7529
  %v8175 = vunpack.c.l.b16 %v7530
  %v8176 = vunpack.c.h.b16 %v7530
  %v8177 = vunpack.c.l.b16 %v7531
  %v8178 = vunpack.c.l.b16 %v7532
  %v8179 = vunpack.c.h.b16 %v7532
  %v8180 = vunpack.c.l.b16 %v7533
  %v8181 = vunpack.c.l.b16 %v7534
  %v8182 = vunpack.c.h.b16 %v7534
  %v8183 = vunpack.c.l.b16 %v7535
  %v8184 = vunpack.c.l.b16 %v7536
  %v8185 = vunpack.c.h.b16 %v7536
  %v8186 = vunpack.c.l.b16 %v7537
  %v8187 = vunpack.c.l.b16 %v7538
  %v8188 = vunpack.c.h.b16 %v7538
  %v8189 = vunpack.c.l.b16 %v7539
  %v8190 = vunpack.c.l.b16 %v7540
  %v8191 = vunpack.c.h.b16 %v7540
  %v8192 = vunpack.c.l.b16 %v7541
  %v8193 = vunpack.c.l.b16 %v7542
  %v8194 = vunpack.c.h.b16 %v7542
  %v8195 = vunpack.c.l.b16 %v7543
  %v8196 = vunpack.c.l.b16 %v7544
  %v8197 = vunpack.c.h.b16 %v7544
  %v8198 = vunpack.c.l.b16 %v7545
  %v8199 = vunpack.c.l.b16 %v7546
  %v8200 = vunpack.c.h.b16 %v7546
  %v8201 = vunpack.c.l.b16 %v7547
  %v8202 = vunpack.c.l.b16 %v7548
  %v8203 = vunpack.c.h.b16 %v7548
  %v8204 = vunpack.c.l.b16 %v7549
  %v8205 = vunpack.c.l.b16 %v7550
  %v8206 = vunpack.c.h.b16 %v7550
  %v8207 = vunpack.c.l.b16 %v7551
  %v8208 = vunpack.c.l.b16 %v7552
  %v8209 = vunpack.c.h.b16 %v7552
  %v8210 = vunpack.c.l.b16 %v7553
  %v8211 = vunpack.c.l.b16 %v7554
  %v8212 = vunpack.c.h.b16 %v7554
  %v8213 = vunpack.c.l.b16 %v7555
  %v8214 = vunpack.c.l.b16 %v7556
  %v8215 = vunpack.c.h.b16 %v7556
  %v8216 = vunpack.c.l.b16 %v7557
  %v8217 = vunpack.c.l.b16 %v7558
  %v8218 = vunpack.c.h.b16 %v7558
  %v8219 = vunpack.c.l.b16 %v7559
  %v8220 = vunpack.c.l.b16 %v7560
  %v8221 = vunpack.c.h.b16 %v7560
  %v8222 = vunpack.c.l.b16 %v7561
  %v8223 = vunpack.c.l.b16 %v7562
  %v8224 = vunpack.c.h.b16 %v7562
  %v8225 = vunpack.c.l.b16 %v7563
  %v8226 = vunpack.c.l.b16 %v7564
  %v8227 = vunpack.c.h.b16 %v7564
  %v8228 = vunpack.c.l.b16 %v7565
  %v8229 = vunpack.c.l.b16 %v7566
  %v8230 = vunpack.c.h.b16 %v7566
  %v8231 = vunpack.c.l.b16 %v7567
  %v8232 = vunpack.c.l.b16 %v7568
  %v8233 = vunpack.c.h.b16 %v7568
  %v8234 = vunpack.c.l.b16 %v7569
  %v8235 = vunpack.c.l.b16 %v7570
  %v8236 = vunpack.c.h.b16 %v7570
  %v8237 = vunpack.c.l.b16 %v7571
  %v8238 = vunpack.c.l.b16 %v7572
  %v8239 = vunpack.c.h.b16 %v7572
  %v8240 = vunpack.c.l.b16 %v7573
  %v8241 = vunpack.c.l.b16 %v7574
  %v8242 = vunpack.c.h.b16 %v7574
  %v8243 = vunpack.c.l.b16 %v7575
  %v8244 = vunpack.c.l.b16 %v7576
  %v8245 = vunpack.c.h.b16 %v7576
  %v8246 = vunpack.c.l.b16 %v7577
  %v8247 = vunpack.c.l.b16 %v7578
  %v8248 = vunpack.c.h.b16 %v7578
  %v8249 = vunpack.c.l.b16 %v7579
  %v8250 = vunpack.c.l.b16 %v7580
  %v8251 = vunpack.c.h.b16 %v7580
  %v8252 = vunpack.c.l.b16 %v7581
  %v8253 = vunpack.c.l.b16 %v7582
  %v8254 = vunpack.c.h.b16 %v7582
  %v8255 = vunpack.c.l.b16 %v7583
  %v8256 = vunpack.c.l.b16 %v7584
  %v8257 = vunpack.c.h.b16 %v7584
  %v8258 = vunpack.c.l.b16 %v7585
  %v8259 = vunpack.c.l.b16 %v7586
  %v8260 = vunpack.c.h.b16 %v7586
  %v8261 = vunpack.c.l.b16 %v7587
  %v8262 = vunpack.c.l.b16 %v7588
  %v8263 = vunpack.c.h.b16 %v7588
  %v8264 = vunpack.c.l.b16 %v7589
  %v8265 = vpack.c.b16 %v7884, %v7881
  %v8266 = vpack.c.b16 %v7885, %v7882
  %v8267 = vpack.c.b16 %v7886, %v7883
  %v8268 = vpack.c.b16 %v7890, %v7887
  %v8269 = vpack.c.b16 %v7891, %v7888
  %v8270 = vpack.c.b16 %v7892, %v7889
  %v8271 = vpack.c.b16 %v7896, %v7893
  %v8272 = vpack.c.b16 %v7897, %v7894
  %v8273 = vpack.c.b16 %v7898, %v7895
  %v8274 = vpack.c.b16 %v7902, %v7899
  %v8275 = vpack.c.b16 %v7903, %v7900
  %v8276 = vpack.c.b16 %v7904, %v7901
  %v8277 = vpack.c.b16 %v7908, %v7905
  %v8278 = vpack.c.b16 %v7909, %v7906
  %v8279 = vpack.c.b16 %v7910, %v7907
  %v8280 = vpack.c.b16 %v7914, %v7911
  %v8281 = vpack.c.b16 %v7915, %v7912
  %v8282 = vpack.c.b16 %v7916, %v7913
  %v8283 = vpack.c.b16 %v7920, %v7917
  %v8284 = vpack.c.b16 %v7921, %v7918
  %v8285 = vpack.c.b16 %v7922, %v7919
  %v8286 = vpack.c.b16 %v7926, %v7923
  %v8287 = vpack.c.b16 %v7927, %v7924
  %v8288 = vpack.c.b16 %v7928, %v7925
  %v8289 = vpack.c.b16 %v7932, %v7929
  %v8290 = vpack.c.b16 %v7933, %v7930
  %v8291 = vpack.c.b16 %v7934, %v7931
  %v8292 = vpack.c.b16 %v7938, %v7935
  %v8293 = vpack.c.b16 %v7939, %v7936
  %v8294 = vpack.c.b16 %v7940, %v7937
  %v8295 = vpack.c.b16 %v7944, %v7941
  %v8296 = vpack.c.b16 %v7945, %v7942
  %v8297 = vpack.c.b16 %v7946, %v7943
  %v8298 = vpack.c.b16 %v7950, %v7947
  %v8299 = vpack.c.b16 %v7951, %v7948
  %v8300 = vpack.c.b16 %v7952, %v7949
  %v8301 = vpack.c.b16 %v7956, %v7953
  %v8302 = vpack.c.b16 %v7957, %v7954
  %v8303 = vpack.c.b16 %v7958, %v7955
  %v8304 = vpack.c.b16 %v7962, %v7959
  %v8305 = vpack.c.b16 %v7963, %v7960
  %v8306 = vpack.c.b16 %v7964, %v7961
  %v8307 = vpack.c.b16 %v7968, %v7965
  %v8308 = vpack.c.b16 %v7969, %v7966
  %v8309 = vpack.c.b16 %v7970, %v7967
  %v8310 = vpack.c.b16 %v7974, %v7971
  %v8311 = vpack.c.b16 %v7975, %v7972
  %v8312 = vpack.c.b16 %v7976, %v7973
  %v8313 = vpack.c.b16 %v7980, %v7977
  %v8314 = vpack.c.b16 %v7981, %v7978
  %v8315 = vpack.c.b16 %v7982, %v7979
  %v8316 = vpack.c.b16 %v7986, %v7983
  %v8317 = vpack.c.b16 %v7987, %v7984
  %v8318 = vpack.c.b16 %v7988, %v7985
  %v8319 = vpack.c.b16 %v7992, %v7989
  %v8320 = vpack.c.b16 %v7993, %v7990
  %v8321 = vpack.c.b16 %v7994, %v7991
  %v8322 = vpack.c.b16 %v7998, %v7995
  %v8323 = vpack.c.b16 %v7999, %v7996
  %v8324 = vpack.c.b16 %v8000, %v7997
  %v8325 = vpack.c.b16 %v8004, %v8001
  %v8326 = vpack.c.b16 %v8005, %v8002
  %v8327 = vpack.c.b16 %v8006, %v8003
  %v8328 = vpack.c.b16 %v8010, %v8007
  %v8329 = vpack.c.b16 %v8011, %v8008
  %v8330 = vpack.c.b16 %v8012, %v8009
  %v8331 = vpack.c.b16 %v8016, %v8013
  %v8332 = vpack.c.b16 %v8017, %v8014
  %v8333 = vpack.c.b16 %v8018, %v8015
  %v8334 = vpack.c.b16 %v8022, %v8019
  %v8335 = vpack.c.b16 %v8023, %v8020
  %v8336 = vpack.c.b16 %v8024, %v8021
  %v8337 = vpack.c.b16 %v8028, %v8025
  %v8338 = vpack.c.b16 %v8029, %v8026
  %v8339 = vpack.c.b16 %v8030, %v8027
  %v8340 = vpack.c.b16 %v8034, %v8031
  %v8341 = vpack.c.b16 %v8035, %v8032
  %v8342 = vpack.c.b16 %v8036, %v8033
  %v8343 = vpack.c.b16 %v8040, %v8037
  %v8344 = vpack.c.b16 %v8041, %v8038
  %v8345 = vpack.c.b16 %v8042, %v8039
  %v8346 = vpack.c.b16 %v8046, %v8043
  %v8347 = vpack.c.b16 %v8047, %v8044
  %v8348 = vpack.c.b16 %v8048, %v8045
  %v8349 = vpack.c.b16 %v8052, %v8049
  %v8350 = vpack.c.b16 %v8053, %v8050
  %v8351 = vpack.c.b16 %v8054, %v8051
  %v8352 = vpack.c.b16 %v8058, %v8055
  %v8353 = vpack.c.b16 %v8059, %v8056
  %v8354 = vpack.c.b16 %v8060, %v8057
  %v8355 = vpack.c.b16 %v8064, %v8061
  %v8356 = vpack.c.b16 %v8065, %v8062
  %v8357 = vpack.c.b16 %v8066, %v8063
  %v8358 = vpack.c.b16 %v8070, %v8067
  %v8359 = vpack.c.b16 %v8071, %v8068
  %v8360 = vpack.c.b16 %v8072, %v8069
  %v8361 = vpack.c.b16 %v8076, %v8073
  %v8362 = vpack.c.b16 %v8077, %v8074
  %v8363 = vpack.c.b16 %v8078, %v8075
  %v8364 = vpack.c.b16 %v8082, %v8079
  %v8365 = vpack.c.b16 %v8083, %v8080
  %v8366 = vpack.c.b16 %v8084, %v8081
  %v8367 = vpack.c.b16 %v8088, %v8085
  %v8368 = vpack.c.b16 %v8089, %v8086
  %v8369 = vpack.c.b16 %v8090, %v8087
  %v8370 = vpack.c.b16 %v8094, %v8091
  %v8371 = vpack.c.b16 %v8095, %v8092
  %v8372 = vpack.c.b16 %v8096, %v8093
  %v8373 = vpack.c.b16 %v8100, %v8097
  %v8374 = vpack.c.b16 %v8101, %v8098
  %v8375 = vpack.c.b16 %v8102, %v8099
  %v8376 = vpack.c.b16 %v8106, %v8103
  %v8377 = vpack.c.b16 %v8107, %v8104
  %v8378 = vpack.c.b16 %v8108, %v8105
  %v8379 = vpack.c.b16 %v8112, %v8109
  %v8380 = vpack.c.b16 %v8113, %v8110
  %v8381 = vpack.c.b16 %v8114, %v8111
  %v8382 = vpack.c.b16 %v8118, %v8115
  %v8383 = vpack.c.b16 %v8119, %v8116
  %v8384 = vpack.c.b16 %v8120, %v8117
  %v8385 = vpack.c.b16 %v8124, %v8121
  %v8386 = vpack.c.b16 %v8125, %v8122
  %v8387 = vpack.c.b16 %v8126, %v8123
  %v8388 = vpack.c.b16 %v8130, %v8127
  %v8389 = vpack.c.b16 %v8131, %v8128
  %v8390 = vpack.c.b16 %v8132, %v8129
  %v8391 = vpack.c.b16 %v8136, %v8133
  %v8392 = vpack.c.b16 %v8137, %v8134
  %v8393 = vpack.c.b16 %v8138, %v8135
  %v8394 = vpack.c.b16 %v8142, %v8139
  %v8395 = vpack.c.b16 %v8143, %v8140
  %v8396 = vpack.c.b16 %v8144, %v8141
  %v8397 = vpack.c.b16 %v8148, %v8145
  %v8398 = vpack.c.b16 %v8149, %v8146
  %v8399 = vpack.c.b16 %v8150, %v8147
  %v8400 = vpack.c.b16 %v8154, %v8151
  %v8401 = vpack.c.b16 %v8155, %v8152
  %v8402 = vpack.c.b16 %v8156, %v8153
  %v8403 = vpack.c.b16 %v8160, %v8157
  %v8404 = vpack.c.b16 %v8161, %v8158
  %v8405 = vpack.c.b16 %v8162, %v8159
  %v8406 = vpack.c.b16 %v8166, %v8163
  %v8407 = vpack.c.b16 %v8167, %v8164
  %v8408 = vpack.c.b16 %v8168, %v8165
  %v8409 = vpack.c.b16 %v8172, %v8169
  %v8410 = vpack.c.b16 %v8173, %v8170
  %v8411 = vpack.c.b16 %v8174, %v8171
  %v8412 = vpack.c.b16 %v8178, %v8175
  %v8413 = vpack.c.b16 %v8179, %v8176
  %v8414 = vpack.c.b16 %v8180, %v8177
  %v8415 = vpack.c.b16 %v8184, %v8181
  %v8416 = vpack.c.b16 %v8185, %v8182
  %v8417 = vpack.c.b16 %v8186, %v8183
  %v8418 = vpack.c.b16 %v8190, %v8187
  %v8419 = vpack.c.b16 %v8191, %v8188
  %v8420 = vpack.c.b16 %v8192, %v8189
  %v8421 = vpack.c.b16 %v8196, %v8193
  %v8422 = vpack.c.b16 %v8197, %v8194
  %v8423 = vpack.c.b16 %v8198, %v8195
  %v8424 = vpack.c.b16 %v8202, %v8199
  %v8425 = vpack.c.b16 %v8203, %v8200
  %v8426 = vpack.c.b16 %v8204, %v8201
  %v8427 = vpack.c.b16 %v8208, %v8205
  %v8428 = vpack.c.b16 %v8209, %v8206
  %v8429 = vpack.c.b16 %v8210, %v8207
  %v8430 = vpack.c.b16 %v8214, %v8211
  %v8431 = vpack.c.b16 %v8215, %v8212
  %v8432 = vpack.c.b16 %v8216, %v8213
  %v8433 = vpack.c.b16 %v8220, %v8217
  %v8434 = vpack.c.b16 %v8221, %v8218
  %v8435 = vpack.c.b16 %v8222, %v8219
  %v8436 = vpack.c.b16 %v8226, %v8223
  %v8437 = vpack.c.b16 %v8227, %v8224
  %v8438 = vpack.c.b16 %v8228, %v8225
  %v8439 = vpack.c.b16 %v8232, %v8229
  %v8440 = vpack.c.b16 %v8233, %v8230
  %v8441 = vpack.c.b16 %v8234, %v8231
  %v8442 = vpack.c.b16 %v8238, %v8235
  %v8443 = vpack.c.b16 %v8239, %v8236
  %v8444 = vpack.c.b16 %v8240, %v8237
  %v8445 = vpack.c.b16 %v8244, %v8241
  %v8446 = vpack.c.b16 %v8245, %v8242
  %v8447 = vpack.c.b16 %v8246, %v8243
  %v8448 = vpack.c.b16 %v8250, %v8247
  %v8449 = vpack.c.b16 %v8251, %v8248
  %v8450 = vpack.c.b16 %v8252, %v8249
  %v8451 = vpack.c.b16 %v8256, %v8253
  %v8452 = vpack.c.b16 %v8257, %v8254
  %v8453 = vpack.c.b16 %v8258, %v8255
  %v8454 = vpack.c.b16 %v8262, %v8259
  %v8455 = vpack.c.b16 %v8263, %v8260
  %v8456 = vpack.c.b16 %v8264, %v8261
  %8649 = vmatpush.bf16.msra.mxu0 %v8286
  %8650 = vmatpush.bf16.msra.mxu0 %v8283
  %8651 = vmatpush.bf16.msra.mxu0 %v8280
  %8652 = vmatpush.bf16.msra.mxu0 %v8277
  %8653 = vmatpush.bf16.msra.mxu0 %v8274
  %8654 = vmatpush.bf16.msra.mxu0 %v8271
  %8655 = vmatpush.bf16.msra.mxu0 %v8268
  %8656 = vmatpush.bf16.msra.mxu0 %v8265
  %8657 = vmatmul.bf16.gmra.mxu0 %v7609
  %v8658 = vpop.f32.mrf.mxu0
  %v8659 = vadd.f32 %v7592, %v8658
  %v8660 = vpop.f32.mrf.mxu0
  %8661 = vdwg.mxu0
  %8662 = vmatpush.bf16.msra.mxu0 %v8310
  %8663 = vmatpush.bf16.msra.mxu0 %v8307
  %8664 = vmatpush.bf16.msra.mxu0 %v8304
  %8665 = vmatpush.bf16.msra.mxu0 %v8301
  %8666 = vmatpush.bf16.msra.mxu0 %v8298
  %8667 = vmatpush.bf16.msra.mxu0 %v8295
  %8668 = vmatpush.bf16.msra.mxu0 %v8292
  %8669 = vmatpush.bf16.msra.mxu0 %v8289
  %8670 = vmatmul.bf16.gmra.mxu0 %v7610
  %v8671 = vpop.f32.mrf.mxu0
  %v8672 = vadd.f32 %v8659, %v8671
  %v8673 = vpop.f32.mrf.mxu0
  %8674 = vdwg.mxu0
  %8675 = vmatpush.bf16.msra.mxu0 %v8334
  %8676 = vmatpush.bf16.msra.mxu0 %v8331
  %8677 = vmatpush.bf16.msra.mxu0 %v8328
  %8678 = vmatpush.bf16.msra.mxu0 %v8325
  %8679 = vmatpush.bf16.msra.mxu0 %v8322
  %8680 = vmatpush.bf16.msra.mxu0 %v8319
  %8681 = vmatpush.bf16.msra.mxu0 %v8316
  %8682 = vmatpush.bf16.msra.mxu0 %v8313
  %8683 = vmatmul.bf16.gmra.mxu0 %v7611
  %v8684 = vpop.f32.mrf.mxu0
  %v8685 = vadd.f32 %v8672, %v8684
  %v8686 = vpop.f32.mrf.mxu0
  %8687 = vdwg.mxu0
  %8688 = vmatpush.bf16.msra.mxu0 %v8358
  %8689 = vmatpush.bf16.msra.mxu0 %v8355
  %8690 = vmatpush.bf16.msra.mxu0 %v8352
  %8691 = vmatpush.bf16.msra.mxu0 %v8349
  %8692 = vmatpush.bf16.msra.mxu0 %v8346
  %8693 = vmatpush.bf16.msra.mxu0 %v8343
  %8694 = vmatpush.bf16.msra.mxu0 %v8340
  %8695 = vmatpush.bf16.msra.mxu0 %v8337
  %8696 = vmatmul.bf16.gmra.mxu0 %v7612
  %v8697 = vpop.f32.mrf.mxu0
  %v8698 = vadd.f32 %v8685, %v8697
  %v8699 = vpop.f32.mrf.mxu0
  %8700 = vdwg.mxu0
  %8701 = vmatpush.bf16.msra.mxu0 %v8382
  %8702 = vmatpush.bf16.msra.mxu0 %v8379
  %8703 = vmatpush.bf16.msra.mxu0 %v8376
  %8704 = vmatpush.bf16.msra.mxu0 %v8373
  %8705 = vmatpush.bf16.msra.mxu0 %v8370
  %8706 = vmatpush.bf16.msra.mxu0 %v8367
  %8707 = vmatpush.bf16.msra.mxu0 %v8364
  %8708 = vmatpush.bf16.msra.mxu0 %v8361
  %8709 = vmatmul.bf16.gmra.mxu0 %v7613
  %v8710 = vpop.f32.mrf.mxu0
  %v8711 = vadd.f32 %v8698, %v8710
  %v8712 = vpop.f32.mrf.mxu0
  %8713 = vdwg.mxu0
  %8714 = vmatpush.bf16.msra.mxu0 %v8406
  %8715 = vmatpush.bf16.msra.mxu0 %v8403
  %8716 = vmatpush.bf16.msra.mxu0 %v8400
  %8717 = vmatpush.bf16.msra.mxu0 %v8397
  %8718 = vmatpush.bf16.msra.mxu0 %v8394
  %8719 = vmatpush.bf16.msra.mxu0 %v8391
  %8720 = vmatpush.bf16.msra.mxu0 %v8388
  %8721 = vmatpush.bf16.msra.mxu0 %v8385
  %8722 = vmatmul.bf16.gmra.mxu0 %v7614
  %v8723 = vpop.f32.mrf.mxu0
  %v8724 = vadd.f32 %v8711, %v8723
  %v8725 = vpop.f32.mrf.mxu0
  %8726 = vdwg.mxu0
  %8727 = vmatpush.bf16.msra.mxu0 %v8430
  %8728 = vmatpush.bf16.msra.mxu0 %v8427
  %8729 = vmatpush.bf16.msra.mxu0 %v8424
  %8730 = vmatpush.bf16.msra.mxu0 %v8421
  %8731 = vmatpush.bf16.msra.mxu0 %v8418
  %8732 = vmatpush.bf16.msra.mxu0 %v8415
  %8733 = vmatpush.bf16.msra.mxu0 %v8412
  %8734 = vmatpush.bf16.msra.mxu0 %v8409
  %8735 = vmatmul.bf16.gmra.mxu0 %v7615
  %v8736 = vpop.f32.mrf.mxu0
  %v8737 = vadd.f32 %v8724, %v8736
  %v8738 = vpop.f32.mrf.mxu0
  %8739 = vdwg.mxu0
  %8740 = vmatpush.bf16.msra.mxu0 %v8454
  %8741 = vmatpush.bf16.msra.mxu0 %v8451
  %8742 = vmatpush.bf16.msra.mxu0 %v8448
  %8743 = vmatpush.bf16.msra.mxu0 %v8445
  %8744 = vmatpush.bf16.msra.mxu0 %v8442
  %8745 = vmatpush.bf16.msra.mxu0 %v8439
  %8746 = vmatpush.bf16.msra.mxu0 %v8436
  %8747 = vmatpush.bf16.msra.mxu0 %v8433
  %8748 = vmatmul.bf16.gmra.mxu0 %v7616
  %v8749 = vpop.f32.mrf.mxu0
  %v8750 = vadd.f32 %v8737, %v8749
  %v8751 = vpop.f32.mrf.mxu0
  %8752 = vdwg.mxu0
  %8753 = vmatpush.bf16.msra.mxu0 %v8287
  %8754 = vmatpush.bf16.msra.mxu0 %v8284
  %8755 = vmatpush.bf16.msra.mxu0 %v8281
  %8756 = vmatpush.bf16.msra.mxu0 %v8278
  %8757 = vmatpush.bf16.msra.mxu0 %v8275
  %8758 = vmatpush.bf16.msra.mxu0 %v8272
  %8759 = vmatpush.bf16.msra.mxu0 %v8269
  %8760 = vmatpush.bf16.msra.mxu0 %v8266
  %8761 = vmatmul.bf16.gmra.mxu0 %v7609
  %v8762 = vpop.f32.mrf.mxu0
  %v8763 = vadd.f32 %v7593, %v8762
  %v8764 = vpop.f32.mrf.mxu0
  %8765 = vdwg.mxu0
  %8766 = vmatpush.bf16.msra.mxu0 %v8311
  %8767 = vmatpush.bf16.msra.mxu0 %v8308
  %8768 = vmatpush.bf16.msra.mxu0 %v8305
  %8769 = vmatpush.bf16.msra.mxu0 %v8302
  %8770 = vmatpush.bf16.msra.mxu0 %v8299
  %8771 = vmatpush.bf16.msra.mxu0 %v8296
  %8772 = vmatpush.bf16.msra.mxu0 %v8293
  %8773 = vmatpush.bf16.msra.mxu0 %v8290
  %8774 = vmatmul.bf16.gmra.mxu0 %v7610
  %v8775 = vpop.f32.mrf.mxu0
  %v8776 = vadd.f32 %v8763, %v8775
  %v8777 = vpop.f32.mrf.mxu0
  %8778 = vdwg.mxu0
  %8779 = vmatpush.bf16.msra.mxu0 %v8335
  %8780 = vmatpush.bf16.msra.mxu0 %v8332
  %8781 = vmatpush.bf16.msra.mxu0 %v8329
  %8782 = vmatpush.bf16.msra.mxu0 %v8326
  %8783 = vmatpush.bf16.msra.mxu0 %v8323
  %8784 = vmatpush.bf16.msra.mxu0 %v8320
  %8785 = vmatpush.bf16.msra.mxu0 %v8317
  %8786 = vmatpush.bf16.msra.mxu0 %v8314
  %8787 = vmatmul.bf16.gmra.mxu0 %v7611
  %v8788 = vpop.f32.mrf.mxu0
  %v8789 = vadd.f32 %v8776, %v8788
  %v8790 = vpop.f32.mrf.mxu0
  %8791 = vdwg.mxu0
  %8792 = vmatpush.bf16.msra.mxu0 %v8359
  %8793 = vmatpush.bf16.msra.mxu0 %v8356
  %8794 = vmatpush.bf16.msra.mxu0 %v8353
  %8795 = vmatpush.bf16.msra.mxu0 %v8350
  %8796 = vmatpush.bf16.msra.mxu0 %v8347
  %8797 = vmatpush.bf16.msra.mxu0 %v8344
  %8798 = vmatpush.bf16.msra.mxu0 %v8341
  %8799 = vmatpush.bf16.msra.mxu0 %v8338
  %8800 = vmatmul.bf16.gmra.mxu0 %v7612
  %v8801 = vpop.f32.mrf.mxu0
  %v8802 = vadd.f32 %v8789, %v8801
  %v8803 = vpop.f32.mrf.mxu0
  %8804 = vdwg.mxu0
  %8805 = vmatpush.bf16.msra.mxu0 %v8383
  %8806 = vmatpush.bf16.msra.mxu0 %v8380
  %8807 = vmatpush.bf16.msra.mxu0 %v8377
  %8808 = vmatpush.bf16.msra.mxu0 %v8374
  %8809 = vmatpush.bf16.msra.mxu0 %v8371
  %8810 = vmatpush.bf16.msra.mxu0 %v8368
  %8811 = vmatpush.bf16.msra.mxu0 %v8365
  %8812 = vmatpush.bf16.msra.mxu0 %v8362
  %8813 = vmatmul.bf16.gmra.mxu0 %v7613
  %v8814 = vpop.f32.mrf.mxu0
  %v8815 = vadd.f32 %v8802, %v8814
  %v8816 = vpop.f32.mrf.mxu0
  %8817 = vdwg.mxu0
  %8818 = vmatpush.bf16.msra.mxu0 %v8407
  %8819 = vmatpush.bf16.msra.mxu0 %v8404
  %8820 = vmatpush.bf16.msra.mxu0 %v8401
  %8821 = vmatpush.bf16.msra.mxu0 %v8398
  %8822 = vmatpush.bf16.msra.mxu0 %v8395
  %8823 = vmatpush.bf16.msra.mxu0 %v8392
  %8824 = vmatpush.bf16.msra.mxu0 %v8389
  %8825 = vmatpush.bf16.msra.mxu0 %v8386
  %8826 = vmatmul.bf16.gmra.mxu0 %v7614
  %v8827 = vpop.f32.mrf.mxu0
  %v8828 = vadd.f32 %v8815, %v8827
  %v8829 = vpop.f32.mrf.mxu0
  %8830 = vdwg.mxu0
  %8831 = vmatpush.bf16.msra.mxu0 %v8431
  %8832 = vmatpush.bf16.msra.mxu0 %v8428
  %8833 = vmatpush.bf16.msra.mxu0 %v8425
  %8834 = vmatpush.bf16.msra.mxu0 %v8422
  %8835 = vmatpush.bf16.msra.mxu0 %v8419
  %8836 = vmatpush.bf16.msra.mxu0 %v8416
  %8837 = vmatpush.bf16.msra.mxu0 %v8413
  %8838 = vmatpush.bf16.msra.mxu0 %v8410
  %8839 = vmatmul.bf16.gmra.mxu0 %v7615
  %v8840 = vpop.f32.mrf.mxu0
  %v8841 = vadd.f32 %v8828, %v8840
  %v8842 = vpop.f32.mrf.mxu0
  %8843 = vdwg.mxu0
  %8844 = vmatpush.bf16.msra.mxu0 %v8455
  %8845 = vmatpush.bf16.msra.mxu0 %v8452
  %8846 = vmatpush.bf16.msra.mxu0 %v8449
  %8847 = vmatpush.bf16.msra.mxu0 %v8446
  %8848 = vmatpush.bf16.msra.mxu0 %v8443
  %8849 = vmatpush.bf16.msra.mxu0 %v8440
  %8850 = vmatpush.bf16.msra.mxu0 %v8437
  %8851 = vmatpush.bf16.msra.mxu0 %v8434
  %8852 = vmatmul.bf16.gmra.mxu0 %v7616
  %v8853 = vpop.f32.mrf.mxu0
  %v8854 = vadd.f32 %v8841, %v8853
  %v8855 = vpop.f32.mrf.mxu0
  %8856 = vdwg.mxu0
  %8857 = vmatpush.bf16.msra.mxu0 %v8288
  %8858 = vmatpush.bf16.msra.mxu0 %v8285
  %8859 = vmatpush.bf16.msra.mxu0 %v8282
  %8860 = vmatpush.bf16.msra.mxu0 %v8279
  %8861 = vmatpush.bf16.msra.mxu0 %v8276
  %8862 = vmatpush.bf16.msra.mxu0 %v8273
  %8863 = vmatpush.bf16.msra.mxu0 %v8270
  %8864 = vmatpush.bf16.msra.mxu0 %v8267
  %8865 = vmatmul.bf16.gmra.mxu0 %v7609
  %v8866 = vpop.f32.mrf.mxu0
  %v8867 = vadd.f32 %v7594, %v8866
  %v8868 = vpop.f32.mrf.mxu0
  %8869 = vdwg.mxu0
  %8870 = vmatpush.bf16.msra.mxu0 %v8312
  %8871 = vmatpush.bf16.msra.mxu0 %v8309
  %8872 = vmatpush.bf16.msra.mxu0 %v8306
  %8873 = vmatpush.bf16.msra.mxu0 %v8303
  %8874 = vmatpush.bf16.msra.mxu0 %v8300
  %8875 = vmatpush.bf16.msra.mxu0 %v8297
  %8876 = vmatpush.bf16.msra.mxu0 %v8294
  %8877 = vmatpush.bf16.msra.mxu0 %v8291
  %8878 = vmatmul.bf16.gmra.mxu0 %v7610
  %v8879 = vpop.f32.mrf.mxu0
  %v8880 = vadd.f32 %v8867, %v8879
  %v8881 = vpop.f32.mrf.mxu0
  %8882 = vdwg.mxu0
  %8883 = vmatpush.bf16.msra.mxu0 %v8336
  %8884 = vmatpush.bf16.msra.mxu0 %v8333
  %8885 = vmatpush.bf16.msra.mxu0 %v8330
  %8886 = vmatpush.bf16.msra.mxu0 %v8327
  %8887 = vmatpush.bf16.msra.mxu0 %v8324
  %8888 = vmatpush.bf16.msra.mxu0 %v8321
  %8889 = vmatpush.bf16.msra.mxu0 %v8318
  %8890 = vmatpush.bf16.msra.mxu0 %v8315
  %8891 = vmatmul.bf16.gmra.mxu0 %v7611
  %v8892 = vpop.f32.mrf.mxu0
  %v8893 = vadd.f32 %v8880, %v8892
  %v8894 = vpop.f32.mrf.mxu0
  %8895 = vdwg.mxu0
  %8896 = vmatpush.bf16.msra.mxu0 %v8360
  %8897 = vmatpush.bf16.msra.mxu0 %v8357
  %8898 = vmatpush.bf16.msra.mxu0 %v8354
  %8899 = vmatpush.bf16.msra.mxu0 %v8351
  %8900 = vmatpush.bf16.msra.mxu0 %v8348
  %8901 = vmatpush.bf16.msra.mxu0 %v8345
  %8902 = vmatpush.bf16.msra.mxu0 %v8342
  %8903 = vmatpush.bf16.msra.mxu0 %v8339
  %8904 = vmatmul.bf16.gmra.mxu0 %v7612
  %v8905 = vpop.f32.mrf.mxu0
  %v8906 = vadd.f32 %v8893, %v8905
  %v8907 = vpop.f32.mrf.mxu0
  %8908 = vdwg.mxu0
  %8909 = vmatpush.bf16.msra.mxu0 %v8384
  %8910 = vmatpush.bf16.msra.mxu0 %v8381
  %8911 = vmatpush.bf16.msra.mxu0 %v8378
  %8912 = vmatpush.bf16.msra.mxu0 %v8375
  %8913 = vmatpush.bf16.msra.mxu0 %v8372
  %8914 = vmatpush.bf16.msra.mxu0 %v8369
  %8915 = vmatpush.bf16.msra.mxu0 %v8366
  %8916 = vmatpush.bf16.msra.mxu0 %v8363
  %8917 = vmatmul.bf16.gmra.mxu0 %v7613
  %v8918 = vpop.f32.mrf.mxu0
  %v8919 = vadd.f32 %v8906, %v8918
  %v8920 = vpop.f32.mrf.mxu0
  %8921 = vdwg.mxu0
  %8922 = vmatpush.bf16.msra.mxu0 %v8408
  %8923 = vmatpush.bf16.msra.mxu0 %v8405
  %8924 = vmatpush.bf16.msra.mxu0 %v8402
  %8925 = vmatpush.bf16.msra.mxu0 %v8399
  %8926 = vmatpush.bf16.msra.mxu0 %v8396
  %8927 = vmatpush.bf16.msra.mxu0 %v8393
  %8928 = vmatpush.bf16.msra.mxu0 %v8390
  %8929 = vmatpush.bf16.msra.mxu0 %v8387
  %8930 = vmatmul.bf16.gmra.mxu0 %v7614
  %v8931 = vpop.f32.mrf.mxu0
  %v8932 = vadd.f32 %v8919, %v8931
  %v8933 = vpop.f32.mrf.mxu0
  %8934 = vdwg.mxu0
  %8935 = vmatpush.bf16.msra.mxu0 %v8432
  %8936 = vmatpush.bf16.msra.mxu0 %v8429
  %8937 = vmatpush.bf16.msra.mxu0 %v8426
  %8938 = vmatpush.bf16.msra.mxu0 %v8423
  %8939 = vmatpush.bf16.msra.mxu0 %v8420
  %8940 = vmatpush.bf16.msra.mxu0 %v8417
  %8941 = vmatpush.bf16.msra.mxu0 %v8414
  %8942 = vmatpush.bf16.msra.mxu0 %v8411
  %8943 = vmatmul.bf16.gmra.mxu0 %v7615
  %v8944 = vpop.f32.mrf.mxu0
  %v8945 = vadd.f32 %v8932, %v8944
  %v8946 = vpop.f32.mrf.mxu0
  %8947 = vdwg.mxu0
  %8948 = vmatpush.bf16.msra.mxu0 %v8456
  %8949 = vmatpush.bf16.msra.mxu0 %v8453
  %8950 = vmatpush.bf16.msra.mxu0 %v8450
  %8951 = vmatpush.bf16.msra.mxu0 %v8447
  %8952 = vmatpush.bf16.msra.mxu0 %v8444
  %8953 = vmatpush.bf16.msra.mxu0 %v8441
  %8954 = vmatpush.bf16.msra.mxu0 %v8438
  %8955 = vmatpush.bf16.msra.mxu0 %v8435
  %8956 = vmatmul.bf16.gmra.mxu0 %v7616
  %v8957 = vpop.f32.mrf.mxu0
  %v8958 = vadd.f32 %v8945, %v8957
  %v8959 = vpop.f32.mrf.mxu0
  %8960 = vdwg.mxu0
  %v8961 = vmax.f32 %v8750, 0.0
  %v8962 = vmax.f32 %v8854, 0.0
  %v8963 = vmax.f32 %v8958, 0.0
  %v8964 = vpack.c.bf16 %v8961, %v8961
  %v8965 = vpack.c.bf16 %v8962, %v8962
  %v8966 = vpack.c.bf16 %v8963, %v8963
  %v8967 = vld [vmem:[%s7] sm:$0xf]
  %v8968 = vld [vmem:[%s7 + $0x4] sm:$0xf]
  %v8969 = vld [vmem:[%s7 + $0x8] sm:$0xf]
  %v8970 = vld [vmem:[%s7 + $0xc] sm:$0xf]
  %v8971 = vld [vmem:[%s7 + $0x10] sm:$0xf]
  %v8972 = vld [vmem:[%s7 + $0x14] sm:$0xf]
  %v8973 = vld [vmem:[%s7 + $0x18] sm:$0xf]
  %v8974 = vld [vmem:[%s7 + $0x1c] sm:$0xf]
  %v8975 = vld [vmem:[%s7 + $0x20] sm:$0xf]
  %v8976 = vld [vmem:[%s7 + $0x24] sm:$0xf]
  %v8977 = vld [vmem:[%s7 + $0x28] sm:$0xf]
  %v8978 = vld [vmem:[%s7 + $0x2c] sm:$0xf]
  %v8979 = vld [vmem:[%s7 + $0x30] sm:$0xf]
  %v8980 = vld [vmem:[%s7 + $0x34] sm:$0xf]
  %v8981 = vld [vmem:[%s7 + $0x38] sm:$0xf]
  %v8982 = vld [vmem:[%s7 + $0x3c] sm:$0xf]
  %v8983 = vld [vmem:[%s7 + $0x40] sm:$0xf]
  %v8984 = vld [vmem:[%s7 + $0x44] sm:$0xf]
  %v8985 = vld [vmem:[%s7 + $0x48] sm:$0xf]
  %v8986 = vld [vmem:[%s7 + $0x4c] sm:$0xf]
  %v8987 = vld [vmem:[%s7 + $0x50] sm:$0xf]
  %v8988 = vld [vmem:[%s7 + $0x54] sm:$0xf]
  %v8989 = vld [vmem:[%s7 + $0x58] sm:$0xf]
  %v8990 = vld [vmem:[%s7 + $0x5c] sm:$0xf]
  %v8991 = vld [vmem:[%s7 + $0x60] sm:$0xf]
  %v8992 = vld [vmem:[%s7 + $0x64] sm:$0xf]
  %v8993 = vld [vmem:[%s7 + $0x68] sm:$0xf]
  %v8994 = vld [vmem:[%s7 + $0x6c] sm:$0xf]
  %v8995 = vld [vmem:[%s7 + $0x70] sm:$0xf]
  %v8996 = vld [vmem:[%s7 + $0x74] sm:$0xf]
  %v8997 = vld [vmem:[%s7 + $0x78] sm:$0xf]
  %v8998 = vld [vmem:[%s7 + $0x7c] sm:$0xf]
  %v8999 = vld [vmem:[%s7 + $0x80] sm:$0xf]
  %v9000 = vld [vmem:[%s7 + $0x84] sm:$0xf]
  %v9001 = vld [vmem:[%s7 + $0x88] sm:$0xf]
  %v9002 = vld [vmem:[%s7 + $0x8c] sm:$0xf]
  %v9003 = vld [vmem:[%s7 + $0x90] sm:$0xf]
  %v9004 = vld [vmem:[%s7 + $0x94] sm:$0x3]
  %v9005 = vld [vmem:[%s8] sm:$0x1]
  %v9007 = vperm.slane %v9005, 0
  %v9047 = vunpack.c.l.b16 %v8967
  %v9048 = vunpack.c.l.b16 %v8968
  %v9049 = vunpack.c.l.b16 %v8969
  %v9050 = vunpack.c.l.b16 %v8970
  %v9051 = vunpack.c.l.b16 %v8971
  %v9052 = vunpack.c.l.b16 %v8972
  %v9053 = vunpack.c.l.b16 %v8973
  %v9054 = vunpack.c.l.b16 %v8974
  %v9055 = vunpack.c.l.b16 %v8975
  %v9056 = vunpack.c.l.b16 %v8976
  %v9057 = vunpack.c.l.b16 %v8977
  %v9058 = vunpack.c.l.b16 %v8978
  %v9059 = vunpack.c.l.b16 %v8979
  %v9060 = vunpack.c.l.b16 %v8980
  %v9061 = vunpack.c.l.b16 %v8981
  %v9062 = vunpack.c.l.b16 %v8982
  %v9063 = vunpack.c.l.b16 %v8983
  %v9064 = vunpack.c.l.b16 %v8984
  %v9065 = vunpack.c.l.b16 %v8985
  %v9066 = vunpack.c.l.b16 %v8986
  %v9067 = vunpack.c.l.b16 %v8987
  %v9068 = vunpack.c.l.b16 %v8988
  %v9069 = vunpack.c.l.b16 %v8989
  %v9070 = vunpack.c.l.b16 %v8990
  %v9071 = vunpack.c.l.b16 %v8991
  %v9072 = vunpack.c.l.b16 %v8992
  %v9073 = vunpack.c.l.b16 %v8993
  %v9074 = vunpack.c.l.b16 %v8994
  %v9075 = vunpack.c.l.b16 %v8995
  %v9076 = vunpack.c.l.b16 %v8996
  %v9077 = vunpack.c.l.b16 %v8997
  %v9078 = vunpack.c.l.b16 %v8998
  %v9079 = vunpack.c.l.b16 %v8999
  %v9080 = vunpack.c.l.b16 %v9000
  %v9081 = vunpack.c.l.b16 %v9001
  %v9082 = vunpack.c.l.b16 %v9002
  %v9083 = vunpack.c.l.b16 %v9003
  %v9084 = vunpack.c.l.b16 %v9004
  %v9085 = vpack.c.b16 %v9048, %v9047
  %v9086 = vpack.c.b16 %v9050, %v9049
  %v9087 = vpack.c.b16 %v9052, %v9051
  %v9088 = vpack.c.b16 %v9054, %v9053
  %v9089 = vpack.c.b16 %v9056, %v9055
  %v9090 = vpack.c.b16 %v9058, %v9057
  %v9091 = vpack.c.b16 %v9060, %v9059
  %v9092 = vpack.c.b16 %v9062, %v9061
  %v9093 = vpack.c.b16 %v9064, %v9063
  %v9094 = vpack.c.b16 %v9066, %v9065
  %v9095 = vpack.c.b16 %v9068, %v9067
  %v9096 = vpack.c.b16 %v9070, %v9069
  %v9097 = vpack.c.b16 %v9072, %v9071
  %v9098 = vpack.c.b16 %v9074, %v9073
  %v9099 = vpack.c.b16 %v9076, %v9075
  %v9100 = vpack.c.b16 %v9078, %v9077
  %v9101 = vpack.c.b16 %v9080, %v9079
  %v9102 = vpack.c.b16 %v9082, %v9081
  %v9103 = vpack.c.b16 %v9084, %v9083
  %vm9122 = vcmask 359424
  %v9124 = vsel %vm9122, %v8966, 0
  %v9127 = vsel %vm1130, %v9103, 0
  %9129 = vmatpush.bf16.msra.mxu0 %v9092
  %9130 = vmatpush.bf16.msra.mxu0 %v9091
  %9131 = vmatpush.bf16.msra.mxu0 %v9090
  %9132 = vmatpush.bf16.msra.mxu0 %v9089
  %9133 = vmatpush.bf16.msra.mxu0 %v9088
  %9134 = vmatpush.bf16.msra.mxu0 %v9087
  %9135 = vmatpush.bf16.msra.mxu0 %v9086
  %9136 = vmatpush.bf16.msra.mxu0 %v9085
  %9137 = vmatmul.bf16.gmra.mxu0 %v8964
  %v9138 = vpop.f32.mrf.mxu0
  %v9139 = vadd.f32 %v9007, %v9138
  %v9140 = vpop.f32.mrf.mxu0
  %9141 = vdwg.mxu0
  %9142 = vmatpush.bf16.msra.mxu0 %v9100
  %9143 = vmatpush.bf16.msra.mxu0 %v9099
  %9144 = vmatpush.bf16.msra.mxu0 %v9098
  %9145 = vmatpush.bf16.msra.mxu0 %v9097
  %9146 = vmatpush.bf16.msra.mxu0 %v9096
  %9147 = vmatpush.bf16.msra.mxu0 %v9095
  %9148 = vmatpush.bf16.msra.mxu0 %v9094
  %9149 = vmatpush.bf16.msra.mxu0 %v9093
  %9150 = vmatmul.bf16.gmra.mxu0 %v8965
  %v9151 = vpop.f32.mrf.mxu0
  %v9152 = vadd.f32 %v9139, %v9151
  %v9153 = vpop.f32.mrf.mxu0
  %9154 = vdwg.mxu0
  %9155 = vmatpush.bf16.msra.mxu0 0
  %9156 = vmatpush.bf16.msra.mxu0 0
  %9157 = vmatpush.bf16.msra.mxu0 0
  %9158 = vmatpush.bf16.msra.mxu0 0
  %9159 = vmatpush.bf16.msra.mxu0 0
  %9160 = vmatpush.bf16.msra.mxu0 %v9127
  %9161 = vmatpush.bf16.msra.mxu0 %v9102
  %9162 = vmatpush.bf16.msra.mxu0 %v9101
  %9163 = vmatmul.bf16.gmra.mxu0 %v9124
  %v9164 = vpop.f32.mrf.mxu0
  %v9165 = vadd.f32 %v9152, %v9164
  %v9166 = vpop.f32.mrf.mxu0
  %9167 = vdwg.mxu0
  %9168 = vmax.xlane.f32.xlu0 %v9165
  %v9169 = vpop.xlane.xlu0 %9168
  %v9170 = vsub.f32 %v9165, %v9169
  %v9171 = vmul.f32 %v9170, 1.442695
  %v9172 = vpow.pop %v9171
  %9173 = vadd.xlane.f32.xlu0 %v9172
  %v9174 = vpop.xlane.xlu0 %9173
  %v9175 = vlog2.pop %v9174
  %v9176 = vmul.f32 %v9175, 0.6931472
  %v9177 = vsub.f32 %v9170, %v9176
  %9178 = vst [vmem:[%s9] sm:$0xff] %v9177
  // Predicated region
  $region38: #{net_forward.1} parent=0 // pred_check
    _
  $region39: #{net_forward.1} parent=0 // pred_check_branch
    %9180 = sbr.rel (0) target = $region41
  $region40: #{net_forward.1} parent=0 // pred_region
    _
  $region41: #{net_forward.1} parent=0 // pred_fallthru
    _
  // Predicated region
  $region42: #{net_forward.1} parent=0 // pred_check
    _
  $region43: #{net_forward.1} parent=0 // pred_check_branch
    %9182 = sbr.rel (0) target = $region45
  $region44: #{net_forward.1} parent=0 // pred_region
    _
  $region45: #{net_forward.1} parent=0 // pred_fallthru
    _

</llo_original>
